<compile_context>
chip_gen: v7x
topology: tpu7x:2x2x1
jax: 0.10.0
libtpu: 0.0.40
codegen_flags: <defaults>
</compile_context>

<pallas_src>
import functools

import jax
import jax.numpy as jnp
from jax import lax
from jax.experimental import pallas as pl
from jax.experimental.pallas import tpu as pltpu


# ---------------------------------------------------------------------------
# In-kernel helpers (traced inside the Pallas kernel body)
# ---------------------------------------------------------------------------
def _group_norm_silu(x2d, count, gamma, beta, gmat, eps, mask=None):
    """GroupNorm + SiLU on a (HW, Cpad) slab, all in f32.

    gmat is a (Cpad, G) one-hot group-membership matrix (all-zero rows for padded
    channels) so group reductions / broadcasts are tiny matmuls.  `mask` (HW, 1)
    restricts the statistics to the spatially valid region.
    """
    if mask is None:
        xm = x2d
    else:
        xm = jnp.where(mask > 0, x2d, 0.0)          # `where` so garbage never poisons sums
    s = jnp.sum(xm, axis=0, keepdims=True)           # (1, Cpad)
    sq = jnp.sum(xm * xm, axis=0, keepdims=True)     # (1, Cpad)
    fwd = (((1,), (0,)), ((), ()))                   # contract channel axis
    gsum = lax.dot_general(s, gmat, fwd, preferred_element_type=jnp.float32)   # (1, G)
    gsq = lax.dot_general(sq, gmat, fwd, preferred_element_type=jnp.float32)   # (1, G)
    mean = gsum / count
    var = gsq / count - mean * mean                  # biased variance (matches PyTorch GN)
    inv = lax.rsqrt(var + eps)
    back = (((1,), (1,)), ((), ()))                  # group -> per-channel
    mean_c = lax.dot_general(mean, gmat, back, preferred_element_type=jnp.float32)
    inv_c = lax.dot_general(inv, gmat, back, preferred_element_type=jnp.float32)
    y = (x2d - mean_c) * (inv_c * gamma) + beta      # padded channels -> exactly 0
    return y * jax.nn.sigmoid(y)                     # SiLU


def _conv3x3_im2col(y2d, w_ref, bias, patch_ref, W, cp):
    """3x3 conv over the full (H*W, cp) domain as ONE im2col matmul.

    For tap (dy, dx) the patch block holds y shifted by k = dy*W + dx rows (wrap-
    around rows only land in the garbage border that the wrapper crops away).
    Single bf16 MXU matmul with K = 9*cp, f32 accumulation.
    """
    hw = y2d.shape[0]
    t = 0
    for dy in range(3):
        for dx in range(3):
            k = dy * W + dx
            if k == 0:
                shifted = y2d
            else:
                shifted = jnp.concatenate([y2d[k:, :], y2d[:k, :]], axis=0)
            patch_ref[:, t * cp:(t + 1) * cp] = shifted.astype(jnp.bfloat16)
            t += 1
    patches = patch_ref[:, :9 * cp]                  # (HW, 9*cp) bf16, lane-aligned
    return jnp.dot(patches, w_ref[...], preferred_element_type=jnp.float32) + bias


# ---------------------------------------------------------------------------
# Pallas kernel: one batch element per grid step, everything fused in VMEM
# ---------------------------------------------------------------------------
def _resblock_kernel(x_ref, vmask_ref, g1_ref, b1_ref, m1_ref, w1_ref, cb1_ref,
                     g2_ref, b2_ref, m2_ref, w2_ref, cb2_ref, *rest,
                     H, W, C_in, C_out, Cp_in, Cp_out, groups, eps, has_skip):
    if has_skip:
        wsk_ref, bsk_ref, o_ref, patch_ref = rest
    else:
        o_ref, patch_ref = rest
        wsk_ref = bsk_ref = None

    x = x_ref[...]                                   # (HW, Cp_in) f32

    # GroupNorm1 + SiLU (stats over the full H*W image)
    cnt1 = float(H * W * (C_in // groups))
    y1 = _group_norm_silu(x, cnt1, g1_ref[...], b1_ref[...], m1_ref[...], eps)

    # Conv1 3x3 (valid) — im2col, bf16 MXU
    z1 = _conv3x3_im2col(y1, w1_ref, cb1_ref[...], patch_ref, W, Cp_in)

    # GroupNorm2 + SiLU (stats over the (H-2, W-2) valid region only)
    vmask = vmask_ref[...]                           # (HW, 1) f32 {0,1}
    cnt2 = float((H - 2) * (W - 2) * (C_out // groups))
    y2 = _group_norm_silu(z1, cnt2, g2_ref[...], b2_ref[...], m2_ref[...], eps,
                          mask=vmask)

    # Conv2 3x3 (valid) — im2col, bf16 MXU
    z2 = _conv3x3_im2col(y2, w2_ref, cb2_ref[...], patch_ref, W, Cp_out)

    # Skip path: residue aligned to the conv2 output (center offset of +2, +2),
    # computed on the full slab so everything stays tile-aligned.
    ksk = 2 * W + 2
    x_shift = jnp.concatenate([x[ksk:, :], x[:ksk, :]], axis=0)
    if has_skip:
        skip = jnp.dot(x_shift.astype(jnp.bfloat16), wsk_ref[...],
                       preferred_element_type=jnp.float32) + bsk_ref[...]
    else:
        skip = x_shift

    o_ref[...] = z2 + skip                           # dense (HW, Cp_out) store


# ---------------------------------------------------------------------------
# Wrapper
# ---------------------------------------------------------------------------
def vae_residual_block(x_nchw, params, *, groups=32, eps=1e-5):
    N, C_in, H, W = x_nchw.shape
    C_out = params["conv1_w"].shape[0]
    has_skip = C_in != C_out
    ho, wo = H - 4, W - 4
    HW = H * W

    def _rup(c, m):
        return ((c + m - 1) // m) * m

    Cp_in = _rup(C_in, 128)        # lane-dense channel padding
    Cp_out = _rup(C_out, 128)
    Cmax = max(Cp_in, Cp_out)

    # Input: NCHW -> NHWC, pad channels, flatten spatial (done in the wrapper so the
    # kernel never reshapes).
    x = jnp.transpose(x_nchw, (0, 2, 3, 1)).astype(jnp.float32)
    x = jnp.pad(x, ((0, 0), (0, 0), (0, 0), (0, Cp_in - C_in)))
    x = x.reshape(N, HW, Cp_in)

    def pad_vec(v, cp):            # (C,) -> (1, cp) f32, zero-padded
        v = v.astype(jnp.float32)
        return jnp.pad(v, (0, cp - v.shape[0])).reshape(1, cp)

    def pack_w(w_oihw, cp_i, cp_o):
        # (Cout, Cin, 3, 3) -> (9*cp_i, cp_o) bf16, row index = (dy*3+dx)*cp_i + ci
        w = jnp.transpose(w_oihw.astype(jnp.float32), (2, 3, 1, 0))   # (3,3,Ci,Co)
        w = jnp.pad(w, ((0, 0), (0, 0),
                        (0, cp_i - w.shape[2]), (0, cp_o - w.shape[3])))
        return w.reshape(9 * cp_i, cp_o).astype(jnp.bfloat16)

    w1 = pack_w(params["conv1_w"], Cp_in, Cp_out)
    w2 = pack_w(params["conv2_w"], Cp_out, Cp_out)
    cb1 = pad_vec(params["conv1_b"], Cp_out)
    cb2 = pad_vec(params["conv2_b"], Cp_out)
    g1 = pad_vec(params["gn1_gamma"], Cp_in)
    b1 = pad_vec(params["gn1_beta"], Cp_in)
    g2 = pad_vec(params["gn2_gamma"], Cp_out)
    b2 = pad_vec(params["gn2_beta"], Cp_out)

    def gmask(c_real, c_pad):      # (c_pad, G) one-hot, zero rows for padded channels
        gs = c_real // groups
        ch = jnp.arange(c_pad)
        m = (ch[:, None] // gs == jnp.arange(groups)[None, :]) & (ch[:, None] < c_real)
        return m.astype(jnp.float32)

    m1 = gmask(C_in, Cp_in)
    m2 = gmask(C_out, Cp_out)

    # Spatial validity mask for GroupNorm2 stats (valid region of conv1's output).
    hh = jnp.arange(H)[:, None]
    ww = jnp.arange(W)[None, :]
    vmask = ((hh < H - 2) & (ww < W - 2)).astype(jnp.float32).reshape(HW, 1)

    inputs = [x, vmask, g1, b1, m1, w1, cb1, g2, b2, m2, w2, cb2]

    def full(shape):
        nd = len(shape)
        return pl.BlockSpec(shape, lambda n, _nd=nd: (0,) * _nd)

    in_specs = [
        pl.BlockSpec((None, HW, Cp_in), lambda n: (n, 0, 0)),
        full((HW, 1)),
        full((1, Cp_in)), full((1, Cp_in)), full((Cp_in, groups)),
        full((9 * Cp_in, Cp_out)), full((1, Cp_out)),
        full((1, Cp_out)), full((1, Cp_out)), full((Cp_out, groups)),
        full((9 * Cp_out, Cp_out)), full((1, Cp_out)),
    ]
    if has_skip:
        wsk = jnp.transpose(params["skip_w"][:, :, 0, 0].astype(jnp.float32), (1, 0))
        wsk = jnp.pad(wsk, ((0, Cp_in - C_in), (0, Cp_out - C_out))).astype(jnp.bfloat16)
        bsk = pad_vec(params["skip_b"], Cp_out)
        inputs += [wsk, bsk]
        in_specs += [full((Cp_in, Cp_out)), full((1, Cp_out))]

    kernel = functools.partial(
        _resblock_kernel, H=H, W=W, C_in=C_in, C_out=C_out,
        Cp_in=Cp_in, Cp_out=Cp_out, groups=groups, eps=eps, has_skip=has_skip)

    # Advisory cost estimate for the XLA scheduler.
    conv_flops = 2 * N * HW * (9 * Cp_in * Cp_out + 9 * Cp_out * Cp_out)
    skip_flops = 2 * N * HW * Cp_in * Cp_out if has_skip else 0
    flops = int(conv_flops + skip_flops + 12 * N * HW * (Cp_in + Cp_out))
    transcendentals = int(N * HW * (Cp_in + Cp_out))
    bytes_accessed = int(N * HW * (Cp_in + Cp_out) * 4
                         + (int(w1.size) + int(w2.size)) * 2
                         + (int(wsk.size) * 2 if has_skip else 0))

    # Size the scoped VMEM to the actual working set (capped for v7x's 64 MiB).
    est = (2 * HW * (Cp_in + Cp_out) * 4            # double-buffered in/out blocks
           + (int(w1.size) + int(w2.size)) * 2      # conv weights (bf16)
           + HW * 9 * Cmax * 2                      # im2col scratch (bf16)
           + 8 * HW * Cmax * 4)                     # live f32 temporaries / spills
    vmem_limit = int(min(64 * 1024 * 1024, max(32 * 1024 * 1024, 2 * est)))

    out = pl.pallas_call(
        kernel,
        out_shape=jax.ShapeDtypeStruct((N, HW, Cp_out), jnp.float32),
        grid_spec=pltpu.PrefetchScalarGridSpec(
            num_scalar_prefetch=0,
            grid=(N,),
            in_specs=in_specs,
            out_specs=pl.BlockSpec((None, HW, Cp_out), lambda n: (n, 0, 0)),
            scratch_shapes=[pltpu.VMEM((HW, 9 * Cmax), jnp.bfloat16)],
        ),
        compiler_params=pltpu.CompilerParams(
            dimension_semantics=("parallel",),       # batch elements are independent
            vmem_limit_bytes=vmem_limit),
        cost_estimate=pl.CostEstimate(
            flops=flops, transcendentals=transcendentals,
            bytes_accessed=bytes_accessed),
    )(*inputs)

    # Crop the valid window and real channels, back to NCHW.
    out = out.reshape(N, H, W, Cp_out)[:, :ho, :wo, :C_out]
    return jnp.transpose(out, (0, 3, 1, 2))


# ---------------------------------------------------------------------------
# Pure-JAX reference (for correctness check)
# ---------------------------------------------------------------------------
def _ref_group_norm(x, gamma, beta, groups, eps):
    N, H, W, C = x.shape
    xg = x.reshape(N, H, W, groups, C // groups)
    mean = xg.mean(axis=(1, 2, 4), keepdims=True)
    var = xg.var(axis=(1, 2, 4), keepdims=True)
    xn = ((xg - mean) / jnp.sqrt(var + eps)).reshape(N, H, W, C)
    return xn * gamma.reshape(1, 1, 1, C) + beta.reshape(1, 1, 1, C)


def _ref_conv(x, w_oihw, b):
    w = jnp.transpose(w_oihw, (2, 3, 1, 0))                         # HWIO
    y = lax.conv_general_dilated(x, w, (1, 1), "VALID",
                                 dimension_numbers=("NHWC", "HWIO", "NHWC"))
    return y + b.reshape(1, 1, 1, -1)


def _ref_forward(x_nchw, params, groups=32, eps=1e-5):
    x = jnp.transpose(x_nchw, (0, 2, 3, 1)).astype(jnp.float32)
    y = jax.nn.silu(_ref_group_norm(x, params["gn1_gamma"], params["gn1_beta"], groups, eps))
    y = _ref_conv(y, params["conv1_w"], params["conv1_b"])
    y = jax.nn.silu(_ref_group_norm(y, params["gn2_gamma"], params["gn2_beta"], groups, eps))
    y = _ref_conv(y, params["conv2_w"], params["conv2_b"])
    res = x[:, 2:-2, 2:-2, :]
    if "skip_w" in params:
        skip = _ref_conv(res, params["skip_w"], params["skip_b"])
    else:
        skip = res
    return jnp.transpose(y + skip, (0, 3, 1, 2))


# ---------------------------------------------------------------------------
if __name__ == "__main__":
    key = jax.random.PRNGKey(0)
    # GroupNorm(32, C) requires C % 32 == 0 -> smallest sensible channels are 32/64.
    N, C_in, C_out, H, W = 2, 32, 64, 16, 16
    ks = jax.random.split(key, 11)
    params = {
        "gn1_gamma": 1.0 + 0.1 * jax.random.normal(ks[0], (C_in,), jnp.float32),
        "gn1_beta": 0.1 * jax.random.normal(ks[1], (C_in,), jnp.float32),
        "conv1_w": 0.05 * jax.random.normal(ks[2], (C_out, C_in, 3, 3), jnp.float32),
        "conv1_b": 0.05 * jax.random.normal(ks[3], (C_out,), jnp.float32),
        "gn2_gamma": 1.0 + 0.1 * jax.random.normal(ks[4], (C_out,), jnp.float32),
        "gn2_beta": 0.1 * jax.random.normal(ks[5], (C_out,), jnp.float32),
        "conv2_w": 0.05 * jax.random.normal(ks[6], (C_out, C_out, 3, 3), jnp.float32),
        "conv2_b": 0.05 * jax.random.normal(ks[7], (C_out,), jnp.float32),
        "skip_w": 0.05 * jax.random.normal(ks[8], (C_out, C_in, 1, 1), jnp.float32),
        "skip_b": 0.05 * jax.random.normal(ks[9], (C_out,), jnp.float32),
    }
    x = jax.random.normal(ks[10], (N, C_in, H, W), jnp.float32)

    out = jax.block_until_ready(vae_residual_block(x, params))
    ref = jax.block_until_ready(_ref_forward(x, params))

    assert out.shape == (N, C_out, H - 4, W - 4), out.shape
    err = float(jnp.max(jnp.abs(out - ref)))
    # bf16 MXU operands with f32 accumulation vs a pure-f32 reference.
    assert err < 5e-2, f"max abs error {err}"
    print("KERNEL_OK")
</pallas_src>

<mosaic_0001>
module attributes {stable_mosaic.version = 11 : i64} {
  func.func @_resblock_kernel(%arg0: i32, %arg1: memref<1x256x128xf32, #tpu.memory_space<vmem>>, %arg2: memref<256x1xf32, #tpu.memory_space<vmem>>, %arg3: memref<1x128xf32, #tpu.memory_space<vmem>>, %arg4: memref<1x128xf32, #tpu.memory_space<vmem>>, %arg5: memref<128x32xf32, #tpu.memory_space<vmem>>, %arg6: memref<1152x128xbf16, #tpu.memory_space<vmem>>, %arg7: memref<1x128xf32, #tpu.memory_space<vmem>>, %arg8: memref<1x128xf32, #tpu.memory_space<vmem>>, %arg9: memref<1x128xf32, #tpu.memory_space<vmem>>, %arg10: memref<128x32xf32, #tpu.memory_space<vmem>>, %arg11: memref<1152x128xbf16, #tpu.memory_space<vmem>>, %arg12: memref<1x128xf32, #tpu.memory_space<vmem>>, %arg13: memref<128x128xbf16, #tpu.memory_space<vmem>>, %arg14: memref<1x128xf32, #tpu.memory_space<vmem>>, %arg15: memref<1x256x128xf32, #tpu.memory_space<vmem>>, %arg16: memref<256x1152xbf16, #tpu.memory_space<vmem>>) attributes {dimension_semantics = [#tpu.dimension_semantics<parallel>], iteration_bounds = array<i64: 2>, scalar_prefetch = 0 : i64, scratch_operands = 1 : i64, tpu.core_type = #tpu.core_type<tc>, window_params = [{transform_indices = @transform_0, window_bounds = array<i64: 1, 256, 128>}, {pipeline_mode = #tpu.pipeline_mode<synchronous>, transform_indices = @transform_1, window_bounds = array<i64: 256, 1>}, {pipeline_mode = #tpu.pipeline_mode<synchronous>, transform_indices = @transform_2, window_bounds = array<i64: 1, 128>}, {pipeline_mode = #tpu.pipeline_mode<synchronous>, transform_indices = @transform_3, window_bounds = array<i64: 1, 128>}, {pipeline_mode = #tpu.pipeline_mode<synchronous>, transform_indices = @transform_4, window_bounds = array<i64: 128, 32>}, {pipeline_mode = #tpu.pipeline_mode<synchronous>, transform_indices = @transform_5, window_bounds = array<i64: 1152, 128>}, {pipeline_mode = #tpu.pipeline_mode<synchronous>, transform_indices = @transform_6, window_bounds = array<i64: 1, 128>}, {pipeline_mode = #tpu.pipeline_mode<synchronous>, transform_indices = @transform_7, window_bounds = array<i64: 1, 128>}, {pipeline_mode = #tpu.pipeline_mode<synchronous>, transform_indices = @transform_8, window_bounds = array<i64: 1, 128>}, {pipeline_mode = #tpu.pipeline_mode<synchronous>, transform_indices = @transform_9, window_bounds = array<i64: 128, 32>}, {pipeline_mode = #tpu.pipeline_mode<synchronous>, transform_indices = @transform_10, window_bounds = array<i64: 1152, 128>}, {pipeline_mode = #tpu.pipeline_mode<synchronous>, transform_indices = @transform_11, window_bounds = array<i64: 1, 128>}, {pipeline_mode = #tpu.pipeline_mode<synchronous>, transform_indices = @transform_12, window_bounds = array<i64: 128, 128>}, {pipeline_mode = #tpu.pipeline_mode<synchronous>, transform_indices = @transform_13, window_bounds = array<i64: 1, 128>}, {transform_indices = @transform_14, window_bounds = array<i64: 1, 256, 128>}]} {
    %c0 = arith.constant 0 : index
    %c0_0 = arith.constant 0 : index
    %c0_1 = arith.constant 0 : index
    %0 = vector.load %arg1[%c0, %c0_0, %c0_1] : memref<1x256x128xf32, #tpu.memory_space<vmem>>, vector<1x256x128xf32>
    %1 = vector.shape_cast %0 : vector<1x256x128xf32> to vector<256x128xf32>
    %c0_2 = arith.constant 0 : index
    %c0_3 = arith.constant 0 : index
    %2 = vector.load %arg3[%c0_2, %c0_3] : memref<1x128xf32, #tpu.memory_space<vmem>>, vector<1x128xf32>
    %c0_4 = arith.constant 0 : index
    %c0_5 = arith.constant 0 : index
    %3 = vector.load %arg4[%c0_4, %c0_5] : memref<1x128xf32, #tpu.memory_space<vmem>>, vector<1x128xf32>
    %c0_6 = arith.constant 0 : index
    %c0_7 = arith.constant 0 : index
    %4 = vector.load %arg5[%c0_6, %c0_7] : memref<128x32xf32, #tpu.memory_space<vmem>>, vector<128x32xf32>
    %cst = arith.constant dense<0.000000e+00> : vector<128xf32>
    %5 = vector.multi_reduction <add>, %1, %cst [0] : vector<256x128xf32> to vector<128xf32>
    %6 = vector.shape_cast %5 : vector<128xf32> to vector<1x128xf32>
    %7 = arith.mulf %1, %1 : vector<256x128xf32>
    %cst_8 = arith.constant dense<0.000000e+00> : vector<128xf32>
    %8 = vector.multi_reduction <add>, %7, %cst_8 [0] : vector<256x128xf32> to vector<128xf32>
    %9 = vector.shape_cast %8 : vector<128xf32> to vector<1x128xf32>
    %cst_9 = arith.constant dense<0.000000e+00> : vector<1x32xf32>
    %10 = tpu.matmul %6, %4, %cst_9 {dimension_numbers = #tpu.dot_dimension_numbers<[1], [0], [0], [1], [0, 0, 1, 1], [], []>} : vector<1x128xf32>, vector<128x32xf32>, vector<1x32xf32> -> vector<1x32xf32>
    %cst_10 = arith.constant dense<0.000000e+00> : vector<1x32xf32>
    %11 = tpu.matmul %9, %4, %cst_10 {dimension_numbers = #tpu.dot_dimension_numbers<[1], [0], [0], [1], [0, 0, 1, 1], [], []>} : vector<1x128xf32>, vector<128x32xf32>, vector<1x32xf32> -> vector<1x32xf32>
    %cst_11 = arith.constant 2.560000e+02 : f32
    %12 = vector.broadcast %cst_11 : f32 to vector<1x32xf32>
    %13 = arith.divf %10, %12 : vector<1x32xf32>
    %cst_12 = arith.constant 2.560000e+02 : f32
    %14 = vector.broadcast %cst_12 : f32 to vector<1x32xf32>
    %15 = arith.divf %11, %14 : vector<1x32xf32>
    %16 = arith.mulf %13, %13 : vector<1x32xf32>
    %17 = arith.subf %15, %16 : vector<1x32xf32>
    %cst_13 = arith.constant 9.99999974E-6 : f32
    %18 = vector.broadcast %cst_13 : f32 to vector<1x32xf32>
    %19 = arith.addf %17, %18 : vector<1x32xf32>
    %20 = math.rsqrt %19 : vector<1x32xf32>
    %cst_14 = arith.constant dense<0.000000e+00> : vector<1x128xf32>
    %21 = tpu.matmul %13, %4, %cst_14 {dimension_numbers = #tpu.dot_dimension_numbers<[1], [1], [0], [0], [0, 0, 1, 0], [], []>} : vector<1x32xf32>, vector<128x32xf32>, vector<1x128xf32> -> vector<1x128xf32>
    %cst_15 = arith.constant dense<0.000000e+00> : vector<1x128xf32>
    %22 = tpu.matmul %20, %4, %cst_15 {dimension_numbers = #tpu.dot_dimension_numbers<[1], [1], [0], [0], [0, 0, 1, 0], [], []>} : vector<1x32xf32>, vector<128x32xf32>, vector<1x128xf32> -> vector<1x128xf32>
    %23 = vector.broadcast %21 : vector<1x128xf32> to vector<256x128xf32>
    %24 = arith.subf %1, %23 : vector<256x128xf32>
    %25 = arith.mulf %22, %2 : vector<1x128xf32>
    %26 = vector.broadcast %25 : vector<1x128xf32> to vector<256x128xf32>
    %27 = arith.mulf %24, %26 : vector<256x128xf32>
    %28 = vector.broadcast %3 : vector<1x128xf32> to vector<256x128xf32>
    %29 = arith.addf %27, %28 : vector<256x128xf32>
    %30 = arith.negf %29 : vector<256x128xf32>
    %31 = math.exp %30 : vector<256x128xf32>
    %cst_16 = arith.constant 1.000000e+00 : f32
    %32 = vector.broadcast %cst_16 : f32 to vector<256x128xf32>
    %33 = arith.addf %32, %31 : vector<256x128xf32>
    %34 = arith.divf %32, %33 : vector<256x128xf32>
    %35 = arith.mulf %29, %34 : vector<256x128xf32>
    %c0_17 = arith.constant 0 : index
    %c0_18 = arith.constant 0 : index
    %36 = vector.load %arg7[%c0_17, %c0_18] : memref<1x128xf32, #tpu.memory_space<vmem>>, vector<1x128xf32>
    %37 = arith.truncf %35 : vector<256x128xf32> to vector<256x128xbf16>
    %c0_19 = arith.constant 0 : index
    %c0_20 = arith.constant 0 : index
    %38 = vector.load %arg16[%c0_19, %c0_20] : memref<256x1152xbf16, #tpu.memory_space<vmem>>, vector<256x128xbf16>
    tpu.vector_store %arg16[%c0_19, %c0_20], %37 {strides = array<i32>} : memref<256x1152xbf16, #tpu.memory_space<vmem>>, vector<256x128xbf16>,
    %39 = vector.extract_strided_slice %35 {offsets = [1, 0], sizes = [255, 128], strides = [1, 1]} : vector<256x128xf32> to vector<255x128xf32>
    %40 = vector.extract_strided_slice %35 {offsets = [0, 0], sizes = [1, 128], strides = [1, 1]} : vector<256x128xf32> to vector<1x128xf32>
    %41 = tpu.concatenate %39, %40 in 0 : vector<255x128xf32>, vector<1x128xf32> -> vector<256x128xf32>
    %42 = arith.truncf %41 : vector<256x128xf32> to vector<256x128xbf16>
    %c0_21 = arith.constant 0 : index
    %c128 = arith.constant 128 : index
    %43 = vector.load %arg16[%c0_21, %c128] : memref<256x1152xbf16, #tpu.memory_space<vmem>>, vector<256x128xbf16>
    tpu.vector_store %arg16[%c0_21, %c128], %42 {strides = array<i32>} : memref<256x1152xbf16, #tpu.memory_space<vmem>>, vector<256x128xbf16>,
    %44 = vector.extract_strided_slice %35 {offsets = [2, 0], sizes = [254, 128], strides = [1, 1]} : vector<256x128xf32> to vector<254x128xf32>
    %45 = vector.extract_strided_slice %35 {offsets = [0, 0], sizes = [2, 128], strides = [1, 1]} : vector<256x128xf32> to vector<2x128xf32>
    %46 = tpu.concatenate %44, %45 in 0 : vector<254x128xf32>, vector<2x128xf32> -> vector<256x128xf32>
    %47 = arith.truncf %46 : vector<256x128xf32> to vector<256x128xbf16>
    %c0_22 = arith.constant 0 : index
    %c256 = arith.constant 256 : index
    %48 = vector.load %arg16[%c0_22, %c256] : memref<256x1152xbf16, #tpu.memory_space<vmem>>, vector<256x128xbf16>
    tpu.vector_store %arg16[%c0_22, %c256], %47 {strides = array<i32>} : memref<256x1152xbf16, #tpu.memory_space<vmem>>, vector<256x128xbf16>,
    %49 = vector.extract_strided_slice %35 {offsets = [16, 0], sizes = [240, 128], strides = [1, 1]} : vector<256x128xf32> to vector<240x128xf32>
    %50 = vector.extract_strided_slice %35 {offsets = [0, 0], sizes = [16, 128], strides = [1, 1]} : vector<256x128xf32> to vector<16x128xf32>
    %51 = tpu.concatenate %49, %50 in 0 : vector<240x128xf32>, vector<16x128xf32> -> vector<256x128xf32>
    %52 = arith.truncf %51 : vector<256x128xf32> to vector<256x128xbf16>
    %c0_23 = arith.constant 0 : index
    %c384 = arith.constant 384 : index
    %53 = vector.load %arg16[%c0_23, %c384] : memref<256x1152xbf16, #tpu.memory_space<vmem>>, vector<256x128xbf16>
    tpu.vector_store %arg16[%c0_23, %c384], %52 {strides = array<i32>} : memref<256x1152xbf16, #tpu.memory_space<vmem>>, vector<256x128xbf16>,
    %54 = vector.extract_strided_slice %35 {offsets = [17, 0], sizes = [239, 128], strides = [1, 1]} : vector<256x128xf32> to vector<239x128xf32>
    %55 = vector.extract_strided_slice %35 {offsets = [0, 0], sizes = [17, 128], strides = [1, 1]} : vector<256x128xf32> to vector<17x128xf32>
    %56 = tpu.concatenate %54, %55 in 0 : vector<239x128xf32>, vector<17x128xf32> -> vector<256x128xf32>
    %57 = arith.truncf %56 : vector<256x128xf32> to vector<256x128xbf16>
    %c0_24 = arith.constant 0 : index
    %c512 = arith.constant 512 : index
    %58 = vector.load %arg16[%c0_24, %c512] : memref<256x1152xbf16, #tpu.memory_space<vmem>>, vector<256x128xbf16>
    tpu.vector_store %arg16[%c0_24, %c512], %57 {strides = array<i32>} : memref<256x1152xbf16, #tpu.memory_space<vmem>>, vector<256x128xbf16>,
    %59 = vector.extract_strided_slice %35 {offsets = [18, 0], sizes = [238, 128], strides = [1, 1]} : vector<256x128xf32> to vector<238x128xf32>
    %60 = vector.extract_strided_slice %35 {offsets = [0, 0], sizes = [18, 128], strides = [1, 1]} : vector<256x128xf32> to vector<18x128xf32>
    %61 = tpu.concatenate %59, %60 in 0 : vector<238x128xf32>, vector<18x128xf32> -> vector<256x128xf32>
    %62 = arith.truncf %61 : vector<256x128xf32> to vector<256x128xbf16>
    %c0_25 = arith.constant 0 : index
    %c640 = arith.constant 640 : index
    %63 = vector.load %arg16[%c0_25, %c640] : memref<256x1152xbf16, #tpu.memory_space<vmem>>, vector<256x128xbf16>
    tpu.vector_store %arg16[%c0_25, %c640], %62 {strides = array<i32>} : memref<256x1152xbf16, #tpu.memory_space<vmem>>, vector<256x128xbf16>,
    %64 = vector.extract_strided_slice %35 {offsets = [32, 0], sizes = [224, 128], strides = [1, 1]} : vector<256x128xf32> to vector<224x128xf32>
    %65 = vector.extract_strided_slice %35 {offsets = [0, 0], sizes = [32, 128], strides = [1, 1]} : vector<256x128xf32> to vector<32x128xf32>
    %66 = tpu.concatenate %64, %65 in 0 : vector<224x128xf32>, vector<32x128xf32> -> vector<256x128xf32>
    %67 = arith.truncf %66 : vector<256x128xf32> to vector<256x128xbf16>
    %c0_26 = arith.constant 0 : index
    %c768 = arith.constant 768 : index
    %68 = vector.load %arg16[%c0_26, %c768] : memref<256x1152xbf16, #tpu.memory_space<vmem>>, vector<256x128xbf16>
    tpu.vector_store %arg16[%c0_26, %c768], %67 {strides = array<i32>} : memref<256x1152xbf16, #tpu.memory_space<vmem>>, vector<256x128xbf16>,
    %69 = vector.extract_strided_slice %35 {offsets = [33, 0], sizes = [223, 128], strides = [1, 1]} : vector<256x128xf32> to vector<223x128xf32>
    %70 = vector.extract_strided_slice %35 {offsets = [0, 0], sizes = [33, 128], strides = [1, 1]} : vector<256x128xf32> to vector<33x128xf32>
    %71 = tpu.concatenate %69, %70 in 0 : vector<223x128xf32>, vector<33x128xf32> -> vector<256x128xf32>
    %72 = arith.truncf %71 : vector<256x128xf32> to vector<256x128xbf16>
    %c0_27 = arith.constant 0 : index
    %c896 = arith.constant 896 : index
    %73 = vector.load %arg16[%c0_27, %c896] : memref<256x1152xbf16, #tpu.memory_space<vmem>>, vector<256x128xbf16>
    tpu.vector_store %arg16[%c0_27, %c896], %72 {strides = array<i32>} : memref<256x1152xbf16, #tpu.memory_space<vmem>>, vector<256x128xbf16>,
    %74 = vector.extract_strided_slice %35 {offsets = [34, 0], sizes = [222, 128], strides = [1, 1]} : vector<256x128xf32> to vector<222x128xf32>
    %75 = vector.extract_strided_slice %35 {offsets = [0, 0], sizes = [34, 128], strides = [1, 1]} : vector<256x128xf32> to vector<34x128xf32>
    %76 = tpu.concatenate %74, %75 in 0 : vector<222x128xf32>, vector<34x128xf32> -> vector<256x128xf32>
    %77 = arith.truncf %76 : vector<256x128xf32> to vector<256x128xbf16>
    %c0_28 = arith.constant 0 : index
    %c1024 = arith.constant 1024 : index
    %78 = vector.load %arg16[%c0_28, %c1024] : memref<256x1152xbf16, #tpu.memory_space<vmem>>, vector<256x128xbf16>
    tpu.vector_store %arg16[%c0_28, %c1024], %77 {strides = array<i32>} : memref<256x1152xbf16, #tpu.memory_space<vmem>>, vector<256x128xbf16>,
    %c0_29 = arith.constant 0 : index
    %c0_30 = arith.constant 0 : index
    %79 = vector.load %arg16[%c0_29, %c0_30] : memref<256x1152xbf16, #tpu.memory_space<vmem>>, vector<256x1152xbf16>
    %c0_31 = arith.constant 0 : index
    %c0_32 = arith.constant 0 : index
    %80 = vector.load %arg6[%c0_31, %c0_32] : memref<1152x128xbf16, #tpu.memory_space<vmem>>, vector<1152x128xbf16>
    %cst_33 = arith.constant dense<0.000000e+00> : vector<256x128xf32>
    %81 = tpu.matmul %79, %80, %cst_33 {dimension_numbers = #tpu.dot_dimension_numbers<[1], [0], [0], [1], [0, 0, 1, 1], [], []>} : vector<256x1152xbf16>, vector<1152x128xbf16>, vector<256x128xf32> -> vector<256x128xf32>
    %82 = vector.broadcast %36 : vector<1x128xf32> to vector<256x128xf32>
    %83 = arith.addf %81, %82 : vector<256x128xf32>
    %c0_34 = arith.constant 0 : index
    %c0_35 = arith.constant 0 : index
    %84 = vector.load %arg2[%c0_34, %c0_35] : memref<256x1xf32, #tpu.memory_space<vmem>>, vector<256x1xf32>
    %c0_36 = arith.constant 0 : index
    %c0_37 = arith.constant 0 : index
    %85 = vector.load %arg8[%c0_36, %c0_37] : memref<1x128xf32, #tpu.memory_space<vmem>>, vector<1x128xf32>
    %c0_38 = arith.constant 0 : index
    %c0_39 = arith.constant 0 : index
    %86 = vector.load %arg9[%c0_38, %c0_39] : memref<1x128xf32, #tpu.memory_space<vmem>>, vector<1x128xf32>
    %c0_40 = arith.constant 0 : index
    %c0_41 = arith.constant 0 : index
    %87 = vector.load %arg10[%c0_40, %c0_41] : memref<128x32xf32, #tpu.memory_space<vmem>>, vector<128x32xf32>
    %cst_42 = arith.constant 0.000000e+00 : f32
    %88 = vector.broadcast %cst_42 : f32 to vector<256x1xf32>
    %89 = arith.cmpf ogt, %84, %88 : vector<256x1xf32>
    %cst_43 = arith.constant 0.000000e+00 : f32
    %90 = vector.shape_cast %89 : vector<256x1xi1> to vector<256x1xi1>
    %91 = vector.broadcast %90 : vector<256x1xi1> to vector<256x128xi1>
    %92 = vector.broadcast %cst_43 : f32 to vector<256x128xf32>
    %93 = arith.select %91, %83, %92 : vector<256x128xi1>, vector<256x128xf32>
    %cst_44 = arith.constant dense<0.000000e+00> : vector<128xf32>
    %94 = vector.multi_reduction <add>, %93, %cst_44 [0] : vector<256x128xf32> to vector<128xf32>
    %95 = vector.shape_cast %94 : vector<128xf32> to vector<1x128xf32>
    %96 = arith.mulf %93, %93 : vector<256x128xf32>
    %cst_45 = arith.constant dense<0.000000e+00> : vector<128xf32>
    %97 = vector.multi_reduction <add>, %96, %cst_45 [0] : vector<256x128xf32> to vector<128xf32>
    %98 = vector.shape_cast %97 : vector<128xf32> to vector<1x128xf32>
    %cst_46 = arith.constant dense<0.000000e+00> : vector<1x32xf32>
    %99 = tpu.matmul %95, %87, %cst_46 {dimension_numbers = #tpu.dot_dimension_numbers<[1], [0], [0], [1], [0, 0, 1, 1], [], []>} : vector<1x128xf32>, vector<128x32xf32>, vector<1x32xf32> -> vector<1x32xf32>
    %cst_47 = arith.constant dense<0.000000e+00> : vector<1x32xf32>
    %100 = tpu.matmul %98, %87, %cst_47 {dimension_numbers = #tpu.dot_dimension_numbers<[1], [0], [0], [1], [0, 0, 1, 1], [], []>} : vector<1x128xf32>, vector<128x32xf32>, vector<1x32xf32> -> vector<1x32xf32>
    %cst_48 = arith.constant 3.920000e+02 : f32
    %101 = vector.broadcast %cst_48 : f32 to vector<1x32xf32>
    %102 = arith.divf %99, %101 : vector<1x32xf32>
    %cst_49 = arith.constant 3.920000e+02 : f32
    %103 = vector.broadcast %cst_49 : f32 to vector<1x32xf32>
    %104 = arith.divf %100, %103 : vector<1x32xf32>
    %105 = arith.mulf %102, %102 : vector<1x32xf32>
    %106 = arith.subf %104, %105 : vector<1x32xf32>
    %cst_50 = arith.constant 9.99999974E-6 : f32
    %107 = vector.broadcast %cst_50 : f32 to vector<1x32xf32>
    %108 = arith.addf %106, %107 : vector<1x32xf32>
    %109 = math.rsqrt %108 : vector<1x32xf32>
    %cst_51 = arith.constant dense<0.000000e+00> : vector<1x128xf32>
    %110 = tpu.matmul %102, %87, %cst_51 {dimension_numbers = #tpu.dot_dimension_numbers<[1], [1], [0], [0], [0, 0, 1, 0], [], []>} : vector<1x32xf32>, vector<128x32xf32>, vector<1x128xf32> -> vector<1x128xf32>
    %cst_52 = arith.constant dense<0.000000e+00> : vector<1x128xf32>
    %111 = tpu.matmul %109, %87, %cst_52 {dimension_numbers = #tpu.dot_dimension_numbers<[1], [1], [0], [0], [0, 0, 1, 0], [], []>} : vector<1x32xf32>, vector<128x32xf32>, vector<1x128xf32> -> vector<1x128xf32>
    %112 = vector.broadcast %110 : vector<1x128xf32> to vector<256x128xf32>
    %113 = arith.subf %83, %112 : vector<256x128xf32>
    %114 = arith.mulf %111, %85 : vector<1x128xf32>
    %115 = vector.broadcast %114 : vector<1x128xf32> to vector<256x128xf32>
    %116 = arith.mulf %113, %115 : vector<256x128xf32>
    %117 = vector.broadcast %86 : vector<1x128xf32> to vector<256x128xf32>
    %118 = arith.addf %116, %117 : vector<256x128xf32>
    %119 = arith.negf %118 : vector<256x128xf32>
    %120 = math.exp %119 : vector<256x128xf32>
    %cst_53 = arith.constant 1.000000e+00 : f32
    %121 = vector.broadcast %cst_53 : f32 to vector<256x128xf32>
    %122 = arith.addf %121, %120 : vector<256x128xf32>
    %123 = arith.divf %121, %122 : vector<256x128xf32>
    %124 = arith.mulf %118, %123 : vector<256x128xf32>
    %c0_54 = arith.constant 0 : index
    %c0_55 = arith.constant 0 : index
    %125 = vector.load %arg12[%c0_54, %c0_55] : memref<1x128xf32, #tpu.memory_space<vmem>>, vector<1x128xf32>
    %126 = arith.truncf %124 : vector<256x128xf32> to vector<256x128xbf16>
    %c0_56 = arith.constant 0 : index
    %c0_57 = arith.constant 0 : index
    %127 = vector.load %arg16[%c0_56, %c0_57] : memref<256x1152xbf16, #tpu.memory_space<vmem>>, vector<256x128xbf16>
    tpu.vector_store %arg16[%c0_56, %c0_57], %126 {strides = array<i32>} : memref<256x1152xbf16, #tpu.memory_space<vmem>>, vector<256x128xbf16>,
    %128 = vector.extract_strided_slice %124 {offsets = [1, 0], sizes = [255, 128], strides = [1, 1]} : vector<256x128xf32> to vector<255x128xf32>
    %129 = vector.extract_strided_slice %124 {offsets = [0, 0], sizes = [1, 128], strides = [1, 1]} : vector<256x128xf32> to vector<1x128xf32>
    %130 = tpu.concatenate %128, %129 in 0 : vector<255x128xf32>, vector<1x128xf32> -> vector<256x128xf32>
    %131 = arith.truncf %130 : vector<256x128xf32> to vector<256x128xbf16>
    %c0_58 = arith.constant 0 : index
    %c128_59 = arith.constant 128 : index
    %132 = vector.load %arg16[%c0_58, %c128_59] : memref<256x1152xbf16, #tpu.memory_space<vmem>>, vector<256x128xbf16>
    tpu.vector_store %arg16[%c0_58, %c128_59], %131 {strides = array<i32>} : memref<256x1152xbf16, #tpu.memory_space<vmem>>, vector<256x128xbf16>,
    %133 = vector.extract_strided_slice %124 {offsets = [2, 0], sizes = [254, 128], strides = [1, 1]} : vector<256x128xf32> to vector<254x128xf32>
    %134 = vector.extract_strided_slice %124 {offsets = [0, 0], sizes = [2, 128], strides = [1, 1]} : vector<256x128xf32> to vector<2x128xf32>
    %135 = tpu.concatenate %133, %134 in 0 : vector<254x128xf32>, vector<2x128xf32> -> vector<256x128xf32>
    %136 = arith.truncf %135 : vector<256x128xf32> to vector<256x128xbf16>
    %c0_60 = arith.constant 0 : index
    %c256_61 = arith.constant 256 : index
    %137 = vector.load %arg16[%c0_60, %c256_61] : memref<256x1152xbf16, #tpu.memory_space<vmem>>, vector<256x128xbf16>
    tpu.vector_store %arg16[%c0_60, %c256_61], %136 {strides = array<i32>} : memref<256x1152xbf16, #tpu.memory_space<vmem>>, vector<256x128xbf16>,
    %138 = vector.extract_strided_slice %124 {offsets = [16, 0], sizes = [240, 128], strides = [1, 1]} : vector<256x128xf32> to vector<240x128xf32>
    %139 = vector.extract_strided_slice %124 {offsets = [0, 0], sizes = [16, 128], strides = [1, 1]} : vector<256x128xf32> to vector<16x128xf32>
    %140 = tpu.concatenate %138, %139 in 0 : vector<240x128xf32>, vector<16x128xf32> -> vector<256x128xf32>
    %141 = arith.truncf %140 : vector<256x128xf32> to vector<256x128xbf16>
    %c0_62 = arith.constant 0 : index
    %c384_63 = arith.constant 384 : index
    %142 = vector.load %arg16[%c0_62, %c384_63] : memref<256x1152xbf16, #tpu.memory_space<vmem>>, vector<256x128xbf16>
    tpu.vector_store %arg16[%c0_62, %c384_63], %141 {strides = array<i32>} : memref<256x1152xbf16, #tpu.memory_space<vmem>>, vector<256x128xbf16>,
    %143 = vector.extract_strided_slice %124 {offsets = [17, 0], sizes = [239, 128], strides = [1, 1]} : vector<256x128xf32> to vector<239x128xf32>
    %144 = vector.extract_strided_slice %124 {offsets = [0, 0], sizes = [17, 128], strides = [1, 1]} : vector<256x128xf32> to vector<17x128xf32>
    %145 = tpu.concatenate %143, %144 in 0 : vector<239x128xf32>, vector<17x128xf32> -> vector<256x128xf32>
    %146 = arith.truncf %145 : vector<256x128xf32> to vector<256x128xbf16>
    %c0_64 = arith.constant 0 : index
    %c512_65 = arith.constant 512 : index
    %147 = vector.load %arg16[%c0_64, %c512_65] : memref<256x1152xbf16, #tpu.memory_space<vmem>>, vector<256x128xbf16>
    tpu.vector_store %arg16[%c0_64, %c512_65], %146 {strides = array<i32>} : memref<256x1152xbf16, #tpu.memory_space<vmem>>, vector<256x128xbf16>,
    %148 = vector.extract_strided_slice %124 {offsets = [18, 0], sizes = [238, 128], strides = [1, 1]} : vector<256x128xf32> to vector<238x128xf32>
    %149 = vector.extract_strided_slice %124 {offsets = [0, 0], sizes = [18, 128], strides = [1, 1]} : vector<256x128xf32> to vector<18x128xf32>
    %150 = tpu.concatenate %148, %149 in 0 : vector<238x128xf32>, vector<18x128xf32> -> vector<256x128xf32>
    %151 = arith.truncf %150 : vector<256x128xf32> to vector<256x128xbf16>
    %c0_66 = arith.constant 0 : index
    %c640_67 = arith.constant 640 : index
    %152 = vector.load %arg16[%c0_66, %c640_67] : memref<256x1152xbf16, #tpu.memory_space<vmem>>, vector<256x128xbf16>
    tpu.vector_store %arg16[%c0_66, %c640_67], %151 {strides = array<i32>} : memref<256x1152xbf16, #tpu.memory_space<vmem>>, vector<256x128xbf16>,
    %153 = vector.extract_strided_slice %124 {offsets = [32, 0], sizes = [224, 128], strides = [1, 1]} : vector<256x128xf32> to vector<224x128xf32>
    %154 = vector.extract_strided_slice %124 {offsets = [0, 0], sizes = [32, 128], strides = [1, 1]} : vector<256x128xf32> to vector<32x128xf32>
    %155 = tpu.concatenate %153, %154 in 0 : vector<224x128xf32>, vector<32x128xf32> -> vector<256x128xf32>
    %156 = arith.truncf %155 : vector<256x128xf32> to vector<256x128xbf16>
    %c0_68 = arith.constant 0 : index
    %c768_69 = arith.constant 768 : index
    %157 = vector.load %arg16[%c0_68, %c768_69] : memref<256x1152xbf16, #tpu.memory_space<vmem>>, vector<256x128xbf16>
    tpu.vector_store %arg16[%c0_68, %c768_69], %156 {strides = array<i32>} : memref<256x1152xbf16, #tpu.memory_space<vmem>>, vector<256x128xbf16>,
    %158 = vector.extract_strided_slice %124 {offsets = [33, 0], sizes = [223, 128], strides = [1, 1]} : vector<256x128xf32> to vector<223x128xf32>
    %159 = vector.extract_strided_slice %124 {offsets = [0, 0], sizes = [33, 128], strides = [1, 1]} : vector<256x128xf32> to vector<33x128xf32>
    %160 = tpu.concatenate %158, %159 in 0 : vector<223x128xf32>, vector<33x128xf32> -> vector<256x128xf32>
    %161 = arith.truncf %160 : vector<256x128xf32> to vector<256x128xbf16>
    %c0_70 = arith.constant 0 : index
    %c896_71 = arith.constant 896 : index
    %162 = vector.load %arg16[%c0_70, %c896_71] : memref<256x1152xbf16, #tpu.memory_space<vmem>>, vector<256x128xbf16>
    tpu.vector_store %arg16[%c0_70, %c896_71], %161 {strides = array<i32>} : memref<256x1152xbf16, #tpu.memory_space<vmem>>, vector<256x128xbf16>,
    %163 = vector.extract_strided_slice %124 {offsets = [34, 0], sizes = [222, 128], strides = [1, 1]} : vector<256x128xf32> to vector<222x128xf32>
    %164 = vector.extract_strided_slice %124 {offsets = [0, 0], sizes = [34, 128], strides = [1, 1]} : vector<256x128xf32> to vector<34x128xf32>
    %165 = tpu.concatenate %163, %164 in 0 : vector<222x128xf32>, vector<34x128xf32> -> vector<256x128xf32>
    %166 = arith.truncf %165 : vector<256x128xf32> to vector<256x128xbf16>
    %c0_72 = arith.constant 0 : index
    %c1024_73 = arith.constant 1024 : index
    %167 = vector.load %arg16[%c0_72, %c1024_73] : memref<256x1152xbf16, #tpu.memory_space<vmem>>, vector<256x128xbf16>
    tpu.vector_store %arg16[%c0_72, %c1024_73], %166 {strides = array<i32>} : memref<256x1152xbf16, #tpu.memory_space<vmem>>, vector<256x128xbf16>,
    %c0_74 = arith.constant 0 : index
    %c0_75 = arith.constant 0 : index
    %168 = vector.load %arg16[%c0_74, %c0_75] : memref<256x1152xbf16, #tpu.memory_space<vmem>>, vector<256x1152xbf16>
    %c0_76 = arith.constant 0 : index
    %c0_77 = arith.constant 0 : index
    %169 = vector.load %arg11[%c0_76, %c0_77] : memref<1152x128xbf16, #tpu.memory_space<vmem>>, vector<1152x128xbf16>
    %cst_78 = arith.constant dense<0.000000e+00> : vector<256x128xf32>
    %170 = tpu.matmul %168, %169, %cst_78 {dimension_numbers = #tpu.dot_dimension_numbers<[1], [0], [0], [1], [0, 0, 1, 1], [], []>} : vector<256x1152xbf16>, vector<1152x128xbf16>, vector<256x128xf32> -> vector<256x128xf32>
    %171 = vector.broadcast %125 : vector<1x128xf32> to vector<256x128xf32>
    %172 = arith.addf %170, %171 : vector<256x128xf32>
    %173 = vector.extract_strided_slice %1 {offsets = [34, 0], sizes = [222, 128], strides = [1, 1]} : vector<256x128xf32> to vector<222x128xf32>
    %174 = vector.extract_strided_slice %1 {offsets = [0, 0], sizes = [34, 128], strides = [1, 1]} : vector<256x128xf32> to vector<34x128xf32>
    %175 = tpu.concatenate %173, %174 in 0 : vector<222x128xf32>, vector<34x128xf32> -> vector<256x128xf32>
    %176 = arith.truncf %175 : vector<256x128xf32> to vector<256x128xbf16>
    %c0_79 = arith.constant 0 : index
    %c0_80 = arith.constant 0 : index
    %177 = vector.load %arg13[%c0_79, %c0_80] : memref<128x128xbf16, #tpu.memory_space<vmem>>, vector<128x128xbf16>
    %cst_81 = arith.constant dense<0.000000e+00> : vector<256x128xf32>
    %178 = tpu.matmul %176, %177, %cst_81 {dimension_numbers = #tpu.dot_dimension_numbers<[1], [0], [0], [1], [0, 0, 1, 1], [], []>} : vector<256x128xbf16>, vector<128x128xbf16>, vector<256x128xf32> -> vector<256x128xf32>
    %c0_82 = arith.constant 0 : index
    %c0_83 = arith.constant 0 : index
    %179 = vector.load %arg14[%c0_82, %c0_83] : memref<1x128xf32, #tpu.memory_space<vmem>>, vector<1x128xf32>
    %180 = vector.broadcast %179 : vector<1x128xf32> to vector<256x128xf32>
    %181 = arith.addf %178, %180 : vector<256x128xf32>
    %182 = arith.addf %172, %181 : vector<256x128xf32>
    %c0_84 = arith.constant 0 : index
    %c0_85 = arith.constant 0 : index
    %c0_86 = arith.constant 0 : index
    %183 = vector.load %arg15[%c0_84, %c0_85, %c0_86] : memref<1x256x128xf32, #tpu.memory_space<vmem>>, vector<1x256x128xf32>
    %184 = vector.shape_cast %183 : vector<1x256x128xf32> to vector<256x128xf32>
    %185 = vector.shape_cast %182 : vector<256x128xf32> to vector<1x256x128xf32>
    tpu.vector_store %arg15[%c0_84, %c0_85, %c0_86], %185 {strides = array<i32>} : memref<1x256x128xf32, #tpu.memory_space<vmem>>, vector<1x256x128xf32>,
    return
  }
  func.func @transform_0(%arg0: i32) -> (i32, i32, i32) {
    %c0_i32 = arith.constant 0 : i32
    %c0_i32_0 = arith.constant 0 : i32
    %c0_i32_1 = arith.constant 0 : i32
    return %arg0, %c0_i32, %c0_i32_0 : i32, i32, i32
  }
  func.func @transform_1(%arg0: i32) -> (i32, i32) {
    %c0_i32 = arith.constant 0 : i32
    %c0_i32_0 = arith.constant 0 : i32
    %c0_i32_1 = arith.constant 0 : i32
    return %c0_i32, %c0_i32_0 : i32, i32
  }
  func.func @transform_2(%arg0: i32) -> (i32, i32) {
    %c0_i32 = arith.constant 0 : i32
    %c0_i32_0 = arith.constant 0 : i32
    %c0_i32_1 = arith.constant 0 : i32
    return %c0_i32, %c0_i32_0 : i32, i32
  }
  func.func @transform_3(%arg0: i32) -> (i32, i32) {
    %c0_i32 = arith.constant 0 : i32
    %c0_i32_0 = arith.constant 0 : i32
    %c0_i32_1 = arith.constant 0 : i32
    return %c0_i32, %c0_i32_0 : i32, i32
  }
  func.func @transform_4(%arg0: i32) -> (i32, i32) {
    %c0_i32 = arith.constant 0 : i32
    %c0_i32_0 = arith.constant 0 : i32
    %c0_i32_1 = arith.constant 0 : i32
    return %c0_i32, %c0_i32_0 : i32, i32
  }
  func.func @transform_5(%arg0: i32) -> (i32, i32) {
    %c0_i32 = arith.constant 0 : i32
    %c0_i32_0 = arith.constant 0 : i32
    %c0_i32_1 = arith.constant 0 : i32
    return %c0_i32, %c0_i32_0 : i32, i32
  }
  func.func @transform_6(%arg0: i32) -> (i32, i32) {
    %c0_i32 = arith.constant 0 : i32
    %c0_i32_0 = arith.constant 0 : i32
    %c0_i32_1 = arith.constant 0 : i32
    return %c0_i32, %c0_i32_0 : i32, i32
  }
  func.func @transform_7(%arg0: i32) -> (i32, i32) {
    %c0_i32 = arith.constant 0 : i32
    %c0_i32_0 = arith.constant 0 : i32
    %c0_i32_1 = arith.constant 0 : i32
    return %c0_i32, %c0_i32_0 : i32, i32
  }
  func.func @transform_8(%arg0: i32) -> (i32, i32) {
    %c0_i32 = arith.constant 0 : i32
    %c0_i32_0 = arith.constant 0 : i32
    %c0_i32_1 = arith.constant 0 : i32
    return %c0_i32, %c0_i32_0 : i32, i32
  }
  func.func @transform_9(%arg0: i32) -> (i32, i32) {
    %c0_i32 = arith.constant 0 : i32
    %c0_i32_0 = arith.constant 0 : i32
    %c0_i32_1 = arith.constant 0 : i32
    return %c0_i32, %c0_i32_0 : i32, i32
  }
  func.func @transform_10(%arg0: i32) -> (i32, i32) {
    %c0_i32 = arith.constant 0 : i32
    %c0_i32_0 = arith.constant 0 : i32
    %c0_i32_1 = arith.constant 0 : i32
    return %c0_i32, %c0_i32_0 : i32, i32
  }
  func.func @transform_11(%arg0: i32) -> (i32, i32) {
    %c0_i32 = arith.constant 0 : i32
    %c0_i32_0 = arith.constant 0 : i32
    %c0_i32_1 = arith.constant 0 : i32
    return %c0_i32, %c0_i32_0 : i32, i32
  }
  func.func @transform_12(%arg0: i32) -> (i32, i32) {
    %c0_i32 = arith.constant 0 : i32
    %c0_i32_0 = arith.constant 0 : i32
    %c0_i32_1 = arith.constant 0 : i32
    return %c0_i32, %c0_i32_0 : i32, i32
  }
  func.func @transform_13(%arg0: i32) -> (i32, i32) {
    %c0_i32 = arith.constant 0 : i32
    %c0_i32_0 = arith.constant 0 : i32
    %c0_i32_1 = arith.constant 0 : i32
    return %c0_i32, %c0_i32_0 : i32, i32
  }
  func.func @transform_14(%arg0: i32) -> (i32, i32, i32) {
    %c0_i32 = arith.constant 0 : i32
    %c0_i32_0 = arith.constant 0 : i32
    %c0_i32_1 = arith.constant 0 : i32
    return %arg0, %c0_i32, %c0_i32_0 : i32, i32, i32
  }
}

</mosaic_0001>

<llo_original>
// kernel: tpu_custom_call.1
$region0: #{tpu_custom_call.1}
  #allocation0 [shape = 'u32[]', space=smem, size = 0x4, offset = 0x4, fixed_abs, tag = 'smem constant byte address 0x4 - core index']
  #allocation1 [shape = 'u32[144,128]{1,0:T(1,128)}', space=vmem, size = 0x12000, scoped, tag = 'internal scratch']
  #allocation2 [shape = 'bf16[256,1152]{1,0:T(16,128)(2,1)}', space=vmem, size = 0x90000, scoped, tag = 'scratch operand']
  %s0 = inlined_call_operand.hbm [shape: f32[2,256,128], index: 0, kind: input, shape index: {}]
  %s1 = inlined_call_operand.vmem [shape: f32[256,1], index: 1, kind: input, shape index: {}]
  %s2 = inlined_call_operand.hbm [shape: f32[1,128], index: 2, kind: input, shape index: {}]
  %s3 = inlined_call_operand.hbm [shape: f32[1,128], index: 3, kind: input, shape index: {}]
  %s4 = inlined_call_operand.vmem [shape: f32[128,32], index: 4, kind: input, shape index: {}]
  %s5 = inlined_call_operand.vmem [shape: bf16[1152,128], index: 5, kind: input, shape index: {}]
  %s6 = inlined_call_operand.hbm [shape: f32[1,128], index: 6, kind: input, shape index: {}]
  %s7 = inlined_call_operand.hbm [shape: f32[1,128], index: 7, kind: input, shape index: {}]
  %s8 = inlined_call_operand.hbm [shape: f32[1,128], index: 8, kind: input, shape index: {}]
  %s9 = inlined_call_operand.vmem [shape: f32[128,32], index: 9, kind: input, shape index: {}]
  %s10 = inlined_call_operand.hbm [shape: bf16[1152,128], index: 10, kind: input, shape index: {}]
  %s11 = inlined_call_operand.vmem [shape: f32[1,128], index: 11, kind: input, shape index: {}]
  %s12 = inlined_call_operand.hbm [shape: bf16[128,128], index: 12, kind: input, shape index: {}]
  %s13 = inlined_call_operand.vmem [shape: f32[1,128], index: 13, kind: input, shape index: {}]
  %s14 = inlined_call_operand.hbm [shape: f32[2,256,128], index: 14, kind: output, shape index: {}]
  %s15 = sld [smem:[#allocation0]]
  $region121: #{tpu_custom_call.1} parent=0
    _
  %s17 = ssub.s32 1, %s15
  %s18 = scalar_select 0, %s17, %s15
  $region1: #{tpu_custom_call.1} parent=0
    #allocation3 [shape = 'u8[262144]{0}', space=vmem, size = 0x40000, scoped, tag = 'input window, operand 0']
    #allocation4 [shape = 's32[2]{0}', space=sflag, size = 0x8, scoped, tag = 'scoped memory for tpu_custom_call.1']
    #allocation5 [shape = 's32[2]{0}', space=sflag, size = 0x8, scoped, tag = 'scoped memory for tpu_custom_call.1']
    #allocation6 [shape = 'u8[512]{0}', space=vmem, size = 0x400, scoped, tag = 'input window, operand 2, single buffered']
    #allocation7 [shape = 's32[1]{0}', space=sflag, size = 0x4, scoped, tag = 'scoped memory for tpu_custom_call.1']
    #allocation8 [shape = 'u8[512]{0}', space=vmem, size = 0x400, scoped, tag = 'input window, operand 3, single buffered']
    #allocation9 [shape = 'u8[512]{0}', space=vmem, size = 0x400, scoped, tag = 'input window, operand 6, single buffered']
    #allocation10 [shape = 's32[1]{0}', space=sflag, size = 0x4, scoped, tag = 'scoped memory for tpu_custom_call.1']
    #allocation11 [shape = 'u8[512]{0}', space=vmem, size = 0x400, scoped, tag = 'input window, operand 7, single buffered']
    #allocation12 [shape = 'u8[512]{0}', space=vmem, size = 0x400, scoped, tag = 'input window, operand 8, single buffered']
    #allocation13 [shape = 's32[1]{0}', space=sflag, size = 0x4, scoped, tag = 'scoped memory for tpu_custom_call.1']
    #allocation14 [shape = 'u8[294912]{0}', space=vmem, size = 0x48000, scoped, tag = 'input window, operand 10, single buffered']
    #allocation15 [shape = 'u8[32768]{0}', space=vmem, size = 0x8000, scoped, tag = 'input window, operand 12, single buffered']
    #allocation16 [shape = 's32[1]{0}', space=sflag, size = 0x4, scoped, tag = 'scoped memory for tpu_custom_call.1']
    #allocation17 [shape = 'u8[262144]{0}', space=vmem, size = 0x40000, scoped, tag = 'output window, operand 0']
    %19 = vsyncpa [#allocation4], 0
    %s20 = scalar_lea.sflag [#allocation4], 1
    %21 = vsyncpa %s20, 0
    %22 = vsyncpa [#allocation7], 0
    %23 = vsyncpa [#allocation10], 0
    %24 = vsyncpa [#allocation13], 0
    %25 = vsyncpa [#allocation16], 0
    %26 = vsyncpa [#allocation5], 0
    %s27 = scalar_lea.sflag [#allocation5], 1
    %28 = vsyncpa %s27, 0
    loop: start=0, step=1, limit=4
    $region2: #{tpu_custom_call.1} parent=1 // loop_pre_header
      _
    $region3: #{tpu_custom_call.1} parent=1 // loop_header
      %s30 = sphi 0, %s34
      %p31 = scmp.ge.s32.totalorder %s30, 4
      %s40 = sphi 0, %s42
      %s43 = sphi 0, %s40
      %s44 = sphi 0, %s43
      %s60 = sphi 0, %s44
      %s64 = sphi 0, %s64
      %s66 = sphi 0, %s64
      %s67 = sphi 0, %s66
      %s81 = sphi 0, %s67
      %s85 = sphi 0, %s85
      %s87 = sphi 0, %s85
      %s88 = sphi 0, %s87
      %s102 = sphi 0, %s88
      %s106 = sphi 0, %s106
      %s108 = sphi 0, %s106
      %s109 = sphi 0, %s108
      %s123 = sphi 0, %s109
      %s127 = sphi 0, %s127
      %s129 = sphi 0, %s127
      %s130 = sphi 0, %s129
      %s144 = sphi 0, %s130
      %s148 = sphi 0, %s148
      %s150 = sphi 0, %s148
      %s151 = sphi 0, %s150
      %s165 = sphi 0, %s151
      %s169 = sphi 0, %s169
      %s171 = sphi 0, %s169
      %s172 = sphi 0, %s171
      %s186 = sphi 0, %s172
      %s190 = sphi 0, %s190
      %s192 = sphi 0, %s190
      %s193 = sphi 0, %s192
      %s207 = sphi 0, %s193
      %s211 = sphi 0, %s211
      %s213 = sphi 0, %s211
      %s214 = sphi 0, %s213
      %s228 = sphi 0, %s214
      %s232 = sphi 0, %s232
      %s234 = sphi 0, %s232
      %s235 = sphi 0, %s234
      %s249 = sphi 0, %s235
      %s253 = sphi 0, %s253
      %s255 = sphi 0, %s253
      %s256 = sphi 0, %s255
      %s270 = sphi 0, %s256
      %s274 = sphi 0, %s274
      %s276 = sphi 0, %s274
      %s277 = sphi 0, %s276
      %s291 = sphi 0, %s277
      %s295 = sphi 0, %s295
      %s297 = sphi 0, %s295
      %s298 = sphi 0, %s297
      %s312 = sphi 0, %s298
      %s316 = sphi 0, %s316
      %s318 = sphi 0, %s316
      %s319 = sphi 0, %s318
      %s333 = sphi 0, %s319
      %s339 = sphi 0, %s341
      %s342 = sphi 0, %s339
      %s343 = sphi 0, %s342
      %s359 = sphi 0, %s343
    $region4: #{tpu_custom_call.1} parent=1 // loop_header_branch
      %33 = sbr.rel (%p31) target = $region8
    $region5: #{tpu_custom_call.1} parent=1 // loop_body
      %s35 = ssub.s32 %s30, 1
      %s36 = ssub.s32 %s30, 2
      %s37 = sadd.s32 %s30, 1
      %s38 = ssub.s32 %s30, %s37
      %p39 = scmp.eq.s32.totalorder %s38, 0
      %s41 = sadd.s32 %s40, 1
      %s42 = scalar_select %p39, %s40, %s41
      %p45 = pneg %p39
      %p46 = scmp.eq.s32.totalorder %s30, 1
      %p47 = por %p45, %p46
      %p48 = scmp.ne.s32.totalorder %s40, %s43
      %p49 = scmp.eq.s32.totalorder %s30, 0
      %p50 = por %p48, %p49
      %p51 = scmp.ne.s32.totalorder %s40, %s43
      %p52 = scmp.eq.s32.totalorder %s35, 1
      %p53 = por %p51, %p52
      %p54 = scmp.ne.s32.totalorder %s43, %s44
      %p55 = scmp.eq.s32.totalorder %s35, 0
      %p56 = por %p54, %p55
      %p57 = scmp.ne.s32.totalorder %s43, %s44
      %p58 = scmp.eq.s32.totalorder %s36, 1
      %p59 = por %p57, %p58
      %p61 = scmp.ne.s32.totalorder %s44, %s60
      %p62 = scmp.eq.s32.totalorder %s36, 0
      %p63 = por %p61, %p62
      %s65 = sadd.s32 %s64, 1
      %p68 = scmp.eq.s32.totalorder %s30, 1
      %p69 = scmp.ne.s32.totalorder %s64, %s66
      %p70 = scmp.eq.s32.totalorder %s30, 0
      %p71 = por %p69, %p70
      %p72 = scmp.ne.s32.totalorder %s64, %s66
      %p73 = scmp.eq.s32.totalorder %s35, 1
      %p74 = por %p72, %p73
      %p75 = scmp.ne.s32.totalorder %s66, %s67
      %p76 = scmp.eq.s32.totalorder %s35, 0
      %p77 = por %p75, %p76
      %p78 = scmp.ne.s32.totalorder %s66, %s67
      %p79 = scmp.eq.s32.totalorder %s36, 1
      %p80 = por %p78, %p79
      %p82 = scmp.ne.s32.totalorder %s67, %s81
      %p83 = scmp.eq.s32.totalorder %s36, 0
      %p84 = por %p82, %p83
      %s86 = sadd.s32 %s85, 1
      %p89 = scmp.eq.s32.totalorder %s30, 1
      %p90 = scmp.ne.s32.totalorder %s85, %s87
      %p91 = scmp.eq.s32.totalorder %s30, 0
      %p92 = por %p90, %p91
      %p93 = scmp.ne.s32.totalorder %s85, %s87
      %p94 = scmp.eq.s32.totalorder %s35, 1
      %p95 = por %p93, %p94
      %p96 = scmp.ne.s32.totalorder %s87, %s88
      %p97 = scmp.eq.s32.totalorder %s35, 0
      %p98 = por %p96, %p97
      %p99 = scmp.ne.s32.totalorder %s87, %s88
      %p100 = scmp.eq.s32.totalorder %s36, 1
      %p101 = por %p99, %p100
      %p103 = scmp.ne.s32.totalorder %s88, %s102
      %p104 = scmp.eq.s32.totalorder %s36, 0
      %p105 = por %p103, %p104
      %s107 = sadd.s32 %s106, 1
      %p110 = scmp.eq.s32.totalorder %s30, 1
      %p111 = scmp.ne.s32.totalorder %s106, %s108
      %p112 = scmp.eq.s32.totalorder %s30, 0
      %p113 = por %p111, %p112
      %p114 = scmp.ne.s32.totalorder %s106, %s108
      %p115 = scmp.eq.s32.totalorder %s35, 1
      %p116 = por %p114, %p115
      %p117 = scmp.ne.s32.totalorder %s108, %s109
      %p118 = scmp.eq.s32.totalorder %s35, 0
      %p119 = por %p117, %p118
      %p120 = scmp.ne.s32.totalorder %s108, %s109
      %p121 = scmp.eq.s32.totalorder %s36, 1
      %p122 = por %p120, %p121
      %p124 = scmp.ne.s32.totalorder %s109, %s123
      %p125 = scmp.eq.s32.totalorder %s36, 0
      %p126 = por %p124, %p125
      %s128 = sadd.s32 %s127, 1
      %p131 = scmp.eq.s32.totalorder %s30, 1
      %p132 = scmp.ne.s32.totalorder %s127, %s129
      %p133 = scmp.eq.s32.totalorder %s30, 0
      %p134 = por %p132, %p133
      %p135 = scmp.ne.s32.totalorder %s127, %s129
      %p136 = scmp.eq.s32.totalorder %s35, 1
      %p137 = por %p135, %p136
      %p138 = scmp.ne.s32.totalorder %s129, %s130
      %p139 = scmp.eq.s32.totalorder %s35, 0
      %p140 = por %p138, %p139
      %p141 = scmp.ne.s32.totalorder %s129, %s130
      %p142 = scmp.eq.s32.totalorder %s36, 1
      %p143 = por %p141, %p142
      %p145 = scmp.ne.s32.totalorder %s130, %s144
      %p146 = scmp.eq.s32.totalorder %s36, 0
      %p147 = por %p145, %p146
      %s149 = sadd.s32 %s148, 1
      %p152 = scmp.eq.s32.totalorder %s30, 1
      %p153 = scmp.ne.s32.totalorder %s148, %s150
      %p154 = scmp.eq.s32.totalorder %s30, 0
      %p155 = por %p153, %p154
      %p156 = scmp.ne.s32.totalorder %s148, %s150
      %p157 = scmp.eq.s32.totalorder %s35, 1
      %p158 = por %p156, %p157
      %p159 = scmp.ne.s32.totalorder %s150, %s151
      %p160 = scmp.eq.s32.totalorder %s35, 0
      %p161 = por %p159, %p160
      %p162 = scmp.ne.s32.totalorder %s150, %s151
      %p163 = scmp.eq.s32.totalorder %s36, 1
      %p164 = por %p162, %p163
      %p166 = scmp.ne.s32.totalorder %s151, %s165
      %p167 = scmp.eq.s32.totalorder %s36, 0
      %p168 = por %p166, %p167
      %s170 = sadd.s32 %s169, 1
      %p173 = scmp.eq.s32.totalorder %s30, 1
      %p174 = scmp.ne.s32.totalorder %s169, %s171
      %p175 = scmp.eq.s32.totalorder %s30, 0
      %p176 = por %p174, %p175
      %p177 = scmp.ne.s32.totalorder %s169, %s171
      %p178 = scmp.eq.s32.totalorder %s35, 1
      %p179 = por %p177, %p178
      %p180 = scmp.ne.s32.totalorder %s171, %s172
      %p181 = scmp.eq.s32.totalorder %s35, 0
      %p182 = por %p180, %p181
      %p183 = scmp.ne.s32.totalorder %s171, %s172
      %p184 = scmp.eq.s32.totalorder %s36, 1
      %p185 = por %p183, %p184
      %p187 = scmp.ne.s32.totalorder %s172, %s186
      %p188 = scmp.eq.s32.totalorder %s36, 0
      %p189 = por %p187, %p188
      %s191 = sadd.s32 %s190, 1
      %p194 = scmp.eq.s32.totalorder %s30, 1
      %p195 = scmp.ne.s32.totalorder %s190, %s192
      %p196 = scmp.eq.s32.totalorder %s30, 0
      %p197 = por %p195, %p196
      %p198 = scmp.ne.s32.totalorder %s190, %s192
      %p199 = scmp.eq.s32.totalorder %s35, 1
      %p200 = por %p198, %p199
      %p201 = scmp.ne.s32.totalorder %s192, %s193
      %p202 = scmp.eq.s32.totalorder %s35, 0
      %p203 = por %p201, %p202
      %p204 = scmp.ne.s32.totalorder %s192, %s193
      %p205 = scmp.eq.s32.totalorder %s36, 1
      %p206 = por %p204, %p205
      %p208 = scmp.ne.s32.totalorder %s193, %s207
      %p209 = scmp.eq.s32.totalorder %s36, 0
      %p210 = por %p208, %p209
      %s212 = sadd.s32 %s211, 1
      %p215 = scmp.eq.s32.totalorder %s30, 1
      %p216 = scmp.ne.s32.totalorder %s211, %s213
      %p217 = scmp.eq.s32.totalorder %s30, 0
      %p218 = por %p216, %p217
      %p219 = scmp.ne.s32.totalorder %s211, %s213
      %p220 = scmp.eq.s32.totalorder %s35, 1
      %p221 = por %p219, %p220
      %p222 = scmp.ne.s32.totalorder %s213, %s214
      %p223 = scmp.eq.s32.totalorder %s35, 0
      %p224 = por %p222, %p223
      %p225 = scmp.ne.s32.totalorder %s213, %s214
      %p226 = scmp.eq.s32.totalorder %s36, 1
      %p227 = por %p225, %p226
      %p229 = scmp.ne.s32.totalorder %s214, %s228
      %p230 = scmp.eq.s32.totalorder %s36, 0
      %p231 = por %p229, %p230
      %s233 = sadd.s32 %s232, 1
      %p236 = scmp.eq.s32.totalorder %s30, 1
      %p237 = scmp.ne.s32.totalorder %s232, %s234
      %p238 = scmp.eq.s32.totalorder %s30, 0
      %p239 = por %p237, %p238
      %p240 = scmp.ne.s32.totalorder %s232, %s234
      %p241 = scmp.eq.s32.totalorder %s35, 1
      %p242 = por %p240, %p241
      %p243 = scmp.ne.s32.totalorder %s234, %s235
      %p244 = scmp.eq.s32.totalorder %s35, 0
      %p245 = por %p243, %p244
      %p246 = scmp.ne.s32.totalorder %s234, %s235
      %p247 = scmp.eq.s32.totalorder %s36, 1
      %p248 = por %p246, %p247
      %p250 = scmp.ne.s32.totalorder %s235, %s249
      %p251 = scmp.eq.s32.totalorder %s36, 0
      %p252 = por %p250, %p251
      %s254 = sadd.s32 %s253, 1
      %p257 = scmp.eq.s32.totalorder %s30, 1
      %p258 = scmp.ne.s32.totalorder %s253, %s255
      %p259 = scmp.eq.s32.totalorder %s30, 0
      %p260 = por %p258, %p259
      %p261 = scmp.ne.s32.totalorder %s253, %s255
      %p262 = scmp.eq.s32.totalorder %s35, 1
      %p263 = por %p261, %p262
      %p264 = scmp.ne.s32.totalorder %s255, %s256
      %p265 = scmp.eq.s32.totalorder %s35, 0
      %p266 = por %p264, %p265
      %p267 = scmp.ne.s32.totalorder %s255, %s256
      %p268 = scmp.eq.s32.totalorder %s36, 1
      %p269 = por %p267, %p268
      %p271 = scmp.ne.s32.totalorder %s256, %s270
      %p272 = scmp.eq.s32.totalorder %s36, 0
      %p273 = por %p271, %p272
      %s275 = sadd.s32 %s274, 1
      %p278 = scmp.eq.s32.totalorder %s30, 1
      %p279 = scmp.ne.s32.totalorder %s274, %s276
      %p280 = scmp.eq.s32.totalorder %s30, 0
      %p281 = por %p279, %p280
      %p282 = scmp.ne.s32.totalorder %s274, %s276
      %p283 = scmp.eq.s32.totalorder %s35, 1
      %p284 = por %p282, %p283
      %p285 = scmp.ne.s32.totalorder %s276, %s277
      %p286 = scmp.eq.s32.totalorder %s35, 0
      %p287 = por %p285, %p286
      %p288 = scmp.ne.s32.totalorder %s276, %s277
      %p289 = scmp.eq.s32.totalorder %s36, 1
      %p290 = por %p288, %p289
      %p292 = scmp.ne.s32.totalorder %s277, %s291
      %p293 = scmp.eq.s32.totalorder %s36, 0
      %p294 = por %p292, %p293
      %s296 = sadd.s32 %s295, 1
      %p299 = scmp.eq.s32.totalorder %s30, 1
      %p300 = scmp.ne.s32.totalorder %s295, %s297
      %p301 = scmp.eq.s32.totalorder %s30, 0
      %p302 = por %p300, %p301
      %p303 = scmp.ne.s32.totalorder %s295, %s297
      %p304 = scmp.eq.s32.totalorder %s35, 1
      %p305 = por %p303, %p304
      %p306 = scmp.ne.s32.totalorder %s297, %s298
      %p307 = scmp.eq.s32.totalorder %s35, 0
      %p308 = por %p306, %p307
      %p309 = scmp.ne.s32.totalorder %s297, %s298
      %p310 = scmp.eq.s32.totalorder %s36, 1
      %p311 = por %p309, %p310
      %p313 = scmp.ne.s32.totalorder %s298, %s312
      %p314 = scmp.eq.s32.totalorder %s36, 0
      %p315 = por %p313, %p314
      %s317 = sadd.s32 %s316, 1
      %p320 = scmp.eq.s32.totalorder %s30, 1
      %p321 = scmp.ne.s32.totalorder %s316, %s318
      %p322 = scmp.eq.s32.totalorder %s30, 0
      %p323 = por %p321, %p322
      %p324 = scmp.ne.s32.totalorder %s316, %s318
      %p325 = scmp.eq.s32.totalorder %s35, 1
      %p326 = por %p324, %p325
      %p327 = scmp.ne.s32.totalorder %s318, %s319
      %p328 = scmp.eq.s32.totalorder %s35, 0
      %p329 = por %p327, %p328
      %p330 = scmp.ne.s32.totalorder %s318, %s319
      %p331 = scmp.eq.s32.totalorder %s36, 1
      %p332 = por %p330, %p331
      %p334 = scmp.ne.s32.totalorder %s319, %s333
      %p335 = scmp.eq.s32.totalorder %s36, 0
      %p336 = por %p334, %p335
      %s337 = ssub.s32 %s30, %s37
      %p338 = scmp.eq.s32.totalorder %s337, 0
      %s340 = sadd.s32 %s339, 1
      %s341 = scalar_select %p338, %s339, %s340
      %p344 = pneg %p338
      %p345 = scmp.eq.s32.totalorder %s30, 1
      %p346 = por %p344, %p345
      %p347 = scmp.ne.s32.totalorder %s339, %s342
      %p348 = scmp.eq.s32.totalorder %s30, 0
      %p349 = por %p347, %p348
      %p350 = scmp.ne.s32.totalorder %s339, %s342
      %p351 = scmp.eq.s32.totalorder %s35, 1
      %p352 = por %p350, %p351
      %p353 = scmp.ne.s32.totalorder %s342, %s343
      %p354 = scmp.eq.s32.totalorder %s35, 0
      %p355 = por %p353, %p354
      %p356 = scmp.ne.s32.totalorder %s342, %s343
      %p357 = scmp.eq.s32.totalorder %s36, 1
      %p358 = por %p356, %p357
      %p360 = scmp.ne.s32.totalorder %s343, %s359
      %p361 = scmp.eq.s32.totalorder %s36, 0
      %p362 = por %p360, %p361
      %p363 = scmp.le.s32.totalorder 1, %s30
      %p364 = scmp.lt.s32.totalorder %s30, 3
      %p365 = pnand %p363, %p364
      %p366 = pneg %p365
      // Predicated region
      $region9: #{tpu_custom_call.1} parent=5 // pred_check
        _
      $region10: #{tpu_custom_call.1} parent=5 // pred_check_branch
        %368 = sbr.rel (%p365) target = $region12
      $region11: #{tpu_custom_call.1} parent=5 // pred_region
        %s369 = ssub.s32 %s30, 1
        // Predicated region
        $region13: #{tpu_custom_call.1} parent=11 // pred_check
          %p370 = pneg %p77
        $region14: #{tpu_custom_call.1} parent=11 // pred_check_branch
          %372 = sbr.rel (%p370) target = $region16
        $region15: #{tpu_custom_call.1} parent=11 // pred_region
          _
        $region16: #{tpu_custom_call.1} parent=11 // pred_fallthru
          _
        // Predicated region
        $region17: #{tpu_custom_call.1} parent=11 // pred_check
          %p373 = pneg %p98
        $region18: #{tpu_custom_call.1} parent=11 // pred_check_branch
          %375 = sbr.rel (%p373) target = $region20
        $region19: #{tpu_custom_call.1} parent=11 // pred_region
          %s377 = ssub.s32 16, 16
          %378 = vsyncadd [#allocation7], %s377
          %s380 = sshll.u32 [#allocation6], 4
          %s381 = int_to_ptr.vmem [resolvable:$true] %s380
          %383 = dma.hbm_to_vmem [thread:$0]  %s2, 16, %s381, [#allocation7]
        $region20: #{tpu_custom_call.1} parent=11 // pred_fallthru
          _
        // Predicated region
        $region21: #{tpu_custom_call.1} parent=11 // pred_check
          %p384 = pneg %p119
        $region22: #{tpu_custom_call.1} parent=11 // pred_check_branch
          %386 = sbr.rel (%p384) target = $region24
        $region23: #{tpu_custom_call.1} parent=11 // pred_region
          %s388 = ssub.s32 16, 16
          %389 = vsyncadd [#allocation7], %s388
          %s391 = sshll.u32 [#allocation8], 4
          %s392 = int_to_ptr.vmem [resolvable:$true] %s391
          %394 = dma.hbm_to_vmem [thread:$0]  %s3, 16, %s392, [#allocation7]
        $region24: #{tpu_custom_call.1} parent=11 // pred_fallthru
          _
        // Predicated region
        $region25: #{tpu_custom_call.1} parent=11 // pred_check
          %p395 = pneg %p140
        $region26: #{tpu_custom_call.1} parent=11 // pred_check_branch
          %397 = sbr.rel (%p395) target = $region28
        $region27: #{tpu_custom_call.1} parent=11 // pred_region
          _
        $region28: #{tpu_custom_call.1} parent=11 // pred_fallthru
          _
        // Predicated region
        $region29: #{tpu_custom_call.1} parent=11 // pred_check
          %p398 = pneg %p161
        $region30: #{tpu_custom_call.1} parent=11 // pred_check_branch
          %400 = sbr.rel (%p398) target = $region32
        $region31: #{tpu_custom_call.1} parent=11 // pred_region
          _
        $region32: #{tpu_custom_call.1} parent=11 // pred_fallthru
          _
        // Predicated region
        $region33: #{tpu_custom_call.1} parent=11 // pred_check
          %p401 = pneg %p182
        $region34: #{tpu_custom_call.1} parent=11 // pred_check_branch
          %403 = sbr.rel (%p401) target = $region36
        $region35: #{tpu_custom_call.1} parent=11 // pred_region
          %s405 = ssub.s32 16, 16
          %406 = vsyncadd [#allocation10], %s405
          %s408 = sshll.u32 [#allocation9], 4
          %s409 = int_to_ptr.vmem [resolvable:$true] %s408
          %411 = dma.hbm_to_vmem [thread:$0]  %s6, 16, %s409, [#allocation10]
        $region36: #{tpu_custom_call.1} parent=11 // pred_fallthru
          _
        // Predicated region
        $region37: #{tpu_custom_call.1} parent=11 // pred_check
          %p412 = pneg %p203
        $region38: #{tpu_custom_call.1} parent=11 // pred_check_branch
          %414 = sbr.rel (%p412) target = $region40
        $region39: #{tpu_custom_call.1} parent=11 // pred_region
          %s416 = ssub.s32 16, 16
          %417 = vsyncadd [#allocation10], %s416
          %s419 = sshll.u32 [#allocation11], 4
          %s420 = int_to_ptr.vmem [resolvable:$true] %s419
          %422 = dma.hbm_to_vmem [thread:$0]  %s7, 16, %s420, [#allocation10]
        $region40: #{tpu_custom_call.1} parent=11 // pred_fallthru
          _
        // Predicated region
        $region41: #{tpu_custom_call.1} parent=11 // pred_check
          %p423 = pneg %p224
        $region42: #{tpu_custom_call.1} parent=11 // pred_check_branch
          %425 = sbr.rel (%p423) target = $region44
        $region43: #{tpu_custom_call.1} parent=11 // pred_region
          %s427 = ssub.s32 16, 16
          %428 = vsyncadd [#allocation13], %s427
          %s430 = sshll.u32 [#allocation12], 4
          %s431 = int_to_ptr.vmem [resolvable:$true] %s430
          %433 = dma.hbm_to_vmem [thread:$0]  %s8, 16, %s431, [#allocation13]
        $region44: #{tpu_custom_call.1} parent=11 // pred_fallthru
          _
        // Predicated region
        $region45: #{tpu_custom_call.1} parent=11 // pred_check
          %p434 = pneg %p245
        $region46: #{tpu_custom_call.1} parent=11 // pred_check_branch
          %436 = sbr.rel (%p434) target = $region48
        $region47: #{tpu_custom_call.1} parent=11 // pred_region
          _
        $region48: #{tpu_custom_call.1} parent=11 // pred_fallthru
          _
        // Predicated region
        $region49: #{tpu_custom_call.1} parent=11 // pred_check
          %p437 = pneg %p266
        $region50: #{tpu_custom_call.1} parent=11 // pred_check_branch
          %439 = sbr.rel (%p437) target = $region52
        $region51: #{tpu_custom_call.1} parent=11 // pred_region
          %s441 = ssub.s32 9216, 9216
          %442 = vsyncadd [#allocation13], %s441
          %s443 = sshll.u32 [#allocation14], 4
          %s444 = int_to_ptr.vmem [resolvable:$true] %s443
          %449 = dma.hbm_to_vmem [thread:$0]  %s10, 9216, %s444, [#allocation13], 64, 64, 4
        $region52: #{tpu_custom_call.1} parent=11 // pred_fallthru
          _
        // Predicated region
        $region53: #{tpu_custom_call.1} parent=11 // pred_check
          %p450 = pneg %p287
        $region54: #{tpu_custom_call.1} parent=11 // pred_check_branch
          %452 = sbr.rel (%p450) target = $region56
        $region55: #{tpu_custom_call.1} parent=11 // pred_region
          _
        $region56: #{tpu_custom_call.1} parent=11 // pred_fallthru
          _
        // Predicated region
        $region57: #{tpu_custom_call.1} parent=11 // pred_check
          %p453 = pneg %p308
        $region58: #{tpu_custom_call.1} parent=11 // pred_check_branch
          %455 = sbr.rel (%p453) target = $region60
        $region59: #{tpu_custom_call.1} parent=11 // pred_region
          %s457 = ssub.s32 1024, 1024
          %458 = vsyncadd [#allocation16], %s457
          %s459 = sshll.u32 [#allocation15], 4
          %s460 = int_to_ptr.vmem [resolvable:$true] %s459
          %465 = dma.hbm_to_vmem [thread:$0]  %s12, 1024, %s460, [#allocation16], 64, 64, 4
        $region60: #{tpu_custom_call.1} parent=11 // pred_fallthru
          _
        // Predicated region
        $region61: #{tpu_custom_call.1} parent=11 // pred_check
          %p466 = pneg %p329
        $region62: #{tpu_custom_call.1} parent=11 // pred_check_branch
          %468 = sbr.rel (%p466) target = $region64
        $region63: #{tpu_custom_call.1} parent=11 // pred_region
          _
        $region64: #{tpu_custom_call.1} parent=11 // pred_fallthru
          _
      $region12: #{tpu_custom_call.1} parent=5 // pred_fallthru
        _
      %p469 = scmp.lt.s32.totalorder %s30, 2
      // Predicated region
      $region65: #{tpu_custom_call.1} parent=5 // pred_check
        %p470 = pneg %p469
      $region66: #{tpu_custom_call.1} parent=5 // pred_check_branch
        %472 = sbr.rel (%p470) target = $region68
      $region67: #{tpu_custom_call.1} parent=5 // pred_region
        // Predicated region
        $region69: #{tpu_custom_call.1} parent=67 // pred_check
          %p473 = pneg %p50
        $region70: #{tpu_custom_call.1} parent=67 // pred_check_branch
          %475 = sbr.rel (%p473) target = $region72
        $region71: #{tpu_custom_call.1} parent=67 // pred_region
          %s476 = sand.u32 %s40, 1
          %s477 = scalar_lea.sflag [#allocation4], %s476
          %s478 = sand.u32 %s40, 1
          %s479 = smul.addr %s478, 256
          %s480 = scalar_lea.vmem [#allocation3], %s479
          %s482 = ssub.s32 4096, 4096
          %483 = vsyncadd %s477, %s482
          %s484 = smul.addr %s30, 32
          %s485 = smul.addr %s484, 128
          %s486 = scalar_lea.hbm %s0, %s485
          %s487 = sshll.u32 %s480, 4
          %s488 = int_to_ptr.vmem [resolvable:$true] %s487
          %493 = dma.hbm_to_vmem [thread:$0]  %s486, 4096, %s488, %s477, 128, 128, 8
        $region72: #{tpu_custom_call.1} parent=67 // pred_fallthru
          _
      $region68: #{tpu_custom_call.1} parent=5 // pred_fallthru
        _
      %p494 = scmp.le.s32.totalorder 1, %s30
      %p495 = scmp.lt.s32.totalorder %s30, 3
      %p496 = pnand %p494, %p495
      %p497 = pneg %p496
      // Predicated region
      $region73: #{tpu_custom_call.1} parent=5 // pred_check
        _
      $region74: #{tpu_custom_call.1} parent=5 // pred_check_branch
        %499 = sbr.rel (%p496) target = $region76
      $region75: #{tpu_custom_call.1} parent=5 // pred_region
        %s500 = ssub.s32 %s30, 1
        %s501 = sand.u32 %s43, 1
        %s502 = scalar_lea.sflag [#allocation4], %s501
        %s503 = sand.u32 %s43, 1
        %s504 = smul.addr %s503, 256
        %s505 = scalar_lea.vmem [#allocation3], %s504
        // Predicated region
        $region77: #{tpu_custom_call.1} parent=75 // pred_check
          %p506 = pneg %p56
        $region78: #{tpu_custom_call.1} parent=75 // pred_check_branch
          %508 = sbr.rel (%p506) target = $region80
        $region79: #{tpu_custom_call.1} parent=75 // pred_region
          %509 = dma.done %s502, 4096
        $region80: #{tpu_custom_call.1} parent=75 // pred_fallthru
          _
        // Predicated region
        $region81: #{tpu_custom_call.1} parent=75 // pred_check
          %p510 = pneg %p98
        $region82: #{tpu_custom_call.1} parent=75 // pred_check_branch
          %512 = sbr.rel (%p510) target = $region84
        $region83: #{tpu_custom_call.1} parent=75 // pred_region
          %513 = dma.done [#allocation7], 16
        $region84: #{tpu_custom_call.1} parent=75 // pred_fallthru
          _
        // Predicated region
        $region85: #{tpu_custom_call.1} parent=75 // pred_check
          %p514 = pneg %p119
        $region86: #{tpu_custom_call.1} parent=75 // pred_check_branch
          %516 = sbr.rel (%p514) target = $region88
        $region87: #{tpu_custom_call.1} parent=75 // pred_region
          %517 = dma.done [#allocation7], 16
        $region88: #{tpu_custom_call.1} parent=75 // pred_fallthru
          _
        // Predicated region
        $region89: #{tpu_custom_call.1} parent=75 // pred_check
          %p518 = pneg %p182
        $region90: #{tpu_custom_call.1} parent=75 // pred_check_branch
          %520 = sbr.rel (%p518) target = $region92
        $region91: #{tpu_custom_call.1} parent=75 // pred_region
          %521 = dma.done [#allocation10], 16
        $region92: #{tpu_custom_call.1} parent=75 // pred_fallthru
          _
        // Predicated region
        $region93: #{tpu_custom_call.1} parent=75 // pred_check
          %p522 = pneg %p203
        $region94: #{tpu_custom_call.1} parent=75 // pred_check_branch
          %524 = sbr.rel (%p522) target = $region96
        $region95: #{tpu_custom_call.1} parent=75 // pred_region
          %525 = dma.done [#allocation10], 16
        $region96: #{tpu_custom_call.1} parent=75 // pred_fallthru
          _
        // Predicated region
        $region97: #{tpu_custom_call.1} parent=75 // pred_check
          %p526 = pneg %p224
        $region98: #{tpu_custom_call.1} parent=75 // pred_check_branch
          %528 = sbr.rel (%p526) target = $region100
        $region99: #{tpu_custom_call.1} parent=75 // pred_region
          %529 = dma.done [#allocation13], 16
        $region100: #{tpu_custom_call.1} parent=75 // pred_fallthru
          _
        // Predicated region
        $region101: #{tpu_custom_call.1} parent=75 // pred_check
          %p530 = pneg %p266
        $region102: #{tpu_custom_call.1} parent=75 // pred_check_branch
          %532 = sbr.rel (%p530) target = $region104
        $region103: #{tpu_custom_call.1} parent=75 // pred_region
          %533 = dma.done [#allocation13], 9216
        $region104: #{tpu_custom_call.1} parent=75 // pred_fallthru
          _
        // Predicated region
        $region105: #{tpu_custom_call.1} parent=75 // pred_check
          %p534 = pneg %p308
        $region106: #{tpu_custom_call.1} parent=75 // pred_check_branch
          %536 = sbr.rel (%p534) target = $region108
        $region107: #{tpu_custom_call.1} parent=75 // pred_region
          %537 = dma.done [#allocation16], 1024
        $region108: #{tpu_custom_call.1} parent=75 // pred_fallthru
          _
        %s538 = sand.u32 %s43, 1
        %s539 = scalar_lea.sflag [#allocation4], %s538
        %s540 = sand.u32 %s43, 1
        %s541 = smul.addr %s540, 256
        %s542 = scalar_lea.vmem [#allocation3], %s541
        %p543 = pneg %p56
        %p544 = pneg %p53
        %p545 = pneg %p77
        %p546 = pneg %p74
        %p547 = pneg %p98
        %p548 = pneg %p95
        %p549 = pneg %p119
        %p550 = pneg %p116
        %p551 = pneg %p140
        %p552 = pneg %p137
        %p553 = pneg %p161
        %p554 = pneg %p158
        %p555 = pneg %p182
        %p556 = pneg %p179
        %p557 = pneg %p203
        %p558 = pneg %p200
        %p559 = pneg %p224
        %p560 = pneg %p221
        %p561 = pneg %p245
        %p562 = pneg %p242
        %p563 = pneg %p266
        %p564 = pneg %p263
        %p565 = pneg %p287
        %p566 = pneg %p284
        %p567 = pneg %p308
        %p568 = pneg %p305
        %p569 = pneg %p329
        %p570 = pneg %p326
        %p571 = pneg %p355
        %p572 = pneg %p352
        %s573 = sand.u32 %s342, 1
        %s574 = scalar_lea.sflag [#allocation5], %s573
        %s575 = sand.u32 %s342, 1
        %s576 = smul.addr %s575, 256
        %s577 = scalar_lea.vmem [#allocation17], %s576
        %v579 = vld [vmem:[%s505] sm:$0xff]
        %v580 = vld [vmem:[%s505 + $0x8] sm:$0xff]
        %v581 = vld [vmem:[%s505 + $0x10] sm:$0xff]
        %v582 = vld [vmem:[%s505 + $0x18] sm:$0xff]
        %v583 = vld [vmem:[%s505 + $0x20] sm:$0xff]
        %v584 = vld [vmem:[%s505 + $0x28] sm:$0xff]
        %v585 = vld [vmem:[%s505 + $0x30] sm:$0xff]
        %v586 = vld [vmem:[%s505 + $0x38] sm:$0xff]
        %v587 = vld [vmem:[%s505 + $0x40] sm:$0xff]
        %v588 = vld [vmem:[%s505 + $0x48] sm:$0xff]
        %v589 = vld [vmem:[%s505 + $0x50] sm:$0xff]
        %v590 = vld [vmem:[%s505 + $0x58] sm:$0xff]
        %v591 = vld [vmem:[%s505 + $0x60] sm:$0xff]
        %v592 = vld [vmem:[%s505 + $0x68] sm:$0xff]
        %v593 = vld [vmem:[%s505 + $0x70] sm:$0xff]
        %v594 = vld [vmem:[%s505 + $0x78] sm:$0xff]
        %v595 = vld [vmem:[%s505 + $0x80] sm:$0xff]
        %v596 = vld [vmem:[%s505 + $0x88] sm:$0xff]
        %v597 = vld [vmem:[%s505 + $0x90] sm:$0xff]
        %v598 = vld [vmem:[%s505 + $0x98] sm:$0xff]
        %v599 = vld [vmem:[%s505 + $0xa0] sm:$0xff]
        %v600 = vld [vmem:[%s505 + $0xa8] sm:$0xff]
        %v601 = vld [vmem:[%s505 + $0xb0] sm:$0xff]
        %v602 = vld [vmem:[%s505 + $0xb8] sm:$0xff]
        %v603 = vld [vmem:[%s505 + $0xc0] sm:$0xff]
        %v604 = vld [vmem:[%s505 + $0xc8] sm:$0xff]
        %v605 = vld [vmem:[%s505 + $0xd0] sm:$0xff]
        %v606 = vld [vmem:[%s505 + $0xd8] sm:$0xff]
        %v607 = vld [vmem:[%s505 + $0xe0] sm:$0xff]
        %v608 = vld [vmem:[%s505 + $0xe8] sm:$0xff]
        %v609 = vld [vmem:[%s505 + $0xf0] sm:$0xff]
        %v610 = vld [vmem:[%s505 + $0xf8] sm:$0xff]
        %v611 = vld [vmem:[#allocation6] sm:$0x1]
        %v612 = vld [vmem:[#allocation8] sm:$0x1]
        %v613 = vld [vmem:[%s4] sm:$0xff]
        %v614 = vld [vmem:[%s4 + $0x8] sm:$0xff]
        %v615 = vld [vmem:[%s4 + $0x10] sm:$0xff]
        %v616 = vld [vmem:[%s4 + $0x18] sm:$0xff]
        %v617 = vld [vmem:[%s4 + $0x20] sm:$0xff]
        %v618 = vld [vmem:[%s4 + $0x28] sm:$0xff]
        %v619 = vld [vmem:[%s4 + $0x30] sm:$0xff]
        %v620 = vld [vmem:[%s4 + $0x38] sm:$0xff]
        %v621 = vld [vmem:[%s4 + $0x40] sm:$0xff]
        %v622 = vld [vmem:[%s4 + $0x48] sm:$0xff]
        %v623 = vld [vmem:[%s4 + $0x50] sm:$0xff]
        %v624 = vld [vmem:[%s4 + $0x58] sm:$0xff]
        %v625 = vld [vmem:[%s4 + $0x60] sm:$0xff]
        %v626 = vld [vmem:[%s4 + $0x68] sm:$0xff]
        %v627 = vld [vmem:[%s4 + $0x70] sm:$0xff]
        %v628 = vld [vmem:[%s4 + $0x78] sm:$0xff]
        %v629 = vadd.f32 %v579, %v580
        %v630 = vadd.f32 %v629, %v581
        %v631 = vadd.f32 %v630, %v582
        %v632 = vadd.f32 %v631, %v583
        %v633 = vadd.f32 %v632, %v584
        %v634 = vadd.f32 %v633, %v585
        %v635 = vadd.f32 %v634, %v586
        %v636 = vadd.f32 %v635, %v587
        %v637 = vadd.f32 %v636, %v588
        %v638 = vadd.f32 %v637, %v589
        %v639 = vadd.f32 %v638, %v590
        %v640 = vadd.f32 %v639, %v591
        %v641 = vadd.f32 %v640, %v592
        %v642 = vadd.f32 %v641, %v593
        %v643 = vadd.f32 %v642, %v594
        %v644 = vadd.f32 %v643, %v595
        %v645 = vadd.f32 %v644, %v596
        %v646 = vadd.f32 %v645, %v597
        %v647 = vadd.f32 %v646, %v598
        %v648 = vadd.f32 %v647, %v599
        %v649 = vadd.f32 %v648, %v600
        %v650 = vadd.f32 %v649, %v601
        %v651 = vadd.f32 %v650, %v602
        %v652 = vadd.f32 %v651, %v603
        %v653 = vadd.f32 %v652, %v604
        %v654 = vadd.f32 %v653, %v605
        %v655 = vadd.f32 %v654, %v606
        %v656 = vadd.f32 %v655, %v607
        %v657 = vadd.f32 %v656, %v608
        %v658 = vadd.f32 %v657, %v609
        %v659 = vadd.f32 %v658, %v610
        %v660 = vrot.slane %v659, 4
        %v661 = vadd.f32 %v659, %v660
        %v662 = vrot.slane %v661, 2
        %v663 = vadd.f32 %v661, %v662
        %v664 = vrot.slane %v663, 1
        %v665 = vadd.f32 %v663, %v664
        %v666 = vmul.f32 %v579, %v579
        %v667 = vmul.f32 %v580, %v580
        %v668 = vmul.f32 %v581, %v581
        %v669 = vmul.f32 %v582, %v582
        %v670 = vmul.f32 %v583, %v583
        %v671 = vmul.f32 %v584, %v584
        %v672 = vmul.f32 %v585, %v585
        %v673 = vmul.f32 %v586, %v586
        %v674 = vmul.f32 %v587, %v587
        %v675 = vmul.f32 %v588, %v588
        %v676 = vmul.f32 %v589, %v589
        %v677 = vmul.f32 %v590, %v590
        %v678 = vmul.f32 %v591, %v591
        %v679 = vmul.f32 %v592, %v592
        %v680 = vmul.f32 %v593, %v593
        %v681 = vmul.f32 %v594, %v594
        %v682 = vmul.f32 %v595, %v595
        %v683 = vmul.f32 %v596, %v596
        %v684 = vmul.f32 %v597, %v597
        %v685 = vmul.f32 %v598, %v598
        %v686 = vmul.f32 %v599, %v599
        %v687 = vmul.f32 %v600, %v600
        %v688 = vmul.f32 %v601, %v601
        %v689 = vmul.f32 %v602, %v602
        %v690 = vmul.f32 %v603, %v603
        %v691 = vmul.f32 %v604, %v604
        %v692 = vmul.f32 %v605, %v605
        %v693 = vmul.f32 %v606, %v606
        %v694 = vmul.f32 %v607, %v607
        %v695 = vmul.f32 %v608, %v608
        %v696 = vmul.f32 %v609, %v609
        %v697 = vmul.f32 %v610, %v610
        %v698 = vadd.f32 %v666, %v667
        %v699 = vadd.f32 %v698, %v668
        %v700 = vadd.f32 %v699, %v669
        %v701 = vadd.f32 %v700, %v670
        %v702 = vadd.f32 %v701, %v671
        %v703 = vadd.f32 %v702, %v672
        %v704 = vadd.f32 %v703, %v673
        %v705 = vadd.f32 %v704, %v674
        %v706 = vadd.f32 %v705, %v675
        %v707 = vadd.f32 %v706, %v676
        %v708 = vadd.f32 %v707, %v677
        %v709 = vadd.f32 %v708, %v678
        %v710 = vadd.f32 %v709, %v679
        %v711 = vadd.f32 %v710, %v680
        %v712 = vadd.f32 %v711, %v681
        %v713 = vadd.f32 %v712, %v682
        %v714 = vadd.f32 %v713, %v683
        %v715 = vadd.f32 %v714, %v684
        %v716 = vadd.f32 %v715, %v685
        %v717 = vadd.f32 %v716, %v686
        %v718 = vadd.f32 %v717, %v687
        %v719 = vadd.f32 %v718, %v688
        %v720 = vadd.f32 %v719, %v689
        %v721 = vadd.f32 %v720, %v690
        %v722 = vadd.f32 %v721, %v691
        %v723 = vadd.f32 %v722, %v692
        %v724 = vadd.f32 %v723, %v693
        %v725 = vadd.f32 %v724, %v694
        %v726 = vadd.f32 %v725, %v695
        %v727 = vadd.f32 %v726, %v696
        %v728 = vadd.f32 %v727, %v697
        %v729 = vrot.slane %v728, 4
        %v730 = vadd.f32 %v728, %v729
        %v731 = vrot.slane %v730, 2
        %v732 = vadd.f32 %v730, %v731
        %v733 = vrot.slane %v732, 1
        %v734 = vadd.f32 %v732, %v733
        %735 = vmatprep.subr.mxu0 0.0
        %736 = vmatpush1.msra.mxu0 %v613
        %737 = vmatprep.subr.mxu0 0.0
        %738 = vmatpush1.msra.mxu0 %v614
        %739 = vmatprep.subr.mxu0 0.0
        %740 = vmatpush1.msra.mxu0 %v615
        %741 = vmatprep.subr.mxu0 0.0
        %742 = vmatpush1.msra.mxu0 %v616
        %743 = vmatprep.subr.mxu0 0.0
        %744 = vmatpush1.msra.mxu0 %v617
        %745 = vmatprep.subr.mxu0 0.0
        %746 = vmatpush1.msra.mxu0 %v618
        %747 = vmatprep.subr.mxu0 0.0
        %748 = vmatpush1.msra.mxu0 %v619
        %749 = vmatprep.subr.mxu0 0.0
        %750 = vmatpush1.msra.mxu0 %v620
        %751 = vmatprep.subr.mxu0 0.0
        %752 = vmatpush1.msra.mxu0 %v621
        %753 = vmatprep.subr.mxu0 0.0
        %754 = vmatpush1.msra.mxu0 %v622
        %755 = vmatprep.subr.mxu0 0.0
        %756 = vmatpush1.msra.mxu0 %v623
        %757 = vmatprep.subr.mxu0 0.0
        %758 = vmatpush1.msra.mxu0 %v624
        %759 = vmatprep.subr.mxu0 0.0
        %760 = vmatpush1.msra.mxu0 %v625
        %761 = vmatprep.subr.mxu0 0.0
        %762 = vmatpush1.msra.mxu0 %v626
        %763 = vmatprep.subr.mxu0 0.0
        %764 = vmatpush1.msra.mxu0 %v627
        %765 = vmatprep.subr.mxu0 0.0
        %766 = vmatpush1.msra.mxu0 %v628
        %767 = vmatprep.subr.mxu0 0.0
        %768 = vmatpush1.msra.mxu0 0.0
        %769 = vmatprep.subr.mxu0 0.0
        %770 = vmatpush1.msra.mxu0 0.0
        %771 = vmatprep.subr.mxu0 0.0
        %772 = vmatpush1.msra.mxu0 0.0
        %773 = vmatprep.subr.mxu0 0.0
        %774 = vmatpush1.msra.mxu0 0.0
        %775 = vmatprep.subr.mxu0 0.0
        %776 = vmatpush1.msra.mxu0 0.0
        %777 = vmatprep.subr.mxu0 0.0
        %778 = vmatpush1.msra.mxu0 0.0
        %779 = vmatprep.subr.mxu0 0.0
        %780 = vmatpush1.msra.mxu0 0.0
        %781 = vmatprep.subr.mxu0 0.0
        %782 = vmatpush1.msra.mxu0 0.0
        %783 = vmatprep.subr.mxu0 0.0
        %784 = vmatpush1.msra.mxu0 0.0
        %785 = vmatprep.subr.mxu0 0.0
        %786 = vmatpush1.msra.mxu0 0.0
        %787 = vmatprep.subr.mxu0 0.0
        %788 = vmatpush1.msra.mxu0 0.0
        %789 = vmatprep.subr.mxu0 0.0
        %790 = vmatpush1.msra.mxu0 0.0
        %791 = vmatprep.subr.mxu0 0.0
        %792 = vmatpush1.msra.mxu0 0.0
        %793 = vmatprep.subr.mxu0 0.0
        %794 = vmatpush1.msra.mxu0 0.0
        %795 = vmatprep.subr.mxu0 0.0
        %796 = vmatpush1.msra.mxu0 0.0
        %797 = vmatprep.subr.mxu0 0.0
        %798 = vmatpush1.msra.mxu0 0.0
        %799 = vmatprep.mubr.f32.mxu0 0.0
        %800 = vmatmul.mubr.f32.gmra.mrb[0].mxu0 %v665
        %v801 = vpop.f32.mrb[0].mxu0
        %v802 = vadd.f32 0.0, %v801
        %v803 = vpop.f32.mrb[0].mxu0
        %804 = vdwg.mxu0
        %805 = vmatprep.subr.mxu0 0.0
        %806 = vmatpush1.msra.mxu0 %v613
        %807 = vmatprep.subr.mxu0 0.0
        %808 = vmatpush1.msra.mxu0 %v614
        %809 = vmatprep.subr.mxu0 0.0
        %810 = vmatpush1.msra.mxu0 %v615
        %811 = vmatprep.subr.mxu0 0.0
        %812 = vmatpush1.msra.mxu0 %v616
        %813 = vmatprep.subr.mxu0 0.0
        %814 = vmatpush1.msra.mxu0 %v617
        %815 = vmatprep.subr.mxu0 0.0
        %816 = vmatpush1.msra.mxu0 %v618
        %817 = vmatprep.subr.mxu0 0.0
        %818 = vmatpush1.msra.mxu0 %v619
        %819 = vmatprep.subr.mxu0 0.0
        %820 = vmatpush1.msra.mxu0 %v620
        %821 = vmatprep.subr.mxu0 0.0
        %822 = vmatpush1.msra.mxu0 %v621
        %823 = vmatprep.subr.mxu0 0.0
        %824 = vmatpush1.msra.mxu0 %v622
        %825 = vmatprep.subr.mxu0 0.0
        %826 = vmatpush1.msra.mxu0 %v623
        %827 = vmatprep.subr.mxu0 0.0
        %828 = vmatpush1.msra.mxu0 %v624
        %829 = vmatprep.subr.mxu0 0.0
        %830 = vmatpush1.msra.mxu0 %v625
        %831 = vmatprep.subr.mxu0 0.0
        %832 = vmatpush1.msra.mxu0 %v626
        %833 = vmatprep.subr.mxu0 0.0
        %834 = vmatpush1.msra.mxu0 %v627
        %835 = vmatprep.subr.mxu0 0.0
        %836 = vmatpush1.msra.mxu0 %v628
        %837 = vmatprep.subr.mxu0 0.0
        %838 = vmatpush1.msra.mxu0 0.0
        %839 = vmatprep.subr.mxu0 0.0
        %840 = vmatpush1.msra.mxu0 0.0
        %841 = vmatprep.subr.mxu0 0.0
        %842 = vmatpush1.msra.mxu0 0.0
        %843 = vmatprep.subr.mxu0 0.0
        %844 = vmatpush1.msra.mxu0 0.0
        %845 = vmatprep.subr.mxu0 0.0
        %846 = vmatpush1.msra.mxu0 0.0
        %847 = vmatprep.subr.mxu0 0.0
        %848 = vmatpush1.msra.mxu0 0.0
        %849 = vmatprep.subr.mxu0 0.0
        %850 = vmatpush1.msra.mxu0 0.0
        %851 = vmatprep.subr.mxu0 0.0
        %852 = vmatpush1.msra.mxu0 0.0
        %853 = vmatprep.subr.mxu0 0.0
        %854 = vmatpush1.msra.mxu0 0.0
        %855 = vmatprep.subr.mxu0 0.0
        %856 = vmatpush1.msra.mxu0 0.0
        %857 = vmatprep.subr.mxu0 0.0
        %858 = vmatpush1.msra.mxu0 0.0
        %859 = vmatprep.subr.mxu0 0.0
        %860 = vmatpush1.msra.mxu0 0.0
        %861 = vmatprep.subr.mxu0 0.0
        %862 = vmatpush1.msra.mxu0 0.0
        %863 = vmatprep.subr.mxu0 0.0
        %864 = vmatpush1.msra.mxu0 0.0
        %865 = vmatprep.subr.mxu0 0.0
        %866 = vmatpush1.msra.mxu0 0.0
        %867 = vmatprep.subr.mxu0 0.0
        %868 = vmatpush1.msra.mxu0 0.0
        %869 = vmatprep.mubr.f32.mxu0 0.0
        %870 = vmatmul.mubr.f32.gmra.mrb[0].mxu0 %v734
        %v871 = vpop.f32.mrb[0].mxu0
        %v872 = vadd.f32 0.0, %v871
        %v873 = vpop.f32.mrb[0].mxu0
        %874 = vdwg.mxu0
        %v875 = vrcp.pop 256.0
        %v876 = vmul.f32 %v802, %v875
        %v877 = vmul.f32 %v872, %v875
        %v878 = vmul.f32 %v876, %v876
        %v879 = vsub.f32 %v877, %v878
        %v880 = vadd.f32 %v879, 1e-05
        %v881 = vrsqrt.pop %v880
        %vm882 = vcmask 261120
        %v884 = vsel %vm882, %v876, 0
        %v887 = vsel %vm882, %v613, 0
        %v890 = vsel %vm882, %v614, 0
        %v893 = vsel %vm882, %v615, 0
        %v896 = vsel %vm882, %v616, 0
        %v899 = vsel %vm882, %v617, 0
        %v902 = vsel %vm882, %v618, 0
        %v905 = vsel %vm882, %v619, 0
        %v908 = vsel %vm882, %v620, 0
        %v911 = vsel %vm882, %v621, 0
        %v914 = vsel %vm882, %v622, 0
        %v917 = vsel %vm882, %v623, 0
        %v920 = vsel %vm882, %v624, 0
        %v923 = vsel %vm882, %v625, 0
        %v926 = vsel %vm882, %v626, 0
        %v929 = vsel %vm882, %v627, 0
        %v932 = vsel %vm882, %v628, 0
        %934 = vmatprep.subr.mxu0 0.0
        %935 = vmatpush1.xpose.msra.mxu0 %v887
        %936 = vmatprep.subr.mxu0 0.0
        %937 = vmatpush1.xpose.msra.mxu0 %v890
        %938 = vmatprep.subr.mxu0 0.0
        %939 = vmatpush1.xpose.msra.mxu0 %v893
        %940 = vmatprep.subr.mxu0 0.0
        %941 = vmatpush1.xpose.msra.mxu0 %v896
        %942 = vmatprep.subr.mxu0 0.0
        %943 = vmatpush1.xpose.msra.mxu0 %v899
        %944 = vmatprep.subr.mxu0 0.0
        %945 = vmatpush1.xpose.msra.mxu0 %v902
        %946 = vmatprep.subr.mxu0 0.0
        %947 = vmatpush1.xpose.msra.mxu0 %v905
        %948 = vmatprep.subr.mxu0 0.0
        %949 = vmatpush1.xpose.msra.mxu0 %v908
        %950 = vmatprep.subr.mxu0 0.0
        %951 = vmatpush1.xpose.msra.mxu0 %v911
        %952 = vmatprep.subr.mxu0 0.0
        %953 = vmatpush1.xpose.msra.mxu0 %v914
        %954 = vmatprep.subr.mxu0 0.0
        %955 = vmatpush1.xpose.msra.mxu0 %v917
        %956 = vmatprep.subr.mxu0 0.0
        %957 = vmatpush1.xpose.msra.mxu0 %v920
        %958 = vmatprep.subr.mxu0 0.0
        %959 = vmatpush1.xpose.msra.mxu0 %v923
        %960 = vmatprep.subr.mxu0 0.0
        %961 = vmatpush1.xpose.msra.mxu0 %v926
        %962 = vmatprep.subr.mxu0 0.0
        %963 = vmatpush1.xpose.msra.mxu0 %v929
        %964 = vmatprep.subr.mxu0 0.0
        %965 = vmatpush1.xpose.msra.mxu0 %v932
        %966 = vmatprep.subr.mxu0 0.0
        %967 = vmatpush1.xpose.msra.mxu0 0.0
        %968 = vmatprep.subr.mxu0 0.0
        %969 = vmatpush1.xpose.msra.mxu0 0.0
        %970 = vmatprep.subr.mxu0 0.0
        %971 = vmatpush1.xpose.msra.mxu0 0.0
        %972 = vmatprep.subr.mxu0 0.0
        %973 = vmatpush1.xpose.msra.mxu0 0.0
        %974 = vmatprep.subr.mxu0 0.0
        %975 = vmatpush1.xpose.msra.mxu0 0.0
        %976 = vmatprep.subr.mxu0 0.0
        %977 = vmatpush1.xpose.msra.mxu0 0.0
        %978 = vmatprep.subr.mxu0 0.0
        %979 = vmatpush1.xpose.msra.mxu0 0.0
        %980 = vmatprep.subr.mxu0 0.0
        %981 = vmatpush1.xpose.msra.mxu0 0.0
        %982 = vmatprep.subr.mxu0 0.0
        %983 = vmatpush1.xpose.msra.mxu0 0.0
        %984 = vmatprep.subr.mxu0 0.0
        %985 = vmatpush1.xpose.msra.mxu0 0.0
        %986 = vmatprep.subr.mxu0 0.0
        %987 = vmatpush1.xpose.msra.mxu0 0.0
        %988 = vmatprep.subr.mxu0 0.0
        %989 = vmatpush1.xpose.msra.mxu0 0.0
        %990 = vmatprep.subr.mxu0 0.0
        %991 = vmatpush1.xpose.msra.mxu0 0.0
        %992 = vmatprep.subr.mxu0 0.0
        %993 = vmatpush1.xpose.msra.mxu0 0.0
        %994 = vmatprep.subr.mxu0 0.0
        %995 = vmatpush1.xpose.msra.mxu0 0.0
        %996 = vmatprep.subr.mxu0 0.0
        %997 = vmatpush1.xpose.msra.mxu0 0.0
        %998 = vmatprep.mubr.f32.mxu0 0.0
        %999 = vmatmul.mubr.f32.gmra.mrb[0].mxu0 %v884
        %v1000 = vpop.f32.mrb[0].mxu0
        %v1001 = vadd.f32 0.0, %v1000
        %v1002 = vpop.f32.mrb[0].mxu0
        %1003 = vdwg.mxu0
        %v1005 = vsel %vm882, %v881, 0
        %1007 = vmatprep.subr.mxu0 0.0
        %1008 = vmatpush1.xpose.msra.mxu0 %v887
        %1009 = vmatprep.subr.mxu0 0.0
        %1010 = vmatpush1.xpose.msra.mxu0 %v890
        %1011 = vmatprep.subr.mxu0 0.0
        %1012 = vmatpush1.xpose.msra.mxu0 %v893
        %1013 = vmatprep.subr.mxu0 0.0
        %1014 = vmatpush1.xpose.msra.mxu0 %v896
        %1015 = vmatprep.subr.mxu0 0.0
        %1016 = vmatpush1.xpose.msra.mxu0 %v899
        %1017 = vmatprep.subr.mxu0 0.0
        %1018 = vmatpush1.xpose.msra.mxu0 %v902
        %1019 = vmatprep.subr.mxu0 0.0
        %1020 = vmatpush1.xpose.msra.mxu0 %v905
        %1021 = vmatprep.subr.mxu0 0.0
        %1022 = vmatpush1.xpose.msra.mxu0 %v908
        %1023 = vmatprep.subr.mxu0 0.0
        %1024 = vmatpush1.xpose.msra.mxu0 %v911
        %1025 = vmatprep.subr.mxu0 0.0
        %1026 = vmatpush1.xpose.msra.mxu0 %v914
        %1027 = vmatprep.subr.mxu0 0.0
        %1028 = vmatpush1.xpose.msra.mxu0 %v917
        %1029 = vmatprep.subr.mxu0 0.0
        %1030 = vmatpush1.xpose.msra.mxu0 %v920
        %1031 = vmatprep.subr.mxu0 0.0
        %1032 = vmatpush1.xpose.msra.mxu0 %v923
        %1033 = vmatprep.subr.mxu0 0.0
        %1034 = vmatpush1.xpose.msra.mxu0 %v926
        %1035 = vmatprep.subr.mxu0 0.0
        %1036 = vmatpush1.xpose.msra.mxu0 %v929
        %1037 = vmatprep.subr.mxu0 0.0
        %1038 = vmatpush1.xpose.msra.mxu0 %v932
        %1039 = vmatprep.subr.mxu0 0.0
        %1040 = vmatpush1.xpose.msra.mxu0 0.0
        %1041 = vmatprep.subr.mxu0 0.0
        %1042 = vmatpush1.xpose.msra.mxu0 0.0
        %1043 = vmatprep.subr.mxu0 0.0
        %1044 = vmatpush1.xpose.msra.mxu0 0.0
        %1045 = vmatprep.subr.mxu0 0.0
        %1046 = vmatpush1.xpose.msra.mxu0 0.0
        %1047 = vmatprep.subr.mxu0 0.0
        %1048 = vmatpush1.xpose.msra.mxu0 0.0
        %1049 = vmatprep.subr.mxu0 0.0
        %1050 = vmatpush1.xpose.msra.mxu0 0.0
        %1051 = vmatprep.subr.mxu0 0.0
        %1052 = vmatpush1.xpose.msra.mxu0 0.0
        %1053 = vmatprep.subr.mxu0 0.0
        %1054 = vmatpush1.xpose.msra.mxu0 0.0
        %1055 = vmatprep.subr.mxu0 0.0
        %1056 = vmatpush1.xpose.msra.mxu0 0.0
        %1057 = vmatprep.subr.mxu0 0.0
        %1058 = vmatpush1.xpose.msra.mxu0 0.0
        %1059 = vmatprep.subr.mxu0 0.0
        %1060 = vmatpush1.xpose.msra.mxu0 0.0
        %1061 = vmatprep.subr.mxu0 0.0
        %1062 = vmatpush1.xpose.msra.mxu0 0.0
        %1063 = vmatprep.subr.mxu0 0.0
        %1064 = vmatpush1.xpose.msra.mxu0 0.0
        %1065 = vmatprep.subr.mxu0 0.0
        %1066 = vmatpush1.xpose.msra.mxu0 0.0
        %1067 = vmatprep.subr.mxu0 0.0
        %1068 = vmatpush1.xpose.msra.mxu0 0.0
        %1069 = vmatprep.subr.mxu0 0.0
        %1070 = vmatpush1.xpose.msra.mxu0 0.0
        %1071 = vmatprep.mubr.f32.mxu0 0.0
        %1072 = vmatmul.mubr.f32.gmra.mrb[0].mxu0 %v1005
        %v1073 = vpop.f32.mrb[0].mxu0
        %v1074 = vadd.f32 0.0, %v1073
        %v1075 = vpop.f32.mrb[0].mxu0
        %1076 = vdwg.mxu0
        %v1077 = vlaneseq
        %v1078 = vshrl.u32 %v1077, 7
        %v1079 = vsub.s32 0, %v1078
        %v1080 = vrot.slane %v1001, %v1079
        %v1081 = vsub.f32 %v579, %v1080
        %v1082 = vsub.f32 %v580, %v1080
        %v1083 = vsub.f32 %v581, %v1080
        %v1084 = vsub.f32 %v582, %v1080
        %v1085 = vsub.f32 %v583, %v1080
        %v1086 = vsub.f32 %v584, %v1080
        %v1087 = vsub.f32 %v585, %v1080
        %v1088 = vsub.f32 %v586, %v1080
        %v1089 = vsub.f32 %v587, %v1080
        %v1090 = vsub.f32 %v588, %v1080
        %v1091 = vsub.f32 %v589, %v1080
        %v1092 = vsub.f32 %v590, %v1080
        %v1093 = vsub.f32 %v591, %v1080
        %v1094 = vsub.f32 %v592, %v1080
        %v1095 = vsub.f32 %v593, %v1080
        %v1096 = vsub.f32 %v594, %v1080
        %v1097 = vsub.f32 %v595, %v1080
        %v1098 = vsub.f32 %v596, %v1080
        %v1099 = vsub.f32 %v597, %v1080
        %v1100 = vsub.f32 %v598, %v1080
        %v1101 = vsub.f32 %v599, %v1080
        %v1102 = vsub.f32 %v600, %v1080
        %v1103 = vsub.f32 %v601, %v1080
        %v1104 = vsub.f32 %v602, %v1080
        %v1105 = vsub.f32 %v603, %v1080
        %v1106 = vsub.f32 %v604, %v1080
        %v1107 = vsub.f32 %v605, %v1080
        %v1108 = vsub.f32 %v606, %v1080
        %v1109 = vsub.f32 %v607, %v1080
        %v1110 = vsub.f32 %v608, %v1080
        %v1111 = vsub.f32 %v609, %v1080
        %v1112 = vsub.f32 %v610, %v1080
        %v1113 = vmul.f32 %v1074, %v611
        %v1114 = vlaneseq
        %v1115 = vshrl.u32 %v1114, 7
        %v1116 = vsub.s32 0, %v1115
        %v1117 = vrot.slane %v1113, %v1116
        %v1118 = vmul.f32 %v1081, %v1117
        %v1119 = vmul.f32 %v1082, %v1117
        %v1120 = vmul.f32 %v1083, %v1117
        %v1121 = vmul.f32 %v1084, %v1117
        %v1122 = vmul.f32 %v1085, %v1117
        %v1123 = vmul.f32 %v1086, %v1117
        %v1124 = vmul.f32 %v1087, %v1117
        %v1125 = vmul.f32 %v1088, %v1117
        %v1126 = vmul.f32 %v1089, %v1117
        %v1127 = vmul.f32 %v1090, %v1117
        %v1128 = vmul.f32 %v1091, %v1117
        %v1129 = vmul.f32 %v1092, %v1117
        %v1130 = vmul.f32 %v1093, %v1117
        %v1131 = vmul.f32 %v1094, %v1117
        %v1132 = vmul.f32 %v1095, %v1117
        %v1133 = vmul.f32 %v1096, %v1117
        %v1134 = vmul.f32 %v1097, %v1117
        %v1135 = vmul.f32 %v1098, %v1117
        %v1136 = vmul.f32 %v1099, %v1117
        %v1137 = vmul.f32 %v1100, %v1117
        %v1138 = vmul.f32 %v1101, %v1117
        %v1139 = vmul.f32 %v1102, %v1117
        %v1140 = vmul.f32 %v1103, %v1117
        %v1141 = vmul.f32 %v1104, %v1117
        %v1142 = vmul.f32 %v1105, %v1117
        %v1143 = vmul.f32 %v1106, %v1117
        %v1144 = vmul.f32 %v1107, %v1117
        %v1145 = vmul.f32 %v1108, %v1117
        %v1146 = vmul.f32 %v1109, %v1117
        %v1147 = vmul.f32 %v1110, %v1117
        %v1148 = vmul.f32 %v1111, %v1117
        %v1149 = vmul.f32 %v1112, %v1117
        %v1151 = vlaneseq
        %v1152 = vshrl.u32 %v1151, 7
        %v1153 = vsub.s32 0, %v1152
        %v1154 = vrot.slane %v612, %v1153
        %v1156 = vadd.f32 %v1118, %v1154
        %v1157 = vadd.f32 %v1119, %v1154
        %v1158 = vadd.f32 %v1120, %v1154
        %v1159 = vadd.f32 %v1121, %v1154
        %v1160 = vadd.f32 %v1122, %v1154
        %v1161 = vadd.f32 %v1123, %v1154
        %v1162 = vadd.f32 %v1124, %v1154
        %v1163 = vadd.f32 %v1125, %v1154
        %v1164 = vadd.f32 %v1126, %v1154
        %v1165 = vadd.f32 %v1127, %v1154
        %v1166 = vadd.f32 %v1128, %v1154
        %v1167 = vadd.f32 %v1129, %v1154
        %v1168 = vadd.f32 %v1130, %v1154
        %v1169 = vadd.f32 %v1131, %v1154
        %v1170 = vadd.f32 %v1132, %v1154
        %v1171 = vadd.f32 %v1133, %v1154
        %v1172 = vadd.f32 %v1134, %v1154
        %v1173 = vadd.f32 %v1135, %v1154
        %v1174 = vadd.f32 %v1136, %v1154
        %v1175 = vadd.f32 %v1137, %v1154
        %v1176 = vadd.f32 %v1138, %v1154
        %v1177 = vadd.f32 %v1139, %v1154
        %v1178 = vadd.f32 %v1140, %v1154
        %v1179 = vadd.f32 %v1141, %v1154
        %v1180 = vadd.f32 %v1142, %v1154
        %v1181 = vadd.f32 %v1143, %v1154
        %v1182 = vadd.f32 %v1144, %v1154
        %v1183 = vadd.f32 %v1145, %v1154
        %v1184 = vadd.f32 %v1146, %v1154
        %v1185 = vadd.f32 %v1147, %v1154
        %v1186 = vadd.f32 %v1148, %v1154
        %v1187 = vadd.f32 %v1149, %v1154
        %v1188 = vxor.u32 %v1156, 2147483648
        %v1189 = vxor.u32 %v1157, 2147483648
        %v1190 = vxor.u32 %v1158, 2147483648
        %v1191 = vxor.u32 %v1159, 2147483648
        %v1192 = vxor.u32 %v1160, 2147483648
        %v1193 = vxor.u32 %v1161, 2147483648
        %v1194 = vxor.u32 %v1162, 2147483648
        %v1195 = vxor.u32 %v1163, 2147483648
        %v1196 = vxor.u32 %v1164, 2147483648
        %v1197 = vxor.u32 %v1165, 2147483648
        %v1198 = vxor.u32 %v1166, 2147483648
        %v1199 = vxor.u32 %v1167, 2147483648
        %v1200 = vxor.u32 %v1168, 2147483648
        %v1201 = vxor.u32 %v1169, 2147483648
        %v1202 = vxor.u32 %v1170, 2147483648
        %v1203 = vxor.u32 %v1171, 2147483648
        %v1204 = vxor.u32 %v1172, 2147483648
        %v1205 = vxor.u32 %v1173, 2147483648
        %v1206 = vxor.u32 %v1174, 2147483648
        %v1207 = vxor.u32 %v1175, 2147483648
        %v1208 = vxor.u32 %v1176, 2147483648
        %v1209 = vxor.u32 %v1177, 2147483648
        %v1210 = vxor.u32 %v1178, 2147483648
        %v1211 = vxor.u32 %v1179, 2147483648
        %v1212 = vxor.u32 %v1180, 2147483648
        %v1213 = vxor.u32 %v1181, 2147483648
        %v1214 = vxor.u32 %v1182, 2147483648
        %v1215 = vxor.u32 %v1183, 2147483648
        %v1216 = vxor.u32 %v1184, 2147483648
        %v1217 = vxor.u32 %v1185, 2147483648
        %v1218 = vxor.u32 %v1186, 2147483648
        %v1219 = vxor.u32 %v1187, 2147483648
        %v1220 = vmul.f32 %v1188, 1.442695
        %v1221 = vpow.pop %v1220
        %v1222 = vmul.f32 %v1189, 1.442695
        %v1223 = vpow.pop %v1222
        %v1224 = vmul.f32 %v1190, 1.442695
        %v1225 = vpow.pop %v1224
        %v1226 = vmul.f32 %v1191, 1.442695
        %v1227 = vpow.pop %v1226
        %v1228 = vmul.f32 %v1192, 1.442695
        %v1229 = vpow.pop %v1228
        %v1230 = vmul.f32 %v1193, 1.442695
        %v1231 = vpow.pop %v1230
        %v1232 = vmul.f32 %v1194, 1.442695
        %v1233 = vpow.pop %v1232
        %v1234 = vmul.f32 %v1195, 1.442695
        %v1235 = vpow.pop %v1234
        %v1236 = vmul.f32 %v1196, 1.442695
        %v1237 = vpow.pop %v1236
        %v1238 = vmul.f32 %v1197, 1.442695
        %v1239 = vpow.pop %v1238
        %v1240 = vmul.f32 %v1198, 1.442695
        %v1241 = vpow.pop %v1240
        %v1242 = vmul.f32 %v1199, 1.442695
        %v1243 = vpow.pop %v1242
        %v1244 = vmul.f32 %v1200, 1.442695
        %v1245 = vpow.pop %v1244
        %v1246 = vmul.f32 %v1201, 1.442695
        %v1247 = vpow.pop %v1246
        %v1248 = vmul.f32 %v1202, 1.442695
        %v1249 = vpow.pop %v1248
        %v1250 = vmul.f32 %v1203, 1.442695
        %v1251 = vpow.pop %v1250
        %v1252 = vmul.f32 %v1204, 1.442695
        %v1253 = vpow.pop %v1252
        %v1254 = vmul.f32 %v1205, 1.442695
        %v1255 = vpow.pop %v1254
        %v1256 = vmul.f32 %v1206, 1.442695
        %v1257 = vpow.pop %v1256
        %v1258 = vmul.f32 %v1207, 1.442695
        %v1259 = vpow.pop %v1258
        %v1260 = vmul.f32 %v1208, 1.442695
        %v1261 = vpow.pop %v1260
        %v1262 = vmul.f32 %v1209, 1.442695
        %v1263 = vpow.pop %v1262
        %v1264 = vmul.f32 %v1210, 1.442695
        %v1265 = vpow.pop %v1264
        %v1266 = vmul.f32 %v1211, 1.442695
        %v1267 = vpow.pop %v1266
        %v1268 = vmul.f32 %v1212, 1.442695
        %v1269 = vpow.pop %v1268
        %v1270 = vmul.f32 %v1213, 1.442695
        %v1271 = vpow.pop %v1270
        %v1272 = vmul.f32 %v1214, 1.442695
        %v1273 = vpow.pop %v1272
        %v1274 = vmul.f32 %v1215, 1.442695
        %v1275 = vpow.pop %v1274
        %v1276 = vmul.f32 %v1216, 1.442695
        %v1277 = vpow.pop %v1276
        %v1278 = vmul.f32 %v1217, 1.442695
        %v1279 = vpow.pop %v1278
        %v1280 = vmul.f32 %v1218, 1.442695
        %v1281 = vpow.pop %v1280
        %v1282 = vmul.f32 %v1219, 1.442695
        %v1283 = vpow.pop %v1282
        %v1284 = vadd.f32 %v1221, 1.0
        %v1285 = vadd.f32 %v1223, 1.0
        %v1286 = vadd.f32 %v1225, 1.0
        %v1287 = vadd.f32 %v1227, 1.0
        %v1288 = vadd.f32 %v1229, 1.0
        %v1289 = vadd.f32 %v1231, 1.0
        %v1290 = vadd.f32 %v1233, 1.0
        %v1291 = vadd.f32 %v1235, 1.0
        %v1292 = vadd.f32 %v1237, 1.0
        %v1293 = vadd.f32 %v1239, 1.0
        %v1294 = vadd.f32 %v1241, 1.0
        %v1295 = vadd.f32 %v1243, 1.0
        %v1296 = vadd.f32 %v1245, 1.0
        %v1297 = vadd.f32 %v1247, 1.0
        %v1298 = vadd.f32 %v1249, 1.0
        %v1299 = vadd.f32 %v1251, 1.0
        %v1300 = vadd.f32 %v1253, 1.0
        %v1301 = vadd.f32 %v1255, 1.0
        %v1302 = vadd.f32 %v1257, 1.0
        %v1303 = vadd.f32 %v1259, 1.0
        %v1304 = vadd.f32 %v1261, 1.0
        %v1305 = vadd.f32 %v1263, 1.0
        %v1306 = vadd.f32 %v1265, 1.0
        %v1307 = vadd.f32 %v1267, 1.0
        %v1308 = vadd.f32 %v1269, 1.0
        %v1309 = vadd.f32 %v1271, 1.0
        %v1310 = vadd.f32 %v1273, 1.0
        %v1311 = vadd.f32 %v1275, 1.0
        %v1312 = vadd.f32 %v1277, 1.0
        %v1313 = vadd.f32 %v1279, 1.0
        %v1314 = vadd.f32 %v1281, 1.0
        %v1315 = vadd.f32 %v1283, 1.0
        %v1316 = vrcp.pop %v1284
        %v1317 = vmul.f32 1.0, %v1316
        %v1318 = vrcp.pop %v1285
        %v1319 = vmul.f32 1.0, %v1318
        %v1320 = vrcp.pop %v1286
        %v1321 = vmul.f32 1.0, %v1320
        %v1322 = vrcp.pop %v1287
        %v1323 = vmul.f32 1.0, %v1322
        %v1324 = vrcp.pop %v1288
        %v1325 = vmul.f32 1.0, %v1324
        %v1326 = vrcp.pop %v1289
        %v1327 = vmul.f32 1.0, %v1326
        %v1328 = vrcp.pop %v1290
        %v1329 = vmul.f32 1.0, %v1328
        %v1330 = vrcp.pop %v1291
        %v1331 = vmul.f32 1.0, %v1330
        %v1332 = vrcp.pop %v1292
        %v1333 = vmul.f32 1.0, %v1332
        %v1334 = vrcp.pop %v1293
        %v1335 = vmul.f32 1.0, %v1334
        %v1336 = vrcp.pop %v1294
        %v1337 = vmul.f32 1.0, %v1336
        %v1338 = vrcp.pop %v1295
        %v1339 = vmul.f32 1.0, %v1338
        %v1340 = vrcp.pop %v1296
        %v1341 = vmul.f32 1.0, %v1340
        %v1342 = vrcp.pop %v1297
        %v1343 = vmul.f32 1.0, %v1342
        %v1344 = vrcp.pop %v1298
        %v1345 = vmul.f32 1.0, %v1344
        %v1346 = vrcp.pop %v1299
        %v1347 = vmul.f32 1.0, %v1346
        %v1348 = vrcp.pop %v1300
        %v1349 = vmul.f32 1.0, %v1348
        %v1350 = vrcp.pop %v1301
        %v1351 = vmul.f32 1.0, %v1350
        %v1352 = vrcp.pop %v1302
        %v1353 = vmul.f32 1.0, %v1352
        %v1354 = vrcp.pop %v1303
        %v1355 = vmul.f32 1.0, %v1354
        %v1356 = vrcp.pop %v1304
        %v1357 = vmul.f32 1.0, %v1356
        %v1358 = vrcp.pop %v1305
        %v1359 = vmul.f32 1.0, %v1358
        %v1360 = vrcp.pop %v1306
        %v1361 = vmul.f32 1.0, %v1360
        %v1362 = vrcp.pop %v1307
        %v1363 = vmul.f32 1.0, %v1362
        %v1364 = vrcp.pop %v1308
        %v1365 = vmul.f32 1.0, %v1364
        %v1366 = vrcp.pop %v1309
        %v1367 = vmul.f32 1.0, %v1366
        %v1368 = vrcp.pop %v1310
        %v1369 = vmul.f32 1.0, %v1368
        %v1370 = vrcp.pop %v1311
        %v1371 = vmul.f32 1.0, %v1370
        %v1372 = vrcp.pop %v1312
        %v1373 = vmul.f32 1.0, %v1372
        %v1374 = vrcp.pop %v1313
        %v1375 = vmul.f32 1.0, %v1374
        %v1376 = vrcp.pop %v1314
        %v1377 = vmul.f32 1.0, %v1376
        %v1378 = vrcp.pop %v1315
        %v1379 = vmul.f32 1.0, %v1378
        %v1380 = vmul.f32 %v1156, %v1317
        %v1381 = vmul.f32 %v1157, %v1319
        %v1382 = vmul.f32 %v1158, %v1321
        %v1383 = vmul.f32 %v1159, %v1323
        %v1384 = vmul.f32 %v1160, %v1325
        %v1385 = vmul.f32 %v1161, %v1327
        %v1386 = vmul.f32 %v1162, %v1329
        %v1387 = vmul.f32 %v1163, %v1331
        %v1388 = vmul.f32 %v1164, %v1333
        %v1389 = vmul.f32 %v1165, %v1335
        %v1390 = vmul.f32 %v1166, %v1337
        %v1391 = vmul.f32 %v1167, %v1339
        %v1392 = vmul.f32 %v1168, %v1341
        %v1393 = vmul.f32 %v1169, %v1343
        %v1394 = vmul.f32 %v1170, %v1345
        %v1395 = vmul.f32 %v1171, %v1347
        %v1396 = vmul.f32 %v1172, %v1349
        %v1397 = vmul.f32 %v1173, %v1351
        %v1398 = vmul.f32 %v1174, %v1353
        %v1399 = vmul.f32 %v1175, %v1355
        %v1400 = vmul.f32 %v1176, %v1357
        %v1401 = vmul.f32 %v1177, %v1359
        %v1402 = vmul.f32 %v1178, %v1361
        %v1403 = vmul.f32 %v1179, %v1363
        %v1404 = vmul.f32 %v1180, %v1365
        %v1405 = vmul.f32 %v1181, %v1367
        %v1406 = vmul.f32 %v1182, %v1369
        %v1407 = vmul.f32 %v1183, %v1371
        %v1408 = vmul.f32 %v1184, %v1373
        %v1409 = vmul.f32 %v1185, %v1375
        %v1410 = vmul.f32 %v1186, %v1377
        %v1411 = vmul.f32 %v1187, %v1379
        %v1412 = vld [vmem:[#allocation9] sm:$0x1]
        %v1413 = vpack.c.bf16 %v1381, %v1380
        %v1414 = vpack.c.bf16 %v1383, %v1382
        %v1415 = vpack.c.bf16 %v1385, %v1384
        %v1416 = vpack.c.bf16 %v1387, %v1386
        %v1417 = vpack.c.bf16 %v1389, %v1388
        %v1418 = vpack.c.bf16 %v1391, %v1390
        %v1419 = vpack.c.bf16 %v1393, %v1392
        %v1420 = vpack.c.bf16 %v1395, %v1394
        %v1421 = vpack.c.bf16 %v1397, %v1396
        %v1422 = vpack.c.bf16 %v1399, %v1398
        %v1423 = vpack.c.bf16 %v1401, %v1400
        %v1424 = vpack.c.bf16 %v1403, %v1402
        %v1425 = vpack.c.bf16 %v1405, %v1404
        %v1426 = vpack.c.bf16 %v1407, %v1406
        %v1427 = vpack.c.bf16 %v1409, %v1408
        %v1428 = vpack.c.bf16 %v1411, %v1410
        %1429 = vst [vmem:[#allocation2] sm:$0xff] %v1413
        %1430 = vst [vmem:[#allocation2 + $0x48] sm:$0xff] %v1414
        %1431 = vst [vmem:[#allocation2 + $0x90] sm:$0xff] %v1415
        %1432 = vst [vmem:[#allocation2 + $0xd8] sm:$0xff] %v1416
        %1433 = vst [vmem:[#allocation2 + $0x120] sm:$0xff] %v1417
        %1434 = vst [vmem:[#allocation2 + $0x168] sm:$0xff] %v1418
        %1435 = vst [vmem:[#allocation2 + $0x1b0] sm:$0xff] %v1419
        %1436 = vst [vmem:[#allocation2 + $0x1f8] sm:$0xff] %v1420
        %1437 = vst [vmem:[#allocation2 + $0x240] sm:$0xff] %v1421
        %1438 = vst [vmem:[#allocation2 + $0x288] sm:$0xff] %v1422
        %1439 = vst [vmem:[#allocation2 + $0x2d0] sm:$0xff] %v1423
        %1440 = vst [vmem:[#allocation2 + $0x318] sm:$0xff] %v1424
        %1441 = vst [vmem:[#allocation2 + $0x360] sm:$0xff] %v1425
        %1442 = vst [vmem:[#allocation2 + $0x3a8] sm:$0xff] %v1426
        %1443 = vst [vmem:[#allocation2 + $0x3f0] sm:$0xff] %v1427
        %1444 = vst [vmem:[#allocation2 + $0x438] sm:$0xff] %v1428
        %vm1477 = vcmask 1046528
        %v1478 = vrot.slane %v1380, 1
        %v1479 = vrot.slane %v1381, 1
        %v1480 = vsel %vm1477, %v1478, %v1479
        %v1481 = vrot.slane %v1382, 1
        %v1482 = vsel %vm1477, %v1479, %v1481
        %v1483 = vrot.slane %v1383, 1
        %v1484 = vsel %vm1477, %v1481, %v1483
        %v1485 = vrot.slane %v1384, 1
        %v1486 = vsel %vm1477, %v1483, %v1485
        %v1487 = vrot.slane %v1385, 1
        %v1488 = vsel %vm1477, %v1485, %v1487
        %v1489 = vrot.slane %v1386, 1
        %v1490 = vsel %vm1477, %v1487, %v1489
        %v1491 = vrot.slane %v1387, 1
        %v1492 = vsel %vm1477, %v1489, %v1491
        %v1493 = vrot.slane %v1388, 1
        %v1494 = vsel %vm1477, %v1491, %v1493
        %v1495 = vrot.slane %v1389, 1
        %v1496 = vsel %vm1477, %v1493, %v1495
        %v1497 = vrot.slane %v1390, 1
        %v1498 = vsel %vm1477, %v1495, %v1497
        %v1499 = vrot.slane %v1391, 1
        %v1500 = vsel %vm1477, %v1497, %v1499
        %v1501 = vrot.slane %v1392, 1
        %v1502 = vsel %vm1477, %v1499, %v1501
        %v1503 = vrot.slane %v1393, 1
        %v1504 = vsel %vm1477, %v1501, %v1503
        %v1505 = vrot.slane %v1394, 1
        %v1506 = vsel %vm1477, %v1503, %v1505
        %v1507 = vrot.slane %v1395, 1
        %v1508 = vsel %vm1477, %v1505, %v1507
        %v1509 = vrot.slane %v1396, 1
        %v1510 = vsel %vm1477, %v1507, %v1509
        %v1511 = vrot.slane %v1397, 1
        %v1512 = vsel %vm1477, %v1509, %v1511
        %v1513 = vrot.slane %v1398, 1
        %v1514 = vsel %vm1477, %v1511, %v1513
        %v1515 = vrot.slane %v1399, 1
        %v1516 = vsel %vm1477, %v1513, %v1515
        %v1517 = vrot.slane %v1400, 1
        %v1518 = vsel %vm1477, %v1515, %v1517
        %v1519 = vrot.slane %v1401, 1
        %v1520 = vsel %vm1477, %v1517, %v1519
        %v1521 = vrot.slane %v1402, 1
        %v1522 = vsel %vm1477, %v1519, %v1521
        %v1523 = vrot.slane %v1403, 1
        %v1524 = vsel %vm1477, %v1521, %v1523
        %v1525 = vrot.slane %v1404, 1
        %v1526 = vsel %vm1477, %v1523, %v1525
        %v1527 = vrot.slane %v1405, 1
        %v1528 = vsel %vm1477, %v1525, %v1527
        %v1529 = vrot.slane %v1406, 1
        %v1530 = vsel %vm1477, %v1527, %v1529
        %v1531 = vrot.slane %v1407, 1
        %v1532 = vsel %vm1477, %v1529, %v1531
        %v1533 = vrot.slane %v1408, 1
        %v1534 = vsel %vm1477, %v1531, %v1533
        %v1535 = vrot.slane %v1409, 1
        %v1536 = vsel %vm1477, %v1533, %v1535
        %v1537 = vrot.slane %v1410, 1
        %v1538 = vsel %vm1477, %v1535, %v1537
        %v1539 = vrot.slane %v1411, 1
        %v1540 = vsel %vm1477, %v1537, %v1539
        %v1574 = vsel %vm1477, %v1539, %v1478
        %v1575 = vpack.c.bf16 %v1482, %v1480
        %v1576 = vpack.c.bf16 %v1486, %v1484
        %v1577 = vpack.c.bf16 %v1490, %v1488
        %v1578 = vpack.c.bf16 %v1494, %v1492
        %v1579 = vpack.c.bf16 %v1498, %v1496
        %v1580 = vpack.c.bf16 %v1502, %v1500
        %v1581 = vpack.c.bf16 %v1506, %v1504
        %v1582 = vpack.c.bf16 %v1510, %v1508
        %v1583 = vpack.c.bf16 %v1514, %v1512
        %v1584 = vpack.c.bf16 %v1518, %v1516
        %v1585 = vpack.c.bf16 %v1522, %v1520
        %v1586 = vpack.c.bf16 %v1526, %v1524
        %v1587 = vpack.c.bf16 %v1530, %v1528
        %v1588 = vpack.c.bf16 %v1534, %v1532
        %v1589 = vpack.c.bf16 %v1538, %v1536
        %v1590 = vpack.c.bf16 %v1574, %v1540
        %1591 = vst [vmem:[#allocation2 + $0x8] sm:$0xff] %v1575
        %1592 = vst [vmem:[#allocation2 + $0x50] sm:$0xff] %v1576
        %1593 = vst [vmem:[#allocation2 + $0x98] sm:$0xff] %v1577
        %1594 = vst [vmem:[#allocation2 + $0xe0] sm:$0xff] %v1578
        %1595 = vst [vmem:[#allocation2 + $0x128] sm:$0xff] %v1579
        %1596 = vst [vmem:[#allocation2 + $0x170] sm:$0xff] %v1580
        %1597 = vst [vmem:[#allocation2 + $0x1b8] sm:$0xff] %v1581
        %1598 = vst [vmem:[#allocation2 + $0x200] sm:$0xff] %v1582
        %1599 = vst [vmem:[#allocation2 + $0x248] sm:$0xff] %v1583
        %1600 = vst [vmem:[#allocation2 + $0x290] sm:$0xff] %v1584
        %1601 = vst [vmem:[#allocation2 + $0x2d8] sm:$0xff] %v1585
        %1602 = vst [vmem:[#allocation2 + $0x320] sm:$0xff] %v1586
        %1603 = vst [vmem:[#allocation2 + $0x368] sm:$0xff] %v1587
        %1604 = vst [vmem:[#allocation2 + $0x3b0] sm:$0xff] %v1588
        %1605 = vst [vmem:[#allocation2 + $0x3f8] sm:$0xff] %v1589
        %1606 = vst [vmem:[#allocation2 + $0x440] sm:$0xff] %v1590
        %vm1607 = vcmask 1045504
        %v1608 = vrot.slane %v1380, 2
        %v1609 = vrot.slane %v1381, 2
        %v1610 = vsel %vm1607, %v1608, %v1609
        %v1611 = vrot.slane %v1382, 2
        %v1612 = vsel %vm1607, %v1609, %v1611
        %v1613 = vrot.slane %v1383, 2
        %v1614 = vsel %vm1607, %v1611, %v1613
        %v1615 = vrot.slane %v1384, 2
        %v1616 = vsel %vm1607, %v1613, %v1615
        %v1617 = vrot.slane %v1385, 2
        %v1618 = vsel %vm1607, %v1615, %v1617
        %v1619 = vrot.slane %v1386, 2
        %v1620 = vsel %vm1607, %v1617, %v1619
        %v1621 = vrot.slane %v1387, 2
        %v1622 = vsel %vm1607, %v1619, %v1621
        %v1623 = vrot.slane %v1388, 2
        %v1624 = vsel %vm1607, %v1621, %v1623
        %v1625 = vrot.slane %v1389, 2
        %v1626 = vsel %vm1607, %v1623, %v1625
        %v1627 = vrot.slane %v1390, 2
        %v1628 = vsel %vm1607, %v1625, %v1627
        %v1629 = vrot.slane %v1391, 2
        %v1630 = vsel %vm1607, %v1627, %v1629
        %v1631 = vrot.slane %v1392, 2
        %v1632 = vsel %vm1607, %v1629, %v1631
        %v1633 = vrot.slane %v1393, 2
        %v1634 = vsel %vm1607, %v1631, %v1633
        %v1635 = vrot.slane %v1394, 2
        %v1636 = vsel %vm1607, %v1633, %v1635
        %v1637 = vrot.slane %v1395, 2
        %v1638 = vsel %vm1607, %v1635, %v1637
        %v1639 = vrot.slane %v1396, 2
        %v1640 = vsel %vm1607, %v1637, %v1639
        %v1641 = vrot.slane %v1397, 2
        %v1642 = vsel %vm1607, %v1639, %v1641
        %v1643 = vrot.slane %v1398, 2
        %v1644 = vsel %vm1607, %v1641, %v1643
        %v1645 = vrot.slane %v1399, 2
        %v1646 = vsel %vm1607, %v1643, %v1645
        %v1647 = vrot.slane %v1400, 2
        %v1648 = vsel %vm1607, %v1645, %v1647
        %v1649 = vrot.slane %v1401, 2
        %v1650 = vsel %vm1607, %v1647, %v1649
        %v1651 = vrot.slane %v1402, 2
        %v1652 = vsel %vm1607, %v1649, %v1651
        %v1653 = vrot.slane %v1403, 2
        %v1654 = vsel %vm1607, %v1651, %v1653
        %v1655 = vrot.slane %v1404, 2
        %v1656 = vsel %vm1607, %v1653, %v1655
        %v1657 = vrot.slane %v1405, 2
        %v1658 = vsel %vm1607, %v1655, %v1657
        %v1659 = vrot.slane %v1406, 2
        %v1660 = vsel %vm1607, %v1657, %v1659
        %v1661 = vrot.slane %v1407, 2
        %v1662 = vsel %vm1607, %v1659, %v1661
        %v1663 = vrot.slane %v1408, 2
        %v1664 = vsel %vm1607, %v1661, %v1663
        %v1665 = vrot.slane %v1409, 2
        %v1666 = vsel %vm1607, %v1663, %v1665
        %v1667 = vrot.slane %v1410, 2
        %v1668 = vsel %vm1607, %v1665, %v1667
        %v1669 = vrot.slane %v1411, 2
        %v1670 = vsel %vm1607, %v1667, %v1669
        %v1704 = vsel %vm1607, %v1669, %v1608
        %v1705 = vpack.c.bf16 %v1612, %v1610
        %v1706 = vpack.c.bf16 %v1616, %v1614
        %v1707 = vpack.c.bf16 %v1620, %v1618
        %v1708 = vpack.c.bf16 %v1624, %v1622
        %v1709 = vpack.c.bf16 %v1628, %v1626
        %v1710 = vpack.c.bf16 %v1632, %v1630
        %v1711 = vpack.c.bf16 %v1636, %v1634
        %v1712 = vpack.c.bf16 %v1640, %v1638
        %v1713 = vpack.c.bf16 %v1644, %v1642
        %v1714 = vpack.c.bf16 %v1648, %v1646
        %v1715 = vpack.c.bf16 %v1652, %v1650
        %v1716 = vpack.c.bf16 %v1656, %v1654
        %v1717 = vpack.c.bf16 %v1660, %v1658
        %v1718 = vpack.c.bf16 %v1664, %v1662
        %v1719 = vpack.c.bf16 %v1668, %v1666
        %v1720 = vpack.c.bf16 %v1704, %v1670
        %1721 = vst [vmem:[#allocation2 + $0x10] sm:$0xff] %v1705
        %1722 = vst [vmem:[#allocation2 + $0x58] sm:$0xff] %v1706
        %1723 = vst [vmem:[#allocation2 + $0xa0] sm:$0xff] %v1707
        %1724 = vst [vmem:[#allocation2 + $0xe8] sm:$0xff] %v1708
        %1725 = vst [vmem:[#allocation2 + $0x130] sm:$0xff] %v1709
        %1726 = vst [vmem:[#allocation2 + $0x178] sm:$0xff] %v1710
        %1727 = vst [vmem:[#allocation2 + $0x1c0] sm:$0xff] %v1711
        %1728 = vst [vmem:[#allocation2 + $0x208] sm:$0xff] %v1712
        %1729 = vst [vmem:[#allocation2 + $0x250] sm:$0xff] %v1713
        %1730 = vst [vmem:[#allocation2 + $0x298] sm:$0xff] %v1714
        %1731 = vst [vmem:[#allocation2 + $0x2e0] sm:$0xff] %v1715
        %1732 = vst [vmem:[#allocation2 + $0x328] sm:$0xff] %v1716
        %1733 = vst [vmem:[#allocation2 + $0x370] sm:$0xff] %v1717
        %1734 = vst [vmem:[#allocation2 + $0x3b8] sm:$0xff] %v1718
        %1735 = vst [vmem:[#allocation2 + $0x400] sm:$0xff] %v1719
        %1736 = vst [vmem:[#allocation2 + $0x448] sm:$0xff] %v1720
        %1737 = vst [vmem:[#allocation2 + $0x18] sm:$0xff] %v1414
        %1738 = vst [vmem:[#allocation2 + $0x60] sm:$0xff] %v1415
        %1739 = vst [vmem:[#allocation2 + $0xa8] sm:$0xff] %v1416
        %1740 = vst [vmem:[#allocation2 + $0xf0] sm:$0xff] %v1417
        %1741 = vst [vmem:[#allocation2 + $0x138] sm:$0xff] %v1418
        %1742 = vst [vmem:[#allocation2 + $0x180] sm:$0xff] %v1419
        %1743 = vst [vmem:[#allocation2 + $0x1c8] sm:$0xff] %v1420
        %1744 = vst [vmem:[#allocation2 + $0x210] sm:$0xff] %v1421
        %1745 = vst [vmem:[#allocation2 + $0x258] sm:$0xff] %v1422
        %1746 = vst [vmem:[#allocation2 + $0x2a0] sm:$0xff] %v1423
        %1747 = vst [vmem:[#allocation2 + $0x2e8] sm:$0xff] %v1424
        %1748 = vst [vmem:[#allocation2 + $0x330] sm:$0xff] %v1425
        %1749 = vst [vmem:[#allocation2 + $0x378] sm:$0xff] %v1426
        %1750 = vst [vmem:[#allocation2 + $0x3c0] sm:$0xff] %v1427
        %1751 = vst [vmem:[#allocation2 + $0x408] sm:$0xff] %v1428
        %1752 = vst [vmem:[#allocation2 + $0x450] sm:$0xff] %v1413
        %1753 = vst [vmem:[#allocation2 + $0x20] sm:$0xff] %v1576
        %1754 = vst [vmem:[#allocation2 + $0x68] sm:$0xff] %v1577
        %1755 = vst [vmem:[#allocation2 + $0xb0] sm:$0xff] %v1578
        %1756 = vst [vmem:[#allocation2 + $0xf8] sm:$0xff] %v1579
        %1757 = vst [vmem:[#allocation2 + $0x140] sm:$0xff] %v1580
        %1758 = vst [vmem:[#allocation2 + $0x188] sm:$0xff] %v1581
        %1759 = vst [vmem:[#allocation2 + $0x1d0] sm:$0xff] %v1582
        %1760 = vst [vmem:[#allocation2 + $0x218] sm:$0xff] %v1583
        %1761 = vst [vmem:[#allocation2 + $0x260] sm:$0xff] %v1584
        %1762 = vst [vmem:[#allocation2 + $0x2a8] sm:$0xff] %v1585
        %1763 = vst [vmem:[#allocation2 + $0x2f0] sm:$0xff] %v1586
        %1764 = vst [vmem:[#allocation2 + $0x338] sm:$0xff] %v1587
        %1765 = vst [vmem:[#allocation2 + $0x380] sm:$0xff] %v1588
        %1766 = vst [vmem:[#allocation2 + $0x3c8] sm:$0xff] %v1589
        %1767 = vst [vmem:[#allocation2 + $0x410] sm:$0xff] %v1590
        %1768 = vst [vmem:[#allocation2 + $0x458] sm:$0xff] %v1575
        %1769 = vst [vmem:[#allocation2 + $0x28] sm:$0xff] %v1706
        %1770 = vst [vmem:[#allocation2 + $0x70] sm:$0xff] %v1707
        %1771 = vst [vmem:[#allocation2 + $0xb8] sm:$0xff] %v1708
        %1772 = vst [vmem:[#allocation2 + $0x100] sm:$0xff] %v1709
        %1773 = vst [vmem:[#allocation2 + $0x148] sm:$0xff] %v1710
        %1774 = vst [vmem:[#allocation2 + $0x190] sm:$0xff] %v1711
        %1775 = vst [vmem:[#allocation2 + $0x1d8] sm:$0xff] %v1712
        %1776 = vst [vmem:[#allocation2 + $0x220] sm:$0xff] %v1713
        %1777 = vst [vmem:[#allocation2 + $0x268] sm:$0xff] %v1714
        %1778 = vst [vmem:[#allocation2 + $0x2b0] sm:$0xff] %v1715
        %1779 = vst [vmem:[#allocation2 + $0x2f8] sm:$0xff] %v1716
        %1780 = vst [vmem:[#allocation2 + $0x340] sm:$0xff] %v1717
        %1781 = vst [vmem:[#allocation2 + $0x388] sm:$0xff] %v1718
        %1782 = vst [vmem:[#allocation2 + $0x3d0] sm:$0xff] %v1719
        %1783 = vst [vmem:[#allocation2 + $0x418] sm:$0xff] %v1720
        %1784 = vst [vmem:[#allocation2 + $0x460] sm:$0xff] %v1705
        %1785 = vst [vmem:[#allocation2 + $0x30] sm:$0xff] %v1415
        %1786 = vst [vmem:[#allocation2 + $0x78] sm:$0xff] %v1416
        %1787 = vst [vmem:[#allocation2 + $0xc0] sm:$0xff] %v1417
        %1788 = vst [vmem:[#allocation2 + $0x108] sm:$0xff] %v1418
        %1789 = vst [vmem:[#allocation2 + $0x150] sm:$0xff] %v1419
        %1790 = vst [vmem:[#allocation2 + $0x198] sm:$0xff] %v1420
        %1791 = vst [vmem:[#allocation2 + $0x1e0] sm:$0xff] %v1421
        %1792 = vst [vmem:[#allocation2 + $0x228] sm:$0xff] %v1422
        %1793 = vst [vmem:[#allocation2 + $0x270] sm:$0xff] %v1423
        %1794 = vst [vmem:[#allocation2 + $0x2b8] sm:$0xff] %v1424
        %1795 = vst [vmem:[#allocation2 + $0x300] sm:$0xff] %v1425
        %1796 = vst [vmem:[#allocation2 + $0x348] sm:$0xff] %v1426
        %1797 = vst [vmem:[#allocation2 + $0x390] sm:$0xff] %v1427
        %1798 = vst [vmem:[#allocation2 + $0x3d8] sm:$0xff] %v1428
        %1799 = vst [vmem:[#allocation2 + $0x420] sm:$0xff] %v1413
        %1800 = vst [vmem:[#allocation2 + $0x468] sm:$0xff] %v1414
        %1801 = vst [vmem:[#allocation2 + $0x38] sm:$0xff] %v1577
        %1802 = vst [vmem:[#allocation2 + $0x80] sm:$0xff] %v1578
        %1803 = vst [vmem:[#allocation2 + $0xc8] sm:$0xff] %v1579
        %1804 = vst [vmem:[#allocation2 + $0x110] sm:$0xff] %v1580
        %1805 = vst [vmem:[#allocation2 + $0x158] sm:$0xff] %v1581
        %1806 = vst [vmem:[#allocation2 + $0x1a0] sm:$0xff] %v1582
        %1807 = vst [vmem:[#allocation2 + $0x1e8] sm:$0xff] %v1583
        %1808 = vst [vmem:[#allocation2 + $0x230] sm:$0xff] %v1584
        %1809 = vst [vmem:[#allocation2 + $0x278] sm:$0xff] %v1585
        %1810 = vst [vmem:[#allocation2 + $0x2c0] sm:$0xff] %v1586
        %1811 = vst [vmem:[#allocation2 + $0x308] sm:$0xff] %v1587
        %1812 = vst [vmem:[#allocation2 + $0x350] sm:$0xff] %v1588
        %1813 = vst [vmem:[#allocation2 + $0x398] sm:$0xff] %v1589
        %1814 = vst [vmem:[#allocation2 + $0x3e0] sm:$0xff] %v1590
        %1815 = vst [vmem:[#allocation2 + $0x428] sm:$0xff] %v1575
        %1816 = vst [vmem:[#allocation2 + $0x470] sm:$0xff] %v1576
        %1817 = vst [vmem:[#allocation2 + $0x40] sm:$0xff] %v1707
        %1818 = vst [vmem:[#allocation2 + $0x88] sm:$0xff] %v1708
        %1819 = vst [vmem:[#allocation2 + $0xd0] sm:$0xff] %v1709
        %1820 = vst [vmem:[#allocation2 + $0x118] sm:$0xff] %v1710
        %1821 = vst [vmem:[#allocation2 + $0x160] sm:$0xff] %v1711
        %1822 = vst [vmem:[#allocation2 + $0x1a8] sm:$0xff] %v1712
        %1823 = vst [vmem:[#allocation2 + $0x1f0] sm:$0xff] %v1713
        %1824 = vst [vmem:[#allocation2 + $0x238] sm:$0xff] %v1714
        %1825 = vst [vmem:[#allocation2 + $0x280] sm:$0xff] %v1715
        %1826 = vst [vmem:[#allocation2 + $0x2c8] sm:$0xff] %v1716
        %1827 = vst [vmem:[#allocation2 + $0x310] sm:$0xff] %v1717
        %1828 = vst [vmem:[#allocation2 + $0x358] sm:$0xff] %v1718
        %1829 = vst [vmem:[#allocation2 + $0x3a0] sm:$0xff] %v1719
        %1830 = vst [vmem:[#allocation2 + $0x3e8] sm:$0xff] %v1720
        %1831 = vst [vmem:[#allocation2 + $0x430] sm:$0xff] %v1705
        %1832 = vst [vmem:[#allocation2 + $0x478] sm:$0xff] %v1706
        %v1833 = vld [vmem:[#allocation2] sm:$0xff]
        %v1834 = vld [vmem:[#allocation2 + $0x8] sm:$0xff]
        %v1835 = vld [vmem:[#allocation2 + $0x10] sm:$0xff]
        %v1836 = vld [vmem:[#allocation2 + $0x18] sm:$0xff]
        %v1837 = vld [vmem:[#allocation2 + $0x20] sm:$0xff]
        %v1838 = vld [vmem:[#allocation2 + $0x28] sm:$0xff]
        %v1839 = vld [vmem:[#allocation2 + $0x30] sm:$0xff]
        %v1840 = vld [vmem:[#allocation2 + $0x38] sm:$0xff]
        %v1841 = vld [vmem:[#allocation2 + $0x40] sm:$0xff]
        %v1842 = vld [vmem:[#allocation2 + $0x48] sm:$0xff]
        %v1843 = vld [vmem:[#allocation2 + $0x50] sm:$0xff]
        %v1844 = vld [vmem:[#allocation2 + $0x58] sm:$0xff]
        %v1845 = vld [vmem:[#allocation2 + $0x60] sm:$0xff]
        %v1846 = vld [vmem:[#allocation2 + $0x68] sm:$0xff]
        %v1847 = vld [vmem:[#allocation2 + $0x70] sm:$0xff]
        %v1848 = vld [vmem:[#allocation2 + $0x78] sm:$0xff]
        %v1849 = vld [vmem:[#allocation2 + $0x80] sm:$0xff]
        %v1850 = vld [vmem:[#allocation2 + $0x88] sm:$0xff]
        %v1851 = vld [vmem:[#allocation2 + $0x90] sm:$0xff]
        %v1852 = vld [vmem:[#allocation2 + $0x98] sm:$0xff]
        %v1853 = vld [vmem:[#allocation2 + $0xa0] sm:$0xff]
        %v1854 = vld [vmem:[#allocation2 + $0xa8] sm:$0xff]
        %v1855 = vld [vmem:[#allocation2 + $0xb0] sm:$0xff]
        %v1856 = vld [vmem:[#allocation2 + $0xb8] sm:$0xff]
        %v1857 = vld [vmem:[#allocation2 + $0xc0] sm:$0xff]
        %v1858 = vld [vmem:[#allocation2 + $0xc8] sm:$0xff]
        %v1859 = vld [vmem:[#allocation2 + $0xd0] sm:$0xff]
        %v1860 = vld [vmem:[#allocation2 + $0xd8] sm:$0xff]
        %v1861 = vld [vmem:[#allocation2 + $0xe0] sm:$0xff]
        %v1862 = vld [vmem:[#allocation2 + $0xe8] sm:$0xff]
        %v1863 = vld [vmem:[#allocation2 + $0xf0] sm:$0xff]
        %v1864 = vld [vmem:[#allocation2 + $0xf8] sm:$0xff]
        %v1865 = vld [vmem:[#allocation2 + $0x100] sm:$0xff]
        %v1866 = vld [vmem:[#allocation2 + $0x108] sm:$0xff]
        %v1867 = vld [vmem:[#allocation2 + $0x110] sm:$0xff]
        %v1868 = vld [vmem:[#allocation2 + $0x118] sm:$0xff]
        %v1869 = vld [vmem:[#allocation2 + $0x120] sm:$0xff]
        %v1870 = vld [vmem:[#allocation2 + $0x128] sm:$0xff]
        %v1871 = vld [vmem:[#allocation2 + $0x130] sm:$0xff]
        %v1872 = vld [vmem:[#allocation2 + $0x138] sm:$0xff]
        %v1873 = vld [vmem:[#allocation2 + $0x140] sm:$0xff]
        %v1874 = vld [vmem:[#allocation2 + $0x148] sm:$0xff]
        %v1875 = vld [vmem:[#allocation2 + $0x150] sm:$0xff]
        %v1876 = vld [vmem:[#allocation2 + $0x158] sm:$0xff]
        %v1877 = vld [vmem:[#allocation2 + $0x160] sm:$0xff]
        %v1878 = vld [vmem:[#allocation2 + $0x168] sm:$0xff]
        %v1879 = vld [vmem:[#allocation2 + $0x170] sm:$0xff]
        %v1880 = vld [vmem:[#allocation2 + $0x178] sm:$0xff]
        %v1881 = vld [vmem:[#allocation2 + $0x180] sm:$0xff]
        %v1882 = vld [vmem:[#allocation2 + $0x188] sm:$0xff]
        %v1883 = vld [vmem:[#allocation2 + $0x190] sm:$0xff]
        %v1884 = vld [vmem:[#allocation2 + $0x198] sm:$0xff]
        %v1885 = vld [vmem:[#allocation2 + $0x1a0] sm:$0xff]
        %v1886 = vld [vmem:[#allocation2 + $0x1a8] sm:$0xff]
        %v1887 = vld [vmem:[#allocation2 + $0x1b0] sm:$0xff]
        %v1888 = vld [vmem:[#allocation2 + $0x1b8] sm:$0xff]
        %v1889 = vld [vmem:[#allocation2 + $0x1c0] sm:$0xff]
        %v1890 = vld [vmem:[#allocation2 + $0x1c8] sm:$0xff]
        %v1891 = vld [vmem:[#allocation2 + $0x1d0] sm:$0xff]
        %v1892 = vld [vmem:[#allocation2 + $0x1d8] sm:$0xff]
        %v1893 = vld [vmem:[#allocation2 + $0x1e0] sm:$0xff]
        %v1894 = vld [vmem:[#allocation2 + $0x1e8] sm:$0xff]
        %v1895 = vld [vmem:[#allocation2 + $0x1f0] sm:$0xff]
        %v1896 = vld [vmem:[#allocation2 + $0x1f8] sm:$0xff]
        %v1897 = vld [vmem:[#allocation2 + $0x200] sm:$0xff]
        %v1898 = vld [vmem:[#allocation2 + $0x208] sm:$0xff]
        %v1899 = vld [vmem:[#allocation2 + $0x210] sm:$0xff]
        %v1900 = vld [vmem:[#allocation2 + $0x218] sm:$0xff]
        %v1901 = vld [vmem:[#allocation2 + $0x220] sm:$0xff]
        %v1902 = vld [vmem:[#allocation2 + $0x228] sm:$0xff]
        %v1903 = vld [vmem:[#allocation2 + $0x230] sm:$0xff]
        %v1904 = vld [vmem:[#allocation2 + $0x238] sm:$0xff]
        %v1905 = vld [vmem:[#allocation2 + $0x240] sm:$0xff]
        %v1906 = vld [vmem:[#allocation2 + $0x248] sm:$0xff]
        %v1907 = vld [vmem:[#allocation2 + $0x250] sm:$0xff]
        %v1908 = vld [vmem:[#allocation2 + $0x258] sm:$0xff]
        %v1909 = vld [vmem:[#allocation2 + $0x260] sm:$0xff]
        %v1910 = vld [vmem:[#allocation2 + $0x268] sm:$0xff]
        %v1911 = vld [vmem:[#allocation2 + $0x270] sm:$0xff]
        %v1912 = vld [vmem:[#allocation2 + $0x278] sm:$0xff]
        %v1913 = vld [vmem:[#allocation2 + $0x280] sm:$0xff]
        %v1914 = vld [vmem:[#allocation2 + $0x288] sm:$0xff]
        %v1915 = vld [vmem:[#allocation2 + $0x290] sm:$0xff]
        %v1916 = vld [vmem:[#allocation2 + $0x298] sm:$0xff]
        %v1917 = vld [vmem:[#allocation2 + $0x2a0] sm:$0xff]
        %v1918 = vld [vmem:[#allocation2 + $0x2a8] sm:$0xff]
        %v1919 = vld [vmem:[#allocation2 + $0x2b0] sm:$0xff]
        %v1920 = vld [vmem:[#allocation2 + $0x2b8] sm:$0xff]
        %v1921 = vld [vmem:[#allocation2 + $0x2c0] sm:$0xff]
        %v1922 = vld [vmem:[#allocation2 + $0x2c8] sm:$0xff]
        %v1923 = vld [vmem:[#allocation2 + $0x2d0] sm:$0xff]
        %v1924 = vld [vmem:[#allocation2 + $0x2d8] sm:$0xff]
        %v1925 = vld [vmem:[#allocation2 + $0x2e0] sm:$0xff]
        %v1926 = vld [vmem:[#allocation2 + $0x2e8] sm:$0xff]
        %v1927 = vld [vmem:[#allocation2 + $0x2f0] sm:$0xff]
        %v1928 = vld [vmem:[#allocation2 + $0x2f8] sm:$0xff]
        %v1929 = vld [vmem:[#allocation2 + $0x300] sm:$0xff]
        %v1930 = vld [vmem:[#allocation2 + $0x308] sm:$0xff]
        %v1931 = vld [vmem:[#allocation2 + $0x310] sm:$0xff]
        %v1932 = vld [vmem:[#allocation2 + $0x318] sm:$0xff]
        %v1933 = vld [vmem:[#allocation2 + $0x320] sm:$0xff]
        %v1934 = vld [vmem:[#allocation2 + $0x328] sm:$0xff]
        %v1935 = vld [vmem:[#allocation2 + $0x330] sm:$0xff]
        %v1936 = vld [vmem:[#allocation2 + $0x338] sm:$0xff]
        %v1937 = vld [vmem:[#allocation2 + $0x340] sm:$0xff]
        %v1938 = vld [vmem:[#allocation2 + $0x348] sm:$0xff]
        %v1939 = vld [vmem:[#allocation2 + $0x350] sm:$0xff]
        %v1940 = vld [vmem:[#allocation2 + $0x358] sm:$0xff]
        %v1941 = vld [vmem:[#allocation2 + $0x360] sm:$0xff]
        %v1942 = vld [vmem:[#allocation2 + $0x368] sm:$0xff]
        %v1943 = vld [vmem:[#allocation2 + $0x370] sm:$0xff]
        %v1944 = vld [vmem:[#allocation2 + $0x378] sm:$0xff]
        %v1945 = vld [vmem:[#allocation2 + $0x380] sm:$0xff]
        %v1946 = vld [vmem:[#allocation2 + $0x388] sm:$0xff]
        %v1947 = vld [vmem:[#allocation2 + $0x390] sm:$0xff]
        %v1948 = vld [vmem:[#allocation2 + $0x398] sm:$0xff]
        %v1949 = vld [vmem:[#allocation2 + $0x3a0] sm:$0xff]
        %v1950 = vld [vmem:[#allocation2 + $0x3a8] sm:$0xff]
        %v1951 = vld [vmem:[#allocation2 + $0x3b0] sm:$0xff]
        %v1952 = vld [vmem:[#allocation2 + $0x3b8] sm:$0xff]
        %v1953 = vld [vmem:[#allocation2 + $0x3c0] sm:$0xff]
        %v1954 = vld [vmem:[#allocation2 + $0x3c8] sm:$0xff]
        %v1955 = vld [vmem:[#allocation2 + $0x3d0] sm:$0xff]
        %v1956 = vld [vmem:[#allocation2 + $0x3d8] sm:$0xff]
        %v1957 = vld [vmem:[#allocation2 + $0x3e0] sm:$0xff]
        %v1958 = vld [vmem:[#allocation2 + $0x3e8] sm:$0xff]
        %v1959 = vld [vmem:[#allocation2 + $0x3f0] sm:$0xff]
        %v1960 = vld [vmem:[#allocation2 + $0x3f8] sm:$0xff]
        %v1961 = vld [vmem:[#allocation2 + $0x400] sm:$0xff]
        %v1962 = vld [vmem:[#allocation2 + $0x408] sm:$0xff]
        %v1963 = vld [vmem:[#allocation2 + $0x410] sm:$0xff]
        %v1964 = vld [vmem:[#allocation2 + $0x418] sm:$0xff]
        %v1965 = vld [vmem:[#allocation2 + $0x420] sm:$0xff]
        %v1966 = vld [vmem:[#allocation2 + $0x428] sm:$0xff]
        %v1967 = vld [vmem:[#allocation2 + $0x430] sm:$0xff]
        %v1968 = vld [vmem:[#allocation2 + $0x438] sm:$0xff]
        %v1969 = vld [vmem:[#allocation2 + $0x440] sm:$0xff]
        %v1970 = vld [vmem:[#allocation2 + $0x448] sm:$0xff]
        %v1971 = vld [vmem:[#allocation2 + $0x450] sm:$0xff]
        %v1972 = vld [vmem:[#allocation2 + $0x458] sm:$0xff]
        %v1973 = vld [vmem:[#allocation2 + $0x460] sm:$0xff]
        %v1974 = vld [vmem:[#allocation2 + $0x468] sm:$0xff]
        %v1975 = vld [vmem:[#allocation2 + $0x470] sm:$0xff]
        %v1976 = vld [vmem:[#allocation2 + $0x478] sm:$0xff]
        %v1977 = vld [vmem:[%s5] sm:$0xf]
        %v1978 = vld [vmem:[%s5 + $0x4] sm:$0xf]
        %v1979 = vld [vmem:[%s5 + $0x8] sm:$0xf]
        %v1980 = vld [vmem:[%s5 + $0xc] sm:$0xf]
        %v1981 = vld [vmem:[%s5 + $0x10] sm:$0xf]
        %v1982 = vld [vmem:[%s5 + $0x14] sm:$0xf]
        %v1983 = vld [vmem:[%s5 + $0x18] sm:$0xf]
        %v1984 = vld [vmem:[%s5 + $0x1c] sm:$0xf]
        %v1985 = vld [vmem:[%s5 + $0x20] sm:$0xf]
        %v1986 = vld [vmem:[%s5 + $0x24] sm:$0xf]
        %v1987 = vld [vmem:[%s5 + $0x28] sm:$0xf]
        %v1988 = vld [vmem:[%s5 + $0x2c] sm:$0xf]
        %v1989 = vld [vmem:[%s5 + $0x30] sm:$0xf]
        %v1990 = vld [vmem:[%s5 + $0x34] sm:$0xf]
        %v1991 = vld [vmem:[%s5 + $0x38] sm:$0xf]
        %v1992 = vld [vmem:[%s5 + $0x3c] sm:$0xf]
        %v1993 = vld [vmem:[%s5 + $0x40] sm:$0xf]
        %v1994 = vld [vmem:[%s5 + $0x44] sm:$0xf]
        %v1995 = vld [vmem:[%s5 + $0x48] sm:$0xf]
        %v1996 = vld [vmem:[%s5 + $0x4c] sm:$0xf]
        %v1997 = vld [vmem:[%s5 + $0x50] sm:$0xf]
        %v1998 = vld [vmem:[%s5 + $0x54] sm:$0xf]
        %v1999 = vld [vmem:[%s5 + $0x58] sm:$0xf]
        %v2000 = vld [vmem:[%s5 + $0x5c] sm:$0xf]
        %v2001 = vld [vmem:[%s5 + $0x60] sm:$0xf]
        %v2002 = vld [vmem:[%s5 + $0x64] sm:$0xf]
        %v2003 = vld [vmem:[%s5 + $0x68] sm:$0xf]
        %v2004 = vld [vmem:[%s5 + $0x6c] sm:$0xf]
        %v2005 = vld [vmem:[%s5 + $0x70] sm:$0xf]
        %v2006 = vld [vmem:[%s5 + $0x74] sm:$0xf]
        %v2007 = vld [vmem:[%s5 + $0x78] sm:$0xf]
        %v2008 = vld [vmem:[%s5 + $0x7c] sm:$0xf]
        %v2009 = vld [vmem:[%s5 + $0x80] sm:$0xf]
        %v2010 = vld [vmem:[%s5 + $0x84] sm:$0xf]
        %v2011 = vld [vmem:[%s5 + $0x88] sm:$0xf]
        %v2012 = vld [vmem:[%s5 + $0x8c] sm:$0xf]
        %v2013 = vld [vmem:[%s5 + $0x90] sm:$0xf]
        %v2014 = vld [vmem:[%s5 + $0x94] sm:$0xf]
        %v2015 = vld [vmem:[%s5 + $0x98] sm:$0xf]
        %v2016 = vld [vmem:[%s5 + $0x9c] sm:$0xf]
        %v2017 = vld [vmem:[%s5 + $0xa0] sm:$0xf]
        %v2018 = vld [vmem:[%s5 + $0xa4] sm:$0xf]
        %v2019 = vld [vmem:[%s5 + $0xa8] sm:$0xf]
        %v2020 = vld [vmem:[%s5 + $0xac] sm:$0xf]
        %v2021 = vld [vmem:[%s5 + $0xb0] sm:$0xf]
        %v2022 = vld [vmem:[%s5 + $0xb4] sm:$0xf]
        %v2023 = vld [vmem:[%s5 + $0xb8] sm:$0xf]
        %v2024 = vld [vmem:[%s5 + $0xbc] sm:$0xf]
        %v2025 = vld [vmem:[%s5 + $0xc0] sm:$0xf]
        %v2026 = vld [vmem:[%s5 + $0xc4] sm:$0xf]
        %v2027 = vld [vmem:[%s5 + $0xc8] sm:$0xf]
        %v2028 = vld [vmem:[%s5 + $0xcc] sm:$0xf]
        %v2029 = vld [vmem:[%s5 + $0xd0] sm:$0xf]
        %v2030 = vld [vmem:[%s5 + $0xd4] sm:$0xf]
        %v2031 = vld [vmem:[%s5 + $0xd8] sm:$0xf]
        %v2032 = vld [vmem:[%s5 + $0xdc] sm:$0xf]
        %v2033 = vld [vmem:[%s5 + $0xe0] sm:$0xf]
        %v2034 = vld [vmem:[%s5 + $0xe4] sm:$0xf]
        %v2035 = vld [vmem:[%s5 + $0xe8] sm:$0xf]
        %v2036 = vld [vmem:[%s5 + $0xec] sm:$0xf]
        %v2037 = vld [vmem:[%s5 + $0xf0] sm:$0xf]
        %v2038 = vld [vmem:[%s5 + $0xf4] sm:$0xf]
        %v2039 = vld [vmem:[%s5 + $0xf8] sm:$0xf]
        %v2040 = vld [vmem:[%s5 + $0xfc] sm:$0xf]
        %v2041 = vld [vmem:[%s5 + $0x100] sm:$0xf]
        %v2042 = vld [vmem:[%s5 + $0x104] sm:$0xf]
        %v2043 = vld [vmem:[%s5 + $0x108] sm:$0xf]
        %v2044 = vld [vmem:[%s5 + $0x10c] sm:$0xf]
        %v2045 = vld [vmem:[%s5 + $0x110] sm:$0xf]
        %v2046 = vld [vmem:[%s5 + $0x114] sm:$0xf]
        %v2047 = vld [vmem:[%s5 + $0x118] sm:$0xf]
        %v2048 = vld [vmem:[%s5 + $0x11c] sm:$0xf]
        %v2049 = vld [vmem:[%s5 + $0x120] sm:$0xf]
        %v2050 = vld [vmem:[%s5 + $0x124] sm:$0xf]
        %v2051 = vld [vmem:[%s5 + $0x128] sm:$0xf]
        %v2052 = vld [vmem:[%s5 + $0x12c] sm:$0xf]
        %v2053 = vld [vmem:[%s5 + $0x130] sm:$0xf]
        %v2054 = vld [vmem:[%s5 + $0x134] sm:$0xf]
        %v2055 = vld [vmem:[%s5 + $0x138] sm:$0xf]
        %v2056 = vld [vmem:[%s5 + $0x13c] sm:$0xf]
        %v2057 = vld [vmem:[%s5 + $0x140] sm:$0xf]
        %v2058 = vld [vmem:[%s5 + $0x144] sm:$0xf]
        %v2059 = vld [vmem:[%s5 + $0x148] sm:$0xf]
        %v2060 = vld [vmem:[%s5 + $0x14c] sm:$0xf]
        %v2061 = vld [vmem:[%s5 + $0x150] sm:$0xf]
        %v2062 = vld [vmem:[%s5 + $0x154] sm:$0xf]
        %v2063 = vld [vmem:[%s5 + $0x158] sm:$0xf]
        %v2064 = vld [vmem:[%s5 + $0x15c] sm:$0xf]
        %v2065 = vld [vmem:[%s5 + $0x160] sm:$0xf]
        %v2066 = vld [vmem:[%s5 + $0x164] sm:$0xf]
        %v2067 = vld [vmem:[%s5 + $0x168] sm:$0xf]
        %v2068 = vld [vmem:[%s5 + $0x16c] sm:$0xf]
        %v2069 = vld [vmem:[%s5 + $0x170] sm:$0xf]
        %v2070 = vld [vmem:[%s5 + $0x174] sm:$0xf]
        %v2071 = vld [vmem:[%s5 + $0x178] sm:$0xf]
        %v2072 = vld [vmem:[%s5 + $0x17c] sm:$0xf]
        %v2073 = vld [vmem:[%s5 + $0x180] sm:$0xf]
        %v2074 = vld [vmem:[%s5 + $0x184] sm:$0xf]
        %v2075 = vld [vmem:[%s5 + $0x188] sm:$0xf]
        %v2076 = vld [vmem:[%s5 + $0x18c] sm:$0xf]
        %v2077 = vld [vmem:[%s5 + $0x190] sm:$0xf]
        %v2078 = vld [vmem:[%s5 + $0x194] sm:$0xf]
        %v2079 = vld [vmem:[%s5 + $0x198] sm:$0xf]
        %v2080 = vld [vmem:[%s5 + $0x19c] sm:$0xf]
        %v2081 = vld [vmem:[%s5 + $0x1a0] sm:$0xf]
        %v2082 = vld [vmem:[%s5 + $0x1a4] sm:$0xf]
        %v2083 = vld [vmem:[%s5 + $0x1a8] sm:$0xf]
        %v2084 = vld [vmem:[%s5 + $0x1ac] sm:$0xf]
        %v2085 = vld [vmem:[%s5 + $0x1b0] sm:$0xf]
        %v2086 = vld [vmem:[%s5 + $0x1b4] sm:$0xf]
        %v2087 = vld [vmem:[%s5 + $0x1b8] sm:$0xf]
        %v2088 = vld [vmem:[%s5 + $0x1bc] sm:$0xf]
        %v2089 = vld [vmem:[%s5 + $0x1c0] sm:$0xf]
        %v2090 = vld [vmem:[%s5 + $0x1c4] sm:$0xf]
        %v2091 = vld [vmem:[%s5 + $0x1c8] sm:$0xf]
        %v2092 = vld [vmem:[%s5 + $0x1cc] sm:$0xf]
        %v2093 = vld [vmem:[%s5 + $0x1d0] sm:$0xf]
        %v2094 = vld [vmem:[%s5 + $0x1d4] sm:$0xf]
        %v2095 = vld [vmem:[%s5 + $0x1d8] sm:$0xf]
        %v2096 = vld [vmem:[%s5 + $0x1dc] sm:$0xf]
        %v2097 = vld [vmem:[%s5 + $0x1e0] sm:$0xf]
        %v2098 = vld [vmem:[%s5 + $0x1e4] sm:$0xf]
        %v2099 = vld [vmem:[%s5 + $0x1e8] sm:$0xf]
        %v2100 = vld [vmem:[%s5 + $0x1ec] sm:$0xf]
        %v2101 = vld [vmem:[%s5 + $0x1f0] sm:$0xf]
        %v2102 = vld [vmem:[%s5 + $0x1f4] sm:$0xf]
        %v2103 = vld [vmem:[%s5 + $0x1f8] sm:$0xf]
        %v2104 = vld [vmem:[%s5 + $0x1fc] sm:$0xf]
        %v2105 = vld [vmem:[%s5 + $0x200] sm:$0xf]
        %v2106 = vld [vmem:[%s5 + $0x204] sm:$0xf]
        %v2107 = vld [vmem:[%s5 + $0x208] sm:$0xf]
        %v2108 = vld [vmem:[%s5 + $0x20c] sm:$0xf]
        %v2109 = vld [vmem:[%s5 + $0x210] sm:$0xf]
        %v2110 = vld [vmem:[%s5 + $0x214] sm:$0xf]
        %v2111 = vld [vmem:[%s5 + $0x218] sm:$0xf]
        %v2112 = vld [vmem:[%s5 + $0x21c] sm:$0xf]
        %v2113 = vld [vmem:[%s5 + $0x220] sm:$0xf]
        %v2114 = vld [vmem:[%s5 + $0x224] sm:$0xf]
        %v2115 = vld [vmem:[%s5 + $0x228] sm:$0xf]
        %v2116 = vld [vmem:[%s5 + $0x22c] sm:$0xf]
        %v2117 = vld [vmem:[%s5 + $0x230] sm:$0xf]
        %v2118 = vld [vmem:[%s5 + $0x234] sm:$0xf]
        %v2119 = vld [vmem:[%s5 + $0x238] sm:$0xf]
        %v2120 = vld [vmem:[%s5 + $0x23c] sm:$0xf]
        %v2122 = vlaneseq
        %v2123 = vshrl.u32 %v2122, 7
        %v2124 = vsub.s32 0, %v2123
        %v2125 = vrot.slane %v1412, %v2124
        %v2271 = vunpack.c.l.b16 %v1977
        %v2272 = vunpack.c.l.b16 %v1978
        %v2273 = vunpack.c.l.b16 %v1979
        %v2274 = vunpack.c.l.b16 %v1980
        %v2275 = vunpack.c.l.b16 %v1981
        %v2276 = vunpack.c.l.b16 %v1982
        %v2277 = vunpack.c.l.b16 %v1983
        %v2278 = vunpack.c.l.b16 %v1984
        %v2279 = vunpack.c.l.b16 %v1985
        %v2280 = vunpack.c.l.b16 %v1986
        %v2281 = vunpack.c.l.b16 %v1987
        %v2282 = vunpack.c.l.b16 %v1988
        %v2283 = vunpack.c.l.b16 %v1989
        %v2284 = vunpack.c.l.b16 %v1990
        %v2285 = vunpack.c.l.b16 %v1991
        %v2286 = vunpack.c.l.b16 %v1992
        %v2287 = vunpack.c.l.b16 %v1993
        %v2288 = vunpack.c.l.b16 %v1994
        %v2289 = vunpack.c.l.b16 %v1995
        %v2290 = vunpack.c.l.b16 %v1996
        %v2291 = vunpack.c.l.b16 %v1997
        %v2292 = vunpack.c.l.b16 %v1998
        %v2293 = vunpack.c.l.b16 %v1999
        %v2294 = vunpack.c.l.b16 %v2000
        %v2295 = vunpack.c.l.b16 %v2001
        %v2296 = vunpack.c.l.b16 %v2002
        %v2297 = vunpack.c.l.b16 %v2003
        %v2298 = vunpack.c.l.b16 %v2004
        %v2299 = vunpack.c.l.b16 %v2005
        %v2300 = vunpack.c.l.b16 %v2006
        %v2301 = vunpack.c.l.b16 %v2007
        %v2302 = vunpack.c.l.b16 %v2008
        %v2303 = vunpack.c.l.b16 %v2009
        %v2304 = vunpack.c.l.b16 %v2010
        %v2305 = vunpack.c.l.b16 %v2011
        %v2306 = vunpack.c.l.b16 %v2012
        %v2307 = vunpack.c.l.b16 %v2013
        %v2308 = vunpack.c.l.b16 %v2014
        %v2309 = vunpack.c.l.b16 %v2015
        %v2310 = vunpack.c.l.b16 %v2016
        %v2311 = vunpack.c.l.b16 %v2017
        %v2312 = vunpack.c.l.b16 %v2018
        %v2313 = vunpack.c.l.b16 %v2019
        %v2314 = vunpack.c.l.b16 %v2020
        %v2315 = vunpack.c.l.b16 %v2021
        %v2316 = vunpack.c.l.b16 %v2022
        %v2317 = vunpack.c.l.b16 %v2023
        %v2318 = vunpack.c.l.b16 %v2024
        %v2319 = vunpack.c.l.b16 %v2025
        %v2320 = vunpack.c.l.b16 %v2026
        %v2321 = vunpack.c.l.b16 %v2027
        %v2322 = vunpack.c.l.b16 %v2028
        %v2323 = vunpack.c.l.b16 %v2029
        %v2324 = vunpack.c.l.b16 %v2030
        %v2325 = vunpack.c.l.b16 %v2031
        %v2326 = vunpack.c.l.b16 %v2032
        %v2327 = vunpack.c.l.b16 %v2033
        %v2328 = vunpack.c.l.b16 %v2034
        %v2329 = vunpack.c.l.b16 %v2035
        %v2330 = vunpack.c.l.b16 %v2036
        %v2331 = vunpack.c.l.b16 %v2037
        %v2332 = vunpack.c.l.b16 %v2038
        %v2333 = vunpack.c.l.b16 %v2039
        %v2334 = vunpack.c.l.b16 %v2040
        %v2335 = vunpack.c.l.b16 %v2041
        %v2336 = vunpack.c.l.b16 %v2042
        %v2337 = vunpack.c.l.b16 %v2043
        %v2338 = vunpack.c.l.b16 %v2044
        %v2339 = vunpack.c.l.b16 %v2045
        %v2340 = vunpack.c.l.b16 %v2046
        %v2341 = vunpack.c.l.b16 %v2047
        %v2342 = vunpack.c.l.b16 %v2048
        %v2343 = vunpack.c.l.b16 %v2049
        %v2344 = vunpack.c.l.b16 %v2050
        %v2345 = vunpack.c.l.b16 %v2051
        %v2346 = vunpack.c.l.b16 %v2052
        %v2347 = vunpack.c.l.b16 %v2053
        %v2348 = vunpack.c.l.b16 %v2054
        %v2349 = vunpack.c.l.b16 %v2055
        %v2350 = vunpack.c.l.b16 %v2056
        %v2351 = vunpack.c.l.b16 %v2057
        %v2352 = vunpack.c.l.b16 %v2058
        %v2353 = vunpack.c.l.b16 %v2059
        %v2354 = vunpack.c.l.b16 %v2060
        %v2355 = vunpack.c.l.b16 %v2061
        %v2356 = vunpack.c.l.b16 %v2062
        %v2357 = vunpack.c.l.b16 %v2063
        %v2358 = vunpack.c.l.b16 %v2064
        %v2359 = vunpack.c.l.b16 %v2065
        %v2360 = vunpack.c.l.b16 %v2066
        %v2361 = vunpack.c.l.b16 %v2067
        %v2362 = vunpack.c.l.b16 %v2068
        %v2363 = vunpack.c.l.b16 %v2069
        %v2364 = vunpack.c.l.b16 %v2070
        %v2365 = vunpack.c.l.b16 %v2071
        %v2366 = vunpack.c.l.b16 %v2072
        %v2367 = vunpack.c.l.b16 %v2073
        %v2368 = vunpack.c.l.b16 %v2074
        %v2369 = vunpack.c.l.b16 %v2075
        %v2370 = vunpack.c.l.b16 %v2076
        %v2371 = vunpack.c.l.b16 %v2077
        %v2372 = vunpack.c.l.b16 %v2078
        %v2373 = vunpack.c.l.b16 %v2079
        %v2374 = vunpack.c.l.b16 %v2080
        %v2375 = vunpack.c.l.b16 %v2081
        %v2376 = vunpack.c.l.b16 %v2082
        %v2377 = vunpack.c.l.b16 %v2083
        %v2378 = vunpack.c.l.b16 %v2084
        %v2379 = vunpack.c.l.b16 %v2085
        %v2380 = vunpack.c.l.b16 %v2086
        %v2381 = vunpack.c.l.b16 %v2087
        %v2382 = vunpack.c.l.b16 %v2088
        %v2383 = vunpack.c.l.b16 %v2089
        %v2384 = vunpack.c.l.b16 %v2090
        %v2385 = vunpack.c.l.b16 %v2091
        %v2386 = vunpack.c.l.b16 %v2092
        %v2387 = vunpack.c.l.b16 %v2093
        %v2388 = vunpack.c.l.b16 %v2094
        %v2389 = vunpack.c.l.b16 %v2095
        %v2390 = vunpack.c.l.b16 %v2096
        %v2391 = vunpack.c.l.b16 %v2097
        %v2392 = vunpack.c.l.b16 %v2098
        %v2393 = vunpack.c.l.b16 %v2099
        %v2394 = vunpack.c.l.b16 %v2100
        %v2395 = vunpack.c.l.b16 %v2101
        %v2396 = vunpack.c.l.b16 %v2102
        %v2397 = vunpack.c.l.b16 %v2103
        %v2398 = vunpack.c.l.b16 %v2104
        %v2399 = vunpack.c.l.b16 %v2105
        %v2400 = vunpack.c.l.b16 %v2106
        %v2401 = vunpack.c.l.b16 %v2107
        %v2402 = vunpack.c.l.b16 %v2108
        %v2403 = vunpack.c.l.b16 %v2109
        %v2404 = vunpack.c.l.b16 %v2110
        %v2405 = vunpack.c.l.b16 %v2111
        %v2406 = vunpack.c.l.b16 %v2112
        %v2407 = vunpack.c.l.b16 %v2113
        %v2408 = vunpack.c.l.b16 %v2114
        %v2409 = vunpack.c.l.b16 %v2115
        %v2410 = vunpack.c.l.b16 %v2116
        %v2411 = vunpack.c.l.b16 %v2117
        %v2412 = vunpack.c.l.b16 %v2118
        %v2413 = vunpack.c.l.b16 %v2119
        %v2414 = vunpack.c.l.b16 %v2120
        %v2415 = vpack.c.b16 %v2272, %v2271
        %v2416 = vpack.c.b16 %v2274, %v2273
        %v2417 = vpack.c.b16 %v2276, %v2275
        %v2418 = vpack.c.b16 %v2278, %v2277
        %v2419 = vpack.c.b16 %v2280, %v2279
        %v2420 = vpack.c.b16 %v2282, %v2281
        %v2421 = vpack.c.b16 %v2284, %v2283
        %v2422 = vpack.c.b16 %v2286, %v2285
        %v2423 = vpack.c.b16 %v2288, %v2287
        %v2424 = vpack.c.b16 %v2290, %v2289
        %v2425 = vpack.c.b16 %v2292, %v2291
        %v2426 = vpack.c.b16 %v2294, %v2293
        %v2427 = vpack.c.b16 %v2296, %v2295
        %v2428 = vpack.c.b16 %v2298, %v2297
        %v2429 = vpack.c.b16 %v2300, %v2299
        %v2430 = vpack.c.b16 %v2302, %v2301
        %v2431 = vpack.c.b16 %v2304, %v2303
        %v2432 = vpack.c.b16 %v2306, %v2305
        %v2433 = vpack.c.b16 %v2308, %v2307
        %v2434 = vpack.c.b16 %v2310, %v2309
        %v2435 = vpack.c.b16 %v2312, %v2311
        %v2436 = vpack.c.b16 %v2314, %v2313
        %v2437 = vpack.c.b16 %v2316, %v2315
        %v2438 = vpack.c.b16 %v2318, %v2317
        %v2439 = vpack.c.b16 %v2320, %v2319
        %v2440 = vpack.c.b16 %v2322, %v2321
        %v2441 = vpack.c.b16 %v2324, %v2323
        %v2442 = vpack.c.b16 %v2326, %v2325
        %v2443 = vpack.c.b16 %v2328, %v2327
        %v2444 = vpack.c.b16 %v2330, %v2329
        %v2445 = vpack.c.b16 %v2332, %v2331
        %v2446 = vpack.c.b16 %v2334, %v2333
        %v2447 = vpack.c.b16 %v2336, %v2335
        %v2448 = vpack.c.b16 %v2338, %v2337
        %v2449 = vpack.c.b16 %v2340, %v2339
        %v2450 = vpack.c.b16 %v2342, %v2341
        %v2451 = vpack.c.b16 %v2344, %v2343
        %v2452 = vpack.c.b16 %v2346, %v2345
        %v2453 = vpack.c.b16 %v2348, %v2347
        %v2454 = vpack.c.b16 %v2350, %v2349
        %v2455 = vpack.c.b16 %v2352, %v2351
        %v2456 = vpack.c.b16 %v2354, %v2353
        %v2457 = vpack.c.b16 %v2356, %v2355
        %v2458 = vpack.c.b16 %v2358, %v2357
        %v2459 = vpack.c.b16 %v2360, %v2359
        %v2460 = vpack.c.b16 %v2362, %v2361
        %v2461 = vpack.c.b16 %v2364, %v2363
        %v2462 = vpack.c.b16 %v2366, %v2365
        %v2463 = vpack.c.b16 %v2368, %v2367
        %v2464 = vpack.c.b16 %v2370, %v2369
        %v2465 = vpack.c.b16 %v2372, %v2371
        %v2466 = vpack.c.b16 %v2374, %v2373
        %v2467 = vpack.c.b16 %v2376, %v2375
        %v2468 = vpack.c.b16 %v2378, %v2377
        %v2469 = vpack.c.b16 %v2380, %v2379
        %v2470 = vpack.c.b16 %v2382, %v2381
        %v2471 = vpack.c.b16 %v2384, %v2383
        %v2472 = vpack.c.b16 %v2386, %v2385
        %v2473 = vpack.c.b16 %v2388, %v2387
        %v2474 = vpack.c.b16 %v2390, %v2389
        %v2475 = vpack.c.b16 %v2392, %v2391
        %v2476 = vpack.c.b16 %v2394, %v2393
        %v2477 = vpack.c.b16 %v2396, %v2395
        %v2478 = vpack.c.b16 %v2398, %v2397
        %v2479 = vpack.c.b16 %v2400, %v2399
        %v2480 = vpack.c.b16 %v2402, %v2401
        %v2481 = vpack.c.b16 %v2404, %v2403
        %v2482 = vpack.c.b16 %v2406, %v2405
        %v2483 = vpack.c.b16 %v2408, %v2407
        %v2484 = vpack.c.b16 %v2410, %v2409
        %v2485 = vpack.c.b16 %v2412, %v2411
        %v2486 = vpack.c.b16 %v2414, %v2413
        %2559 = vmatprep.subr.bf16.mxu0 0
        %2560 = vmatpush1.bf16.msra.mxu0 %v2415
        %2561 = vmatprep.subr.bf16.mxu0 0
        %2562 = vmatpush1.bf16.msra.mxu0 %v2416
        %2563 = vmatprep.subr.bf16.mxu0 0
        %2564 = vmatpush1.bf16.msra.mxu0 %v2417
        %2565 = vmatprep.subr.bf16.mxu0 0
        %2566 = vmatpush1.bf16.msra.mxu0 %v2418
        %2567 = vmatprep.subr.bf16.mxu0 0
        %2568 = vmatpush1.bf16.msra.mxu0 %v2419
        %2569 = vmatprep.subr.bf16.mxu0 0
        %2570 = vmatpush1.bf16.msra.mxu0 %v2420
        %2571 = vmatprep.subr.bf16.mxu0 0
        %2572 = vmatpush1.bf16.msra.mxu0 %v2421
        %2573 = vmatprep.subr.bf16.mxu0 0
        %2574 = vmatpush1.bf16.msra.mxu0 %v2422
        %2575 = vmatprep.subr.bf16.mxu0 0
        %2576 = vmatpush1.bf16.msra.mxu0 %v2423
        %2577 = vmatprep.subr.bf16.mxu0 0
        %2578 = vmatpush1.bf16.msra.mxu0 %v2424
        %2579 = vmatprep.subr.bf16.mxu0 0
        %2580 = vmatpush1.bf16.msra.mxu0 %v2425
        %2581 = vmatprep.subr.bf16.mxu0 0
        %2582 = vmatpush1.bf16.msra.mxu0 %v2426
        %2583 = vmatprep.subr.bf16.mxu0 0
        %2584 = vmatpush1.bf16.msra.mxu0 %v2427
        %2585 = vmatprep.subr.bf16.mxu0 0
        %2586 = vmatpush1.bf16.msra.mxu0 %v2428
        %2587 = vmatprep.subr.bf16.mxu0 0
        %2588 = vmatpush1.bf16.msra.mxu0 %v2429
        %2589 = vmatprep.subr.bf16.mxu0 0
        %2590 = vmatpush1.bf16.msra.mxu0 %v2430
        %2591 = vmatprep.mubr.bf16.mxu0 %v1834
        %2592 = vmatmul.mubr.bf16.gmra.mrb[0].mxu0 %v1833
        %v2593 = vpop.f32.mrb[0].mxu0
        %v2594 = vadd.f32 %v2125, %v2593
        %v2595 = vpop.f32.mrb[0].mxu0
        %v2596 = vpop.f32.mrb[0].mxu0
        %v2597 = vadd.f32 %v2125, %v2596
        %v2598 = vpop.f32.mrb[0].mxu0
        %2599 = vmatprep.mubr.bf16.mxu0 %v1843
        %2600 = vmatmul.mubr.bf16.gmra.mrb[0].mxu0 %v1842
        %v2601 = vpop.f32.mrb[0].mxu0
        %v2602 = vadd.f32 %v2125, %v2601
        %v2603 = vpop.f32.mrb[0].mxu0
        %v2604 = vpop.f32.mrb[0].mxu0
        %v2605 = vadd.f32 %v2125, %v2604
        %v2606 = vpop.f32.mrb[0].mxu0
        %2607 = vmatprep.mubr.bf16.mxu0 %v1852
        %2608 = vmatmul.mubr.bf16.gmra.mrb[0].mxu0 %v1851
        %v2609 = vpop.f32.mrb[0].mxu0
        %v2610 = vadd.f32 %v2125, %v2609
        %v2611 = vpop.f32.mrb[0].mxu0
        %v2612 = vpop.f32.mrb[0].mxu0
        %v2613 = vadd.f32 %v2125, %v2612
        %v2614 = vpop.f32.mrb[0].mxu0
        %2615 = vmatprep.mubr.bf16.mxu0 %v1861
        %2616 = vmatmul.mubr.bf16.gmra.mrb[0].mxu0 %v1860
        %v2617 = vpop.f32.mrb[0].mxu0
        %v2618 = vadd.f32 %v2125, %v2617
        %v2619 = vpop.f32.mrb[0].mxu0
        %v2620 = vpop.f32.mrb[0].mxu0
        %v2621 = vadd.f32 %v2125, %v2620
        %v2622 = vpop.f32.mrb[0].mxu0
        %2623 = vmatprep.mubr.bf16.mxu0 %v1870
        %2624 = vmatmul.mubr.bf16.gmra.mrb[0].mxu0 %v1869
        %v2625 = vpop.f32.mrb[0].mxu0
        %v2626 = vadd.f32 %v2125, %v2625
        %v2627 = vpop.f32.mrb[0].mxu0
        %v2628 = vpop.f32.mrb[0].mxu0
        %v2629 = vadd.f32 %v2125, %v2628
        %v2630 = vpop.f32.mrb[0].mxu0
        %2631 = vmatprep.mubr.bf16.mxu0 %v1879
        %2632 = vmatmul.mubr.bf16.gmra.mrb[0].mxu0 %v1878
        %v2633 = vpop.f32.mrb[0].mxu0
        %v2634 = vadd.f32 %v2125, %v2633
        %v2635 = vpop.f32.mrb[0].mxu0
        %v2636 = vpop.f32.mrb[0].mxu0
        %v2637 = vadd.f32 %v2125, %v2636
        %v2638 = vpop.f32.mrb[0].mxu0
        %2639 = vmatprep.mubr.bf16.mxu0 %v1888
        %2640 = vmatmul.mubr.bf16.gmra.mrb[0].mxu0 %v1887
        %v2641 = vpop.f32.mrb[0].mxu0
        %v2642 = vadd.f32 %v2125, %v2641
        %v2643 = vpop.f32.mrb[0].mxu0
        %v2644 = vpop.f32.mrb[0].mxu0
        %v2645 = vadd.f32 %v2125, %v2644
        %v2646 = vpop.f32.mrb[0].mxu0
        %2647 = vmatprep.mubr.bf16.mxu0 %v1897
        %2648 = vmatmul.mubr.bf16.gmra.mrb[0].mxu0 %v1896
        %v2649 = vpop.f32.mrb[0].mxu0
        %v2650 = vadd.f32 %v2125, %v2649
        %v2651 = vpop.f32.mrb[0].mxu0
        %v2652 = vpop.f32.mrb[0].mxu0
        %v2653 = vadd.f32 %v2125, %v2652
        %v2654 = vpop.f32.mrb[0].mxu0
        %2655 = vmatprep.mubr.bf16.mxu0 %v1906
        %2656 = vmatmul.mubr.bf16.gmra.mrb[0].mxu0 %v1905
        %v2657 = vpop.f32.mrb[0].mxu0
        %v2658 = vadd.f32 %v2125, %v2657
        %v2659 = vpop.f32.mrb[0].mxu0
        %v2660 = vpop.f32.mrb[0].mxu0
        %v2661 = vadd.f32 %v2125, %v2660
        %v2662 = vpop.f32.mrb[0].mxu0
        %2663 = vmatprep.mubr.bf16.mxu0 %v1915
        %2664 = vmatmul.mubr.bf16.gmra.mrb[0].mxu0 %v1914
        %v2665 = vpop.f32.mrb[0].mxu0
        %v2666 = vadd.f32 %v2125, %v2665
        %v2667 = vpop.f32.mrb[0].mxu0
        %v2668 = vpop.f32.mrb[0].mxu0
        %v2669 = vadd.f32 %v2125, %v2668
        %v2670 = vpop.f32.mrb[0].mxu0
        %2671 = vmatprep.mubr.bf16.mxu0 %v1924
        %2672 = vmatmul.mubr.bf16.gmra.mrb[0].mxu0 %v1923
        %v2673 = vpop.f32.mrb[0].mxu0
        %v2674 = vadd.f32 %v2125, %v2673
        %v2675 = vpop.f32.mrb[0].mxu0
        %v2676 = vpop.f32.mrb[0].mxu0
        %v2677 = vadd.f32 %v2125, %v2676
        %v2678 = vpop.f32.mrb[0].mxu0
        %2679 = vmatprep.mubr.bf16.mxu0 %v1933
        %2680 = vmatmul.mubr.bf16.gmra.mrb[0].mxu0 %v1932
        %v2681 = vpop.f32.mrb[0].mxu0
        %v2682 = vadd.f32 %v2125, %v2681
        %v2683 = vpop.f32.mrb[0].mxu0
        %v2684 = vpop.f32.mrb[0].mxu0
        %v2685 = vadd.f32 %v2125, %v2684
        %v2686 = vpop.f32.mrb[0].mxu0
        %2687 = vmatprep.mubr.bf16.mxu0 %v1942
        %2688 = vmatmul.mubr.bf16.gmra.mrb[0].mxu0 %v1941
        %v2689 = vpop.f32.mrb[0].mxu0
        %v2690 = vadd.f32 %v2125, %v2689
        %v2691 = vpop.f32.mrb[0].mxu0
        %v2692 = vpop.f32.mrb[0].mxu0
        %v2693 = vadd.f32 %v2125, %v2692
        %v2694 = vpop.f32.mrb[0].mxu0
        %2695 = vmatprep.mubr.bf16.mxu0 %v1951
        %2696 = vmatmul.mubr.bf16.gmra.mrb[0].mxu0 %v1950
        %v2697 = vpop.f32.mrb[0].mxu0
        %v2698 = vadd.f32 %v2125, %v2697
        %v2699 = vpop.f32.mrb[0].mxu0
        %v2700 = vpop.f32.mrb[0].mxu0
        %v2701 = vadd.f32 %v2125, %v2700
        %v2702 = vpop.f32.mrb[0].mxu0
        %2703 = vmatprep.mubr.bf16.mxu0 %v1960
        %2704 = vmatmul.mubr.bf16.gmra.mrb[0].mxu0 %v1959
        %v2705 = vpop.f32.mrb[0].mxu0
        %v2706 = vadd.f32 %v2125, %v2705
        %v2707 = vpop.f32.mrb[0].mxu0
        %v2708 = vpop.f32.mrb[0].mxu0
        %v2709 = vadd.f32 %v2125, %v2708
        %v2710 = vpop.f32.mrb[0].mxu0
        %2711 = vmatprep.mubr.bf16.mxu0 %v1969
        %2712 = vmatmul.mubr.bf16.gmra.mrb[0].mxu0 %v1968
        %v2713 = vpop.f32.mrb[0].mxu0
        %v2714 = vadd.f32 %v2125, %v2713
        %v2715 = vpop.f32.mrb[0].mxu0
        %v2716 = vpop.f32.mrb[0].mxu0
        %v2717 = vadd.f32 %v2125, %v2716
        %v2718 = vpop.f32.mrb[0].mxu0
        %2719 = vdwg.mxu0
        %2720 = vmatprep.subr.bf16.mxu0 0
        %2721 = vmatpush1.bf16.msra.mxu0 %v2431
        %2722 = vmatprep.subr.bf16.mxu0 0
        %2723 = vmatpush1.bf16.msra.mxu0 %v2432
        %2724 = vmatprep.subr.bf16.mxu0 0
        %2725 = vmatpush1.bf16.msra.mxu0 %v2433
        %2726 = vmatprep.subr.bf16.mxu0 0
        %2727 = vmatpush1.bf16.msra.mxu0 %v2434
        %2728 = vmatprep.subr.bf16.mxu0 0
        %2729 = vmatpush1.bf16.msra.mxu0 %v2435
        %2730 = vmatprep.subr.bf16.mxu0 0
        %2731 = vmatpush1.bf16.msra.mxu0 %v2436
        %2732 = vmatprep.subr.bf16.mxu0 0
        %2733 = vmatpush1.bf16.msra.mxu0 %v2437
        %2734 = vmatprep.subr.bf16.mxu0 0
        %2735 = vmatpush1.bf16.msra.mxu0 %v2438
        %2736 = vmatprep.subr.bf16.mxu0 0
        %2737 = vmatpush1.bf16.msra.mxu0 %v2439
        %2738 = vmatprep.subr.bf16.mxu0 0
        %2739 = vmatpush1.bf16.msra.mxu0 %v2440
        %2740 = vmatprep.subr.bf16.mxu0 0
        %2741 = vmatpush1.bf16.msra.mxu0 %v2441
        %2742 = vmatprep.subr.bf16.mxu0 0
        %2743 = vmatpush1.bf16.msra.mxu0 %v2442
        %2744 = vmatprep.subr.bf16.mxu0 0
        %2745 = vmatpush1.bf16.msra.mxu0 %v2443
        %2746 = vmatprep.subr.bf16.mxu0 0
        %2747 = vmatpush1.bf16.msra.mxu0 %v2444
        %2748 = vmatprep.subr.bf16.mxu0 0
        %2749 = vmatpush1.bf16.msra.mxu0 %v2445
        %2750 = vmatprep.subr.bf16.mxu0 0
        %2751 = vmatpush1.bf16.msra.mxu0 %v2446
        %2752 = vmatprep.mubr.bf16.mxu0 %v1836
        %2753 = vmatmul.mubr.bf16.gmra.mrb[0].mxu0 %v1835
        %v2754 = vpop.f32.mrb[0].mxu0
        %v2755 = vadd.f32 %v2594, %v2754
        %v2756 = vpop.f32.mrb[0].mxu0
        %v2757 = vpop.f32.mrb[0].mxu0
        %v2758 = vadd.f32 %v2597, %v2757
        %v2759 = vpop.f32.mrb[0].mxu0
        %2760 = vmatprep.mubr.bf16.mxu0 %v1845
        %2761 = vmatmul.mubr.bf16.gmra.mrb[0].mxu0 %v1844
        %v2762 = vpop.f32.mrb[0].mxu0
        %v2763 = vadd.f32 %v2602, %v2762
        %v2764 = vpop.f32.mrb[0].mxu0
        %v2765 = vpop.f32.mrb[0].mxu0
        %v2766 = vadd.f32 %v2605, %v2765
        %v2767 = vpop.f32.mrb[0].mxu0
        %2768 = vmatprep.mubr.bf16.mxu0 %v1854
        %2769 = vmatmul.mubr.bf16.gmra.mrb[0].mxu0 %v1853
        %v2770 = vpop.f32.mrb[0].mxu0
        %v2771 = vadd.f32 %v2610, %v2770
        %v2772 = vpop.f32.mrb[0].mxu0
        %v2773 = vpop.f32.mrb[0].mxu0
        %v2774 = vadd.f32 %v2613, %v2773
        %v2775 = vpop.f32.mrb[0].mxu0
        %2776 = vmatprep.mubr.bf16.mxu0 %v1863
        %2777 = vmatmul.mubr.bf16.gmra.mrb[0].mxu0 %v1862
        %v2778 = vpop.f32.mrb[0].mxu0
        %v2779 = vadd.f32 %v2618, %v2778
        %v2780 = vpop.f32.mrb[0].mxu0
        %v2781 = vpop.f32.mrb[0].mxu0
        %v2782 = vadd.f32 %v2621, %v2781
        %v2783 = vpop.f32.mrb[0].mxu0
        %2784 = vmatprep.mubr.bf16.mxu0 %v1872
        %2785 = vmatmul.mubr.bf16.gmra.mrb[0].mxu0 %v1871
        %v2786 = vpop.f32.mrb[0].mxu0
        %v2787 = vadd.f32 %v2626, %v2786
        %v2788 = vpop.f32.mrb[0].mxu0
        %v2789 = vpop.f32.mrb[0].mxu0
        %v2790 = vadd.f32 %v2629, %v2789
        %v2791 = vpop.f32.mrb[0].mxu0
        %2792 = vmatprep.mubr.bf16.mxu0 %v1881
        %2793 = vmatmul.mubr.bf16.gmra.mrb[0].mxu0 %v1880
        %v2794 = vpop.f32.mrb[0].mxu0
        %v2795 = vadd.f32 %v2634, %v2794
        %v2796 = vpop.f32.mrb[0].mxu0
        %v2797 = vpop.f32.mrb[0].mxu0
        %v2798 = vadd.f32 %v2637, %v2797
        %v2799 = vpop.f32.mrb[0].mxu0
        %2800 = vmatprep.mubr.bf16.mxu0 %v1890
        %2801 = vmatmul.mubr.bf16.gmra.mrb[0].mxu0 %v1889
        %v2802 = vpop.f32.mrb[0].mxu0
        %v2803 = vadd.f32 %v2642, %v2802
        %v2804 = vpop.f32.mrb[0].mxu0
        %v2805 = vpop.f32.mrb[0].mxu0
        %v2806 = vadd.f32 %v2645, %v2805
        %v2807 = vpop.f32.mrb[0].mxu0
        %2808 = vmatprep.mubr.bf16.mxu0 %v1899
        %2809 = vmatmul.mubr.bf16.gmra.mrb[0].mxu0 %v1898
        %v2810 = vpop.f32.mrb[0].mxu0
        %v2811 = vadd.f32 %v2650, %v2810
        %v2812 = vpop.f32.mrb[0].mxu0
        %v2813 = vpop.f32.mrb[0].mxu0
        %v2814 = vadd.f32 %v2653, %v2813
        %v2815 = vpop.f32.mrb[0].mxu0
        %2816 = vmatprep.mubr.bf16.mxu0 %v1908
        %2817 = vmatmul.mubr.bf16.gmra.mrb[0].mxu0 %v1907
        %v2818 = vpop.f32.mrb[0].mxu0
        %v2819 = vadd.f32 %v2658, %v2818
        %v2820 = vpop.f32.mrb[0].mxu0
        %v2821 = vpop.f32.mrb[0].mxu0
        %v2822 = vadd.f32 %v2661, %v2821
        %v2823 = vpop.f32.mrb[0].mxu0
        %2824 = vmatprep.mubr.bf16.mxu0 %v1917
        %2825 = vmatmul.mubr.bf16.gmra.mrb[0].mxu0 %v1916
        %v2826 = vpop.f32.mrb[0].mxu0
        %v2827 = vadd.f32 %v2666, %v2826
        %v2828 = vpop.f32.mrb[0].mxu0
        %v2829 = vpop.f32.mrb[0].mxu0
        %v2830 = vadd.f32 %v2669, %v2829
        %v2831 = vpop.f32.mrb[0].mxu0
        %2832 = vmatprep.mubr.bf16.mxu0 %v1926
        %2833 = vmatmul.mubr.bf16.gmra.mrb[0].mxu0 %v1925
        %v2834 = vpop.f32.mrb[0].mxu0
        %v2835 = vadd.f32 %v2674, %v2834
        %v2836 = vpop.f32.mrb[0].mxu0
        %v2837 = vpop.f32.mrb[0].mxu0
        %v2838 = vadd.f32 %v2677, %v2837
        %v2839 = vpop.f32.mrb[0].mxu0
        %2840 = vmatprep.mubr.bf16.mxu0 %v1935
        %2841 = vmatmul.mubr.bf16.gmra.mrb[0].mxu0 %v1934
        %v2842 = vpop.f32.mrb[0].mxu0
        %v2843 = vadd.f32 %v2682, %v2842
        %v2844 = vpop.f32.mrb[0].mxu0
        %v2845 = vpop.f32.mrb[0].mxu0
        %v2846 = vadd.f32 %v2685, %v2845
        %v2847 = vpop.f32.mrb[0].mxu0
        %2848 = vmatprep.mubr.bf16.mxu0 %v1944
        %2849 = vmatmul.mubr.bf16.gmra.mrb[0].mxu0 %v1943
        %v2850 = vpop.f32.mrb[0].mxu0
        %v2851 = vadd.f32 %v2690, %v2850
        %v2852 = vpop.f32.mrb[0].mxu0
        %v2853 = vpop.f32.mrb[0].mxu0
        %v2854 = vadd.f32 %v2693, %v2853
        %v2855 = vpop.f32.mrb[0].mxu0
        %2856 = vmatprep.mubr.bf16.mxu0 %v1953
        %2857 = vmatmul.mubr.bf16.gmra.mrb[0].mxu0 %v1952
        %v2858 = vpop.f32.mrb[0].mxu0
        %v2859 = vadd.f32 %v2698, %v2858
        %v2860 = vpop.f32.mrb[0].mxu0
        %v2861 = vpop.f32.mrb[0].mxu0
        %v2862 = vadd.f32 %v2701, %v2861
        %v2863 = vpop.f32.mrb[0].mxu0
        %2864 = vmatprep.mubr.bf16.mxu0 %v1962
        %2865 = vmatmul.mubr.bf16.gmra.mrb[0].mxu0 %v1961
        %v2866 = vpop.f32.mrb[0].mxu0
        %v2867 = vadd.f32 %v2706, %v2866
        %v2868 = vpop.f32.mrb[0].mxu0
        %v2869 = vpop.f32.mrb[0].mxu0
        %v2870 = vadd.f32 %v2709, %v2869
        %v2871 = vpop.f32.mrb[0].mxu0
        %2872 = vmatprep.mubr.bf16.mxu0 %v1971
        %2873 = vmatmul.mubr.bf16.gmra.mrb[0].mxu0 %v1970
        %v2874 = vpop.f32.mrb[0].mxu0
        %v2875 = vadd.f32 %v2714, %v2874
        %v2876 = vpop.f32.mrb[0].mxu0
        %v2877 = vpop.f32.mrb[0].mxu0
        %v2878 = vadd.f32 %v2717, %v2877
        %v2879 = vpop.f32.mrb[0].mxu0
        %2880 = vdwg.mxu0
        %2881 = vmatprep.subr.bf16.mxu0 0
        %2882 = vmatpush1.bf16.msra.mxu0 %v2447
        %2883 = vmatprep.subr.bf16.mxu0 0
        %2884 = vmatpush1.bf16.msra.mxu0 %v2448
        %2885 = vmatprep.subr.bf16.mxu0 0
        %2886 = vmatpush1.bf16.msra.mxu0 %v2449
        %2887 = vmatprep.subr.bf16.mxu0 0
        %2888 = vmatpush1.bf16.msra.mxu0 %v2450
        %2889 = vmatprep.subr.bf16.mxu0 0
        %2890 = vmatpush1.bf16.msra.mxu0 %v2451
        %2891 = vmatprep.subr.bf16.mxu0 0
        %2892 = vmatpush1.bf16.msra.mxu0 %v2452
        %2893 = vmatprep.subr.bf16.mxu0 0
        %2894 = vmatpush1.bf16.msra.mxu0 %v2453
        %2895 = vmatprep.subr.bf16.mxu0 0
        %2896 = vmatpush1.bf16.msra.mxu0 %v2454
        %2897 = vmatprep.subr.bf16.mxu0 0
        %2898 = vmatpush1.bf16.msra.mxu0 %v2455
        %2899 = vmatprep.subr.bf16.mxu0 0
        %2900 = vmatpush1.bf16.msra.mxu0 %v2456
        %2901 = vmatprep.subr.bf16.mxu0 0
        %2902 = vmatpush1.bf16.msra.mxu0 %v2457
        %2903 = vmatprep.subr.bf16.mxu0 0
        %2904 = vmatpush1.bf16.msra.mxu0 %v2458
        %2905 = vmatprep.subr.bf16.mxu0 0
        %2906 = vmatpush1.bf16.msra.mxu0 %v2459
        %2907 = vmatprep.subr.bf16.mxu0 0
        %2908 = vmatpush1.bf16.msra.mxu0 %v2460
        %2909 = vmatprep.subr.bf16.mxu0 0
        %2910 = vmatpush1.bf16.msra.mxu0 %v2461
        %2911 = vmatprep.subr.bf16.mxu0 0
        %2912 = vmatpush1.bf16.msra.mxu0 %v2462
        %2913 = vmatprep.mubr.bf16.mxu0 %v1838
        %2914 = vmatmul.mubr.bf16.gmra.mrb[0].mxu0 %v1837
        %v2915 = vpop.f32.mrb[0].mxu0
        %v2916 = vadd.f32 %v2755, %v2915
        %v2917 = vpop.f32.mrb[0].mxu0
        %v2918 = vpop.f32.mrb[0].mxu0
        %v2919 = vadd.f32 %v2758, %v2918
        %v2920 = vpop.f32.mrb[0].mxu0
        %2921 = vmatprep.mubr.bf16.mxu0 %v1847
        %2922 = vmatmul.mubr.bf16.gmra.mrb[0].mxu0 %v1846
        %v2923 = vpop.f32.mrb[0].mxu0
        %v2924 = vadd.f32 %v2763, %v2923
        %v2925 = vpop.f32.mrb[0].mxu0
        %v2926 = vpop.f32.mrb[0].mxu0
        %v2927 = vadd.f32 %v2766, %v2926
        %v2928 = vpop.f32.mrb[0].mxu0
        %2929 = vmatprep.mubr.bf16.mxu0 %v1856
        %2930 = vmatmul.mubr.bf16.gmra.mrb[0].mxu0 %v1855
        %v2931 = vpop.f32.mrb[0].mxu0
        %v2932 = vadd.f32 %v2771, %v2931
        %v2933 = vpop.f32.mrb[0].mxu0
        %v2934 = vpop.f32.mrb[0].mxu0
        %v2935 = vadd.f32 %v2774, %v2934
        %v2936 = vpop.f32.mrb[0].mxu0
        %2937 = vmatprep.mubr.bf16.mxu0 %v1865
        %2938 = vmatmul.mubr.bf16.gmra.mrb[0].mxu0 %v1864
        %v2939 = vpop.f32.mrb[0].mxu0
        %v2940 = vadd.f32 %v2779, %v2939
        %v2941 = vpop.f32.mrb[0].mxu0
        %v2942 = vpop.f32.mrb[0].mxu0
        %v2943 = vadd.f32 %v2782, %v2942
        %v2944 = vpop.f32.mrb[0].mxu0
        %2945 = vmatprep.mubr.bf16.mxu0 %v1874
        %2946 = vmatmul.mubr.bf16.gmra.mrb[0].mxu0 %v1873
        %v2947 = vpop.f32.mrb[0].mxu0
        %v2948 = vadd.f32 %v2787, %v2947
        %v2949 = vpop.f32.mrb[0].mxu0
        %v2950 = vpop.f32.mrb[0].mxu0
        %v2951 = vadd.f32 %v2790, %v2950
        %v2952 = vpop.f32.mrb[0].mxu0
        %2953 = vmatprep.mubr.bf16.mxu0 %v1883
        %2954 = vmatmul.mubr.bf16.gmra.mrb[0].mxu0 %v1882
        %v2955 = vpop.f32.mrb[0].mxu0
        %v2956 = vadd.f32 %v2795, %v2955
        %v2957 = vpop.f32.mrb[0].mxu0
        %v2958 = vpop.f32.mrb[0].mxu0
        %v2959 = vadd.f32 %v2798, %v2958
        %v2960 = vpop.f32.mrb[0].mxu0
        %2961 = vmatprep.mubr.bf16.mxu0 %v1892
        %2962 = vmatmul.mubr.bf16.gmra.mrb[0].mxu0 %v1891
        %v2963 = vpop.f32.mrb[0].mxu0
        %v2964 = vadd.f32 %v2803, %v2963
        %v2965 = vpop.f32.mrb[0].mxu0
        %v2966 = vpop.f32.mrb[0].mxu0
        %v2967 = vadd.f32 %v2806, %v2966
        %v2968 = vpop.f32.mrb[0].mxu0
        %2969 = vmatprep.mubr.bf16.mxu0 %v1901
        %2970 = vmatmul.mubr.bf16.gmra.mrb[0].mxu0 %v1900
        %v2971 = vpop.f32.mrb[0].mxu0
        %v2972 = vadd.f32 %v2811, %v2971
        %v2973 = vpop.f32.mrb[0].mxu0
        %v2974 = vpop.f32.mrb[0].mxu0
        %v2975 = vadd.f32 %v2814, %v2974
        %v2976 = vpop.f32.mrb[0].mxu0
        %2977 = vmatprep.mubr.bf16.mxu0 %v1910
        %2978 = vmatmul.mubr.bf16.gmra.mrb[0].mxu0 %v1909
        %v2979 = vpop.f32.mrb[0].mxu0
        %v2980 = vadd.f32 %v2819, %v2979
        %v2981 = vpop.f32.mrb[0].mxu0
        %v2982 = vpop.f32.mrb[0].mxu0
        %v2983 = vadd.f32 %v2822, %v2982
        %v2984 = vpop.f32.mrb[0].mxu0
        %2985 = vmatprep.mubr.bf16.mxu0 %v1919
        %2986 = vmatmul.mubr.bf16.gmra.mrb[0].mxu0 %v1918
        %v2987 = vpop.f32.mrb[0].mxu0
        %v2988 = vadd.f32 %v2827, %v2987
        %v2989 = vpop.f32.mrb[0].mxu0
        %v2990 = vpop.f32.mrb[0].mxu0
        %v2991 = vadd.f32 %v2830, %v2990
        %v2992 = vpop.f32.mrb[0].mxu0
        %2993 = vmatprep.mubr.bf16.mxu0 %v1928
        %2994 = vmatmul.mubr.bf16.gmra.mrb[0].mxu0 %v1927
        %v2995 = vpop.f32.mrb[0].mxu0
        %v2996 = vadd.f32 %v2835, %v2995
        %v2997 = vpop.f32.mrb[0].mxu0
        %v2998 = vpop.f32.mrb[0].mxu0
        %v2999 = vadd.f32 %v2838, %v2998
        %v3000 = vpop.f32.mrb[0].mxu0
        %3001 = vmatprep.mubr.bf16.mxu0 %v1937
        %3002 = vmatmul.mubr.bf16.gmra.mrb[0].mxu0 %v1936
        %v3003 = vpop.f32.mrb[0].mxu0
        %v3004 = vadd.f32 %v2843, %v3003
        %v3005 = vpop.f32.mrb[0].mxu0
        %v3006 = vpop.f32.mrb[0].mxu0
        %v3007 = vadd.f32 %v2846, %v3006
        %v3008 = vpop.f32.mrb[0].mxu0
        %3009 = vmatprep.mubr.bf16.mxu0 %v1946
        %3010 = vmatmul.mubr.bf16.gmra.mrb[0].mxu0 %v1945
        %v3011 = vpop.f32.mrb[0].mxu0
        %v3012 = vadd.f32 %v2851, %v3011
        %v3013 = vpop.f32.mrb[0].mxu0
        %v3014 = vpop.f32.mrb[0].mxu0
        %v3015 = vadd.f32 %v2854, %v3014
        %v3016 = vpop.f32.mrb[0].mxu0
        %3017 = vmatprep.mubr.bf16.mxu0 %v1955
        %3018 = vmatmul.mubr.bf16.gmra.mrb[0].mxu0 %v1954
        %v3019 = vpop.f32.mrb[0].mxu0
        %v3020 = vadd.f32 %v2859, %v3019
        %v3021 = vpop.f32.mrb[0].mxu0
        %v3022 = vpop.f32.mrb[0].mxu0
        %v3023 = vadd.f32 %v2862, %v3022
        %v3024 = vpop.f32.mrb[0].mxu0
        %3025 = vmatprep.mubr.bf16.mxu0 %v1964
        %3026 = vmatmul.mubr.bf16.gmra.mrb[0].mxu0 %v1963
        %v3027 = vpop.f32.mrb[0].mxu0
        %v3028 = vadd.f32 %v2867, %v3027
        %v3029 = vpop.f32.mrb[0].mxu0
        %v3030 = vpop.f32.mrb[0].mxu0
        %v3031 = vadd.f32 %v2870, %v3030
        %v3032 = vpop.f32.mrb[0].mxu0
        %3033 = vmatprep.mubr.bf16.mxu0 %v1973
        %3034 = vmatmul.mubr.bf16.gmra.mrb[0].mxu0 %v1972
        %v3035 = vpop.f32.mrb[0].mxu0
        %v3036 = vadd.f32 %v2875, %v3035
        %v3037 = vpop.f32.mrb[0].mxu0
        %v3038 = vpop.f32.mrb[0].mxu0
        %v3039 = vadd.f32 %v2878, %v3038
        %v3040 = vpop.f32.mrb[0].mxu0
        %3041 = vdwg.mxu0
        %3042 = vmatprep.subr.bf16.mxu0 0
        %3043 = vmatpush1.bf16.msra.mxu0 %v2463
        %3044 = vmatprep.subr.bf16.mxu0 0
        %3045 = vmatpush1.bf16.msra.mxu0 %v2464
        %3046 = vmatprep.subr.bf16.mxu0 0
        %3047 = vmatpush1.bf16.msra.mxu0 %v2465
        %3048 = vmatprep.subr.bf16.mxu0 0
        %3049 = vmatpush1.bf16.msra.mxu0 %v2466
        %3050 = vmatprep.subr.bf16.mxu0 0
        %3051 = vmatpush1.bf16.msra.mxu0 %v2467
        %3052 = vmatprep.subr.bf16.mxu0 0
        %3053 = vmatpush1.bf16.msra.mxu0 %v2468
        %3054 = vmatprep.subr.bf16.mxu0 0
        %3055 = vmatpush1.bf16.msra.mxu0 %v2469
        %3056 = vmatprep.subr.bf16.mxu0 0
        %3057 = vmatpush1.bf16.msra.mxu0 %v2470
        %3058 = vmatprep.subr.bf16.mxu0 0
        %3059 = vmatpush1.bf16.msra.mxu0 %v2471
        %3060 = vmatprep.subr.bf16.mxu0 0
        %3061 = vmatpush1.bf16.msra.mxu0 %v2472
        %3062 = vmatprep.subr.bf16.mxu0 0
        %3063 = vmatpush1.bf16.msra.mxu0 %v2473
        %3064 = vmatprep.subr.bf16.mxu0 0
        %3065 = vmatpush1.bf16.msra.mxu0 %v2474
        %3066 = vmatprep.subr.bf16.mxu0 0
        %3067 = vmatpush1.bf16.msra.mxu0 %v2475
        %3068 = vmatprep.subr.bf16.mxu0 0
        %3069 = vmatpush1.bf16.msra.mxu0 %v2476
        %3070 = vmatprep.subr.bf16.mxu0 0
        %3071 = vmatpush1.bf16.msra.mxu0 %v2477
        %3072 = vmatprep.subr.bf16.mxu0 0
        %3073 = vmatpush1.bf16.msra.mxu0 %v2478
        %3074 = vmatprep.mubr.bf16.mxu0 %v1840
        %3075 = vmatmul.mubr.bf16.gmra.mrb[0].mxu0 %v1839
        %v3076 = vpop.f32.mrb[0].mxu0
        %v3077 = vadd.f32 %v2916, %v3076
        %v3078 = vpop.f32.mrb[0].mxu0
        %v3079 = vpop.f32.mrb[0].mxu0
        %v3080 = vadd.f32 %v2919, %v3079
        %v3081 = vpop.f32.mrb[0].mxu0
        %3082 = vmatprep.mubr.bf16.mxu0 %v1849
        %3083 = vmatmul.mubr.bf16.gmra.mrb[0].mxu0 %v1848
        %v3084 = vpop.f32.mrb[0].mxu0
        %v3085 = vadd.f32 %v2924, %v3084
        %v3086 = vpop.f32.mrb[0].mxu0
        %v3087 = vpop.f32.mrb[0].mxu0
        %v3088 = vadd.f32 %v2927, %v3087
        %v3089 = vpop.f32.mrb[0].mxu0
        %3090 = vmatprep.mubr.bf16.mxu0 %v1858
        %3091 = vmatmul.mubr.bf16.gmra.mrb[0].mxu0 %v1857
        %v3092 = vpop.f32.mrb[0].mxu0
        %v3093 = vadd.f32 %v2932, %v3092
        %v3094 = vpop.f32.mrb[0].mxu0
        %v3095 = vpop.f32.mrb[0].mxu0
        %v3096 = vadd.f32 %v2935, %v3095
        %v3097 = vpop.f32.mrb[0].mxu0
        %3098 = vmatprep.mubr.bf16.mxu0 %v1867
        %3099 = vmatmul.mubr.bf16.gmra.mrb[0].mxu0 %v1866
        %v3100 = vpop.f32.mrb[0].mxu0
        %v3101 = vadd.f32 %v2940, %v3100
        %v3102 = vpop.f32.mrb[0].mxu0
        %v3103 = vpop.f32.mrb[0].mxu0
        %v3104 = vadd.f32 %v2943, %v3103
        %v3105 = vpop.f32.mrb[0].mxu0
        %3106 = vmatprep.mubr.bf16.mxu0 %v1876
        %3107 = vmatmul.mubr.bf16.gmra.mrb[0].mxu0 %v1875
        %v3108 = vpop.f32.mrb[0].mxu0
        %v3109 = vadd.f32 %v2948, %v3108
        %v3110 = vpop.f32.mrb[0].mxu0
        %v3111 = vpop.f32.mrb[0].mxu0
        %v3112 = vadd.f32 %v2951, %v3111
        %v3113 = vpop.f32.mrb[0].mxu0
        %3114 = vmatprep.mubr.bf16.mxu0 %v1885
        %3115 = vmatmul.mubr.bf16.gmra.mrb[0].mxu0 %v1884
        %v3116 = vpop.f32.mrb[0].mxu0
        %v3117 = vadd.f32 %v2956, %v3116
        %v3118 = vpop.f32.mrb[0].mxu0
        %v3119 = vpop.f32.mrb[0].mxu0
        %v3120 = vadd.f32 %v2959, %v3119
        %v3121 = vpop.f32.mrb[0].mxu0
        %3122 = vmatprep.mubr.bf16.mxu0 %v1894
        %3123 = vmatmul.mubr.bf16.gmra.mrb[0].mxu0 %v1893
        %v3124 = vpop.f32.mrb[0].mxu0
        %v3125 = vadd.f32 %v2964, %v3124
        %v3126 = vpop.f32.mrb[0].mxu0
        %v3127 = vpop.f32.mrb[0].mxu0
        %v3128 = vadd.f32 %v2967, %v3127
        %v3129 = vpop.f32.mrb[0].mxu0
        %3130 = vmatprep.mubr.bf16.mxu0 %v1903
        %3131 = vmatmul.mubr.bf16.gmra.mrb[0].mxu0 %v1902
        %v3132 = vpop.f32.mrb[0].mxu0
        %v3133 = vadd.f32 %v2972, %v3132
        %v3134 = vpop.f32.mrb[0].mxu0
        %v3135 = vpop.f32.mrb[0].mxu0
        %v3136 = vadd.f32 %v2975, %v3135
        %v3137 = vpop.f32.mrb[0].mxu0
        %3138 = vmatprep.mubr.bf16.mxu0 %v1912
        %3139 = vmatmul.mubr.bf16.gmra.mrb[0].mxu0 %v1911
        %v3140 = vpop.f32.mrb[0].mxu0
        %v3141 = vadd.f32 %v2980, %v3140
        %v3142 = vpop.f32.mrb[0].mxu0
        %v3143 = vpop.f32.mrb[0].mxu0
        %v3144 = vadd.f32 %v2983, %v3143
        %v3145 = vpop.f32.mrb[0].mxu0
        %3146 = vmatprep.mubr.bf16.mxu0 %v1921
        %3147 = vmatmul.mubr.bf16.gmra.mrb[0].mxu0 %v1920
        %v3148 = vpop.f32.mrb[0].mxu0
        %v3149 = vadd.f32 %v2988, %v3148
        %v3150 = vpop.f32.mrb[0].mxu0
        %v3151 = vpop.f32.mrb[0].mxu0
        %v3152 = vadd.f32 %v2991, %v3151
        %v3153 = vpop.f32.mrb[0].mxu0
        %3154 = vmatprep.mubr.bf16.mxu0 %v1930
        %3155 = vmatmul.mubr.bf16.gmra.mrb[0].mxu0 %v1929
        %v3156 = vpop.f32.mrb[0].mxu0
        %v3157 = vadd.f32 %v2996, %v3156
        %v3158 = vpop.f32.mrb[0].mxu0
        %v3159 = vpop.f32.mrb[0].mxu0
        %v3160 = vadd.f32 %v2999, %v3159
        %v3161 = vpop.f32.mrb[0].mxu0
        %3162 = vmatprep.mubr.bf16.mxu0 %v1939
        %3163 = vmatmul.mubr.bf16.gmra.mrb[0].mxu0 %v1938
        %v3164 = vpop.f32.mrb[0].mxu0
        %v3165 = vadd.f32 %v3004, %v3164
        %v3166 = vpop.f32.mrb[0].mxu0
        %v3167 = vpop.f32.mrb[0].mxu0
        %v3168 = vadd.f32 %v3007, %v3167
        %v3169 = vpop.f32.mrb[0].mxu0
        %3170 = vmatprep.mubr.bf16.mxu0 %v1948
        %3171 = vmatmul.mubr.bf16.gmra.mrb[0].mxu0 %v1947
        %v3172 = vpop.f32.mrb[0].mxu0
        %v3173 = vadd.f32 %v3012, %v3172
        %v3174 = vpop.f32.mrb[0].mxu0
        %v3175 = vpop.f32.mrb[0].mxu0
        %v3176 = vadd.f32 %v3015, %v3175
        %v3177 = vpop.f32.mrb[0].mxu0
        %3178 = vmatprep.mubr.bf16.mxu0 %v1957
        %3179 = vmatmul.mubr.bf16.gmra.mrb[0].mxu0 %v1956
        %v3180 = vpop.f32.mrb[0].mxu0
        %v3181 = vadd.f32 %v3020, %v3180
        %v3182 = vpop.f32.mrb[0].mxu0
        %v3183 = vpop.f32.mrb[0].mxu0
        %v3184 = vadd.f32 %v3023, %v3183
        %v3185 = vpop.f32.mrb[0].mxu0
        %3186 = vmatprep.mubr.bf16.mxu0 %v1966
        %3187 = vmatmul.mubr.bf16.gmra.mrb[0].mxu0 %v1965
        %v3188 = vpop.f32.mrb[0].mxu0
        %v3189 = vadd.f32 %v3028, %v3188
        %v3190 = vpop.f32.mrb[0].mxu0
        %v3191 = vpop.f32.mrb[0].mxu0
        %v3192 = vadd.f32 %v3031, %v3191
        %v3193 = vpop.f32.mrb[0].mxu0
        %3194 = vmatprep.mubr.bf16.mxu0 %v1975
        %3195 = vmatmul.mubr.bf16.gmra.mrb[0].mxu0 %v1974
        %v3196 = vpop.f32.mrb[0].mxu0
        %v3197 = vadd.f32 %v3036, %v3196
        %v3198 = vpop.f32.mrb[0].mxu0
        %v3199 = vpop.f32.mrb[0].mxu0
        %v3200 = vadd.f32 %v3039, %v3199
        %v3201 = vpop.f32.mrb[0].mxu0
        %3202 = vdwg.mxu0
        %3203 = vmatprep.subr.bf16.mxu0 0
        %3204 = vmatpush1.bf16.msra.mxu0 %v2479
        %3205 = vmatprep.subr.bf16.mxu0 0
        %3206 = vmatpush1.bf16.msra.mxu0 %v2480
        %3207 = vmatprep.subr.bf16.mxu0 0
        %3208 = vmatpush1.bf16.msra.mxu0 %v2481
        %3209 = vmatprep.subr.bf16.mxu0 0
        %3210 = vmatpush1.bf16.msra.mxu0 %v2482
        %3211 = vmatprep.subr.bf16.mxu0 0
        %3212 = vmatpush1.bf16.msra.mxu0 %v2483
        %3213 = vmatprep.subr.bf16.mxu0 0
        %3214 = vmatpush1.bf16.msra.mxu0 %v2484
        %3215 = vmatprep.subr.bf16.mxu0 0
        %3216 = vmatpush1.bf16.msra.mxu0 %v2485
        %3217 = vmatprep.subr.bf16.mxu0 0
        %3218 = vmatpush1.bf16.msra.mxu0 %v2486
        %3219 = vmatprep.subr.bf16.mxu0 0
        %3220 = vmatpush1.bf16.msra.mxu0 0
        %3221 = vmatprep.subr.bf16.mxu0 0
        %3222 = vmatpush1.bf16.msra.mxu0 0
        %3223 = vmatprep.subr.bf16.mxu0 0
        %3224 = vmatpush1.bf16.msra.mxu0 0
        %3225 = vmatprep.subr.bf16.mxu0 0
        %3226 = vmatpush1.bf16.msra.mxu0 0
        %3227 = vmatprep.subr.bf16.mxu0 0
        %3228 = vmatpush1.bf16.msra.mxu0 0
        %3229 = vmatprep.subr.bf16.mxu0 0
        %3230 = vmatpush1.bf16.msra.mxu0 0
        %3231 = vmatprep.subr.bf16.mxu0 0
        %3232 = vmatpush1.bf16.msra.mxu0 0
        %3233 = vmatprep.subr.bf16.mxu0 0
        %3234 = vmatpush1.bf16.msra.mxu0 0
        %3235 = vmatprep.mubr.bf16.mxu0 0
        %3236 = vmatmul.mubr.bf16.gmra.mrb[0].mxu0 %v1841
        %v3237 = vpop.f32.mrb[0].mxu0
        %v3238 = vadd.f32 %v3077, %v3237
        %v3239 = vpop.f32.mrb[0].mxu0
        %v3240 = vpop.f32.mrb[0].mxu0
        %v3241 = vadd.f32 %v3080, %v3240
        %v3242 = vpop.f32.mrb[0].mxu0
        %3243 = vmatprep.mubr.bf16.mxu0 0
        %3244 = vmatmul.mubr.bf16.gmra.mrb[0].mxu0 %v1850
        %v3245 = vpop.f32.mrb[0].mxu0
        %v3246 = vadd.f32 %v3085, %v3245
        %v3247 = vpop.f32.mrb[0].mxu0
        %v3248 = vpop.f32.mrb[0].mxu0
        %v3249 = vadd.f32 %v3088, %v3248
        %v3250 = vpop.f32.mrb[0].mxu0
        %3251 = vmatprep.mubr.bf16.mxu0 0
        %3252 = vmatmul.mubr.bf16.gmra.mrb[0].mxu0 %v1859
        %v3253 = vpop.f32.mrb[0].mxu0
        %v3254 = vadd.f32 %v3093, %v3253
        %v3255 = vpop.f32.mrb[0].mxu0
        %v3256 = vpop.f32.mrb[0].mxu0
        %v3257 = vadd.f32 %v3096, %v3256
        %v3258 = vpop.f32.mrb[0].mxu0
        %3259 = vmatprep.mubr.bf16.mxu0 0
        %3260 = vmatmul.mubr.bf16.gmra.mrb[0].mxu0 %v1868
        %v3261 = vpop.f32.mrb[0].mxu0
        %v3262 = vadd.f32 %v3101, %v3261
        %v3263 = vpop.f32.mrb[0].mxu0
        %v3264 = vpop.f32.mrb[0].mxu0
        %v3265 = vadd.f32 %v3104, %v3264
        %v3266 = vpop.f32.mrb[0].mxu0
        %3267 = vmatprep.mubr.bf16.mxu0 0
        %3268 = vmatmul.mubr.bf16.gmra.mrb[0].mxu0 %v1877
        %v3269 = vpop.f32.mrb[0].mxu0
        %v3270 = vadd.f32 %v3109, %v3269
        %v3271 = vpop.f32.mrb[0].mxu0
        %v3272 = vpop.f32.mrb[0].mxu0
        %v3273 = vadd.f32 %v3112, %v3272
        %v3274 = vpop.f32.mrb[0].mxu0
        %3275 = vmatprep.mubr.bf16.mxu0 0
        %3276 = vmatmul.mubr.bf16.gmra.mrb[0].mxu0 %v1886
        %v3277 = vpop.f32.mrb[0].mxu0
        %v3278 = vadd.f32 %v3117, %v3277
        %v3279 = vpop.f32.mrb[0].mxu0
        %v3280 = vpop.f32.mrb[0].mxu0
        %v3281 = vadd.f32 %v3120, %v3280
        %v3282 = vpop.f32.mrb[0].mxu0
        %3283 = vmatprep.mubr.bf16.mxu0 0
        %3284 = vmatmul.mubr.bf16.gmra.mrb[0].mxu0 %v1895
        %v3285 = vpop.f32.mrb[0].mxu0
        %v3286 = vadd.f32 %v3125, %v3285
        %v3287 = vpop.f32.mrb[0].mxu0
        %v3288 = vpop.f32.mrb[0].mxu0
        %v3289 = vadd.f32 %v3128, %v3288
        %v3290 = vpop.f32.mrb[0].mxu0
        %3291 = vmatprep.mubr.bf16.mxu0 0
        %3292 = vmatmul.mubr.bf16.gmra.mrb[0].mxu0 %v1904
        %v3293 = vpop.f32.mrb[0].mxu0
        %v3294 = vadd.f32 %v3133, %v3293
        %v3295 = vpop.f32.mrb[0].mxu0
        %v3296 = vpop.f32.mrb[0].mxu0
        %v3297 = vadd.f32 %v3136, %v3296
        %v3298 = vpop.f32.mrb[0].mxu0
        %3299 = vmatprep.mubr.bf16.mxu0 0
        %3300 = vmatmul.mubr.bf16.gmra.mrb[0].mxu0 %v1913
        %v3301 = vpop.f32.mrb[0].mxu0
        %v3302 = vadd.f32 %v3141, %v3301
        %v3303 = vpop.f32.mrb[0].mxu0
        %v3304 = vpop.f32.mrb[0].mxu0
        %v3305 = vadd.f32 %v3144, %v3304
        %v3306 = vpop.f32.mrb[0].mxu0
        %3307 = vmatprep.mubr.bf16.mxu0 0
        %3308 = vmatmul.mubr.bf16.gmra.mrb[0].mxu0 %v1922
        %v3309 = vpop.f32.mrb[0].mxu0
        %v3310 = vadd.f32 %v3149, %v3309
        %v3311 = vpop.f32.mrb[0].mxu0
        %v3312 = vpop.f32.mrb[0].mxu0
        %v3313 = vadd.f32 %v3152, %v3312
        %v3314 = vpop.f32.mrb[0].mxu0
        %3315 = vmatprep.mubr.bf16.mxu0 0
        %3316 = vmatmul.mubr.bf16.gmra.mrb[0].mxu0 %v1931
        %v3317 = vpop.f32.mrb[0].mxu0
        %v3318 = vadd.f32 %v3157, %v3317
        %v3319 = vpop.f32.mrb[0].mxu0
        %v3320 = vpop.f32.mrb[0].mxu0
        %v3321 = vadd.f32 %v3160, %v3320
        %v3322 = vpop.f32.mrb[0].mxu0
        %3323 = vmatprep.mubr.bf16.mxu0 0
        %3324 = vmatmul.mubr.bf16.gmra.mrb[0].mxu0 %v1940
        %v3325 = vpop.f32.mrb[0].mxu0
        %v3326 = vadd.f32 %v3165, %v3325
        %v3327 = vpop.f32.mrb[0].mxu0
        %v3328 = vpop.f32.mrb[0].mxu0
        %v3329 = vadd.f32 %v3168, %v3328
        %v3330 = vpop.f32.mrb[0].mxu0
        %3331 = vmatprep.mubr.bf16.mxu0 0
        %3332 = vmatmul.mubr.bf16.gmra.mrb[0].mxu0 %v1949
        %v3333 = vpop.f32.mrb[0].mxu0
        %v3334 = vadd.f32 %v3173, %v3333
        %v3335 = vpop.f32.mrb[0].mxu0
        %v3336 = vpop.f32.mrb[0].mxu0
        %v3337 = vadd.f32 %v3176, %v3336
        %v3338 = vpop.f32.mrb[0].mxu0
        %3339 = vmatprep.mubr.bf16.mxu0 0
        %3340 = vmatmul.mubr.bf16.gmra.mrb[0].mxu0 %v1958
        %v3341 = vpop.f32.mrb[0].mxu0
        %v3342 = vadd.f32 %v3181, %v3341
        %v3343 = vpop.f32.mrb[0].mxu0
        %v3344 = vpop.f32.mrb[0].mxu0
        %v3345 = vadd.f32 %v3184, %v3344
        %v3346 = vpop.f32.mrb[0].mxu0
        %3347 = vmatprep.mubr.bf16.mxu0 0
        %3348 = vmatmul.mubr.bf16.gmra.mrb[0].mxu0 %v1967
        %v3349 = vpop.f32.mrb[0].mxu0
        %v3350 = vadd.f32 %v3189, %v3349
        %v3351 = vpop.f32.mrb[0].mxu0
        %v3352 = vpop.f32.mrb[0].mxu0
        %v3353 = vadd.f32 %v3192, %v3352
        %v3354 = vpop.f32.mrb[0].mxu0
        %3355 = vmatprep.mubr.bf16.mxu0 0
        %3356 = vmatmul.mubr.bf16.gmra.mrb[0].mxu0 %v1976
        %v3357 = vpop.f32.mrb[0].mxu0
        %v3358 = vadd.f32 %v3197, %v3357
        %v3359 = vpop.f32.mrb[0].mxu0
        %v3360 = vpop.f32.mrb[0].mxu0
        %v3361 = vadd.f32 %v3200, %v3360
        %v3362 = vpop.f32.mrb[0].mxu0
        %3363 = vdwg.mxu0
        %v3364 = vld [vmem:[%s1] sm:$0xff]
        %v3365 = vld [vmem:[%s1 + $0x8] sm:$0xff]
        %v3366 = vld [vmem:[%s1 + $0x10] sm:$0xff]
        %v3367 = vld [vmem:[%s1 + $0x18] sm:$0xff]
        %v3368 = vld [vmem:[%s1 + $0x20] sm:$0xff]
        %v3369 = vld [vmem:[%s1 + $0x28] sm:$0xff]
        %v3370 = vld [vmem:[%s1 + $0x30] sm:$0xff]
        %v3371 = vld [vmem:[%s1 + $0x38] sm:$0xff]
        %v3372 = vld [vmem:[%s1 + $0x40] sm:$0xff]
        %v3373 = vld [vmem:[%s1 + $0x48] sm:$0xff]
        %v3374 = vld [vmem:[%s1 + $0x50] sm:$0xff]
        %v3375 = vld [vmem:[%s1 + $0x58] sm:$0xff]
        %v3376 = vld [vmem:[%s1 + $0x60] sm:$0xff]
        %v3377 = vld [vmem:[%s1 + $0x68] sm:$0xff]
        %v3378 = vld [vmem:[%s1 + $0x70] sm:$0xff]
        %v3379 = vld [vmem:[%s1 + $0x78] sm:$0xff]
        %v3380 = vld [vmem:[%s1 + $0x80] sm:$0xff]
        %v3381 = vld [vmem:[%s1 + $0x88] sm:$0xff]
        %v3382 = vld [vmem:[%s1 + $0x90] sm:$0xff]
        %v3383 = vld [vmem:[%s1 + $0x98] sm:$0xff]
        %v3384 = vld [vmem:[%s1 + $0xa0] sm:$0xff]
        %v3385 = vld [vmem:[%s1 + $0xa8] sm:$0xff]
        %v3386 = vld [vmem:[%s1 + $0xb0] sm:$0xff]
        %v3387 = vld [vmem:[%s1 + $0xb8] sm:$0xff]
        %v3388 = vld [vmem:[%s1 + $0xc0] sm:$0xff]
        %v3389 = vld [vmem:[%s1 + $0xc8] sm:$0xff]
        %v3390 = vld [vmem:[%s1 + $0xd0] sm:$0xff]
        %v3391 = vld [vmem:[%s1 + $0xd8] sm:$0xff]
        %v3392 = vld [vmem:[%s1 + $0xe0] sm:$0xff]
        %v3393 = vld [vmem:[%s1 + $0xe8] sm:$0xff]
        %v3394 = vld [vmem:[%s1 + $0xf0] sm:$0xff]
        %v3395 = vld [vmem:[%s1 + $0xf8] sm:$0xff]
        %v3396 = vld [vmem:[#allocation11] sm:$0x1]
        %v3397 = vld [vmem:[#allocation12] sm:$0x1]
        %v3398 = vld [vmem:[%s9] sm:$0xff]
        %v3399 = vld [vmem:[%s9 + $0x8] sm:$0xff]
        %v3400 = vld [vmem:[%s9 + $0x10] sm:$0xff]
        %v3401 = vld [vmem:[%s9 + $0x18] sm:$0xff]
        %v3402 = vld [vmem:[%s9 + $0x20] sm:$0xff]
        %v3403 = vld [vmem:[%s9 + $0x28] sm:$0xff]
        %v3404 = vld [vmem:[%s9 + $0x30] sm:$0xff]
        %v3405 = vld [vmem:[%s9 + $0x38] sm:$0xff]
        %v3406 = vld [vmem:[%s9 + $0x40] sm:$0xff]
        %v3407 = vld [vmem:[%s9 + $0x48] sm:$0xff]
        %v3408 = vld [vmem:[%s9 + $0x50] sm:$0xff]
        %v3409 = vld [vmem:[%s9 + $0x58] sm:$0xff]
        %v3410 = vld [vmem:[%s9 + $0x60] sm:$0xff]
        %v3411 = vld [vmem:[%s9 + $0x68] sm:$0xff]
        %v3412 = vld [vmem:[%s9 + $0x70] sm:$0xff]
        %v3413 = vld [vmem:[%s9 + $0x78] sm:$0xff]
        %vm3414 = vcmp.gt.f32.partialorder %v3364, 0.0
        %vm3415 = vcmp.gt.f32.partialorder %v3365, 0.0
        %vm3416 = vcmp.gt.f32.partialorder %v3366, 0.0
        %vm3417 = vcmp.gt.f32.partialorder %v3367, 0.0
        %vm3418 = vcmp.gt.f32.partialorder %v3368, 0.0
        %vm3419 = vcmp.gt.f32.partialorder %v3369, 0.0
        %vm3420 = vcmp.gt.f32.partialorder %v3370, 0.0
        %vm3421 = vcmp.gt.f32.partialorder %v3371, 0.0
        %vm3422 = vcmp.gt.f32.partialorder %v3372, 0.0
        %vm3423 = vcmp.gt.f32.partialorder %v3373, 0.0
        %vm3424 = vcmp.gt.f32.partialorder %v3374, 0.0
        %vm3425 = vcmp.gt.f32.partialorder %v3375, 0.0
        %vm3426 = vcmp.gt.f32.partialorder %v3376, 0.0
        %vm3427 = vcmp.gt.f32.partialorder %v3377, 0.0
        %vm3428 = vcmp.gt.f32.partialorder %v3378, 0.0
        %vm3429 = vcmp.gt.f32.partialorder %v3379, 0.0
        %vm3430 = vcmp.gt.f32.partialorder %v3380, 0.0
        %vm3431 = vcmp.gt.f32.partialorder %v3381, 0.0
        %vm3432 = vcmp.gt.f32.partialorder %v3382, 0.0
        %vm3433 = vcmp.gt.f32.partialorder %v3383, 0.0
        %vm3434 = vcmp.gt.f32.partialorder %v3384, 0.0
        %vm3435 = vcmp.gt.f32.partialorder %v3385, 0.0
        %vm3436 = vcmp.gt.f32.partialorder %v3386, 0.0
        %vm3437 = vcmp.gt.f32.partialorder %v3387, 0.0
        %vm3438 = vcmp.gt.f32.partialorder %v3388, 0.0
        %vm3439 = vcmp.gt.f32.partialorder %v3389, 0.0
        %vm3440 = vcmp.gt.f32.partialorder %v3390, 0.0
        %vm3441 = vcmp.gt.f32.partialorder %v3391, 0.0
        %vm3442 = vcmp.gt.f32.partialorder %v3392, 0.0
        %vm3443 = vcmp.gt.f32.partialorder %v3393, 0.0
        %vm3444 = vcmp.gt.f32.partialorder %v3394, 0.0
        %vm3445 = vcmp.gt.f32.partialorder %v3395, 0.0
        %v3446 = vsel %vm3414, 1, 0
        %v3447 = vsel %vm3415, 1, 0
        %v3448 = vsel %vm3416, 1, 0
        %v3449 = vsel %vm3417, 1, 0
        %v3450 = vsel %vm3418, 1, 0
        %v3451 = vsel %vm3419, 1, 0
        %v3452 = vsel %vm3420, 1, 0
        %v3453 = vsel %vm3421, 1, 0
        %v3454 = vsel %vm3422, 1, 0
        %v3455 = vsel %vm3423, 1, 0
        %v3456 = vsel %vm3424, 1, 0
        %v3457 = vsel %vm3425, 1, 0
        %v3458 = vsel %vm3426, 1, 0
        %v3459 = vsel %vm3427, 1, 0
        %v3460 = vsel %vm3428, 1, 0
        %v3461 = vsel %vm3429, 1, 0
        %v3462 = vsel %vm3430, 1, 0
        %v3463 = vsel %vm3431, 1, 0
        %v3464 = vsel %vm3432, 1, 0
        %v3465 = vsel %vm3433, 1, 0
        %v3466 = vsel %vm3434, 1, 0
        %v3467 = vsel %vm3435, 1, 0
        %v3468 = vsel %vm3436, 1, 0
        %v3469 = vsel %vm3437, 1, 0
        %v3470 = vsel %vm3438, 1, 0
        %v3471 = vsel %vm3439, 1, 0
        %v3472 = vsel %vm3440, 1, 0
        %v3473 = vsel %vm3441, 1, 0
        %v3474 = vsel %vm3442, 1, 0
        %v3475 = vsel %vm3443, 1, 0
        %v3476 = vsel %vm3444, 1, 0
        %v3477 = vsel %vm3445, 1, 0
        %3478 = vset.pattern.permute.xlu0 0
        %3479 = vperm.xlu0 %3478, %v3446
        %v3480 = vpop.permute.xlu0 %3479
        %3481 = vset.pattern.permute.xlu0 0
        %3482 = vperm.xlu0 %3481, %v3447
        %v3483 = vpop.permute.xlu0 %3482
        %3484 = vset.pattern.permute.xlu0 0
        %3485 = vperm.xlu0 %3484, %v3448
        %v3486 = vpop.permute.xlu0 %3485
        %3487 = vset.pattern.permute.xlu0 0
        %3488 = vperm.xlu0 %3487, %v3449
        %v3489 = vpop.permute.xlu0 %3488
        %3490 = vset.pattern.permute.xlu0 0
        %3491 = vperm.xlu0 %3490, %v3450
        %v3492 = vpop.permute.xlu0 %3491
        %3493 = vset.pattern.permute.xlu0 0
        %3494 = vperm.xlu0 %3493, %v3451
        %v3495 = vpop.permute.xlu0 %3494
        %3496 = vset.pattern.permute.xlu0 0
        %3497 = vperm.xlu0 %3496, %v3452
        %v3498 = vpop.permute.xlu0 %3497
        %3499 = vset.pattern.permute.xlu0 0
        %3500 = vperm.xlu0 %3499, %v3453
        %v3501 = vpop.permute.xlu0 %3500
        %3502 = vset.pattern.permute.xlu0 0
        %3503 = vperm.xlu0 %3502, %v3454
        %v3504 = vpop.permute.xlu0 %3503
        %3505 = vset.pattern.permute.xlu0 0
        %3506 = vperm.xlu0 %3505, %v3455
        %v3507 = vpop.permute.xlu0 %3506
        %3508 = vset.pattern.permute.xlu0 0
        %3509 = vperm.xlu0 %3508, %v3456
        %v3510 = vpop.permute.xlu0 %3509
        %3511 = vset.pattern.permute.xlu0 0
        %3512 = vperm.xlu0 %3511, %v3457
        %v3513 = vpop.permute.xlu0 %3512
        %3514 = vset.pattern.permute.xlu0 0
        %3515 = vperm.xlu0 %3514, %v3458
        %v3516 = vpop.permute.xlu0 %3515
        %3517 = vset.pattern.permute.xlu0 0
        %3518 = vperm.xlu0 %3517, %v3459
        %v3519 = vpop.permute.xlu0 %3518
        %3520 = vset.pattern.permute.xlu0 0
        %3521 = vperm.xlu0 %3520, %v3460
        %v3522 = vpop.permute.xlu0 %3521
        %3523 = vset.pattern.permute.xlu0 0
        %3524 = vperm.xlu0 %3523, %v3461
        %v3525 = vpop.permute.xlu0 %3524
        %3526 = vset.pattern.permute.xlu0 0
        %3527 = vperm.xlu0 %3526, %v3462
        %v3528 = vpop.permute.xlu0 %3527
        %3529 = vset.pattern.permute.xlu0 0
        %3530 = vperm.xlu0 %3529, %v3463
        %v3531 = vpop.permute.xlu0 %3530
        %3532 = vset.pattern.permute.xlu0 0
        %3533 = vperm.xlu0 %3532, %v3464
        %v3534 = vpop.permute.xlu0 %3533
        %3535 = vset.pattern.permute.xlu0 0
        %3536 = vperm.xlu0 %3535, %v3465
        %v3537 = vpop.permute.xlu0 %3536
        %3538 = vset.pattern.permute.xlu0 0
        %3539 = vperm.xlu0 %3538, %v3466
        %v3540 = vpop.permute.xlu0 %3539
        %3541 = vset.pattern.permute.xlu0 0
        %3542 = vperm.xlu0 %3541, %v3467
        %v3543 = vpop.permute.xlu0 %3542
        %3544 = vset.pattern.permute.xlu0 0
        %3545 = vperm.xlu0 %3544, %v3468
        %v3546 = vpop.permute.xlu0 %3545
        %3547 = vset.pattern.permute.xlu0 0
        %3548 = vperm.xlu0 %3547, %v3469
        %v3549 = vpop.permute.xlu0 %3548
        %3550 = vset.pattern.permute.xlu0 0
        %3551 = vperm.xlu0 %3550, %v3470
        %v3552 = vpop.permute.xlu0 %3551
        %3553 = vset.pattern.permute.xlu0 0
        %3554 = vperm.xlu0 %3553, %v3471
        %v3555 = vpop.permute.xlu0 %3554
        %3556 = vset.pattern.permute.xlu0 0
        %3557 = vperm.xlu0 %3556, %v3472
        %v3558 = vpop.permute.xlu0 %3557
        %3559 = vset.pattern.permute.xlu0 0
        %3560 = vperm.xlu0 %3559, %v3473
        %v3561 = vpop.permute.xlu0 %3560
        %3562 = vset.pattern.permute.xlu0 0
        %3563 = vperm.xlu0 %3562, %v3474
        %v3564 = vpop.permute.xlu0 %3563
        %3565 = vset.pattern.permute.xlu0 0
        %3566 = vperm.xlu0 %3565, %v3475
        %v3567 = vpop.permute.xlu0 %3566
        %3568 = vset.pattern.permute.xlu0 0
        %3569 = vperm.xlu0 %3568, %v3476
        %v3570 = vpop.permute.xlu0 %3569
        %3571 = vset.pattern.permute.xlu0 0
        %3572 = vperm.xlu0 %3571, %v3477
        %v3573 = vpop.permute.xlu0 %3572
        %vm3574 = vcmp.eq.s32.totalorder %v3480, 1
        %vm3575 = vcmp.eq.s32.totalorder %v3483, 1
        %vm3576 = vcmp.eq.s32.totalorder %v3486, 1
        %vm3577 = vcmp.eq.s32.totalorder %v3489, 1
        %vm3578 = vcmp.eq.s32.totalorder %v3492, 1
        %vm3579 = vcmp.eq.s32.totalorder %v3495, 1
        %vm3580 = vcmp.eq.s32.totalorder %v3498, 1
        %vm3581 = vcmp.eq.s32.totalorder %v3501, 1
        %vm3582 = vcmp.eq.s32.totalorder %v3504, 1
        %vm3583 = vcmp.eq.s32.totalorder %v3507, 1
        %vm3584 = vcmp.eq.s32.totalorder %v3510, 1
        %vm3585 = vcmp.eq.s32.totalorder %v3513, 1
        %vm3586 = vcmp.eq.s32.totalorder %v3516, 1
        %vm3587 = vcmp.eq.s32.totalorder %v3519, 1
        %vm3588 = vcmp.eq.s32.totalorder %v3522, 1
        %vm3589 = vcmp.eq.s32.totalorder %v3525, 1
        %vm3590 = vcmp.eq.s32.totalorder %v3528, 1
        %vm3591 = vcmp.eq.s32.totalorder %v3531, 1
        %vm3592 = vcmp.eq.s32.totalorder %v3534, 1
        %vm3593 = vcmp.eq.s32.totalorder %v3537, 1
        %vm3594 = vcmp.eq.s32.totalorder %v3540, 1
        %vm3595 = vcmp.eq.s32.totalorder %v3543, 1
        %vm3596 = vcmp.eq.s32.totalorder %v3546, 1
        %vm3597 = vcmp.eq.s32.totalorder %v3549, 1
        %vm3598 = vcmp.eq.s32.totalorder %v3552, 1
        %vm3599 = vcmp.eq.s32.totalorder %v3555, 1
        %vm3600 = vcmp.eq.s32.totalorder %v3558, 1
        %vm3601 = vcmp.eq.s32.totalorder %v3561, 1
        %vm3602 = vcmp.eq.s32.totalorder %v3564, 1
        %vm3603 = vcmp.eq.s32.totalorder %v3567, 1
        %vm3604 = vcmp.eq.s32.totalorder %v3570, 1
        %vm3605 = vcmp.eq.s32.totalorder %v3573, 1
        %v3606 = vsel %vm3574, %v3238, 0.0
        %v3607 = vsel %vm3575, %v3241, 0.0
        %v3608 = vsel %vm3576, %v3246, 0.0
        %v3609 = vsel %vm3577, %v3249, 0.0
        %v3610 = vsel %vm3578, %v3254, 0.0
        %v3611 = vsel %vm3579, %v3257, 0.0
        %v3612 = vsel %vm3580, %v3262, 0.0
        %v3613 = vsel %vm3581, %v3265, 0.0
        %v3614 = vsel %vm3582, %v3270, 0.0
        %v3615 = vsel %vm3583, %v3273, 0.0
        %v3616 = vsel %vm3584, %v3278, 0.0
        %v3617 = vsel %vm3585, %v3281, 0.0
        %v3618 = vsel %vm3586, %v3286, 0.0
        %v3619 = vsel %vm3587, %v3289, 0.0
        %v3620 = vsel %vm3588, %v3294, 0.0
        %v3621 = vsel %vm3589, %v3297, 0.0
        %v3622 = vsel %vm3590, %v3302, 0.0
        %v3623 = vsel %vm3591, %v3305, 0.0
        %v3624 = vsel %vm3592, %v3310, 0.0
        %v3625 = vsel %vm3593, %v3313, 0.0
        %v3626 = vsel %vm3594, %v3318, 0.0
        %v3627 = vsel %vm3595, %v3321, 0.0
        %v3628 = vsel %vm3596, %v3326, 0.0
        %v3629 = vsel %vm3597, %v3329, 0.0
        %v3630 = vsel %vm3598, %v3334, 0.0
        %v3631 = vsel %vm3599, %v3337, 0.0
        %v3632 = vsel %vm3600, %v3342, 0.0
        %v3633 = vsel %vm3601, %v3345, 0.0
        %v3634 = vsel %vm3602, %v3350, 0.0
        %v3635 = vsel %vm3603, %v3353, 0.0
        %v3636 = vsel %vm3604, %v3358, 0.0
        %v3637 = vsel %vm3605, %v3361, 0.0
        %v3638 = vadd.f32 %v3606, %v3607
        %v3639 = vadd.f32 %v3638, %v3608
        %v3640 = vadd.f32 %v3639, %v3609
        %v3641 = vadd.f32 %v3640, %v3610
        %v3642 = vadd.f32 %v3641, %v3611
        %v3643 = vadd.f32 %v3642, %v3612
        %v3644 = vadd.f32 %v3643, %v3613
        %v3645 = vadd.f32 %v3644, %v3614
        %v3646 = vadd.f32 %v3645, %v3615
        %v3647 = vadd.f32 %v3646, %v3616
        %v3648 = vadd.f32 %v3647, %v3617
        %v3649 = vadd.f32 %v3648, %v3618
        %v3650 = vadd.f32 %v3649, %v3619
        %v3651 = vadd.f32 %v3650, %v3620
        %v3652 = vadd.f32 %v3651, %v3621
        %v3653 = vadd.f32 %v3652, %v3622
        %v3654 = vadd.f32 %v3653, %v3623
        %v3655 = vadd.f32 %v3654, %v3624
        %v3656 = vadd.f32 %v3655, %v3625
        %v3657 = vadd.f32 %v3656, %v3626
        %v3658 = vadd.f32 %v3657, %v3627
        %v3659 = vadd.f32 %v3658, %v3628
        %v3660 = vadd.f32 %v3659, %v3629
        %v3661 = vadd.f32 %v3660, %v3630
        %v3662 = vadd.f32 %v3661, %v3631
        %v3663 = vadd.f32 %v3662, %v3632
        %v3664 = vadd.f32 %v3663, %v3633
        %v3665 = vadd.f32 %v3664, %v3634
        %v3666 = vadd.f32 %v3665, %v3635
        %v3667 = vadd.f32 %v3666, %v3636
        %v3668 = vadd.f32 %v3667, %v3637
        %v3669 = vrot.slane %v3668, 4
        %v3670 = vadd.f32 %v3668, %v3669
        %v3671 = vrot.slane %v3670, 2
        %v3672 = vadd.f32 %v3670, %v3671
        %v3673 = vrot.slane %v3672, 1
        %v3674 = vadd.f32 %v3672, %v3673
        %v3675 = vmul.f32 %v3606, %v3606
        %v3676 = vmul.f32 %v3607, %v3607
        %v3677 = vmul.f32 %v3608, %v3608
        %v3678 = vmul.f32 %v3609, %v3609
        %v3679 = vmul.f32 %v3610, %v3610
        %v3680 = vmul.f32 %v3611, %v3611
        %v3681 = vmul.f32 %v3612, %v3612
        %v3682 = vmul.f32 %v3613, %v3613
        %v3683 = vmul.f32 %v3614, %v3614
        %v3684 = vmul.f32 %v3615, %v3615
        %v3685 = vmul.f32 %v3616, %v3616
        %v3686 = vmul.f32 %v3617, %v3617
        %v3687 = vmul.f32 %v3618, %v3618
        %v3688 = vmul.f32 %v3619, %v3619
        %v3689 = vmul.f32 %v3620, %v3620
        %v3690 = vmul.f32 %v3621, %v3621
        %v3691 = vmul.f32 %v3622, %v3622
        %v3692 = vmul.f32 %v3623, %v3623
        %v3693 = vmul.f32 %v3624, %v3624
        %v3694 = vmul.f32 %v3625, %v3625
        %v3695 = vmul.f32 %v3626, %v3626
        %v3696 = vmul.f32 %v3627, %v3627
        %v3697 = vmul.f32 %v3628, %v3628
        %v3698 = vmul.f32 %v3629, %v3629
        %v3699 = vmul.f32 %v3630, %v3630
        %v3700 = vmul.f32 %v3631, %v3631
        %v3701 = vmul.f32 %v3632, %v3632
        %v3702 = vmul.f32 %v3633, %v3633
        %v3703 = vmul.f32 %v3634, %v3634
        %v3704 = vmul.f32 %v3635, %v3635
        %v3705 = vmul.f32 %v3636, %v3636
        %v3706 = vmul.f32 %v3637, %v3637
        %v3707 = vadd.f32 %v3675, %v3676
        %v3708 = vadd.f32 %v3707, %v3677
        %v3709 = vadd.f32 %v3708, %v3678
        %v3710 = vadd.f32 %v3709, %v3679
        %v3711 = vadd.f32 %v3710, %v3680
        %v3712 = vadd.f32 %v3711, %v3681
        %v3713 = vadd.f32 %v3712, %v3682
        %v3714 = vadd.f32 %v3713, %v3683
        %v3715 = vadd.f32 %v3714, %v3684
        %v3716 = vadd.f32 %v3715, %v3685
        %v3717 = vadd.f32 %v3716, %v3686
        %v3718 = vadd.f32 %v3717, %v3687
        %v3719 = vadd.f32 %v3718, %v3688
        %v3720 = vadd.f32 %v3719, %v3689
        %v3721 = vadd.f32 %v3720, %v3690
        %v3722 = vadd.f32 %v3721, %v3691
        %v3723 = vadd.f32 %v3722, %v3692
        %v3724 = vadd.f32 %v3723, %v3693
        %v3725 = vadd.f32 %v3724, %v3694
        %v3726 = vadd.f32 %v3725, %v3695
        %v3727 = vadd.f32 %v3726, %v3696
        %v3728 = vadd.f32 %v3727, %v3697
        %v3729 = vadd.f32 %v3728, %v3698
        %v3730 = vadd.f32 %v3729, %v3699
        %v3731 = vadd.f32 %v3730, %v3700
        %v3732 = vadd.f32 %v3731, %v3701
        %v3733 = vadd.f32 %v3732, %v3702
        %v3734 = vadd.f32 %v3733, %v3703
        %v3735 = vadd.f32 %v3734, %v3704
        %v3736 = vadd.f32 %v3735, %v3705
        %v3737 = vadd.f32 %v3736, %v3706
        %v3738 = vrot.slane %v3737, 4
        %v3739 = vadd.f32 %v3737, %v3738
        %v3740 = vrot.slane %v3739, 2
        %v3741 = vadd.f32 %v3739, %v3740
        %v3742 = vrot.slane %v3741, 1
        %v3743 = vadd.f32 %v3741, %v3742
        %3744 = vmatprep.subr.mxu0 0.0
        %3745 = vmatpush1.msra.mxu0 %v3398
        %3746 = vmatprep.subr.mxu0 0.0
        %3747 = vmatpush1.msra.mxu0 %v3399
        %3748 = vmatprep.subr.mxu0 0.0
        %3749 = vmatpush1.msra.mxu0 %v3400
        %3750 = vmatprep.subr.mxu0 0.0
        %3751 = vmatpush1.msra.mxu0 %v3401
        %3752 = vmatprep.subr.mxu0 0.0
        %3753 = vmatpush1.msra.mxu0 %v3402
        %3754 = vmatprep.subr.mxu0 0.0
        %3755 = vmatpush1.msra.mxu0 %v3403
        %3756 = vmatprep.subr.mxu0 0.0
        %3757 = vmatpush1.msra.mxu0 %v3404
        %3758 = vmatprep.subr.mxu0 0.0
        %3759 = vmatpush1.msra.mxu0 %v3405
        %3760 = vmatprep.subr.mxu0 0.0
        %3761 = vmatpush1.msra.mxu0 %v3406
        %3762 = vmatprep.subr.mxu0 0.0
        %3763 = vmatpush1.msra.mxu0 %v3407
        %3764 = vmatprep.subr.mxu0 0.0
        %3765 = vmatpush1.msra.mxu0 %v3408
        %3766 = vmatprep.subr.mxu0 0.0
        %3767 = vmatpush1.msra.mxu0 %v3409
        %3768 = vmatprep.subr.mxu0 0.0
        %3769 = vmatpush1.msra.mxu0 %v3410
        %3770 = vmatprep.subr.mxu0 0.0
        %3771 = vmatpush1.msra.mxu0 %v3411
        %3772 = vmatprep.subr.mxu0 0.0
        %3773 = vmatpush1.msra.mxu0 %v3412
        %3774 = vmatprep.subr.mxu0 0.0
        %3775 = vmatpush1.msra.mxu0 %v3413
        %3776 = vmatprep.subr.mxu0 0.0
        %3777 = vmatpush1.msra.mxu0 0.0
        %3778 = vmatprep.subr.mxu0 0.0
        %3779 = vmatpush1.msra.mxu0 0.0
        %3780 = vmatprep.subr.mxu0 0.0
        %3781 = vmatpush1.msra.mxu0 0.0
        %3782 = vmatprep.subr.mxu0 0.0
        %3783 = vmatpush1.msra.mxu0 0.0
        %3784 = vmatprep.subr.mxu0 0.0
        %3785 = vmatpush1.msra.mxu0 0.0
        %3786 = vmatprep.subr.mxu0 0.0
        %3787 = vmatpush1.msra.mxu0 0.0
        %3788 = vmatprep.subr.mxu0 0.0
        %3789 = vmatpush1.msra.mxu0 0.0
        %3790 = vmatprep.subr.mxu0 0.0
        %3791 = vmatpush1.msra.mxu0 0.0
        %3792 = vmatprep.subr.mxu0 0.0
        %3793 = vmatpush1.msra.mxu0 0.0
        %3794 = vmatprep.subr.mxu0 0.0
        %3795 = vmatpush1.msra.mxu0 0.0
        %3796 = vmatprep.subr.mxu0 0.0
        %3797 = vmatpush1.msra.mxu0 0.0
        %3798 = vmatprep.subr.mxu0 0.0
        %3799 = vmatpush1.msra.mxu0 0.0
        %3800 = vmatprep.subr.mxu0 0.0
        %3801 = vmatpush1.msra.mxu0 0.0
        %3802 = vmatprep.subr.mxu0 0.0
        %3803 = vmatpush1.msra.mxu0 0.0
        %3804 = vmatprep.subr.mxu0 0.0
        %3805 = vmatpush1.msra.mxu0 0.0
        %3806 = vmatprep.subr.mxu0 0.0
        %3807 = vmatpush1.msra.mxu0 0.0
        %3808 = vmatprep.mubr.f32.mxu0 0.0
        %3809 = vmatmul.mubr.f32.gmra.mrb[0].mxu0 %v3674
        %v3810 = vpop.f32.mrb[0].mxu0
        %v3811 = vadd.f32 0.0, %v3810
        %v3812 = vpop.f32.mrb[0].mxu0
        %3813 = vdwg.mxu0
        %3814 = vmatprep.subr.mxu0 0.0
        %3815 = vmatpush1.msra.mxu0 %v3398
        %3816 = vmatprep.subr.mxu0 0.0
        %3817 = vmatpush1.msra.mxu0 %v3399
        %3818 = vmatprep.subr.mxu0 0.0
        %3819 = vmatpush1.msra.mxu0 %v3400
        %3820 = vmatprep.subr.mxu0 0.0
        %3821 = vmatpush1.msra.mxu0 %v3401
        %3822 = vmatprep.subr.mxu0 0.0
        %3823 = vmatpush1.msra.mxu0 %v3402
        %3824 = vmatprep.subr.mxu0 0.0
        %3825 = vmatpush1.msra.mxu0 %v3403
        %3826 = vmatprep.subr.mxu0 0.0
        %3827 = vmatpush1.msra.mxu0 %v3404
        %3828 = vmatprep.subr.mxu0 0.0
        %3829 = vmatpush1.msra.mxu0 %v3405
        %3830 = vmatprep.subr.mxu0 0.0
        %3831 = vmatpush1.msra.mxu0 %v3406
        %3832 = vmatprep.subr.mxu0 0.0
        %3833 = vmatpush1.msra.mxu0 %v3407
        %3834 = vmatprep.subr.mxu0 0.0
        %3835 = vmatpush1.msra.mxu0 %v3408
        %3836 = vmatprep.subr.mxu0 0.0
        %3837 = vmatpush1.msra.mxu0 %v3409
        %3838 = vmatprep.subr.mxu0 0.0
        %3839 = vmatpush1.msra.mxu0 %v3410
        %3840 = vmatprep.subr.mxu0 0.0
        %3841 = vmatpush1.msra.mxu0 %v3411
        %3842 = vmatprep.subr.mxu0 0.0
        %3843 = vmatpush1.msra.mxu0 %v3412
        %3844 = vmatprep.subr.mxu0 0.0
        %3845 = vmatpush1.msra.mxu0 %v3413
        %3846 = vmatprep.subr.mxu0 0.0
        %3847 = vmatpush1.msra.mxu0 0.0
        %3848 = vmatprep.subr.mxu0 0.0
        %3849 = vmatpush1.msra.mxu0 0.0
        %3850 = vmatprep.subr.mxu0 0.0
        %3851 = vmatpush1.msra.mxu0 0.0
        %3852 = vmatprep.subr.mxu0 0.0
        %3853 = vmatpush1.msra.mxu0 0.0
        %3854 = vmatprep.subr.mxu0 0.0
        %3855 = vmatpush1.msra.mxu0 0.0
        %3856 = vmatprep.subr.mxu0 0.0
        %3857 = vmatpush1.msra.mxu0 0.0
        %3858 = vmatprep.subr.mxu0 0.0
        %3859 = vmatpush1.msra.mxu0 0.0
        %3860 = vmatprep.subr.mxu0 0.0
        %3861 = vmatpush1.msra.mxu0 0.0
        %3862 = vmatprep.subr.mxu0 0.0
        %3863 = vmatpush1.msra.mxu0 0.0
        %3864 = vmatprep.subr.mxu0 0.0
        %3865 = vmatpush1.msra.mxu0 0.0
        %3866 = vmatprep.subr.mxu0 0.0
        %3867 = vmatpush1.msra.mxu0 0.0
        %3868 = vmatprep.subr.mxu0 0.0
        %3869 = vmatpush1.msra.mxu0 0.0
        %3870 = vmatprep.subr.mxu0 0.0
        %3871 = vmatpush1.msra.mxu0 0.0
        %3872 = vmatprep.subr.mxu0 0.0
        %3873 = vmatpush1.msra.mxu0 0.0
        %3874 = vmatprep.subr.mxu0 0.0
        %3875 = vmatpush1.msra.mxu0 0.0
        %3876 = vmatprep.subr.mxu0 0.0
        %3877 = vmatpush1.msra.mxu0 0.0
        %3878 = vmatprep.mubr.f32.mxu0 0.0
        %3879 = vmatmul.mubr.f32.gmra.mrb[0].mxu0 %v3743
        %v3880 = vpop.f32.mrb[0].mxu0
        %v3881 = vadd.f32 0.0, %v3880
        %v3882 = vpop.f32.mrb[0].mxu0
        %3883 = vdwg.mxu0
        %v3884 = vrcp.pop 392.0
        %v3885 = vmul.f32 %v3811, %v3884
        %v3886 = vmul.f32 %v3881, %v3884
        %v3887 = vmul.f32 %v3885, %v3885
        %v3888 = vsub.f32 %v3886, %v3887
        %v3889 = vadd.f32 %v3888, 1e-05
        %v3890 = vrsqrt.pop %v3889
        %v3892 = vsel %vm882, %v3885, 0
        %v3895 = vsel %vm882, %v3398, 0
        %v3898 = vsel %vm882, %v3399, 0
        %v3901 = vsel %vm882, %v3400, 0
        %v3904 = vsel %vm882, %v3401, 0
        %v3907 = vsel %vm882, %v3402, 0
        %v3910 = vsel %vm882, %v3403, 0
        %v3913 = vsel %vm882, %v3404, 0
        %v3916 = vsel %vm882, %v3405, 0
        %v3919 = vsel %vm882, %v3406, 0
        %v3922 = vsel %vm882, %v3407, 0
        %v3925 = vsel %vm882, %v3408, 0
        %v3928 = vsel %vm882, %v3409, 0
        %v3931 = vsel %vm882, %v3410, 0
        %v3934 = vsel %vm882, %v3411, 0
        %v3937 = vsel %vm882, %v3412, 0
        %v3940 = vsel %vm882, %v3413, 0
        %3942 = vmatprep.subr.mxu0 0.0
        %3943 = vmatpush1.xpose.msra.mxu0 %v3895
        %3944 = vmatprep.subr.mxu0 0.0
        %3945 = vmatpush1.xpose.msra.mxu0 %v3898
        %3946 = vmatprep.subr.mxu0 0.0
        %3947 = vmatpush1.xpose.msra.mxu0 %v3901
        %3948 = vmatprep.subr.mxu0 0.0
        %3949 = vmatpush1.xpose.msra.mxu0 %v3904
        %3950 = vmatprep.subr.mxu0 0.0
        %3951 = vmatpush1.xpose.msra.mxu0 %v3907
        %3952 = vmatprep.subr.mxu0 0.0
        %3953 = vmatpush1.xpose.msra.mxu0 %v3910
        %3954 = vmatprep.subr.mxu0 0.0
        %3955 = vmatpush1.xpose.msra.mxu0 %v3913
        %3956 = vmatprep.subr.mxu0 0.0
        %3957 = vmatpush1.xpose.msra.mxu0 %v3916
        %3958 = vmatprep.subr.mxu0 0.0
        %3959 = vmatpush1.xpose.msra.mxu0 %v3919
        %3960 = vmatprep.subr.mxu0 0.0
        %3961 = vmatpush1.xpose.msra.mxu0 %v3922
        %3962 = vmatprep.subr.mxu0 0.0
        %3963 = vmatpush1.xpose.msra.mxu0 %v3925
        %3964 = vmatprep.subr.mxu0 0.0
        %3965 = vmatpush1.xpose.msra.mxu0 %v3928
        %3966 = vmatprep.subr.mxu0 0.0
        %3967 = vmatpush1.xpose.msra.mxu0 %v3931
        %3968 = vmatprep.subr.mxu0 0.0
        %3969 = vmatpush1.xpose.msra.mxu0 %v3934
        %3970 = vmatprep.subr.mxu0 0.0
        %3971 = vmatpush1.xpose.msra.mxu0 %v3937
        %3972 = vmatprep.subr.mxu0 0.0
        %3973 = vmatpush1.xpose.msra.mxu0 %v3940
        %3974 = vmatprep.subr.mxu0 0.0
        %3975 = vmatpush1.xpose.msra.mxu0 0.0
        %3976 = vmatprep.subr.mxu0 0.0
        %3977 = vmatpush1.xpose.msra.mxu0 0.0
        %3978 = vmatprep.subr.mxu0 0.0
        %3979 = vmatpush1.xpose.msra.mxu0 0.0
        %3980 = vmatprep.subr.mxu0 0.0
        %3981 = vmatpush1.xpose.msra.mxu0 0.0
        %3982 = vmatprep.subr.mxu0 0.0
        %3983 = vmatpush1.xpose.msra.mxu0 0.0
        %3984 = vmatprep.subr.mxu0 0.0
        %3985 = vmatpush1.xpose.msra.mxu0 0.0
        %3986 = vmatprep.subr.mxu0 0.0
        %3987 = vmatpush1.xpose.msra.mxu0 0.0
        %3988 = vmatprep.subr.mxu0 0.0
        %3989 = vmatpush1.xpose.msra.mxu0 0.0
        %3990 = vmatprep.subr.mxu0 0.0
        %3991 = vmatpush1.xpose.msra.mxu0 0.0
        %3992 = vmatprep.subr.mxu0 0.0
        %3993 = vmatpush1.xpose.msra.mxu0 0.0
        %3994 = vmatprep.subr.mxu0 0.0
        %3995 = vmatpush1.xpose.msra.mxu0 0.0
        %3996 = vmatprep.subr.mxu0 0.0
        %3997 = vmatpush1.xpose.msra.mxu0 0.0
        %3998 = vmatprep.subr.mxu0 0.0
        %3999 = vmatpush1.xpose.msra.mxu0 0.0
        %4000 = vmatprep.subr.mxu0 0.0
        %4001 = vmatpush1.xpose.msra.mxu0 0.0
        %4002 = vmatprep.subr.mxu0 0.0
        %4003 = vmatpush1.xpose.msra.mxu0 0.0
        %4004 = vmatprep.subr.mxu0 0.0
        %4005 = vmatpush1.xpose.msra.mxu0 0.0
        %4006 = vmatprep.mubr.f32.mxu0 0.0
        %4007 = vmatmul.mubr.f32.gmra.mrb[0].mxu0 %v3892
        %v4008 = vpop.f32.mrb[0].mxu0
        %v4009 = vadd.f32 0.0, %v4008
        %v4010 = vpop.f32.mrb[0].mxu0
        %4011 = vdwg.mxu0
        %v4013 = vsel %vm882, %v3890, 0
        %4015 = vmatprep.subr.mxu0 0.0
        %4016 = vmatpush1.xpose.msra.mxu0 %v3895
        %4017 = vmatprep.subr.mxu0 0.0
        %4018 = vmatpush1.xpose.msra.mxu0 %v3898
        %4019 = vmatprep.subr.mxu0 0.0
        %4020 = vmatpush1.xpose.msra.mxu0 %v3901
        %4021 = vmatprep.subr.mxu0 0.0
        %4022 = vmatpush1.xpose.msra.mxu0 %v3904
        %4023 = vmatprep.subr.mxu0 0.0
        %4024 = vmatpush1.xpose.msra.mxu0 %v3907
        %4025 = vmatprep.subr.mxu0 0.0
        %4026 = vmatpush1.xpose.msra.mxu0 %v3910
        %4027 = vmatprep.subr.mxu0 0.0
        %4028 = vmatpush1.xpose.msra.mxu0 %v3913
        %4029 = vmatprep.subr.mxu0 0.0
        %4030 = vmatpush1.xpose.msra.mxu0 %v3916
        %4031 = vmatprep.subr.mxu0 0.0
        %4032 = vmatpush1.xpose.msra.mxu0 %v3919
        %4033 = vmatprep.subr.mxu0 0.0
        %4034 = vmatpush1.xpose.msra.mxu0 %v3922
        %4035 = vmatprep.subr.mxu0 0.0
        %4036 = vmatpush1.xpose.msra.mxu0 %v3925
        %4037 = vmatprep.subr.mxu0 0.0
        %4038 = vmatpush1.xpose.msra.mxu0 %v3928
        %4039 = vmatprep.subr.mxu0 0.0
        %4040 = vmatpush1.xpose.msra.mxu0 %v3931
        %4041 = vmatprep.subr.mxu0 0.0
        %4042 = vmatpush1.xpose.msra.mxu0 %v3934
        %4043 = vmatprep.subr.mxu0 0.0
        %4044 = vmatpush1.xpose.msra.mxu0 %v3937
        %4045 = vmatprep.subr.mxu0 0.0
        %4046 = vmatpush1.xpose.msra.mxu0 %v3940
        %4047 = vmatprep.subr.mxu0 0.0
        %4048 = vmatpush1.xpose.msra.mxu0 0.0
        %4049 = vmatprep.subr.mxu0 0.0
        %4050 = vmatpush1.xpose.msra.mxu0 0.0
        %4051 = vmatprep.subr.mxu0 0.0
        %4052 = vmatpush1.xpose.msra.mxu0 0.0
        %4053 = vmatprep.subr.mxu0 0.0
        %4054 = vmatpush1.xpose.msra.mxu0 0.0
        %4055 = vmatprep.subr.mxu0 0.0
        %4056 = vmatpush1.xpose.msra.mxu0 0.0
        %4057 = vmatprep.subr.mxu0 0.0
        %4058 = vmatpush1.xpose.msra.mxu0 0.0
        %4059 = vmatprep.subr.mxu0 0.0
        %4060 = vmatpush1.xpose.msra.mxu0 0.0
        %4061 = vmatprep.subr.mxu0 0.0
        %4062 = vmatpush1.xpose.msra.mxu0 0.0
        %4063 = vmatprep.subr.mxu0 0.0
        %4064 = vmatpush1.xpose.msra.mxu0 0.0
        %4065 = vmatprep.subr.mxu0 0.0
        %4066 = vmatpush1.xpose.msra.mxu0 0.0
        %4067 = vmatprep.subr.mxu0 0.0
        %4068 = vmatpush1.xpose.msra.mxu0 0.0
        %4069 = vmatprep.subr.mxu0 0.0
        %4070 = vmatpush1.xpose.msra.mxu0 0.0
        %4071 = vmatprep.subr.mxu0 0.0
        %4072 = vmatpush1.xpose.msra.mxu0 0.0
        %4073 = vmatprep.subr.mxu0 0.0
        %4074 = vmatpush1.xpose.msra.mxu0 0.0
        %4075 = vmatprep.subr.mxu0 0.0
        %4076 = vmatpush1.xpose.msra.mxu0 0.0
        %4077 = vmatprep.subr.mxu0 0.0
        %4078 = vmatpush1.xpose.msra.mxu0 0.0
        %4079 = vmatprep.mubr.f32.mxu0 0.0
        %4080 = vmatmul.mubr.f32.gmra.mrb[0].mxu0 %v4013
        %v4081 = vpop.f32.mrb[0].mxu0
        %v4082 = vadd.f32 0.0, %v4081
        %v4083 = vpop.f32.mrb[0].mxu0
        %4084 = vdwg.mxu0
        %v4085 = vlaneseq
        %v4086 = vshrl.u32 %v4085, 7
        %v4087 = vsub.s32 0, %v4086
        %v4088 = vrot.slane %v4009, %v4087
        %v4089 = vsub.f32 %v3238, %v4088
        %v4090 = vsub.f32 %v3241, %v4088
        %v4091 = vsub.f32 %v3246, %v4088
        %v4092 = vsub.f32 %v3249, %v4088
        %v4093 = vsub.f32 %v3254, %v4088
        %v4094 = vsub.f32 %v3257, %v4088
        %v4095 = vsub.f32 %v3262, %v4088
        %v4096 = vsub.f32 %v3265, %v4088
        %v4097 = vsub.f32 %v3270, %v4088
        %v4098 = vsub.f32 %v3273, %v4088
        %v4099 = vsub.f32 %v3278, %v4088
        %v4100 = vsub.f32 %v3281, %v4088
        %v4101 = vsub.f32 %v3286, %v4088
        %v4102 = vsub.f32 %v3289, %v4088
        %v4103 = vsub.f32 %v3294, %v4088
        %v4104 = vsub.f32 %v3297, %v4088
        %v4105 = vsub.f32 %v3302, %v4088
        %v4106 = vsub.f32 %v3305, %v4088
        %v4107 = vsub.f32 %v3310, %v4088
        %v4108 = vsub.f32 %v3313, %v4088
        %v4109 = vsub.f32 %v3318, %v4088
        %v4110 = vsub.f32 %v3321, %v4088
        %v4111 = vsub.f32 %v3326, %v4088
        %v4112 = vsub.f32 %v3329, %v4088
        %v4113 = vsub.f32 %v3334, %v4088
        %v4114 = vsub.f32 %v3337, %v4088
        %v4115 = vsub.f32 %v3342, %v4088
        %v4116 = vsub.f32 %v3345, %v4088
        %v4117 = vsub.f32 %v3350, %v4088
        %v4118 = vsub.f32 %v3353, %v4088
        %v4119 = vsub.f32 %v3358, %v4088
        %v4120 = vsub.f32 %v3361, %v4088
        %v4121 = vmul.f32 %v4082, %v3396
        %v4122 = vlaneseq
        %v4123 = vshrl.u32 %v4122, 7
        %v4124 = vsub.s32 0, %v4123
        %v4125 = vrot.slane %v4121, %v4124
        %v4126 = vmul.f32 %v4089, %v4125
        %v4127 = vmul.f32 %v4090, %v4125
        %v4128 = vmul.f32 %v4091, %v4125
        %v4129 = vmul.f32 %v4092, %v4125
        %v4130 = vmul.f32 %v4093, %v4125
        %v4131 = vmul.f32 %v4094, %v4125
        %v4132 = vmul.f32 %v4095, %v4125
        %v4133 = vmul.f32 %v4096, %v4125
        %v4134 = vmul.f32 %v4097, %v4125
        %v4135 = vmul.f32 %v4098, %v4125
        %v4136 = vmul.f32 %v4099, %v4125
        %v4137 = vmul.f32 %v4100, %v4125
        %v4138 = vmul.f32 %v4101, %v4125
        %v4139 = vmul.f32 %v4102, %v4125
        %v4140 = vmul.f32 %v4103, %v4125
        %v4141 = vmul.f32 %v4104, %v4125
        %v4142 = vmul.f32 %v4105, %v4125
        %v4143 = vmul.f32 %v4106, %v4125
        %v4144 = vmul.f32 %v4107, %v4125
        %v4145 = vmul.f32 %v4108, %v4125
        %v4146 = vmul.f32 %v4109, %v4125
        %v4147 = vmul.f32 %v4110, %v4125
        %v4148 = vmul.f32 %v4111, %v4125
        %v4149 = vmul.f32 %v4112, %v4125
        %v4150 = vmul.f32 %v4113, %v4125
        %v4151 = vmul.f32 %v4114, %v4125
        %v4152 = vmul.f32 %v4115, %v4125
        %v4153 = vmul.f32 %v4116, %v4125
        %v4154 = vmul.f32 %v4117, %v4125
        %v4155 = vmul.f32 %v4118, %v4125
        %v4156 = vmul.f32 %v4119, %v4125
        %v4157 = vmul.f32 %v4120, %v4125
        %v4159 = vlaneseq
        %v4160 = vshrl.u32 %v4159, 7
        %v4161 = vsub.s32 0, %v4160
        %v4162 = vrot.slane %v3397, %v4161
        %v4164 = vadd.f32 %v4126, %v4162
        %v4165 = vadd.f32 %v4127, %v4162
        %v4166 = vadd.f32 %v4128, %v4162
        %v4167 = vadd.f32 %v4129, %v4162
        %v4168 = vadd.f32 %v4130, %v4162
        %v4169 = vadd.f32 %v4131, %v4162
        %v4170 = vadd.f32 %v4132, %v4162
        %v4171 = vadd.f32 %v4133, %v4162
        %v4172 = vadd.f32 %v4134, %v4162
        %v4173 = vadd.f32 %v4135, %v4162
        %v4174 = vadd.f32 %v4136, %v4162
        %v4175 = vadd.f32 %v4137, %v4162
        %v4176 = vadd.f32 %v4138, %v4162
        %v4177 = vadd.f32 %v4139, %v4162
        %v4178 = vadd.f32 %v4140, %v4162
        %v4179 = vadd.f32 %v4141, %v4162
        %v4180 = vadd.f32 %v4142, %v4162
        %v4181 = vadd.f32 %v4143, %v4162
        %v4182 = vadd.f32 %v4144, %v4162
        %v4183 = vadd.f32 %v4145, %v4162
        %v4184 = vadd.f32 %v4146, %v4162
        %v4185 = vadd.f32 %v4147, %v4162
        %v4186 = vadd.f32 %v4148, %v4162
        %v4187 = vadd.f32 %v4149, %v4162
        %v4188 = vadd.f32 %v4150, %v4162
        %v4189 = vadd.f32 %v4151, %v4162
        %v4190 = vadd.f32 %v4152, %v4162
        %v4191 = vadd.f32 %v4153, %v4162
        %v4192 = vadd.f32 %v4154, %v4162
        %v4193 = vadd.f32 %v4155, %v4162
        %v4194 = vadd.f32 %v4156, %v4162
        %v4195 = vadd.f32 %v4157, %v4162
        %v4196 = vxor.u32 %v4164, 2147483648
        %v4197 = vxor.u32 %v4165, 2147483648
        %v4198 = vxor.u32 %v4166, 2147483648
        %v4199 = vxor.u32 %v4167, 2147483648
        %v4200 = vxor.u32 %v4168, 2147483648
        %v4201 = vxor.u32 %v4169, 2147483648
        %v4202 = vxor.u32 %v4170, 2147483648
        %v4203 = vxor.u32 %v4171, 2147483648
        %v4204 = vxor.u32 %v4172, 2147483648
        %v4205 = vxor.u32 %v4173, 2147483648
        %v4206 = vxor.u32 %v4174, 2147483648
        %v4207 = vxor.u32 %v4175, 2147483648
        %v4208 = vxor.u32 %v4176, 2147483648
        %v4209 = vxor.u32 %v4177, 2147483648
        %v4210 = vxor.u32 %v4178, 2147483648
        %v4211 = vxor.u32 %v4179, 2147483648
        %v4212 = vxor.u32 %v4180, 2147483648
        %v4213 = vxor.u32 %v4181, 2147483648
        %v4214 = vxor.u32 %v4182, 2147483648
        %v4215 = vxor.u32 %v4183, 2147483648
        %v4216 = vxor.u32 %v4184, 2147483648
        %v4217 = vxor.u32 %v4185, 2147483648
        %v4218 = vxor.u32 %v4186, 2147483648
        %v4219 = vxor.u32 %v4187, 2147483648
        %v4220 = vxor.u32 %v4188, 2147483648
        %v4221 = vxor.u32 %v4189, 2147483648
        %v4222 = vxor.u32 %v4190, 2147483648
        %v4223 = vxor.u32 %v4191, 2147483648
        %v4224 = vxor.u32 %v4192, 2147483648
        %v4225 = vxor.u32 %v4193, 2147483648
        %v4226 = vxor.u32 %v4194, 2147483648
        %v4227 = vxor.u32 %v4195, 2147483648
        %v4228 = vmul.f32 %v4196, 1.442695
        %v4229 = vpow.pop %v4228
        %v4230 = vmul.f32 %v4197, 1.442695
        %v4231 = vpow.pop %v4230
        %v4232 = vmul.f32 %v4198, 1.442695
        %v4233 = vpow.pop %v4232
        %v4234 = vmul.f32 %v4199, 1.442695
        %v4235 = vpow.pop %v4234
        %v4236 = vmul.f32 %v4200, 1.442695
        %v4237 = vpow.pop %v4236
        %v4238 = vmul.f32 %v4201, 1.442695
        %v4239 = vpow.pop %v4238
        %v4240 = vmul.f32 %v4202, 1.442695
        %v4241 = vpow.pop %v4240
        %v4242 = vmul.f32 %v4203, 1.442695
        %v4243 = vpow.pop %v4242
        %v4244 = vmul.f32 %v4204, 1.442695
        %v4245 = vpow.pop %v4244
        %v4246 = vmul.f32 %v4205, 1.442695
        %v4247 = vpow.pop %v4246
        %v4248 = vmul.f32 %v4206, 1.442695
        %v4249 = vpow.pop %v4248
        %v4250 = vmul.f32 %v4207, 1.442695
        %v4251 = vpow.pop %v4250
        %v4252 = vmul.f32 %v4208, 1.442695
        %v4253 = vpow.pop %v4252
        %v4254 = vmul.f32 %v4209, 1.442695
        %v4255 = vpow.pop %v4254
        %v4256 = vmul.f32 %v4210, 1.442695
        %v4257 = vpow.pop %v4256
        %v4258 = vmul.f32 %v4211, 1.442695
        %v4259 = vpow.pop %v4258
        %v4260 = vmul.f32 %v4212, 1.442695
        %v4261 = vpow.pop %v4260
        %v4262 = vmul.f32 %v4213, 1.442695
        %v4263 = vpow.pop %v4262
        %v4264 = vmul.f32 %v4214, 1.442695
        %v4265 = vpow.pop %v4264
        %v4266 = vmul.f32 %v4215, 1.442695
        %v4267 = vpow.pop %v4266
        %v4268 = vmul.f32 %v4216, 1.442695
        %v4269 = vpow.pop %v4268
        %v4270 = vmul.f32 %v4217, 1.442695
        %v4271 = vpow.pop %v4270
        %v4272 = vmul.f32 %v4218, 1.442695
        %v4273 = vpow.pop %v4272
        %v4274 = vmul.f32 %v4219, 1.442695
        %v4275 = vpow.pop %v4274
        %v4276 = vmul.f32 %v4220, 1.442695
        %v4277 = vpow.pop %v4276
        %v4278 = vmul.f32 %v4221, 1.442695
        %v4279 = vpow.pop %v4278
        %v4280 = vmul.f32 %v4222, 1.442695
        %v4281 = vpow.pop %v4280
        %v4282 = vmul.f32 %v4223, 1.442695
        %v4283 = vpow.pop %v4282
        %v4284 = vmul.f32 %v4224, 1.442695
        %v4285 = vpow.pop %v4284
        %v4286 = vmul.f32 %v4225, 1.442695
        %v4287 = vpow.pop %v4286
        %v4288 = vmul.f32 %v4226, 1.442695
        %v4289 = vpow.pop %v4288
        %v4290 = vmul.f32 %v4227, 1.442695
        %v4291 = vpow.pop %v4290
        %v4292 = vadd.f32 %v4229, 1.0
        %v4293 = vadd.f32 %v4231, 1.0
        %v4294 = vadd.f32 %v4233, 1.0
        %v4295 = vadd.f32 %v4235, 1.0
        %v4296 = vadd.f32 %v4237, 1.0
        %v4297 = vadd.f32 %v4239, 1.0
        %v4298 = vadd.f32 %v4241, 1.0
        %v4299 = vadd.f32 %v4243, 1.0
        %v4300 = vadd.f32 %v4245, 1.0
        %v4301 = vadd.f32 %v4247, 1.0
        %v4302 = vadd.f32 %v4249, 1.0
        %v4303 = vadd.f32 %v4251, 1.0
        %v4304 = vadd.f32 %v4253, 1.0
        %v4305 = vadd.f32 %v4255, 1.0
        %v4306 = vadd.f32 %v4257, 1.0
        %v4307 = vadd.f32 %v4259, 1.0
        %v4308 = vadd.f32 %v4261, 1.0
        %v4309 = vadd.f32 %v4263, 1.0
        %v4310 = vadd.f32 %v4265, 1.0
        %v4311 = vadd.f32 %v4267, 1.0
        %v4312 = vadd.f32 %v4269, 1.0
        %v4313 = vadd.f32 %v4271, 1.0
        %v4314 = vadd.f32 %v4273, 1.0
        %v4315 = vadd.f32 %v4275, 1.0
        %v4316 = vadd.f32 %v4277, 1.0
        %v4317 = vadd.f32 %v4279, 1.0
        %v4318 = vadd.f32 %v4281, 1.0
        %v4319 = vadd.f32 %v4283, 1.0
        %v4320 = vadd.f32 %v4285, 1.0
        %v4321 = vadd.f32 %v4287, 1.0
        %v4322 = vadd.f32 %v4289, 1.0
        %v4323 = vadd.f32 %v4291, 1.0
        %v4324 = vrcp.pop %v4292
        %v4325 = vmul.f32 1.0, %v4324
        %v4326 = vrcp.pop %v4293
        %v4327 = vmul.f32 1.0, %v4326
        %v4328 = vrcp.pop %v4294
        %v4329 = vmul.f32 1.0, %v4328
        %v4330 = vrcp.pop %v4295
        %v4331 = vmul.f32 1.0, %v4330
        %v4332 = vrcp.pop %v4296
        %v4333 = vmul.f32 1.0, %v4332
        %v4334 = vrcp.pop %v4297
        %v4335 = vmul.f32 1.0, %v4334
        %v4336 = vrcp.pop %v4298
        %v4337 = vmul.f32 1.0, %v4336
        %v4338 = vrcp.pop %v4299
        %v4339 = vmul.f32 1.0, %v4338
        %v4340 = vrcp.pop %v4300
        %v4341 = vmul.f32 1.0, %v4340
        %v4342 = vrcp.pop %v4301
        %v4343 = vmul.f32 1.0, %v4342
        %v4344 = vrcp.pop %v4302
        %v4345 = vmul.f32 1.0, %v4344
        %v4346 = vrcp.pop %v4303
        %v4347 = vmul.f32 1.0, %v4346
        %v4348 = vrcp.pop %v4304
        %v4349 = vmul.f32 1.0, %v4348
        %v4350 = vrcp.pop %v4305
        %v4351 = vmul.f32 1.0, %v4350
        %v4352 = vrcp.pop %v4306
        %v4353 = vmul.f32 1.0, %v4352
        %v4354 = vrcp.pop %v4307
        %v4355 = vmul.f32 1.0, %v4354
        %v4356 = vrcp.pop %v4308
        %v4357 = vmul.f32 1.0, %v4356
        %v4358 = vrcp.pop %v4309
        %v4359 = vmul.f32 1.0, %v4358
        %v4360 = vrcp.pop %v4310
        %v4361 = vmul.f32 1.0, %v4360
        %v4362 = vrcp.pop %v4311
        %v4363 = vmul.f32 1.0, %v4362
        %v4364 = vrcp.pop %v4312
        %v4365 = vmul.f32 1.0, %v4364
        %v4366 = vrcp.pop %v4313
        %v4367 = vmul.f32 1.0, %v4366
        %v4368 = vrcp.pop %v4314
        %v4369 = vmul.f32 1.0, %v4368
        %v4370 = vrcp.pop %v4315
        %v4371 = vmul.f32 1.0, %v4370
        %v4372 = vrcp.pop %v4316
        %v4373 = vmul.f32 1.0, %v4372
        %v4374 = vrcp.pop %v4317
        %v4375 = vmul.f32 1.0, %v4374
        %v4376 = vrcp.pop %v4318
        %v4377 = vmul.f32 1.0, %v4376
        %v4378 = vrcp.pop %v4319
        %v4379 = vmul.f32 1.0, %v4378
        %v4380 = vrcp.pop %v4320
        %v4381 = vmul.f32 1.0, %v4380
        %v4382 = vrcp.pop %v4321
        %v4383 = vmul.f32 1.0, %v4382
        %v4384 = vrcp.pop %v4322
        %v4385 = vmul.f32 1.0, %v4384
        %v4386 = vrcp.pop %v4323
        %v4387 = vmul.f32 1.0, %v4386
        %v4388 = vmul.f32 %v4164, %v4325
        %v4389 = vmul.f32 %v4165, %v4327
        %v4390 = vmul.f32 %v4166, %v4329
        %v4391 = vmul.f32 %v4167, %v4331
        %v4392 = vmul.f32 %v4168, %v4333
        %v4393 = vmul.f32 %v4169, %v4335
        %v4394 = vmul.f32 %v4170, %v4337
        %v4395 = vmul.f32 %v4171, %v4339
        %v4396 = vmul.f32 %v4172, %v4341
        %v4397 = vmul.f32 %v4173, %v4343
        %v4398 = vmul.f32 %v4174, %v4345
        %v4399 = vmul.f32 %v4175, %v4347
        %v4400 = vmul.f32 %v4176, %v4349
        %v4401 = vmul.f32 %v4177, %v4351
        %v4402 = vmul.f32 %v4178, %v4353
        %v4403 = vmul.f32 %v4179, %v4355
        %v4404 = vmul.f32 %v4180, %v4357
        %v4405 = vmul.f32 %v4181, %v4359
        %v4406 = vmul.f32 %v4182, %v4361
        %v4407 = vmul.f32 %v4183, %v4363
        %v4408 = vmul.f32 %v4184, %v4365
        %v4409 = vmul.f32 %v4185, %v4367
        %v4410 = vmul.f32 %v4186, %v4369
        %v4411 = vmul.f32 %v4187, %v4371
        %v4412 = vmul.f32 %v4188, %v4373
        %v4413 = vmul.f32 %v4189, %v4375
        %v4414 = vmul.f32 %v4190, %v4377
        %v4415 = vmul.f32 %v4191, %v4379
        %v4416 = vmul.f32 %v4192, %v4381
        %v4417 = vmul.f32 %v4193, %v4383
        %v4418 = vmul.f32 %v4194, %v4385
        %v4419 = vmul.f32 %v4195, %v4387
        %v4420 = vld [vmem:[%s11] sm:$0x1]
        %v4421 = vpack.c.bf16 %v4389, %v4388
        %v4422 = vpack.c.bf16 %v4391, %v4390
        %v4423 = vpack.c.bf16 %v4393, %v4392
        %v4424 = vpack.c.bf16 %v4395, %v4394
        %v4425 = vpack.c.bf16 %v4397, %v4396
        %v4426 = vpack.c.bf16 %v4399, %v4398
        %v4427 = vpack.c.bf16 %v4401, %v4400
        %v4428 = vpack.c.bf16 %v4403, %v4402
        %v4429 = vpack.c.bf16 %v4405, %v4404
        %v4430 = vpack.c.bf16 %v4407, %v4406
        %v4431 = vpack.c.bf16 %v4409, %v4408
        %v4432 = vpack.c.bf16 %v4411, %v4410
        %v4433 = vpack.c.bf16 %v4413, %v4412
        %v4434 = vpack.c.bf16 %v4415, %v4414
        %v4435 = vpack.c.bf16 %v4417, %v4416
        %v4436 = vpack.c.bf16 %v4419, %v4418
        %4437 = vst [vmem:[#allocation2] sm:$0xff] %v4421
        %4438 = vst [vmem:[#allocation2 + $0x48] sm:$0xff] %v4422
        %4439 = vst [vmem:[#allocation2 + $0x90] sm:$0xff] %v4423
        %4440 = vst [vmem:[#allocation2 + $0xd8] sm:$0xff] %v4424
        %4441 = vst [vmem:[#allocation2 + $0x120] sm:$0xff] %v4425
        %4442 = vst [vmem:[#allocation2 + $0x168] sm:$0xff] %v4426
        %4443 = vst [vmem:[#allocation2 + $0x1b0] sm:$0xff] %v4427
        %4444 = vst [vmem:[#allocation2 + $0x1f8] sm:$0xff] %v4428
        %4445 = vst [vmem:[#allocation2 + $0x240] sm:$0xff] %v4429
        %4446 = vst [vmem:[#allocation2 + $0x288] sm:$0xff] %v4430
        %4447 = vst [vmem:[#allocation2 + $0x2d0] sm:$0xff] %v4431
        %4448 = vst [vmem:[#allocation2 + $0x318] sm:$0xff] %v4432
        %4449 = vst [vmem:[#allocation2 + $0x360] sm:$0xff] %v4433
        %4450 = vst [vmem:[#allocation2 + $0x3a8] sm:$0xff] %v4434
        %4451 = vst [vmem:[#allocation2 + $0x3f0] sm:$0xff] %v4435
        %4452 = vst [vmem:[#allocation2 + $0x438] sm:$0xff] %v4436
        %v4485 = vrot.slane %v4388, 1
        %v4486 = vrot.slane %v4389, 1
        %v4487 = vsel %vm1477, %v4485, %v4486
        %v4488 = vrot.slane %v4390, 1
        %v4489 = vsel %vm1477, %v4486, %v4488
        %v4490 = vrot.slane %v4391, 1
        %v4491 = vsel %vm1477, %v4488, %v4490
        %v4492 = vrot.slane %v4392, 1
        %v4493 = vsel %vm1477, %v4490, %v4492
        %v4494 = vrot.slane %v4393, 1
        %v4495 = vsel %vm1477, %v4492, %v4494
        %v4496 = vrot.slane %v4394, 1
        %v4497 = vsel %vm1477, %v4494, %v4496
        %v4498 = vrot.slane %v4395, 1
        %v4499 = vsel %vm1477, %v4496, %v4498
        %v4500 = vrot.slane %v4396, 1
        %v4501 = vsel %vm1477, %v4498, %v4500
        %v4502 = vrot.slane %v4397, 1
        %v4503 = vsel %vm1477, %v4500, %v4502
        %v4504 = vrot.slane %v4398, 1
        %v4505 = vsel %vm1477, %v4502, %v4504
        %v4506 = vrot.slane %v4399, 1
        %v4507 = vsel %vm1477, %v4504, %v4506
        %v4508 = vrot.slane %v4400, 1
        %v4509 = vsel %vm1477, %v4506, %v4508
        %v4510 = vrot.slane %v4401, 1
        %v4511 = vsel %vm1477, %v4508, %v4510
        %v4512 = vrot.slane %v4402, 1
        %v4513 = vsel %vm1477, %v4510, %v4512
        %v4514 = vrot.slane %v4403, 1
        %v4515 = vsel %vm1477, %v4512, %v4514
        %v4516 = vrot.slane %v4404, 1
        %v4517 = vsel %vm1477, %v4514, %v4516
        %v4518 = vrot.slane %v4405, 1
        %v4519 = vsel %vm1477, %v4516, %v4518
        %v4520 = vrot.slane %v4406, 1
        %v4521 = vsel %vm1477, %v4518, %v4520
        %v4522 = vrot.slane %v4407, 1
        %v4523 = vsel %vm1477, %v4520, %v4522
        %v4524 = vrot.slane %v4408, 1
        %v4525 = vsel %vm1477, %v4522, %v4524
        %v4526 = vrot.slane %v4409, 1
        %v4527 = vsel %vm1477, %v4524, %v4526
        %v4528 = vrot.slane %v4410, 1
        %v4529 = vsel %vm1477, %v4526, %v4528
        %v4530 = vrot.slane %v4411, 1
        %v4531 = vsel %vm1477, %v4528, %v4530
        %v4532 = vrot.slane %v4412, 1
        %v4533 = vsel %vm1477, %v4530, %v4532
        %v4534 = vrot.slane %v4413, 1
        %v4535 = vsel %vm1477, %v4532, %v4534
        %v4536 = vrot.slane %v4414, 1
        %v4537 = vsel %vm1477, %v4534, %v4536
        %v4538 = vrot.slane %v4415, 1
        %v4539 = vsel %vm1477, %v4536, %v4538
        %v4540 = vrot.slane %v4416, 1
        %v4541 = vsel %vm1477, %v4538, %v4540
        %v4542 = vrot.slane %v4417, 1
        %v4543 = vsel %vm1477, %v4540, %v4542
        %v4544 = vrot.slane %v4418, 1
        %v4545 = vsel %vm1477, %v4542, %v4544
        %v4546 = vrot.slane %v4419, 1
        %v4547 = vsel %vm1477, %v4544, %v4546
        %v4581 = vsel %vm1477, %v4546, %v4485
        %v4582 = vpack.c.bf16 %v4489, %v4487
        %v4583 = vpack.c.bf16 %v4493, %v4491
        %v4584 = vpack.c.bf16 %v4497, %v4495
        %v4585 = vpack.c.bf16 %v4501, %v4499
        %v4586 = vpack.c.bf16 %v4505, %v4503
        %v4587 = vpack.c.bf16 %v4509, %v4507
        %v4588 = vpack.c.bf16 %v4513, %v4511
        %v4589 = vpack.c.bf16 %v4517, %v4515
        %v4590 = vpack.c.bf16 %v4521, %v4519
        %v4591 = vpack.c.bf16 %v4525, %v4523
        %v4592 = vpack.c.bf16 %v4529, %v4527
        %v4593 = vpack.c.bf16 %v4533, %v4531
        %v4594 = vpack.c.bf16 %v4537, %v4535
        %v4595 = vpack.c.bf16 %v4541, %v4539
        %v4596 = vpack.c.bf16 %v4545, %v4543
        %v4597 = vpack.c.bf16 %v4581, %v4547
        %4598 = vst [vmem:[#allocation2 + $0x8] sm:$0xff] %v4582
        %4599 = vst [vmem:[#allocation2 + $0x50] sm:$0xff] %v4583
        %4600 = vst [vmem:[#allocation2 + $0x98] sm:$0xff] %v4584
        %4601 = vst [vmem:[#allocation2 + $0xe0] sm:$0xff] %v4585
        %4602 = vst [vmem:[#allocation2 + $0x128] sm:$0xff] %v4586
        %4603 = vst [vmem:[#allocation2 + $0x170] sm:$0xff] %v4587
        %4604 = vst [vmem:[#allocation2 + $0x1b8] sm:$0xff] %v4588
        %4605 = vst [vmem:[#allocation2 + $0x200] sm:$0xff] %v4589
        %4606 = vst [vmem:[#allocation2 + $0x248] sm:$0xff] %v4590
        %4607 = vst [vmem:[#allocation2 + $0x290] sm:$0xff] %v4591
        %4608 = vst [vmem:[#allocation2 + $0x2d8] sm:$0xff] %v4592
        %4609 = vst [vmem:[#allocation2 + $0x320] sm:$0xff] %v4593
        %4610 = vst [vmem:[#allocation2 + $0x368] sm:$0xff] %v4594
        %4611 = vst [vmem:[#allocation2 + $0x3b0] sm:$0xff] %v4595
        %4612 = vst [vmem:[#allocation2 + $0x3f8] sm:$0xff] %v4596
        %4613 = vst [vmem:[#allocation2 + $0x440] sm:$0xff] %v4597
        %v4614 = vrot.slane %v4388, 2
        %v4615 = vrot.slane %v4389, 2
        %v4616 = vsel %vm1607, %v4614, %v4615
        %v4617 = vrot.slane %v4390, 2
        %v4618 = vsel %vm1607, %v4615, %v4617
        %v4619 = vrot.slane %v4391, 2
        %v4620 = vsel %vm1607, %v4617, %v4619
        %v4621 = vrot.slane %v4392, 2
        %v4622 = vsel %vm1607, %v4619, %v4621
        %v4623 = vrot.slane %v4393, 2
        %v4624 = vsel %vm1607, %v4621, %v4623
        %v4625 = vrot.slane %v4394, 2
        %v4626 = vsel %vm1607, %v4623, %v4625
        %v4627 = vrot.slane %v4395, 2
        %v4628 = vsel %vm1607, %v4625, %v4627
        %v4629 = vrot.slane %v4396, 2
        %v4630 = vsel %vm1607, %v4627, %v4629
        %v4631 = vrot.slane %v4397, 2
        %v4632 = vsel %vm1607, %v4629, %v4631
        %v4633 = vrot.slane %v4398, 2
        %v4634 = vsel %vm1607, %v4631, %v4633
        %v4635 = vrot.slane %v4399, 2
        %v4636 = vsel %vm1607, %v4633, %v4635
        %v4637 = vrot.slane %v4400, 2
        %v4638 = vsel %vm1607, %v4635, %v4637
        %v4639 = vrot.slane %v4401, 2
        %v4640 = vsel %vm1607, %v4637, %v4639
        %v4641 = vrot.slane %v4402, 2
        %v4642 = vsel %vm1607, %v4639, %v4641
        %v4643 = vrot.slane %v4403, 2
        %v4644 = vsel %vm1607, %v4641, %v4643
        %v4645 = vrot.slane %v4404, 2
        %v4646 = vsel %vm1607, %v4643, %v4645
        %v4647 = vrot.slane %v4405, 2
        %v4648 = vsel %vm1607, %v4645, %v4647
        %v4649 = vrot.slane %v4406, 2
        %v4650 = vsel %vm1607, %v4647, %v4649
        %v4651 = vrot.slane %v4407, 2
        %v4652 = vsel %vm1607, %v4649, %v4651
        %v4653 = vrot.slane %v4408, 2
        %v4654 = vsel %vm1607, %v4651, %v4653
        %v4655 = vrot.slane %v4409, 2
        %v4656 = vsel %vm1607, %v4653, %v4655
        %v4657 = vrot.slane %v4410, 2
        %v4658 = vsel %vm1607, %v4655, %v4657
        %v4659 = vrot.slane %v4411, 2
        %v4660 = vsel %vm1607, %v4657, %v4659
        %v4661 = vrot.slane %v4412, 2
        %v4662 = vsel %vm1607, %v4659, %v4661
        %v4663 = vrot.slane %v4413, 2
        %v4664 = vsel %vm1607, %v4661, %v4663
        %v4665 = vrot.slane %v4414, 2
        %v4666 = vsel %vm1607, %v4663, %v4665
        %v4667 = vrot.slane %v4415, 2
        %v4668 = vsel %vm1607, %v4665, %v4667
        %v4669 = vrot.slane %v4416, 2
        %v4670 = vsel %vm1607, %v4667, %v4669
        %v4671 = vrot.slane %v4417, 2
        %v4672 = vsel %vm1607, %v4669, %v4671
        %v4673 = vrot.slane %v4418, 2
        %v4674 = vsel %vm1607, %v4671, %v4673
        %v4675 = vrot.slane %v4419, 2
        %v4676 = vsel %vm1607, %v4673, %v4675
        %v4710 = vsel %vm1607, %v4675, %v4614
        %v4711 = vpack.c.bf16 %v4618, %v4616
        %v4712 = vpack.c.bf16 %v4622, %v4620
        %v4713 = vpack.c.bf16 %v4626, %v4624
        %v4714 = vpack.c.bf16 %v4630, %v4628
        %v4715 = vpack.c.bf16 %v4634, %v4632
        %v4716 = vpack.c.bf16 %v4638, %v4636
        %v4717 = vpack.c.bf16 %v4642, %v4640
        %v4718 = vpack.c.bf16 %v4646, %v4644
        %v4719 = vpack.c.bf16 %v4650, %v4648
        %v4720 = vpack.c.bf16 %v4654, %v4652
        %v4721 = vpack.c.bf16 %v4658, %v4656
        %v4722 = vpack.c.bf16 %v4662, %v4660
        %v4723 = vpack.c.bf16 %v4666, %v4664
        %v4724 = vpack.c.bf16 %v4670, %v4668
        %v4725 = vpack.c.bf16 %v4674, %v4672
        %v4726 = vpack.c.bf16 %v4710, %v4676
        %4727 = vst [vmem:[#allocation2 + $0x10] sm:$0xff] %v4711
        %4728 = vst [vmem:[#allocation2 + $0x58] sm:$0xff] %v4712
        %4729 = vst [vmem:[#allocation2 + $0xa0] sm:$0xff] %v4713
        %4730 = vst [vmem:[#allocation2 + $0xe8] sm:$0xff] %v4714
        %4731 = vst [vmem:[#allocation2 + $0x130] sm:$0xff] %v4715
        %4732 = vst [vmem:[#allocation2 + $0x178] sm:$0xff] %v4716
        %4733 = vst [vmem:[#allocation2 + $0x1c0] sm:$0xff] %v4717
        %4734 = vst [vmem:[#allocation2 + $0x208] sm:$0xff] %v4718
        %4735 = vst [vmem:[#allocation2 + $0x250] sm:$0xff] %v4719
        %4736 = vst [vmem:[#allocation2 + $0x298] sm:$0xff] %v4720
        %4737 = vst [vmem:[#allocation2 + $0x2e0] sm:$0xff] %v4721
        %4738 = vst [vmem:[#allocation2 + $0x328] sm:$0xff] %v4722
        %4739 = vst [vmem:[#allocation2 + $0x370] sm:$0xff] %v4723
        %4740 = vst [vmem:[#allocation2 + $0x3b8] sm:$0xff] %v4724
        %4741 = vst [vmem:[#allocation2 + $0x400] sm:$0xff] %v4725
        %4742 = vst [vmem:[#allocation2 + $0x448] sm:$0xff] %v4726
        %4743 = vst [vmem:[#allocation2 + $0x18] sm:$0xff] %v4422
        %4744 = vst [vmem:[#allocation2 + $0x60] sm:$0xff] %v4423
        %4745 = vst [vmem:[#allocation2 + $0xa8] sm:$0xff] %v4424
        %4746 = vst [vmem:[#allocation2 + $0xf0] sm:$0xff] %v4425
        %4747 = vst [vmem:[#allocation2 + $0x138] sm:$0xff] %v4426
        %4748 = vst [vmem:[#allocation2 + $0x180] sm:$0xff] %v4427
        %4749 = vst [vmem:[#allocation2 + $0x1c8] sm:$0xff] %v4428
        %4750 = vst [vmem:[#allocation2 + $0x210] sm:$0xff] %v4429
        %4751 = vst [vmem:[#allocation2 + $0x258] sm:$0xff] %v4430
        %4752 = vst [vmem:[#allocation2 + $0x2a0] sm:$0xff] %v4431
        %4753 = vst [vmem:[#allocation2 + $0x2e8] sm:$0xff] %v4432
        %4754 = vst [vmem:[#allocation2 + $0x330] sm:$0xff] %v4433
        %4755 = vst [vmem:[#allocation2 + $0x378] sm:$0xff] %v4434
        %4756 = vst [vmem:[#allocation2 + $0x3c0] sm:$0xff] %v4435
        %4757 = vst [vmem:[#allocation2 + $0x408] sm:$0xff] %v4436
        %4758 = vst [vmem:[#allocation2 + $0x450] sm:$0xff] %v4421
        %4759 = vst [vmem:[#allocation2 + $0x20] sm:$0xff] %v4583
        %4760 = vst [vmem:[#allocation2 + $0x68] sm:$0xff] %v4584
        %4761 = vst [vmem:[#allocation2 + $0xb0] sm:$0xff] %v4585
        %4762 = vst [vmem:[#allocation2 + $0xf8] sm:$0xff] %v4586
        %4763 = vst [vmem:[#allocation2 + $0x140] sm:$0xff] %v4587
        %4764 = vst [vmem:[#allocation2 + $0x188] sm:$0xff] %v4588
        %4765 = vst [vmem:[#allocation2 + $0x1d0] sm:$0xff] %v4589
        %4766 = vst [vmem:[#allocation2 + $0x218] sm:$0xff] %v4590
        %4767 = vst [vmem:[#allocation2 + $0x260] sm:$0xff] %v4591
        %4768 = vst [vmem:[#allocation2 + $0x2a8] sm:$0xff] %v4592
        %4769 = vst [vmem:[#allocation2 + $0x2f0] sm:$0xff] %v4593
        %4770 = vst [vmem:[#allocation2 + $0x338] sm:$0xff] %v4594
        %4771 = vst [vmem:[#allocation2 + $0x380] sm:$0xff] %v4595
        %4772 = vst [vmem:[#allocation2 + $0x3c8] sm:$0xff] %v4596
        %4773 = vst [vmem:[#allocation2 + $0x410] sm:$0xff] %v4597
        %4774 = vst [vmem:[#allocation2 + $0x458] sm:$0xff] %v4582
        %4775 = vst [vmem:[#allocation2 + $0x28] sm:$0xff] %v4712
        %4776 = vst [vmem:[#allocation2 + $0x70] sm:$0xff] %v4713
        %4777 = vst [vmem:[#allocation2 + $0xb8] sm:$0xff] %v4714
        %4778 = vst [vmem:[#allocation2 + $0x100] sm:$0xff] %v4715
        %4779 = vst [vmem:[#allocation2 + $0x148] sm:$0xff] %v4716
        %4780 = vst [vmem:[#allocation2 + $0x190] sm:$0xff] %v4717
        %4781 = vst [vmem:[#allocation2 + $0x1d8] sm:$0xff] %v4718
        %4782 = vst [vmem:[#allocation2 + $0x220] sm:$0xff] %v4719
        %4783 = vst [vmem:[#allocation2 + $0x268] sm:$0xff] %v4720
        %4784 = vst [vmem:[#allocation2 + $0x2b0] sm:$0xff] %v4721
        %4785 = vst [vmem:[#allocation2 + $0x2f8] sm:$0xff] %v4722
        %4786 = vst [vmem:[#allocation2 + $0x340] sm:$0xff] %v4723
        %4787 = vst [vmem:[#allocation2 + $0x388] sm:$0xff] %v4724
        %4788 = vst [vmem:[#allocation2 + $0x3d0] sm:$0xff] %v4725
        %4789 = vst [vmem:[#allocation2 + $0x418] sm:$0xff] %v4726
        %4790 = vst [vmem:[#allocation2 + $0x460] sm:$0xff] %v4711
        %4791 = vst [vmem:[#allocation2 + $0x30] sm:$0xff] %v4423
        %4792 = vst [vmem:[#allocation2 + $0x78] sm:$0xff] %v4424
        %4793 = vst [vmem:[#allocation2 + $0xc0] sm:$0xff] %v4425
        %4794 = vst [vmem:[#allocation2 + $0x108] sm:$0xff] %v4426
        %4795 = vst [vmem:[#allocation2 + $0x150] sm:$0xff] %v4427
        %4796 = vst [vmem:[#allocation2 + $0x198] sm:$0xff] %v4428
        %4797 = vst [vmem:[#allocation2 + $0x1e0] sm:$0xff] %v4429
        %4798 = vst [vmem:[#allocation2 + $0x228] sm:$0xff] %v4430
        %4799 = vst [vmem:[#allocation2 + $0x270] sm:$0xff] %v4431
        %4800 = vst [vmem:[#allocation2 + $0x2b8] sm:$0xff] %v4432
        %4801 = vst [vmem:[#allocation2 + $0x300] sm:$0xff] %v4433
        %4802 = vst [vmem:[#allocation2 + $0x348] sm:$0xff] %v4434
        %4803 = vst [vmem:[#allocation2 + $0x390] sm:$0xff] %v4435
        %4804 = vst [vmem:[#allocation2 + $0x3d8] sm:$0xff] %v4436
        %4805 = vst [vmem:[#allocation2 + $0x420] sm:$0xff] %v4421
        %4806 = vst [vmem:[#allocation2 + $0x468] sm:$0xff] %v4422
        %4807 = vst [vmem:[#allocation2 + $0x38] sm:$0xff] %v4584
        %4808 = vst [vmem:[#allocation2 + $0x80] sm:$0xff] %v4585
        %4809 = vst [vmem:[#allocation2 + $0xc8] sm:$0xff] %v4586
        %4810 = vst [vmem:[#allocation2 + $0x110] sm:$0xff] %v4587
        %4811 = vst [vmem:[#allocation2 + $0x158] sm:$0xff] %v4588
        %4812 = vst [vmem:[#allocation2 + $0x1a0] sm:$0xff] %v4589
        %4813 = vst [vmem:[#allocation2 + $0x1e8] sm:$0xff] %v4590
        %4814 = vst [vmem:[#allocation2 + $0x230] sm:$0xff] %v4591
        %4815 = vst [vmem:[#allocation2 + $0x278] sm:$0xff] %v4592
        %4816 = vst [vmem:[#allocation2 + $0x2c0] sm:$0xff] %v4593
        %4817 = vst [vmem:[#allocation2 + $0x308] sm:$0xff] %v4594
        %4818 = vst [vmem:[#allocation2 + $0x350] sm:$0xff] %v4595
        %4819 = vst [vmem:[#allocation2 + $0x398] sm:$0xff] %v4596
        %4820 = vst [vmem:[#allocation2 + $0x3e0] sm:$0xff] %v4597
        %4821 = vst [vmem:[#allocation2 + $0x428] sm:$0xff] %v4582
        %4822 = vst [vmem:[#allocation2 + $0x470] sm:$0xff] %v4583
        %4823 = vst [vmem:[#allocation2 + $0x40] sm:$0xff] %v4713
        %4824 = vst [vmem:[#allocation2 + $0x88] sm:$0xff] %v4714
        %4825 = vst [vmem:[#allocation2 + $0xd0] sm:$0xff] %v4715
        %4826 = vst [vmem:[#allocation2 + $0x118] sm:$0xff] %v4716
        %4827 = vst [vmem:[#allocation2 + $0x160] sm:$0xff] %v4717
        %4828 = vst [vmem:[#allocation2 + $0x1a8] sm:$0xff] %v4718
        %4829 = vst [vmem:[#allocation2 + $0x1f0] sm:$0xff] %v4719
        %4830 = vst [vmem:[#allocation2 + $0x238] sm:$0xff] %v4720
        %4831 = vst [vmem:[#allocation2 + $0x280] sm:$0xff] %v4721
        %4832 = vst [vmem:[#allocation2 + $0x2c8] sm:$0xff] %v4722
        %4833 = vst [vmem:[#allocation2 + $0x310] sm:$0xff] %v4723
        %4834 = vst [vmem:[#allocation2 + $0x358] sm:$0xff] %v4724
        %4835 = vst [vmem:[#allocation2 + $0x3a0] sm:$0xff] %v4725
        %4836 = vst [vmem:[#allocation2 + $0x3e8] sm:$0xff] %v4726
        %4837 = vst [vmem:[#allocation2 + $0x430] sm:$0xff] %v4711
        %4838 = vst [vmem:[#allocation2 + $0x478] sm:$0xff] %v4712
        %v4839 = vld [vmem:[#allocation2] sm:$0xff]
        %v4840 = vld [vmem:[#allocation2 + $0x8] sm:$0xff]
        %v4841 = vld [vmem:[#allocation2 + $0x10] sm:$0xff]
        %v4842 = vld [vmem:[#allocation2 + $0x18] sm:$0xff]
        %v4843 = vld [vmem:[#allocation2 + $0x20] sm:$0xff]
        %v4844 = vld [vmem:[#allocation2 + $0x28] sm:$0xff]
        %v4845 = vld [vmem:[#allocation2 + $0x30] sm:$0xff]
        %v4846 = vld [vmem:[#allocation2 + $0x38] sm:$0xff]
        %v4847 = vld [vmem:[#allocation2 + $0x40] sm:$0xff]
        %v4848 = vld [vmem:[#allocation2 + $0x48] sm:$0xff]
        %v4849 = vld [vmem:[#allocation2 + $0x50] sm:$0xff]
        %v4850 = vld [vmem:[#allocation2 + $0x58] sm:$0xff]
        %v4851 = vld [vmem:[#allocation2 + $0x60] sm:$0xff]
        %v4852 = vld [vmem:[#allocation2 + $0x68] sm:$0xff]
        %v4853 = vld [vmem:[#allocation2 + $0x70] sm:$0xff]
        %v4854 = vld [vmem:[#allocation2 + $0x78] sm:$0xff]
        %v4855 = vld [vmem:[#allocation2 + $0x80] sm:$0xff]
        %v4856 = vld [vmem:[#allocation2 + $0x88] sm:$0xff]
        %v4857 = vld [vmem:[#allocation2 + $0x90] sm:$0xff]
        %v4858 = vld [vmem:[#allocation2 + $0x98] sm:$0xff]
        %v4859 = vld [vmem:[#allocation2 + $0xa0] sm:$0xff]
        %v4860 = vld [vmem:[#allocation2 + $0xa8] sm:$0xff]
        %v4861 = vld [vmem:[#allocation2 + $0xb0] sm:$0xff]
        %v4862 = vld [vmem:[#allocation2 + $0xb8] sm:$0xff]
        %v4863 = vld [vmem:[#allocation2 + $0xc0] sm:$0xff]
        %v4864 = vld [vmem:[#allocation2 + $0xc8] sm:$0xff]
        %v4865 = vld [vmem:[#allocation2 + $0xd0] sm:$0xff]
        %v4866 = vld [vmem:[#allocation2 + $0xd8] sm:$0xff]
        %v4867 = vld [vmem:[#allocation2 + $0xe0] sm:$0xff]
        %v4868 = vld [vmem:[#allocation2 + $0xe8] sm:$0xff]
        %v4869 = vld [vmem:[#allocation2 + $0xf0] sm:$0xff]
        %v4870 = vld [vmem:[#allocation2 + $0xf8] sm:$0xff]
        %v4871 = vld [vmem:[#allocation2 + $0x100] sm:$0xff]
        %v4872 = vld [vmem:[#allocation2 + $0x108] sm:$0xff]
        %v4873 = vld [vmem:[#allocation2 + $0x110] sm:$0xff]
        %v4874 = vld [vmem:[#allocation2 + $0x118] sm:$0xff]
        %v4875 = vld [vmem:[#allocation2 + $0x120] sm:$0xff]
        %v4876 = vld [vmem:[#allocation2 + $0x128] sm:$0xff]
        %v4877 = vld [vmem:[#allocation2 + $0x130] sm:$0xff]
        %v4878 = vld [vmem:[#allocation2 + $0x138] sm:$0xff]
        %v4879 = vld [vmem:[#allocation2 + $0x140] sm:$0xff]
        %v4880 = vld [vmem:[#allocation2 + $0x148] sm:$0xff]
        %v4881 = vld [vmem:[#allocation2 + $0x150] sm:$0xff]
        %v4882 = vld [vmem:[#allocation2 + $0x158] sm:$0xff]
        %v4883 = vld [vmem:[#allocation2 + $0x160] sm:$0xff]
        %v4884 = vld [vmem:[#allocation2 + $0x168] sm:$0xff]
        %v4885 = vld [vmem:[#allocation2 + $0x170] sm:$0xff]
        %v4886 = vld [vmem:[#allocation2 + $0x178] sm:$0xff]
        %v4887 = vld [vmem:[#allocation2 + $0x180] sm:$0xff]
        %v4888 = vld [vmem:[#allocation2 + $0x188] sm:$0xff]
        %v4889 = vld [vmem:[#allocation2 + $0x190] sm:$0xff]
        %v4890 = vld [vmem:[#allocation2 + $0x198] sm:$0xff]
        %v4891 = vld [vmem:[#allocation2 + $0x1a0] sm:$0xff]
        %v4892 = vld [vmem:[#allocation2 + $0x1a8] sm:$0xff]
        %v4893 = vld [vmem:[#allocation2 + $0x1b0] sm:$0xff]
        %v4894 = vld [vmem:[#allocation2 + $0x1b8] sm:$0xff]
        %v4895 = vld [vmem:[#allocation2 + $0x1c0] sm:$0xff]
        %v4896 = vld [vmem:[#allocation2 + $0x1c8] sm:$0xff]
        %v4897 = vld [vmem:[#allocation2 + $0x1d0] sm:$0xff]
        %v4898 = vld [vmem:[#allocation2 + $0x1d8] sm:$0xff]
        %v4899 = vld [vmem:[#allocation2 + $0x1e0] sm:$0xff]
        %v4900 = vld [vmem:[#allocation2 + $0x1e8] sm:$0xff]
        %v4901 = vld [vmem:[#allocation2 + $0x1f0] sm:$0xff]
        %v4902 = vld [vmem:[#allocation2 + $0x1f8] sm:$0xff]
        %v4903 = vld [vmem:[#allocation2 + $0x200] sm:$0xff]
        %v4904 = vld [vmem:[#allocation2 + $0x208] sm:$0xff]
        %v4905 = vld [vmem:[#allocation2 + $0x210] sm:$0xff]
        %v4906 = vld [vmem:[#allocation2 + $0x218] sm:$0xff]
        %v4907 = vld [vmem:[#allocation2 + $0x220] sm:$0xff]
        %v4908 = vld [vmem:[#allocation2 + $0x228] sm:$0xff]
        %v4909 = vld [vmem:[#allocation2 + $0x230] sm:$0xff]
        %v4910 = vld [vmem:[#allocation2 + $0x238] sm:$0xff]
        %v4911 = vld [vmem:[#allocation2 + $0x240] sm:$0xff]
        %v4912 = vld [vmem:[#allocation2 + $0x248] sm:$0xff]
        %v4913 = vld [vmem:[#allocation2 + $0x250] sm:$0xff]
        %v4914 = vld [vmem:[#allocation2 + $0x258] sm:$0xff]
        %v4915 = vld [vmem:[#allocation2 + $0x260] sm:$0xff]
        %v4916 = vld [vmem:[#allocation2 + $0x268] sm:$0xff]
        %v4917 = vld [vmem:[#allocation2 + $0x270] sm:$0xff]
        %v4918 = vld [vmem:[#allocation2 + $0x278] sm:$0xff]
        %v4919 = vld [vmem:[#allocation2 + $0x280] sm:$0xff]
        %v4920 = vld [vmem:[#allocation2 + $0x288] sm:$0xff]
        %v4921 = vld [vmem:[#allocation2 + $0x290] sm:$0xff]
        %v4922 = vld [vmem:[#allocation2 + $0x298] sm:$0xff]
        %v4923 = vld [vmem:[#allocation2 + $0x2a0] sm:$0xff]
        %v4924 = vld [vmem:[#allocation2 + $0x2a8] sm:$0xff]
        %v4925 = vld [vmem:[#allocation2 + $0x2b0] sm:$0xff]
        %v4926 = vld [vmem:[#allocation2 + $0x2b8] sm:$0xff]
        %v4927 = vld [vmem:[#allocation2 + $0x2c0] sm:$0xff]
        %v4928 = vld [vmem:[#allocation2 + $0x2c8] sm:$0xff]
        %v4929 = vld [vmem:[#allocation2 + $0x2d0] sm:$0xff]
        %v4930 = vld [vmem:[#allocation2 + $0x2d8] sm:$0xff]
        %v4931 = vld [vmem:[#allocation2 + $0x2e0] sm:$0xff]
        %v4932 = vld [vmem:[#allocation2 + $0x2e8] sm:$0xff]
        %v4933 = vld [vmem:[#allocation2 + $0x2f0] sm:$0xff]
        %v4934 = vld [vmem:[#allocation2 + $0x2f8] sm:$0xff]
        %v4935 = vld [vmem:[#allocation2 + $0x300] sm:$0xff]
        %v4936 = vld [vmem:[#allocation2 + $0x308] sm:$0xff]
        %v4937 = vld [vmem:[#allocation2 + $0x310] sm:$0xff]
        %v4938 = vld [vmem:[#allocation2 + $0x318] sm:$0xff]
        %v4939 = vld [vmem:[#allocation2 + $0x320] sm:$0xff]
        %v4940 = vld [vmem:[#allocation2 + $0x328] sm:$0xff]
        %v4941 = vld [vmem:[#allocation2 + $0x330] sm:$0xff]
        %v4942 = vld [vmem:[#allocation2 + $0x338] sm:$0xff]
        %v4943 = vld [vmem:[#allocation2 + $0x340] sm:$0xff]
        %v4944 = vld [vmem:[#allocation2 + $0x348] sm:$0xff]
        %v4945 = vld [vmem:[#allocation2 + $0x350] sm:$0xff]
        %v4946 = vld [vmem:[#allocation2 + $0x358] sm:$0xff]
        %v4947 = vld [vmem:[#allocation2 + $0x360] sm:$0xff]
        %v4948 = vld [vmem:[#allocation2 + $0x368] sm:$0xff]
        %v4949 = vld [vmem:[#allocation2 + $0x370] sm:$0xff]
        %v4950 = vld [vmem:[#allocation2 + $0x378] sm:$0xff]
        %v4951 = vld [vmem:[#allocation2 + $0x380] sm:$0xff]
        %v4952 = vld [vmem:[#allocation2 + $0x388] sm:$0xff]
        %v4953 = vld [vmem:[#allocation2 + $0x390] sm:$0xff]
        %v4954 = vld [vmem:[#allocation2 + $0x398] sm:$0xff]
        %v4955 = vld [vmem:[#allocation2 + $0x3a0] sm:$0xff]
        %v4956 = vld [vmem:[#allocation2 + $0x3a8] sm:$0xff]
        %v4957 = vld [vmem:[#allocation2 + $0x3b0] sm:$0xff]
        %v4958 = vld [vmem:[#allocation2 + $0x3b8] sm:$0xff]
        %v4959 = vld [vmem:[#allocation2 + $0x3c0] sm:$0xff]
        %v4960 = vld [vmem:[#allocation2 + $0x3c8] sm:$0xff]
        %v4961 = vld [vmem:[#allocation2 + $0x3d0] sm:$0xff]
        %v4962 = vld [vmem:[#allocation2 + $0x3d8] sm:$0xff]
        %v4963 = vld [vmem:[#allocation2 + $0x3e0] sm:$0xff]
        %v4964 = vld [vmem:[#allocation2 + $0x3e8] sm:$0xff]
        %v4965 = vld [vmem:[#allocation2 + $0x3f0] sm:$0xff]
        %v4966 = vld [vmem:[#allocation2 + $0x3f8] sm:$0xff]
        %v4967 = vld [vmem:[#allocation2 + $0x400] sm:$0xff]
        %v4968 = vld [vmem:[#allocation2 + $0x408] sm:$0xff]
        %v4969 = vld [vmem:[#allocation2 + $0x410] sm:$0xff]
        %v4970 = vld [vmem:[#allocation2 + $0x418] sm:$0xff]
        %v4971 = vld [vmem:[#allocation2 + $0x420] sm:$0xff]
        %v4972 = vld [vmem:[#allocation2 + $0x428] sm:$0xff]
        %v4973 = vld [vmem:[#allocation2 + $0x430] sm:$0xff]
        %v4974 = vld [vmem:[#allocation2 + $0x438] sm:$0xff]
        %v4975 = vld [vmem:[#allocation2 + $0x440] sm:$0xff]
        %v4976 = vld [vmem:[#allocation2 + $0x448] sm:$0xff]
        %v4977 = vld [vmem:[#allocation2 + $0x450] sm:$0xff]
        %v4978 = vld [vmem:[#allocation2 + $0x458] sm:$0xff]
        %v4979 = vld [vmem:[#allocation2 + $0x460] sm:$0xff]
        %v4980 = vld [vmem:[#allocation2 + $0x468] sm:$0xff]
        %v4981 = vld [vmem:[#allocation2 + $0x470] sm:$0xff]
        %v4982 = vld [vmem:[#allocation2 + $0x478] sm:$0xff]
        %v4983 = vld [vmem:[#allocation14] sm:$0xf]
        %v4984 = vld [vmem:[#allocation14 + $0x4] sm:$0xf]
        %v4985 = vld [vmem:[#allocation14 + $0x8] sm:$0xf]
        %v4986 = vld [vmem:[#allocation14 + $0xc] sm:$0xf]
        %v4987 = vld [vmem:[#allocation14 + $0x10] sm:$0xf]
        %v4988 = vld [vmem:[#allocation14 + $0x14] sm:$0xf]
        %v4989 = vld [vmem:[#allocation14 + $0x18] sm:$0xf]
        %v4990 = vld [vmem:[#allocation14 + $0x1c] sm:$0xf]
        %v4991 = vld [vmem:[#allocation14 + $0x20] sm:$0xf]
        %v4992 = vld [vmem:[#allocation14 + $0x24] sm:$0xf]
        %v4993 = vld [vmem:[#allocation14 + $0x28] sm:$0xf]
        %v4994 = vld [vmem:[#allocation14 + $0x2c] sm:$0xf]
        %v4995 = vld [vmem:[#allocation14 + $0x30] sm:$0xf]
        %v4996 = vld [vmem:[#allocation14 + $0x34] sm:$0xf]
        %v4997 = vld [vmem:[#allocation14 + $0x38] sm:$0xf]
        %v4998 = vld [vmem:[#allocation14 + $0x3c] sm:$0xf]
        %v4999 = vld [vmem:[#allocation14 + $0x40] sm:$0xf]
        %v5000 = vld [vmem:[#allocation14 + $0x44] sm:$0xf]
        %v5001 = vld [vmem:[#allocation14 + $0x48] sm:$0xf]
        %v5002 = vld [vmem:[#allocation14 + $0x4c] sm:$0xf]
        %v5003 = vld [vmem:[#allocation14 + $0x50] sm:$0xf]
        %v5004 = vld [vmem:[#allocation14 + $0x54] sm:$0xf]
        %v5005 = vld [vmem:[#allocation14 + $0x58] sm:$0xf]
        %v5006 = vld [vmem:[#allocation14 + $0x5c] sm:$0xf]
        %v5007 = vld [vmem:[#allocation14 + $0x60] sm:$0xf]
        %v5008 = vld [vmem:[#allocation14 + $0x64] sm:$0xf]
        %v5009 = vld [vmem:[#allocation14 + $0x68] sm:$0xf]
        %v5010 = vld [vmem:[#allocation14 + $0x6c] sm:$0xf]
        %v5011 = vld [vmem:[#allocation14 + $0x70] sm:$0xf]
        %v5012 = vld [vmem:[#allocation14 + $0x74] sm:$0xf]
        %v5013 = vld [vmem:[#allocation14 + $0x78] sm:$0xf]
        %v5014 = vld [vmem:[#allocation14 + $0x7c] sm:$0xf]
        %v5015 = vld [vmem:[#allocation14 + $0x80] sm:$0xf]
        %v5016 = vld [vmem:[#allocation14 + $0x84] sm:$0xf]
        %v5017 = vld [vmem:[#allocation14 + $0x88] sm:$0xf]
        %v5018 = vld [vmem:[#allocation14 + $0x8c] sm:$0xf]
        %v5019 = vld [vmem:[#allocation14 + $0x90] sm:$0xf]
        %v5020 = vld [vmem:[#allocation14 + $0x94] sm:$0xf]
        %v5021 = vld [vmem:[#allocation14 + $0x98] sm:$0xf]
        %v5022 = vld [vmem:[#allocation14 + $0x9c] sm:$0xf]
        %v5023 = vld [vmem:[#allocation14 + $0xa0] sm:$0xf]
        %v5024 = vld [vmem:[#allocation14 + $0xa4] sm:$0xf]
        %v5025 = vld [vmem:[#allocation14 + $0xa8] sm:$0xf]
        %v5026 = vld [vmem:[#allocation14 + $0xac] sm:$0xf]
        %v5027 = vld [vmem:[#allocation14 + $0xb0] sm:$0xf]
        %v5028 = vld [vmem:[#allocation14 + $0xb4] sm:$0xf]
        %v5029 = vld [vmem:[#allocation14 + $0xb8] sm:$0xf]
        %v5030 = vld [vmem:[#allocation14 + $0xbc] sm:$0xf]
        %v5031 = vld [vmem:[#allocation14 + $0xc0] sm:$0xf]
        %v5032 = vld [vmem:[#allocation14 + $0xc4] sm:$0xf]
        %v5033 = vld [vmem:[#allocation14 + $0xc8] sm:$0xf]
        %v5034 = vld [vmem:[#allocation14 + $0xcc] sm:$0xf]
        %v5035 = vld [vmem:[#allocation14 + $0xd0] sm:$0xf]
        %v5036 = vld [vmem:[#allocation14 + $0xd4] sm:$0xf]
        %v5037 = vld [vmem:[#allocation14 + $0xd8] sm:$0xf]
        %v5038 = vld [vmem:[#allocation14 + $0xdc] sm:$0xf]
        %v5039 = vld [vmem:[#allocation14 + $0xe0] sm:$0xf]
        %v5040 = vld [vmem:[#allocation14 + $0xe4] sm:$0xf]
        %v5041 = vld [vmem:[#allocation14 + $0xe8] sm:$0xf]
        %v5042 = vld [vmem:[#allocation14 + $0xec] sm:$0xf]
        %v5043 = vld [vmem:[#allocation14 + $0xf0] sm:$0xf]
        %v5044 = vld [vmem:[#allocation14 + $0xf4] sm:$0xf]
        %v5045 = vld [vmem:[#allocation14 + $0xf8] sm:$0xf]
        %v5046 = vld [vmem:[#allocation14 + $0xfc] sm:$0xf]
        %v5047 = vld [vmem:[#allocation14 + $0x100] sm:$0xf]
        %v5048 = vld [vmem:[#allocation14 + $0x104] sm:$0xf]
        %v5049 = vld [vmem:[#allocation14 + $0x108] sm:$0xf]
        %v5050 = vld [vmem:[#allocation14 + $0x10c] sm:$0xf]
        %v5051 = vld [vmem:[#allocation14 + $0x110] sm:$0xf]
        %v5052 = vld [vmem:[#allocation14 + $0x114] sm:$0xf]
        %v5053 = vld [vmem:[#allocation14 + $0x118] sm:$0xf]
        %v5054 = vld [vmem:[#allocation14 + $0x11c] sm:$0xf]
        %v5055 = vld [vmem:[#allocation14 + $0x120] sm:$0xf]
        %v5056 = vld [vmem:[#allocation14 + $0x124] sm:$0xf]
        %v5057 = vld [vmem:[#allocation14 + $0x128] sm:$0xf]
        %v5058 = vld [vmem:[#allocation14 + $0x12c] sm:$0xf]
        %v5059 = vld [vmem:[#allocation14 + $0x130] sm:$0xf]
        %v5060 = vld [vmem:[#allocation14 + $0x134] sm:$0xf]
        %v5061 = vld [vmem:[#allocation14 + $0x138] sm:$0xf]
        %v5062 = vld [vmem:[#allocation14 + $0x13c] sm:$0xf]
        %v5063 = vld [vmem:[#allocation14 + $0x140] sm:$0xf]
        %v5064 = vld [vmem:[#allocation14 + $0x144] sm:$0xf]
        %v5065 = vld [vmem:[#allocation14 + $0x148] sm:$0xf]
        %v5066 = vld [vmem:[#allocation14 + $0x14c] sm:$0xf]
        %v5067 = vld [vmem:[#allocation14 + $0x150] sm:$0xf]
        %v5068 = vld [vmem:[#allocation14 + $0x154] sm:$0xf]
        %v5069 = vld [vmem:[#allocation14 + $0x158] sm:$0xf]
        %v5070 = vld [vmem:[#allocation14 + $0x15c] sm:$0xf]
        %v5071 = vld [vmem:[#allocation14 + $0x160] sm:$0xf]
        %v5072 = vld [vmem:[#allocation14 + $0x164] sm:$0xf]
        %v5073 = vld [vmem:[#allocation14 + $0x168] sm:$0xf]
        %v5074 = vld [vmem:[#allocation14 + $0x16c] sm:$0xf]
        %v5075 = vld [vmem:[#allocation14 + $0x170] sm:$0xf]
        %v5076 = vld [vmem:[#allocation14 + $0x174] sm:$0xf]
        %v5077 = vld [vmem:[#allocation14 + $0x178] sm:$0xf]
        %v5078 = vld [vmem:[#allocation14 + $0x17c] sm:$0xf]
        %v5079 = vld [vmem:[#allocation14 + $0x180] sm:$0xf]
        %v5080 = vld [vmem:[#allocation14 + $0x184] sm:$0xf]
        %v5081 = vld [vmem:[#allocation14 + $0x188] sm:$0xf]
        %v5082 = vld [vmem:[#allocation14 + $0x18c] sm:$0xf]
        %v5083 = vld [vmem:[#allocation14 + $0x190] sm:$0xf]
        %v5084 = vld [vmem:[#allocation14 + $0x194] sm:$0xf]
        %v5085 = vld [vmem:[#allocation14 + $0x198] sm:$0xf]
        %v5086 = vld [vmem:[#allocation14 + $0x19c] sm:$0xf]
        %v5087 = vld [vmem:[#allocation14 + $0x1a0] sm:$0xf]
        %v5088 = vld [vmem:[#allocation14 + $0x1a4] sm:$0xf]
        %v5089 = vld [vmem:[#allocation14 + $0x1a8] sm:$0xf]
        %v5090 = vld [vmem:[#allocation14 + $0x1ac] sm:$0xf]
        %v5091 = vld [vmem:[#allocation14 + $0x1b0] sm:$0xf]
        %v5092 = vld [vmem:[#allocation14 + $0x1b4] sm:$0xf]
        %v5093 = vld [vmem:[#allocation14 + $0x1b8] sm:$0xf]
        %v5094 = vld [vmem:[#allocation14 + $0x1bc] sm:$0xf]
        %v5095 = vld [vmem:[#allocation14 + $0x1c0] sm:$0xf]
        %v5096 = vld [vmem:[#allocation14 + $0x1c4] sm:$0xf]
        %v5097 = vld [vmem:[#allocation14 + $0x1c8] sm:$0xf]
        %v5098 = vld [vmem:[#allocation14 + $0x1cc] sm:$0xf]
        %v5099 = vld [vmem:[#allocation14 + $0x1d0] sm:$0xf]
        %v5100 = vld [vmem:[#allocation14 + $0x1d4] sm:$0xf]
        %v5101 = vld [vmem:[#allocation14 + $0x1d8] sm:$0xf]
        %v5102 = vld [vmem:[#allocation14 + $0x1dc] sm:$0xf]
        %v5103 = vld [vmem:[#allocation14 + $0x1e0] sm:$0xf]
        %v5104 = vld [vmem:[#allocation14 + $0x1e4] sm:$0xf]
        %v5105 = vld [vmem:[#allocation14 + $0x1e8] sm:$0xf]
        %v5106 = vld [vmem:[#allocation14 + $0x1ec] sm:$0xf]
        %v5107 = vld [vmem:[#allocation14 + $0x1f0] sm:$0xf]
        %v5108 = vld [vmem:[#allocation14 + $0x1f4] sm:$0xf]
        %v5109 = vld [vmem:[#allocation14 + $0x1f8] sm:$0xf]
        %v5110 = vld [vmem:[#allocation14 + $0x1fc] sm:$0xf]
        %v5111 = vld [vmem:[#allocation14 + $0x200] sm:$0xf]
        %v5112 = vld [vmem:[#allocation14 + $0x204] sm:$0xf]
        %v5113 = vld [vmem:[#allocation14 + $0x208] sm:$0xf]
        %v5114 = vld [vmem:[#allocation14 + $0x20c] sm:$0xf]
        %v5115 = vld [vmem:[#allocation14 + $0x210] sm:$0xf]
        %v5116 = vld [vmem:[#allocation14 + $0x214] sm:$0xf]
        %v5117 = vld [vmem:[#allocation14 + $0x218] sm:$0xf]
        %v5118 = vld [vmem:[#allocation14 + $0x21c] sm:$0xf]
        %v5119 = vld [vmem:[#allocation14 + $0x220] sm:$0xf]
        %v5120 = vld [vmem:[#allocation14 + $0x224] sm:$0xf]
        %v5121 = vld [vmem:[#allocation14 + $0x228] sm:$0xf]
        %v5122 = vld [vmem:[#allocation14 + $0x22c] sm:$0xf]
        %v5123 = vld [vmem:[#allocation14 + $0x230] sm:$0xf]
        %v5124 = vld [vmem:[#allocation14 + $0x234] sm:$0xf]
        %v5125 = vld [vmem:[#allocation14 + $0x238] sm:$0xf]
        %v5126 = vld [vmem:[#allocation14 + $0x23c] sm:$0xf]
        %v5128 = vlaneseq
        %v5129 = vshrl.u32 %v5128, 7
        %v5130 = vsub.s32 0, %v5129
        %v5131 = vrot.slane %v4420, %v5130
        %v5277 = vunpack.c.l.b16 %v4983
        %v5278 = vunpack.c.l.b16 %v4984
        %v5279 = vunpack.c.l.b16 %v4985
        %v5280 = vunpack.c.l.b16 %v4986
        %v5281 = vunpack.c.l.b16 %v4987
        %v5282 = vunpack.c.l.b16 %v4988
        %v5283 = vunpack.c.l.b16 %v4989
        %v5284 = vunpack.c.l.b16 %v4990
        %v5285 = vunpack.c.l.b16 %v4991
        %v5286 = vunpack.c.l.b16 %v4992
        %v5287 = vunpack.c.l.b16 %v4993
        %v5288 = vunpack.c.l.b16 %v4994
        %v5289 = vunpack.c.l.b16 %v4995
        %v5290 = vunpack.c.l.b16 %v4996
        %v5291 = vunpack.c.l.b16 %v4997
        %v5292 = vunpack.c.l.b16 %v4998
        %v5293 = vunpack.c.l.b16 %v4999
        %v5294 = vunpack.c.l.b16 %v5000
        %v5295 = vunpack.c.l.b16 %v5001
        %v5296 = vunpack.c.l.b16 %v5002
        %v5297 = vunpack.c.l.b16 %v5003
        %v5298 = vunpack.c.l.b16 %v5004
        %v5299 = vunpack.c.l.b16 %v5005
        %v5300 = vunpack.c.l.b16 %v5006
        %v5301 = vunpack.c.l.b16 %v5007
        %v5302 = vunpack.c.l.b16 %v5008
        %v5303 = vunpack.c.l.b16 %v5009
        %v5304 = vunpack.c.l.b16 %v5010
        %v5305 = vunpack.c.l.b16 %v5011
        %v5306 = vunpack.c.l.b16 %v5012
        %v5307 = vunpack.c.l.b16 %v5013
        %v5308 = vunpack.c.l.b16 %v5014
        %v5309 = vunpack.c.l.b16 %v5015
        %v5310 = vunpack.c.l.b16 %v5016
        %v5311 = vunpack.c.l.b16 %v5017
        %v5312 = vunpack.c.l.b16 %v5018
        %v5313 = vunpack.c.l.b16 %v5019
        %v5314 = vunpack.c.l.b16 %v5020
        %v5315 = vunpack.c.l.b16 %v5021
        %v5316 = vunpack.c.l.b16 %v5022
        %v5317 = vunpack.c.l.b16 %v5023
        %v5318 = vunpack.c.l.b16 %v5024
        %v5319 = vunpack.c.l.b16 %v5025
        %v5320 = vunpack.c.l.b16 %v5026
        %v5321 = vunpack.c.l.b16 %v5027
        %v5322 = vunpack.c.l.b16 %v5028
        %v5323 = vunpack.c.l.b16 %v5029
        %v5324 = vunpack.c.l.b16 %v5030
        %v5325 = vunpack.c.l.b16 %v5031
        %v5326 = vunpack.c.l.b16 %v5032
        %v5327 = vunpack.c.l.b16 %v5033
        %v5328 = vunpack.c.l.b16 %v5034
        %v5329 = vunpack.c.l.b16 %v5035
        %v5330 = vunpack.c.l.b16 %v5036
        %v5331 = vunpack.c.l.b16 %v5037
        %v5332 = vunpack.c.l.b16 %v5038
        %v5333 = vunpack.c.l.b16 %v5039
        %v5334 = vunpack.c.l.b16 %v5040
        %v5335 = vunpack.c.l.b16 %v5041
        %v5336 = vunpack.c.l.b16 %v5042
        %v5337 = vunpack.c.l.b16 %v5043
        %v5338 = vunpack.c.l.b16 %v5044
        %v5339 = vunpack.c.l.b16 %v5045
        %v5340 = vunpack.c.l.b16 %v5046
        %v5341 = vunpack.c.l.b16 %v5047
        %v5342 = vunpack.c.l.b16 %v5048
        %v5343 = vunpack.c.l.b16 %v5049
        %v5344 = vunpack.c.l.b16 %v5050
        %v5345 = vunpack.c.l.b16 %v5051
        %v5346 = vunpack.c.l.b16 %v5052
        %v5347 = vunpack.c.l.b16 %v5053
        %v5348 = vunpack.c.l.b16 %v5054
        %v5349 = vunpack.c.l.b16 %v5055
        %v5350 = vunpack.c.l.b16 %v5056
        %v5351 = vunpack.c.l.b16 %v5057
        %v5352 = vunpack.c.l.b16 %v5058
        %v5353 = vunpack.c.l.b16 %v5059
        %v5354 = vunpack.c.l.b16 %v5060
        %v5355 = vunpack.c.l.b16 %v5061
        %v5356 = vunpack.c.l.b16 %v5062
        %v5357 = vunpack.c.l.b16 %v5063
        %v5358 = vunpack.c.l.b16 %v5064
        %v5359 = vunpack.c.l.b16 %v5065
        %v5360 = vunpack.c.l.b16 %v5066
        %v5361 = vunpack.c.l.b16 %v5067
        %v5362 = vunpack.c.l.b16 %v5068
        %v5363 = vunpack.c.l.b16 %v5069
        %v5364 = vunpack.c.l.b16 %v5070
        %v5365 = vunpack.c.l.b16 %v5071
        %v5366 = vunpack.c.l.b16 %v5072
        %v5367 = vunpack.c.l.b16 %v5073
        %v5368 = vunpack.c.l.b16 %v5074
        %v5369 = vunpack.c.l.b16 %v5075
        %v5370 = vunpack.c.l.b16 %v5076
        %v5371 = vunpack.c.l.b16 %v5077
        %v5372 = vunpack.c.l.b16 %v5078
        %v5373 = vunpack.c.l.b16 %v5079
        %v5374 = vunpack.c.l.b16 %v5080
        %v5375 = vunpack.c.l.b16 %v5081
        %v5376 = vunpack.c.l.b16 %v5082
        %v5377 = vunpack.c.l.b16 %v5083
        %v5378 = vunpack.c.l.b16 %v5084
        %v5379 = vunpack.c.l.b16 %v5085
        %v5380 = vunpack.c.l.b16 %v5086
        %v5381 = vunpack.c.l.b16 %v5087
        %v5382 = vunpack.c.l.b16 %v5088
        %v5383 = vunpack.c.l.b16 %v5089
        %v5384 = vunpack.c.l.b16 %v5090
        %v5385 = vunpack.c.l.b16 %v5091
        %v5386 = vunpack.c.l.b16 %v5092
        %v5387 = vunpack.c.l.b16 %v5093
        %v5388 = vunpack.c.l.b16 %v5094
        %v5389 = vunpack.c.l.b16 %v5095
        %v5390 = vunpack.c.l.b16 %v5096
        %v5391 = vunpack.c.l.b16 %v5097
        %v5392 = vunpack.c.l.b16 %v5098
        %v5393 = vunpack.c.l.b16 %v5099
        %v5394 = vunpack.c.l.b16 %v5100
        %v5395 = vunpack.c.l.b16 %v5101
        %v5396 = vunpack.c.l.b16 %v5102
        %v5397 = vunpack.c.l.b16 %v5103
        %v5398 = vunpack.c.l.b16 %v5104
        %v5399 = vunpack.c.l.b16 %v5105
        %v5400 = vunpack.c.l.b16 %v5106
        %v5401 = vunpack.c.l.b16 %v5107
        %v5402 = vunpack.c.l.b16 %v5108
        %v5403 = vunpack.c.l.b16 %v5109
        %v5404 = vunpack.c.l.b16 %v5110
        %v5405 = vunpack.c.l.b16 %v5111
        %v5406 = vunpack.c.l.b16 %v5112
        %v5407 = vunpack.c.l.b16 %v5113
        %v5408 = vunpack.c.l.b16 %v5114
        %v5409 = vunpack.c.l.b16 %v5115
        %v5410 = vunpack.c.l.b16 %v5116
        %v5411 = vunpack.c.l.b16 %v5117
        %v5412 = vunpack.c.l.b16 %v5118
        %v5413 = vunpack.c.l.b16 %v5119
        %v5414 = vunpack.c.l.b16 %v5120
        %v5415 = vunpack.c.l.b16 %v5121
        %v5416 = vunpack.c.l.b16 %v5122
        %v5417 = vunpack.c.l.b16 %v5123
        %v5418 = vunpack.c.l.b16 %v5124
        %v5419 = vunpack.c.l.b16 %v5125
        %v5420 = vunpack.c.l.b16 %v5126
        %v5421 = vpack.c.b16 %v5278, %v5277
        %v5422 = vpack.c.b16 %v5280, %v5279
        %v5423 = vpack.c.b16 %v5282, %v5281
        %v5424 = vpack.c.b16 %v5284, %v5283
        %v5425 = vpack.c.b16 %v5286, %v5285
        %v5426 = vpack.c.b16 %v5288, %v5287
        %v5427 = vpack.c.b16 %v5290, %v5289
        %v5428 = vpack.c.b16 %v5292, %v5291
        %v5429 = vpack.c.b16 %v5294, %v5293
        %v5430 = vpack.c.b16 %v5296, %v5295
        %v5431 = vpack.c.b16 %v5298, %v5297
        %v5432 = vpack.c.b16 %v5300, %v5299
        %v5433 = vpack.c.b16 %v5302, %v5301
        %v5434 = vpack.c.b16 %v5304, %v5303
        %v5435 = vpack.c.b16 %v5306, %v5305
        %v5436 = vpack.c.b16 %v5308, %v5307
        %v5437 = vpack.c.b16 %v5310, %v5309
        %v5438 = vpack.c.b16 %v5312, %v5311
        %v5439 = vpack.c.b16 %v5314, %v5313
        %v5440 = vpack.c.b16 %v5316, %v5315
        %v5441 = vpack.c.b16 %v5318, %v5317
        %v5442 = vpack.c.b16 %v5320, %v5319
        %v5443 = vpack.c.b16 %v5322, %v5321
        %v5444 = vpack.c.b16 %v5324, %v5323
        %v5445 = vpack.c.b16 %v5326, %v5325
        %v5446 = vpack.c.b16 %v5328, %v5327
        %v5447 = vpack.c.b16 %v5330, %v5329
        %v5448 = vpack.c.b16 %v5332, %v5331
        %v5449 = vpack.c.b16 %v5334, %v5333
        %v5450 = vpack.c.b16 %v5336, %v5335
        %v5451 = vpack.c.b16 %v5338, %v5337
        %v5452 = vpack.c.b16 %v5340, %v5339
        %v5453 = vpack.c.b16 %v5342, %v5341
        %v5454 = vpack.c.b16 %v5344, %v5343
        %v5455 = vpack.c.b16 %v5346, %v5345
        %v5456 = vpack.c.b16 %v5348, %v5347
        %v5457 = vpack.c.b16 %v5350, %v5349
        %v5458 = vpack.c.b16 %v5352, %v5351
        %v5459 = vpack.c.b16 %v5354, %v5353
        %v5460 = vpack.c.b16 %v5356, %v5355
        %v5461 = vpack.c.b16 %v5358, %v5357
        %v5462 = vpack.c.b16 %v5360, %v5359
        %v5463 = vpack.c.b16 %v5362, %v5361
        %v5464 = vpack.c.b16 %v5364, %v5363
        %v5465 = vpack.c.b16 %v5366, %v5365
        %v5466 = vpack.c.b16 %v5368, %v5367
        %v5467 = vpack.c.b16 %v5370, %v5369
        %v5468 = vpack.c.b16 %v5372, %v5371
        %v5469 = vpack.c.b16 %v5374, %v5373
        %v5470 = vpack.c.b16 %v5376, %v5375
        %v5471 = vpack.c.b16 %v5378, %v5377
        %v5472 = vpack.c.b16 %v5380, %v5379
        %v5473 = vpack.c.b16 %v5382, %v5381
        %v5474 = vpack.c.b16 %v5384, %v5383
        %v5475 = vpack.c.b16 %v5386, %v5385
        %v5476 = vpack.c.b16 %v5388, %v5387
        %v5477 = vpack.c.b16 %v5390, %v5389
        %v5478 = vpack.c.b16 %v5392, %v5391
        %v5479 = vpack.c.b16 %v5394, %v5393
        %v5480 = vpack.c.b16 %v5396, %v5395
        %v5481 = vpack.c.b16 %v5398, %v5397
        %v5482 = vpack.c.b16 %v5400, %v5399
        %v5483 = vpack.c.b16 %v5402, %v5401
        %v5484 = vpack.c.b16 %v5404, %v5403
        %v5485 = vpack.c.b16 %v5406, %v5405
        %v5486 = vpack.c.b16 %v5408, %v5407
        %v5487 = vpack.c.b16 %v5410, %v5409
        %v5488 = vpack.c.b16 %v5412, %v5411
        %v5489 = vpack.c.b16 %v5414, %v5413
        %v5490 = vpack.c.b16 %v5416, %v5415
        %v5491 = vpack.c.b16 %v5418, %v5417
        %v5492 = vpack.c.b16 %v5420, %v5419
        %5565 = vmatprep.subr.bf16.mxu0 0
        %5566 = vmatpush1.bf16.msra.mxu0 %v5421
        %5567 = vmatprep.subr.bf16.mxu0 0
        %5568 = vmatpush1.bf16.msra.mxu0 %v5422
        %5569 = vmatprep.subr.bf16.mxu0 0
        %5570 = vmatpush1.bf16.msra.mxu0 %v5423
        %5571 = vmatprep.subr.bf16.mxu0 0
        %5572 = vmatpush1.bf16.msra.mxu0 %v5424
        %5573 = vmatprep.subr.bf16.mxu0 0
        %5574 = vmatpush1.bf16.msra.mxu0 %v5425
        %5575 = vmatprep.subr.bf16.mxu0 0
        %5576 = vmatpush1.bf16.msra.mxu0 %v5426
        %5577 = vmatprep.subr.bf16.mxu0 0
        %5578 = vmatpush1.bf16.msra.mxu0 %v5427
        %5579 = vmatprep.subr.bf16.mxu0 0
        %5580 = vmatpush1.bf16.msra.mxu0 %v5428
        %5581 = vmatprep.subr.bf16.mxu0 0
        %5582 = vmatpush1.bf16.msra.mxu0 %v5429
        %5583 = vmatprep.subr.bf16.mxu0 0
        %5584 = vmatpush1.bf16.msra.mxu0 %v5430
        %5585 = vmatprep.subr.bf16.mxu0 0
        %5586 = vmatpush1.bf16.msra.mxu0 %v5431
        %5587 = vmatprep.subr.bf16.mxu0 0
        %5588 = vmatpush1.bf16.msra.mxu0 %v5432
        %5589 = vmatprep.subr.bf16.mxu0 0
        %5590 = vmatpush1.bf16.msra.mxu0 %v5433
        %5591 = vmatprep.subr.bf16.mxu0 0
        %5592 = vmatpush1.bf16.msra.mxu0 %v5434
        %5593 = vmatprep.subr.bf16.mxu0 0
        %5594 = vmatpush1.bf16.msra.mxu0 %v5435
        %5595 = vmatprep.subr.bf16.mxu0 0
        %5596 = vmatpush1.bf16.msra.mxu0 %v5436
        %5597 = vmatprep.mubr.bf16.mxu0 %v4840
        %5598 = vmatmul.mubr.bf16.gmra.mrb[0].mxu0 %v4839
        %v5599 = vpop.f32.mrb[0].mxu0
        %v5600 = vadd.f32 %v5131, %v5599
        %v5601 = vpop.f32.mrb[0].mxu0
        %v5602 = vpop.f32.mrb[0].mxu0
        %v5603 = vadd.f32 %v5131, %v5602
        %v5604 = vpop.f32.mrb[0].mxu0
        %5605 = vmatprep.mubr.bf16.mxu0 %v4849
        %5606 = vmatmul.mubr.bf16.gmra.mrb[0].mxu0 %v4848
        %v5607 = vpop.f32.mrb[0].mxu0
        %v5608 = vadd.f32 %v5131, %v5607
        %v5609 = vpop.f32.mrb[0].mxu0
        %v5610 = vpop.f32.mrb[0].mxu0
        %v5611 = vadd.f32 %v5131, %v5610
        %v5612 = vpop.f32.mrb[0].mxu0
        %5613 = vmatprep.mubr.bf16.mxu0 %v4858
        %5614 = vmatmul.mubr.bf16.gmra.mrb[0].mxu0 %v4857
        %v5615 = vpop.f32.mrb[0].mxu0
        %v5616 = vadd.f32 %v5131, %v5615
        %v5617 = vpop.f32.mrb[0].mxu0
        %v5618 = vpop.f32.mrb[0].mxu0
        %v5619 = vadd.f32 %v5131, %v5618
        %v5620 = vpop.f32.mrb[0].mxu0
        %5621 = vmatprep.mubr.bf16.mxu0 %v4867
        %5622 = vmatmul.mubr.bf16.gmra.mrb[0].mxu0 %v4866
        %v5623 = vpop.f32.mrb[0].mxu0
        %v5624 = vadd.f32 %v5131, %v5623
        %v5625 = vpop.f32.mrb[0].mxu0
        %v5626 = vpop.f32.mrb[0].mxu0
        %v5627 = vadd.f32 %v5131, %v5626
        %v5628 = vpop.f32.mrb[0].mxu0
        %5629 = vmatprep.mubr.bf16.mxu0 %v4876
        %5630 = vmatmul.mubr.bf16.gmra.mrb[0].mxu0 %v4875
        %v5631 = vpop.f32.mrb[0].mxu0
        %v5632 = vadd.f32 %v5131, %v5631
        %v5633 = vpop.f32.mrb[0].mxu0
        %v5634 = vpop.f32.mrb[0].mxu0
        %v5635 = vadd.f32 %v5131, %v5634
        %v5636 = vpop.f32.mrb[0].mxu0
        %5637 = vmatprep.mubr.bf16.mxu0 %v4885
        %5638 = vmatmul.mubr.bf16.gmra.mrb[0].mxu0 %v4884
        %v5639 = vpop.f32.mrb[0].mxu0
        %v5640 = vadd.f32 %v5131, %v5639
        %v5641 = vpop.f32.mrb[0].mxu0
        %v5642 = vpop.f32.mrb[0].mxu0
        %v5643 = vadd.f32 %v5131, %v5642
        %v5644 = vpop.f32.mrb[0].mxu0
        %5645 = vmatprep.mubr.bf16.mxu0 %v4894
        %5646 = vmatmul.mubr.bf16.gmra.mrb[0].mxu0 %v4893
        %v5647 = vpop.f32.mrb[0].mxu0
        %v5648 = vadd.f32 %v5131, %v5647
        %v5649 = vpop.f32.mrb[0].mxu0
        %v5650 = vpop.f32.mrb[0].mxu0
        %v5651 = vadd.f32 %v5131, %v5650
        %v5652 = vpop.f32.mrb[0].mxu0
        %5653 = vmatprep.mubr.bf16.mxu0 %v4903
        %5654 = vmatmul.mubr.bf16.gmra.mrb[0].mxu0 %v4902
        %v5655 = vpop.f32.mrb[0].mxu0
        %v5656 = vadd.f32 %v5131, %v5655
        %v5657 = vpop.f32.mrb[0].mxu0
        %v5658 = vpop.f32.mrb[0].mxu0
        %v5659 = vadd.f32 %v5131, %v5658
        %v5660 = vpop.f32.mrb[0].mxu0
        %5661 = vmatprep.mubr.bf16.mxu0 %v4912
        %5662 = vmatmul.mubr.bf16.gmra.mrb[0].mxu0 %v4911
        %v5663 = vpop.f32.mrb[0].mxu0
        %v5664 = vadd.f32 %v5131, %v5663
        %v5665 = vpop.f32.mrb[0].mxu0
        %v5666 = vpop.f32.mrb[0].mxu0
        %v5667 = vadd.f32 %v5131, %v5666
        %v5668 = vpop.f32.mrb[0].mxu0
        %5669 = vmatprep.mubr.bf16.mxu0 %v4921
        %5670 = vmatmul.mubr.bf16.gmra.mrb[0].mxu0 %v4920
        %v5671 = vpop.f32.mrb[0].mxu0
        %v5672 = vadd.f32 %v5131, %v5671
        %v5673 = vpop.f32.mrb[0].mxu0
        %v5674 = vpop.f32.mrb[0].mxu0
        %v5675 = vadd.f32 %v5131, %v5674
        %v5676 = vpop.f32.mrb[0].mxu0
        %5677 = vmatprep.mubr.bf16.mxu0 %v4930
        %5678 = vmatmul.mubr.bf16.gmra.mrb[0].mxu0 %v4929
        %v5679 = vpop.f32.mrb[0].mxu0
        %v5680 = vadd.f32 %v5131, %v5679
        %v5681 = vpop.f32.mrb[0].mxu0
        %v5682 = vpop.f32.mrb[0].mxu0
        %v5683 = vadd.f32 %v5131, %v5682
        %v5684 = vpop.f32.mrb[0].mxu0
        %5685 = vmatprep.mubr.bf16.mxu0 %v4939
        %5686 = vmatmul.mubr.bf16.gmra.mrb[0].mxu0 %v4938
        %v5687 = vpop.f32.mrb[0].mxu0
        %v5688 = vadd.f32 %v5131, %v5687
        %v5689 = vpop.f32.mrb[0].mxu0
        %v5690 = vpop.f32.mrb[0].mxu0
        %v5691 = vadd.f32 %v5131, %v5690
        %v5692 = vpop.f32.mrb[0].mxu0
        %5693 = vmatprep.mubr.bf16.mxu0 %v4948
        %5694 = vmatmul.mubr.bf16.gmra.mrb[0].mxu0 %v4947
        %v5695 = vpop.f32.mrb[0].mxu0
        %v5696 = vadd.f32 %v5131, %v5695
        %v5697 = vpop.f32.mrb[0].mxu0
        %v5698 = vpop.f32.mrb[0].mxu0
        %v5699 = vadd.f32 %v5131, %v5698
        %v5700 = vpop.f32.mrb[0].mxu0
        %5701 = vmatprep.mubr.bf16.mxu0 %v4957
        %5702 = vmatmul.mubr.bf16.gmra.mrb[0].mxu0 %v4956
        %v5703 = vpop.f32.mrb[0].mxu0
        %v5704 = vadd.f32 %v5131, %v5703
        %v5705 = vpop.f32.mrb[0].mxu0
        %v5706 = vpop.f32.mrb[0].mxu0
        %v5707 = vadd.f32 %v5131, %v5706
        %v5708 = vpop.f32.mrb[0].mxu0
        %5709 = vmatprep.mubr.bf16.mxu0 %v4966
        %5710 = vmatmul.mubr.bf16.gmra.mrb[0].mxu0 %v4965
        %v5711 = vpop.f32.mrb[0].mxu0
        %v5712 = vadd.f32 %v5131, %v5711
        %v5713 = vpop.f32.mrb[0].mxu0
        %v5714 = vpop.f32.mrb[0].mxu0
        %v5715 = vadd.f32 %v5131, %v5714
        %v5716 = vpop.f32.mrb[0].mxu0
        %5717 = vmatprep.mubr.bf16.mxu0 %v4975
        %5718 = vmatmul.mubr.bf16.gmra.mrb[0].mxu0 %v4974
        %v5719 = vpop.f32.mrb[0].mxu0
        %v5720 = vadd.f32 %v5131, %v5719
        %v5721 = vpop.f32.mrb[0].mxu0
        %v5722 = vpop.f32.mrb[0].mxu0
        %v5723 = vadd.f32 %v5131, %v5722
        %v5724 = vpop.f32.mrb[0].mxu0
        %5725 = vdwg.mxu0
        %5726 = vmatprep.subr.bf16.mxu0 0
        %5727 = vmatpush1.bf16.msra.mxu0 %v5437
        %5728 = vmatprep.subr.bf16.mxu0 0
        %5729 = vmatpush1.bf16.msra.mxu0 %v5438
        %5730 = vmatprep.subr.bf16.mxu0 0
        %5731 = vmatpush1.bf16.msra.mxu0 %v5439
        %5732 = vmatprep.subr.bf16.mxu0 0
        %5733 = vmatpush1.bf16.msra.mxu0 %v5440
        %5734 = vmatprep.subr.bf16.mxu0 0
        %5735 = vmatpush1.bf16.msra.mxu0 %v5441
        %5736 = vmatprep.subr.bf16.mxu0 0
        %5737 = vmatpush1.bf16.msra.mxu0 %v5442
        %5738 = vmatprep.subr.bf16.mxu0 0
        %5739 = vmatpush1.bf16.msra.mxu0 %v5443
        %5740 = vmatprep.subr.bf16.mxu0 0
        %5741 = vmatpush1.bf16.msra.mxu0 %v5444
        %5742 = vmatprep.subr.bf16.mxu0 0
        %5743 = vmatpush1.bf16.msra.mxu0 %v5445
        %5744 = vmatprep.subr.bf16.mxu0 0
        %5745 = vmatpush1.bf16.msra.mxu0 %v5446
        %5746 = vmatprep.subr.bf16.mxu0 0
        %5747 = vmatpush1.bf16.msra.mxu0 %v5447
        %5748 = vmatprep.subr.bf16.mxu0 0
        %5749 = vmatpush1.bf16.msra.mxu0 %v5448
        %5750 = vmatprep.subr.bf16.mxu0 0
        %5751 = vmatpush1.bf16.msra.mxu0 %v5449
        %5752 = vmatprep.subr.bf16.mxu0 0
        %5753 = vmatpush1.bf16.msra.mxu0 %v5450
        %5754 = vmatprep.subr.bf16.mxu0 0
        %5755 = vmatpush1.bf16.msra.mxu0 %v5451
        %5756 = vmatprep.subr.bf16.mxu0 0
        %5757 = vmatpush1.bf16.msra.mxu0 %v5452
        %5758 = vmatprep.mubr.bf16.mxu0 %v4842
        %5759 = vmatmul.mubr.bf16.gmra.mrb[0].mxu0 %v4841
        %v5760 = vpop.f32.mrb[0].mxu0
        %v5761 = vadd.f32 %v5600, %v5760
        %v5762 = vpop.f32.mrb[0].mxu0
        %v5763 = vpop.f32.mrb[0].mxu0
        %v5764 = vadd.f32 %v5603, %v5763
        %v5765 = vpop.f32.mrb[0].mxu0
        %5766 = vmatprep.mubr.bf16.mxu0 %v4851
        %5767 = vmatmul.mubr.bf16.gmra.mrb[0].mxu0 %v4850
        %v5768 = vpop.f32.mrb[0].mxu0
        %v5769 = vadd.f32 %v5608, %v5768
        %v5770 = vpop.f32.mrb[0].mxu0
        %v5771 = vpop.f32.mrb[0].mxu0
        %v5772 = vadd.f32 %v5611, %v5771
        %v5773 = vpop.f32.mrb[0].mxu0
        %5774 = vmatprep.mubr.bf16.mxu0 %v4860
        %5775 = vmatmul.mubr.bf16.gmra.mrb[0].mxu0 %v4859
        %v5776 = vpop.f32.mrb[0].mxu0
        %v5777 = vadd.f32 %v5616, %v5776
        %v5778 = vpop.f32.mrb[0].mxu0
        %v5779 = vpop.f32.mrb[0].mxu0
        %v5780 = vadd.f32 %v5619, %v5779
        %v5781 = vpop.f32.mrb[0].mxu0
        %5782 = vmatprep.mubr.bf16.mxu0 %v4869
        %5783 = vmatmul.mubr.bf16.gmra.mrb[0].mxu0 %v4868
        %v5784 = vpop.f32.mrb[0].mxu0
        %v5785 = vadd.f32 %v5624, %v5784
        %v5786 = vpop.f32.mrb[0].mxu0
        %v5787 = vpop.f32.mrb[0].mxu0
        %v5788 = vadd.f32 %v5627, %v5787
        %v5789 = vpop.f32.mrb[0].mxu0
        %5790 = vmatprep.mubr.bf16.mxu0 %v4878
        %5791 = vmatmul.mubr.bf16.gmra.mrb[0].mxu0 %v4877
        %v5792 = vpop.f32.mrb[0].mxu0
        %v5793 = vadd.f32 %v5632, %v5792
        %v5794 = vpop.f32.mrb[0].mxu0
        %v5795 = vpop.f32.mrb[0].mxu0
        %v5796 = vadd.f32 %v5635, %v5795
        %v5797 = vpop.f32.mrb[0].mxu0
        %5798 = vmatprep.mubr.bf16.mxu0 %v4887
        %5799 = vmatmul.mubr.bf16.gmra.mrb[0].mxu0 %v4886
        %v5800 = vpop.f32.mrb[0].mxu0
        %v5801 = vadd.f32 %v5640, %v5800
        %v5802 = vpop.f32.mrb[0].mxu0
        %v5803 = vpop.f32.mrb[0].mxu0
        %v5804 = vadd.f32 %v5643, %v5803
        %v5805 = vpop.f32.mrb[0].mxu0
        %5806 = vmatprep.mubr.bf16.mxu0 %v4896
        %5807 = vmatmul.mubr.bf16.gmra.mrb[0].mxu0 %v4895
        %v5808 = vpop.f32.mrb[0].mxu0
        %v5809 = vadd.f32 %v5648, %v5808
        %v5810 = vpop.f32.mrb[0].mxu0
        %v5811 = vpop.f32.mrb[0].mxu0
        %v5812 = vadd.f32 %v5651, %v5811
        %v5813 = vpop.f32.mrb[0].mxu0
        %5814 = vmatprep.mubr.bf16.mxu0 %v4905
        %5815 = vmatmul.mubr.bf16.gmra.mrb[0].mxu0 %v4904
        %v5816 = vpop.f32.mrb[0].mxu0
        %v5817 = vadd.f32 %v5656, %v5816
        %v5818 = vpop.f32.mrb[0].mxu0
        %v5819 = vpop.f32.mrb[0].mxu0
        %v5820 = vadd.f32 %v5659, %v5819
        %v5821 = vpop.f32.mrb[0].mxu0
        %5822 = vmatprep.mubr.bf16.mxu0 %v4914
        %5823 = vmatmul.mubr.bf16.gmra.mrb[0].mxu0 %v4913
        %v5824 = vpop.f32.mrb[0].mxu0
        %v5825 = vadd.f32 %v5664, %v5824
        %v5826 = vpop.f32.mrb[0].mxu0
        %v5827 = vpop.f32.mrb[0].mxu0
        %v5828 = vadd.f32 %v5667, %v5827
        %v5829 = vpop.f32.mrb[0].mxu0
        %5830 = vmatprep.mubr.bf16.mxu0 %v4923
        %5831 = vmatmul.mubr.bf16.gmra.mrb[0].mxu0 %v4922
        %v5832 = vpop.f32.mrb[0].mxu0
        %v5833 = vadd.f32 %v5672, %v5832
        %v5834 = vpop.f32.mrb[0].mxu0
        %v5835 = vpop.f32.mrb[0].mxu0
        %v5836 = vadd.f32 %v5675, %v5835
        %v5837 = vpop.f32.mrb[0].mxu0
        %5838 = vmatprep.mubr.bf16.mxu0 %v4932
        %5839 = vmatmul.mubr.bf16.gmra.mrb[0].mxu0 %v4931
        %v5840 = vpop.f32.mrb[0].mxu0
        %v5841 = vadd.f32 %v5680, %v5840
        %v5842 = vpop.f32.mrb[0].mxu0
        %v5843 = vpop.f32.mrb[0].mxu0
        %v5844 = vadd.f32 %v5683, %v5843
        %v5845 = vpop.f32.mrb[0].mxu0
        %5846 = vmatprep.mubr.bf16.mxu0 %v4941
        %5847 = vmatmul.mubr.bf16.gmra.mrb[0].mxu0 %v4940
        %v5848 = vpop.f32.mrb[0].mxu0
        %v5849 = vadd.f32 %v5688, %v5848
        %v5850 = vpop.f32.mrb[0].mxu0
        %v5851 = vpop.f32.mrb[0].mxu0
        %v5852 = vadd.f32 %v5691, %v5851
        %v5853 = vpop.f32.mrb[0].mxu0
        %5854 = vmatprep.mubr.bf16.mxu0 %v4950
        %5855 = vmatmul.mubr.bf16.gmra.mrb[0].mxu0 %v4949
        %v5856 = vpop.f32.mrb[0].mxu0
        %v5857 = vadd.f32 %v5696, %v5856
        %v5858 = vpop.f32.mrb[0].mxu0
        %v5859 = vpop.f32.mrb[0].mxu0
        %v5860 = vadd.f32 %v5699, %v5859
        %v5861 = vpop.f32.mrb[0].mxu0
        %5862 = vmatprep.mubr.bf16.mxu0 %v4959
        %5863 = vmatmul.mubr.bf16.gmra.mrb[0].mxu0 %v4958
        %v5864 = vpop.f32.mrb[0].mxu0
        %v5865 = vadd.f32 %v5704, %v5864
        %v5866 = vpop.f32.mrb[0].mxu0
        %v5867 = vpop.f32.mrb[0].mxu0
        %v5868 = vadd.f32 %v5707, %v5867
        %v5869 = vpop.f32.mrb[0].mxu0
        %5870 = vmatprep.mubr.bf16.mxu0 %v4968
        %5871 = vmatmul.mubr.bf16.gmra.mrb[0].mxu0 %v4967
        %v5872 = vpop.f32.mrb[0].mxu0
        %v5873 = vadd.f32 %v5712, %v5872
        %v5874 = vpop.f32.mrb[0].mxu0
        %v5875 = vpop.f32.mrb[0].mxu0
        %v5876 = vadd.f32 %v5715, %v5875
        %v5877 = vpop.f32.mrb[0].mxu0
        %5878 = vmatprep.mubr.bf16.mxu0 %v4977
        %5879 = vmatmul.mubr.bf16.gmra.mrb[0].mxu0 %v4976
        %v5880 = vpop.f32.mrb[0].mxu0
        %v5881 = vadd.f32 %v5720, %v5880
        %v5882 = vpop.f32.mrb[0].mxu0
        %v5883 = vpop.f32.mrb[0].mxu0
        %v5884 = vadd.f32 %v5723, %v5883
        %v5885 = vpop.f32.mrb[0].mxu0
        %5886 = vdwg.mxu0
        %5887 = vmatprep.subr.bf16.mxu0 0
        %5888 = vmatpush1.bf16.msra.mxu0 %v5453
        %5889 = vmatprep.subr.bf16.mxu0 0
        %5890 = vmatpush1.bf16.msra.mxu0 %v5454
        %5891 = vmatprep.subr.bf16.mxu0 0
        %5892 = vmatpush1.bf16.msra.mxu0 %v5455
        %5893 = vmatprep.subr.bf16.mxu0 0
        %5894 = vmatpush1.bf16.msra.mxu0 %v5456
        %5895 = vmatprep.subr.bf16.mxu0 0
        %5896 = vmatpush1.bf16.msra.mxu0 %v5457
        %5897 = vmatprep.subr.bf16.mxu0 0
        %5898 = vmatpush1.bf16.msra.mxu0 %v5458
        %5899 = vmatprep.subr.bf16.mxu0 0
        %5900 = vmatpush1.bf16.msra.mxu0 %v5459
        %5901 = vmatprep.subr.bf16.mxu0 0
        %5902 = vmatpush1.bf16.msra.mxu0 %v5460
        %5903 = vmatprep.subr.bf16.mxu0 0
        %5904 = vmatpush1.bf16.msra.mxu0 %v5461
        %5905 = vmatprep.subr.bf16.mxu0 0
        %5906 = vmatpush1.bf16.msra.mxu0 %v5462
        %5907 = vmatprep.subr.bf16.mxu0 0
        %5908 = vmatpush1.bf16.msra.mxu0 %v5463
        %5909 = vmatprep.subr.bf16.mxu0 0
        %5910 = vmatpush1.bf16.msra.mxu0 %v5464
        %5911 = vmatprep.subr.bf16.mxu0 0
        %5912 = vmatpush1.bf16.msra.mxu0 %v5465
        %5913 = vmatprep.subr.bf16.mxu0 0
        %5914 = vmatpush1.bf16.msra.mxu0 %v5466
        %5915 = vmatprep.subr.bf16.mxu0 0
        %5916 = vmatpush1.bf16.msra.mxu0 %v5467
        %5917 = vmatprep.subr.bf16.mxu0 0
        %5918 = vmatpush1.bf16.msra.mxu0 %v5468
        %5919 = vmatprep.mubr.bf16.mxu0 %v4844
        %5920 = vmatmul.mubr.bf16.gmra.mrb[0].mxu0 %v4843
        %v5921 = vpop.f32.mrb[0].mxu0
        %v5922 = vadd.f32 %v5761, %v5921
        %v5923 = vpop.f32.mrb[0].mxu0
        %v5924 = vpop.f32.mrb[0].mxu0
        %v5925 = vadd.f32 %v5764, %v5924
        %v5926 = vpop.f32.mrb[0].mxu0
        %5927 = vmatprep.mubr.bf16.mxu0 %v4853
        %5928 = vmatmul.mubr.bf16.gmra.mrb[0].mxu0 %v4852
        %v5929 = vpop.f32.mrb[0].mxu0
        %v5930 = vadd.f32 %v5769, %v5929
        %v5931 = vpop.f32.mrb[0].mxu0
        %v5932 = vpop.f32.mrb[0].mxu0
        %v5933 = vadd.f32 %v5772, %v5932
        %v5934 = vpop.f32.mrb[0].mxu0
        %5935 = vmatprep.mubr.bf16.mxu0 %v4862
        %5936 = vmatmul.mubr.bf16.gmra.mrb[0].mxu0 %v4861
        %v5937 = vpop.f32.mrb[0].mxu0
        %v5938 = vadd.f32 %v5777, %v5937
        %v5939 = vpop.f32.mrb[0].mxu0
        %v5940 = vpop.f32.mrb[0].mxu0
        %v5941 = vadd.f32 %v5780, %v5940
        %v5942 = vpop.f32.mrb[0].mxu0
        %5943 = vmatprep.mubr.bf16.mxu0 %v4871
        %5944 = vmatmul.mubr.bf16.gmra.mrb[0].mxu0 %v4870
        %v5945 = vpop.f32.mrb[0].mxu0
        %v5946 = vadd.f32 %v5785, %v5945
        %v5947 = vpop.f32.mrb[0].mxu0
        %v5948 = vpop.f32.mrb[0].mxu0
        %v5949 = vadd.f32 %v5788, %v5948
        %v5950 = vpop.f32.mrb[0].mxu0
        %5951 = vmatprep.mubr.bf16.mxu0 %v4880
        %5952 = vmatmul.mubr.bf16.gmra.mrb[0].mxu0 %v4879
        %v5953 = vpop.f32.mrb[0].mxu0
        %v5954 = vadd.f32 %v5793, %v5953
        %v5955 = vpop.f32.mrb[0].mxu0
        %v5956 = vpop.f32.mrb[0].mxu0
        %v5957 = vadd.f32 %v5796, %v5956
        %v5958 = vpop.f32.mrb[0].mxu0
        %5959 = vmatprep.mubr.bf16.mxu0 %v4889
        %5960 = vmatmul.mubr.bf16.gmra.mrb[0].mxu0 %v4888
        %v5961 = vpop.f32.mrb[0].mxu0
        %v5962 = vadd.f32 %v5801, %v5961
        %v5963 = vpop.f32.mrb[0].mxu0
        %v5964 = vpop.f32.mrb[0].mxu0
        %v5965 = vadd.f32 %v5804, %v5964
        %v5966 = vpop.f32.mrb[0].mxu0
        %5967 = vmatprep.mubr.bf16.mxu0 %v4898
        %5968 = vmatmul.mubr.bf16.gmra.mrb[0].mxu0 %v4897
        %v5969 = vpop.f32.mrb[0].mxu0
        %v5970 = vadd.f32 %v5809, %v5969
        %v5971 = vpop.f32.mrb[0].mxu0
        %v5972 = vpop.f32.mrb[0].mxu0
        %v5973 = vadd.f32 %v5812, %v5972
        %v5974 = vpop.f32.mrb[0].mxu0
        %5975 = vmatprep.mubr.bf16.mxu0 %v4907
        %5976 = vmatmul.mubr.bf16.gmra.mrb[0].mxu0 %v4906
        %v5977 = vpop.f32.mrb[0].mxu0
        %v5978 = vadd.f32 %v5817, %v5977
        %v5979 = vpop.f32.mrb[0].mxu0
        %v5980 = vpop.f32.mrb[0].mxu0
        %v5981 = vadd.f32 %v5820, %v5980
        %v5982 = vpop.f32.mrb[0].mxu0
        %5983 = vmatprep.mubr.bf16.mxu0 %v4916
        %5984 = vmatmul.mubr.bf16.gmra.mrb[0].mxu0 %v4915
        %v5985 = vpop.f32.mrb[0].mxu0
        %v5986 = vadd.f32 %v5825, %v5985
        %v5987 = vpop.f32.mrb[0].mxu0
        %v5988 = vpop.f32.mrb[0].mxu0
        %v5989 = vadd.f32 %v5828, %v5988
        %v5990 = vpop.f32.mrb[0].mxu0
        %5991 = vmatprep.mubr.bf16.mxu0 %v4925
        %5992 = vmatmul.mubr.bf16.gmra.mrb[0].mxu0 %v4924
        %v5993 = vpop.f32.mrb[0].mxu0
        %v5994 = vadd.f32 %v5833, %v5993
        %v5995 = vpop.f32.mrb[0].mxu0
        %v5996 = vpop.f32.mrb[0].mxu0
        %v5997 = vadd.f32 %v5836, %v5996
        %v5998 = vpop.f32.mrb[0].mxu0
        %5999 = vmatprep.mubr.bf16.mxu0 %v4934
        %6000 = vmatmul.mubr.bf16.gmra.mrb[0].mxu0 %v4933
        %v6001 = vpop.f32.mrb[0].mxu0
        %v6002 = vadd.f32 %v5841, %v6001
        %v6003 = vpop.f32.mrb[0].mxu0
        %v6004 = vpop.f32.mrb[0].mxu0
        %v6005 = vadd.f32 %v5844, %v6004
        %v6006 = vpop.f32.mrb[0].mxu0
        %6007 = vmatprep.mubr.bf16.mxu0 %v4943
        %6008 = vmatmul.mubr.bf16.gmra.mrb[0].mxu0 %v4942
        %v6009 = vpop.f32.mrb[0].mxu0
        %v6010 = vadd.f32 %v5849, %v6009
        %v6011 = vpop.f32.mrb[0].mxu0
        %v6012 = vpop.f32.mrb[0].mxu0
        %v6013 = vadd.f32 %v5852, %v6012
        %v6014 = vpop.f32.mrb[0].mxu0
        %6015 = vmatprep.mubr.bf16.mxu0 %v4952
        %6016 = vmatmul.mubr.bf16.gmra.mrb[0].mxu0 %v4951
        %v6017 = vpop.f32.mrb[0].mxu0
        %v6018 = vadd.f32 %v5857, %v6017
        %v6019 = vpop.f32.mrb[0].mxu0
        %v6020 = vpop.f32.mrb[0].mxu0
        %v6021 = vadd.f32 %v5860, %v6020
        %v6022 = vpop.f32.mrb[0].mxu0
        %6023 = vmatprep.mubr.bf16.mxu0 %v4961
        %6024 = vmatmul.mubr.bf16.gmra.mrb[0].mxu0 %v4960
        %v6025 = vpop.f32.mrb[0].mxu0
        %v6026 = vadd.f32 %v5865, %v6025
        %v6027 = vpop.f32.mrb[0].mxu0
        %v6028 = vpop.f32.mrb[0].mxu0
        %v6029 = vadd.f32 %v5868, %v6028
        %v6030 = vpop.f32.mrb[0].mxu0
        %6031 = vmatprep.mubr.bf16.mxu0 %v4970
        %6032 = vmatmul.mubr.bf16.gmra.mrb[0].mxu0 %v4969
        %v6033 = vpop.f32.mrb[0].mxu0
        %v6034 = vadd.f32 %v5873, %v6033
        %v6035 = vpop.f32.mrb[0].mxu0
        %v6036 = vpop.f32.mrb[0].mxu0
        %v6037 = vadd.f32 %v5876, %v6036
        %v6038 = vpop.f32.mrb[0].mxu0
        %6039 = vmatprep.mubr.bf16.mxu0 %v4979
        %6040 = vmatmul.mubr.bf16.gmra.mrb[0].mxu0 %v4978
        %v6041 = vpop.f32.mrb[0].mxu0
        %v6042 = vadd.f32 %v5881, %v6041
        %v6043 = vpop.f32.mrb[0].mxu0
        %v6044 = vpop.f32.mrb[0].mxu0
        %v6045 = vadd.f32 %v5884, %v6044
        %v6046 = vpop.f32.mrb[0].mxu0
        %6047 = vdwg.mxu0
        %6048 = vmatprep.subr.bf16.mxu0 0
        %6049 = vmatpush1.bf16.msra.mxu0 %v5469
        %6050 = vmatprep.subr.bf16.mxu0 0
        %6051 = vmatpush1.bf16.msra.mxu0 %v5470
        %6052 = vmatprep.subr.bf16.mxu0 0
        %6053 = vmatpush1.bf16.msra.mxu0 %v5471
        %6054 = vmatprep.subr.bf16.mxu0 0
        %6055 = vmatpush1.bf16.msra.mxu0 %v5472
        %6056 = vmatprep.subr.bf16.mxu0 0
        %6057 = vmatpush1.bf16.msra.mxu0 %v5473
        %6058 = vmatprep.subr.bf16.mxu0 0
        %6059 = vmatpush1.bf16.msra.mxu0 %v5474
        %6060 = vmatprep.subr.bf16.mxu0 0
        %6061 = vmatpush1.bf16.msra.mxu0 %v5475
        %6062 = vmatprep.subr.bf16.mxu0 0
        %6063 = vmatpush1.bf16.msra.mxu0 %v5476
        %6064 = vmatprep.subr.bf16.mxu0 0
        %6065 = vmatpush1.bf16.msra.mxu0 %v5477
        %6066 = vmatprep.subr.bf16.mxu0 0
        %6067 = vmatpush1.bf16.msra.mxu0 %v5478
        %6068 = vmatprep.subr.bf16.mxu0 0
        %6069 = vmatpush1.bf16.msra.mxu0 %v5479
        %6070 = vmatprep.subr.bf16.mxu0 0
        %6071 = vmatpush1.bf16.msra.mxu0 %v5480
        %6072 = vmatprep.subr.bf16.mxu0 0
        %6073 = vmatpush1.bf16.msra.mxu0 %v5481
        %6074 = vmatprep.subr.bf16.mxu0 0
        %6075 = vmatpush1.bf16.msra.mxu0 %v5482
        %6076 = vmatprep.subr.bf16.mxu0 0
        %6077 = vmatpush1.bf16.msra.mxu0 %v5483
        %6078 = vmatprep.subr.bf16.mxu0 0
        %6079 = vmatpush1.bf16.msra.mxu0 %v5484
        %6080 = vmatprep.mubr.bf16.mxu0 %v4846
        %6081 = vmatmul.mubr.bf16.gmra.mrb[0].mxu0 %v4845
        %v6082 = vpop.f32.mrb[0].mxu0
        %v6083 = vadd.f32 %v5922, %v6082
        %v6084 = vpop.f32.mrb[0].mxu0
        %v6085 = vpop.f32.mrb[0].mxu0
        %v6086 = vadd.f32 %v5925, %v6085
        %v6087 = vpop.f32.mrb[0].mxu0
        %6088 = vmatprep.mubr.bf16.mxu0 %v4855
        %6089 = vmatmul.mubr.bf16.gmra.mrb[0].mxu0 %v4854
        %v6090 = vpop.f32.mrb[0].mxu0
        %v6091 = vadd.f32 %v5930, %v6090
        %v6092 = vpop.f32.mrb[0].mxu0
        %v6093 = vpop.f32.mrb[0].mxu0
        %v6094 = vadd.f32 %v5933, %v6093
        %v6095 = vpop.f32.mrb[0].mxu0
        %6096 = vmatprep.mubr.bf16.mxu0 %v4864
        %6097 = vmatmul.mubr.bf16.gmra.mrb[0].mxu0 %v4863
        %v6098 = vpop.f32.mrb[0].mxu0
        %v6099 = vadd.f32 %v5938, %v6098
        %v6100 = vpop.f32.mrb[0].mxu0
        %v6101 = vpop.f32.mrb[0].mxu0
        %v6102 = vadd.f32 %v5941, %v6101
        %v6103 = vpop.f32.mrb[0].mxu0
        %6104 = vmatprep.mubr.bf16.mxu0 %v4873
        %6105 = vmatmul.mubr.bf16.gmra.mrb[0].mxu0 %v4872
        %v6106 = vpop.f32.mrb[0].mxu0
        %v6107 = vadd.f32 %v5946, %v6106
        %v6108 = vpop.f32.mrb[0].mxu0
        %v6109 = vpop.f32.mrb[0].mxu0
        %v6110 = vadd.f32 %v5949, %v6109
        %v6111 = vpop.f32.mrb[0].mxu0
        %6112 = vmatprep.mubr.bf16.mxu0 %v4882
        %6113 = vmatmul.mubr.bf16.gmra.mrb[0].mxu0 %v4881
        %v6114 = vpop.f32.mrb[0].mxu0
        %v6115 = vadd.f32 %v5954, %v6114
        %v6116 = vpop.f32.mrb[0].mxu0
        %v6117 = vpop.f32.mrb[0].mxu0
        %v6118 = vadd.f32 %v5957, %v6117
        %v6119 = vpop.f32.mrb[0].mxu0
        %6120 = vmatprep.mubr.bf16.mxu0 %v4891
        %6121 = vmatmul.mubr.bf16.gmra.mrb[0].mxu0 %v4890
        %v6122 = vpop.f32.mrb[0].mxu0
        %v6123 = vadd.f32 %v5962, %v6122
        %v6124 = vpop.f32.mrb[0].mxu0
        %v6125 = vpop.f32.mrb[0].mxu0
        %v6126 = vadd.f32 %v5965, %v6125
        %v6127 = vpop.f32.mrb[0].mxu0
        %6128 = vmatprep.mubr.bf16.mxu0 %v4900
        %6129 = vmatmul.mubr.bf16.gmra.mrb[0].mxu0 %v4899
        %v6130 = vpop.f32.mrb[0].mxu0
        %v6131 = vadd.f32 %v5970, %v6130
        %v6132 = vpop.f32.mrb[0].mxu0
        %v6133 = vpop.f32.mrb[0].mxu0
        %v6134 = vadd.f32 %v5973, %v6133
        %v6135 = vpop.f32.mrb[0].mxu0
        %6136 = vmatprep.mubr.bf16.mxu0 %v4909
        %6137 = vmatmul.mubr.bf16.gmra.mrb[0].mxu0 %v4908
        %v6138 = vpop.f32.mrb[0].mxu0
        %v6139 = vadd.f32 %v5978, %v6138
        %v6140 = vpop.f32.mrb[0].mxu0
        %v6141 = vpop.f32.mrb[0].mxu0
        %v6142 = vadd.f32 %v5981, %v6141
        %v6143 = vpop.f32.mrb[0].mxu0
        %6144 = vmatprep.mubr.bf16.mxu0 %v4918
        %6145 = vmatmul.mubr.bf16.gmra.mrb[0].mxu0 %v4917
        %v6146 = vpop.f32.mrb[0].mxu0
        %v6147 = vadd.f32 %v5986, %v6146
        %v6148 = vpop.f32.mrb[0].mxu0
        %v6149 = vpop.f32.mrb[0].mxu0
        %v6150 = vadd.f32 %v5989, %v6149
        %v6151 = vpop.f32.mrb[0].mxu0
        %6152 = vmatprep.mubr.bf16.mxu0 %v4927
        %6153 = vmatmul.mubr.bf16.gmra.mrb[0].mxu0 %v4926
        %v6154 = vpop.f32.mrb[0].mxu0
        %v6155 = vadd.f32 %v5994, %v6154
        %v6156 = vpop.f32.mrb[0].mxu0
        %v6157 = vpop.f32.mrb[0].mxu0
        %v6158 = vadd.f32 %v5997, %v6157
        %v6159 = vpop.f32.mrb[0].mxu0
        %6160 = vmatprep.mubr.bf16.mxu0 %v4936
        %6161 = vmatmul.mubr.bf16.gmra.mrb[0].mxu0 %v4935
        %v6162 = vpop.f32.mrb[0].mxu0
        %v6163 = vadd.f32 %v6002, %v6162
        %v6164 = vpop.f32.mrb[0].mxu0
        %v6165 = vpop.f32.mrb[0].mxu0
        %v6166 = vadd.f32 %v6005, %v6165
        %v6167 = vpop.f32.mrb[0].mxu0
        %6168 = vmatprep.mubr.bf16.mxu0 %v4945
        %6169 = vmatmul.mubr.bf16.gmra.mrb[0].mxu0 %v4944
        %v6170 = vpop.f32.mrb[0].mxu0
        %v6171 = vadd.f32 %v6010, %v6170
        %v6172 = vpop.f32.mrb[0].mxu0
        %v6173 = vpop.f32.mrb[0].mxu0
        %v6174 = vadd.f32 %v6013, %v6173
        %v6175 = vpop.f32.mrb[0].mxu0
        %6176 = vmatprep.mubr.bf16.mxu0 %v4954
        %6177 = vmatmul.mubr.bf16.gmra.mrb[0].mxu0 %v4953
        %v6178 = vpop.f32.mrb[0].mxu0
        %v6179 = vadd.f32 %v6018, %v6178
        %v6180 = vpop.f32.mrb[0].mxu0
        %v6181 = vpop.f32.mrb[0].mxu0
        %v6182 = vadd.f32 %v6021, %v6181
        %v6183 = vpop.f32.mrb[0].mxu0
        %6184 = vmatprep.mubr.bf16.mxu0 %v4963
        %6185 = vmatmul.mubr.bf16.gmra.mrb[0].mxu0 %v4962
        %v6186 = vpop.f32.mrb[0].mxu0
        %v6187 = vadd.f32 %v6026, %v6186
        %v6188 = vpop.f32.mrb[0].mxu0
        %v6189 = vpop.f32.mrb[0].mxu0
        %v6190 = vadd.f32 %v6029, %v6189
        %v6191 = vpop.f32.mrb[0].mxu0
        %6192 = vmatprep.mubr.bf16.mxu0 %v4972
        %6193 = vmatmul.mubr.bf16.gmra.mrb[0].mxu0 %v4971
        %v6194 = vpop.f32.mrb[0].mxu0
        %v6195 = vadd.f32 %v6034, %v6194
        %v6196 = vpop.f32.mrb[0].mxu0
        %v6197 = vpop.f32.mrb[0].mxu0
        %v6198 = vadd.f32 %v6037, %v6197
        %v6199 = vpop.f32.mrb[0].mxu0
        %6200 = vmatprep.mubr.bf16.mxu0 %v4981
        %6201 = vmatmul.mubr.bf16.gmra.mrb[0].mxu0 %v4980
        %v6202 = vpop.f32.mrb[0].mxu0
        %v6203 = vadd.f32 %v6042, %v6202
        %v6204 = vpop.f32.mrb[0].mxu0
        %v6205 = vpop.f32.mrb[0].mxu0
        %v6206 = vadd.f32 %v6045, %v6205
        %v6207 = vpop.f32.mrb[0].mxu0
        %6208 = vdwg.mxu0
        %6209 = vmatprep.subr.bf16.mxu0 0
        %6210 = vmatpush1.bf16.msra.mxu0 %v5485
        %6211 = vmatprep.subr.bf16.mxu0 0
        %6212 = vmatpush1.bf16.msra.mxu0 %v5486
        %6213 = vmatprep.subr.bf16.mxu0 0
        %6214 = vmatpush1.bf16.msra.mxu0 %v5487
        %6215 = vmatprep.subr.bf16.mxu0 0
        %6216 = vmatpush1.bf16.msra.mxu0 %v5488
        %6217 = vmatprep.subr.bf16.mxu0 0
        %6218 = vmatpush1.bf16.msra.mxu0 %v5489
        %6219 = vmatprep.subr.bf16.mxu0 0
        %6220 = vmatpush1.bf16.msra.mxu0 %v5490
        %6221 = vmatprep.subr.bf16.mxu0 0
        %6222 = vmatpush1.bf16.msra.mxu0 %v5491
        %6223 = vmatprep.subr.bf16.mxu0 0
        %6224 = vmatpush1.bf16.msra.mxu0 %v5492
        %6225 = vmatprep.subr.bf16.mxu0 0
        %6226 = vmatpush1.bf16.msra.mxu0 0
        %6227 = vmatprep.subr.bf16.mxu0 0
        %6228 = vmatpush1.bf16.msra.mxu0 0
        %6229 = vmatprep.subr.bf16.mxu0 0
        %6230 = vmatpush1.bf16.msra.mxu0 0
        %6231 = vmatprep.subr.bf16.mxu0 0
        %6232 = vmatpush1.bf16.msra.mxu0 0
        %6233 = vmatprep.subr.bf16.mxu0 0
        %6234 = vmatpush1.bf16.msra.mxu0 0
        %6235 = vmatprep.subr.bf16.mxu0 0
        %6236 = vmatpush1.bf16.msra.mxu0 0
        %6237 = vmatprep.subr.bf16.mxu0 0
        %6238 = vmatpush1.bf16.msra.mxu0 0
        %6239 = vmatprep.subr.bf16.mxu0 0
        %6240 = vmatpush1.bf16.msra.mxu0 0
        %6241 = vmatprep.mubr.bf16.mxu0 0
        %6242 = vmatmul.mubr.bf16.gmra.mrb[0].mxu0 %v4847
        %v6243 = vpop.f32.mrb[0].mxu0
        %v6244 = vadd.f32 %v6083, %v6243
        %v6245 = vpop.f32.mrb[0].mxu0
        %v6246 = vpop.f32.mrb[0].mxu0
        %v6247 = vadd.f32 %v6086, %v6246
        %v6248 = vpop.f32.mrb[0].mxu0
        %6249 = vmatprep.mubr.bf16.mxu0 0
        %6250 = vmatmul.mubr.bf16.gmra.mrb[0].mxu0 %v4856
        %v6251 = vpop.f32.mrb[0].mxu0
        %v6252 = vadd.f32 %v6091, %v6251
        %v6253 = vpop.f32.mrb[0].mxu0
        %v6254 = vpop.f32.mrb[0].mxu0
        %v6255 = vadd.f32 %v6094, %v6254
        %v6256 = vpop.f32.mrb[0].mxu0
        %6257 = vmatprep.mubr.bf16.mxu0 0
        %6258 = vmatmul.mubr.bf16.gmra.mrb[0].mxu0 %v4865
        %v6259 = vpop.f32.mrb[0].mxu0
        %v6260 = vadd.f32 %v6099, %v6259
        %v6261 = vpop.f32.mrb[0].mxu0
        %v6262 = vpop.f32.mrb[0].mxu0
        %v6263 = vadd.f32 %v6102, %v6262
        %v6264 = vpop.f32.mrb[0].mxu0
        %6265 = vmatprep.mubr.bf16.mxu0 0
        %6266 = vmatmul.mubr.bf16.gmra.mrb[0].mxu0 %v4874
        %v6267 = vpop.f32.mrb[0].mxu0
        %v6268 = vadd.f32 %v6107, %v6267
        %v6269 = vpop.f32.mrb[0].mxu0
        %v6270 = vpop.f32.mrb[0].mxu0
        %v6271 = vadd.f32 %v6110, %v6270
        %v6272 = vpop.f32.mrb[0].mxu0
        %6273 = vmatprep.mubr.bf16.mxu0 0
        %6274 = vmatmul.mubr.bf16.gmra.mrb[0].mxu0 %v4883
        %v6275 = vpop.f32.mrb[0].mxu0
        %v6276 = vadd.f32 %v6115, %v6275
        %v6277 = vpop.f32.mrb[0].mxu0
        %v6278 = vpop.f32.mrb[0].mxu0
        %v6279 = vadd.f32 %v6118, %v6278
        %v6280 = vpop.f32.mrb[0].mxu0
        %6281 = vmatprep.mubr.bf16.mxu0 0
        %6282 = vmatmul.mubr.bf16.gmra.mrb[0].mxu0 %v4892
        %v6283 = vpop.f32.mrb[0].mxu0
        %v6284 = vadd.f32 %v6123, %v6283
        %v6285 = vpop.f32.mrb[0].mxu0
        %v6286 = vpop.f32.mrb[0].mxu0
        %v6287 = vadd.f32 %v6126, %v6286
        %v6288 = vpop.f32.mrb[0].mxu0
        %6289 = vmatprep.mubr.bf16.mxu0 0
        %6290 = vmatmul.mubr.bf16.gmra.mrb[0].mxu0 %v4901
        %v6291 = vpop.f32.mrb[0].mxu0
        %v6292 = vadd.f32 %v6131, %v6291
        %v6293 = vpop.f32.mrb[0].mxu0
        %v6294 = vpop.f32.mrb[0].mxu0
        %v6295 = vadd.f32 %v6134, %v6294
        %v6296 = vpop.f32.mrb[0].mxu0
        %6297 = vmatprep.mubr.bf16.mxu0 0
        %6298 = vmatmul.mubr.bf16.gmra.mrb[0].mxu0 %v4910
        %v6299 = vpop.f32.mrb[0].mxu0
        %v6300 = vadd.f32 %v6139, %v6299
        %v6301 = vpop.f32.mrb[0].mxu0
        %v6302 = vpop.f32.mrb[0].mxu0
        %v6303 = vadd.f32 %v6142, %v6302
        %v6304 = vpop.f32.mrb[0].mxu0
        %6305 = vmatprep.mubr.bf16.mxu0 0
        %6306 = vmatmul.mubr.bf16.gmra.mrb[0].mxu0 %v4919
        %v6307 = vpop.f32.mrb[0].mxu0
        %v6308 = vadd.f32 %v6147, %v6307
        %v6309 = vpop.f32.mrb[0].mxu0
        %v6310 = vpop.f32.mrb[0].mxu0
        %v6311 = vadd.f32 %v6150, %v6310
        %v6312 = vpop.f32.mrb[0].mxu0
        %6313 = vmatprep.mubr.bf16.mxu0 0
        %6314 = vmatmul.mubr.bf16.gmra.mrb[0].mxu0 %v4928
        %v6315 = vpop.f32.mrb[0].mxu0
        %v6316 = vadd.f32 %v6155, %v6315
        %v6317 = vpop.f32.mrb[0].mxu0
        %v6318 = vpop.f32.mrb[0].mxu0
        %v6319 = vadd.f32 %v6158, %v6318
        %v6320 = vpop.f32.mrb[0].mxu0
        %6321 = vmatprep.mubr.bf16.mxu0 0
        %6322 = vmatmul.mubr.bf16.gmra.mrb[0].mxu0 %v4937
        %v6323 = vpop.f32.mrb[0].mxu0
        %v6324 = vadd.f32 %v6163, %v6323
        %v6325 = vpop.f32.mrb[0].mxu0
        %v6326 = vpop.f32.mrb[0].mxu0
        %v6327 = vadd.f32 %v6166, %v6326
        %v6328 = vpop.f32.mrb[0].mxu0
        %6329 = vmatprep.mubr.bf16.mxu0 0
        %6330 = vmatmul.mubr.bf16.gmra.mrb[0].mxu0 %v4946
        %v6331 = vpop.f32.mrb[0].mxu0
        %v6332 = vadd.f32 %v6171, %v6331
        %v6333 = vpop.f32.mrb[0].mxu0
        %v6334 = vpop.f32.mrb[0].mxu0
        %v6335 = vadd.f32 %v6174, %v6334
        %v6336 = vpop.f32.mrb[0].mxu0
        %6337 = vmatprep.mubr.bf16.mxu0 0
        %6338 = vmatmul.mubr.bf16.gmra.mrb[0].mxu0 %v4955
        %v6339 = vpop.f32.mrb[0].mxu0
        %v6340 = vadd.f32 %v6179, %v6339
        %v6341 = vpop.f32.mrb[0].mxu0
        %v6342 = vpop.f32.mrb[0].mxu0
        %v6343 = vadd.f32 %v6182, %v6342
        %v6344 = vpop.f32.mrb[0].mxu0
        %6345 = vmatprep.mubr.bf16.mxu0 0
        %6346 = vmatmul.mubr.bf16.gmra.mrb[0].mxu0 %v4964
        %v6347 = vpop.f32.mrb[0].mxu0
        %v6348 = vadd.f32 %v6187, %v6347
        %v6349 = vpop.f32.mrb[0].mxu0
        %v6350 = vpop.f32.mrb[0].mxu0
        %v6351 = vadd.f32 %v6190, %v6350
        %v6352 = vpop.f32.mrb[0].mxu0
        %6353 = vmatprep.mubr.bf16.mxu0 0
        %6354 = vmatmul.mubr.bf16.gmra.mrb[0].mxu0 %v4973
        %v6355 = vpop.f32.mrb[0].mxu0
        %v6356 = vadd.f32 %v6195, %v6355
        %v6357 = vpop.f32.mrb[0].mxu0
        %v6358 = vpop.f32.mrb[0].mxu0
        %v6359 = vadd.f32 %v6198, %v6358
        %v6360 = vpop.f32.mrb[0].mxu0
        %6361 = vmatprep.mubr.bf16.mxu0 0
        %6362 = vmatmul.mubr.bf16.gmra.mrb[0].mxu0 %v4982
        %v6363 = vpop.f32.mrb[0].mxu0
        %v6364 = vadd.f32 %v6203, %v6363
        %v6365 = vpop.f32.mrb[0].mxu0
        %v6366 = vpop.f32.mrb[0].mxu0
        %v6367 = vadd.f32 %v6206, %v6366
        %v6368 = vpop.f32.mrb[0].mxu0
        %6369 = vdwg.mxu0
        %v6398 = vrot.slane %v583, 2
        %v6399 = vrot.slane %v584, 2
        %v6400 = vsel %vm1607, %v6398, %v6399
        %v6401 = vrot.slane %v585, 2
        %v6402 = vsel %vm1607, %v6399, %v6401
        %v6403 = vrot.slane %v586, 2
        %v6404 = vsel %vm1607, %v6401, %v6403
        %v6405 = vrot.slane %v587, 2
        %v6406 = vsel %vm1607, %v6403, %v6405
        %v6407 = vrot.slane %v588, 2
        %v6408 = vsel %vm1607, %v6405, %v6407
        %v6409 = vrot.slane %v589, 2
        %v6410 = vsel %vm1607, %v6407, %v6409
        %v6411 = vrot.slane %v590, 2
        %v6412 = vsel %vm1607, %v6409, %v6411
        %v6413 = vrot.slane %v591, 2
        %v6414 = vsel %vm1607, %v6411, %v6413
        %v6415 = vrot.slane %v592, 2
        %v6416 = vsel %vm1607, %v6413, %v6415
        %v6417 = vrot.slane %v593, 2
        %v6418 = vsel %vm1607, %v6415, %v6417
        %v6419 = vrot.slane %v594, 2
        %v6420 = vsel %vm1607, %v6417, %v6419
        %v6421 = vrot.slane %v595, 2
        %v6422 = vsel %vm1607, %v6419, %v6421
        %v6423 = vrot.slane %v596, 2
        %v6424 = vsel %vm1607, %v6421, %v6423
        %v6425 = vrot.slane %v597, 2
        %v6426 = vsel %vm1607, %v6423, %v6425
        %v6427 = vrot.slane %v598, 2
        %v6428 = vsel %vm1607, %v6425, %v6427
        %v6429 = vrot.slane %v599, 2
        %v6430 = vsel %vm1607, %v6427, %v6429
        %v6431 = vrot.slane %v600, 2
        %v6432 = vsel %vm1607, %v6429, %v6431
        %v6433 = vrot.slane %v601, 2
        %v6434 = vsel %vm1607, %v6431, %v6433
        %v6435 = vrot.slane %v602, 2
        %v6436 = vsel %vm1607, %v6433, %v6435
        %v6437 = vrot.slane %v603, 2
        %v6438 = vsel %vm1607, %v6435, %v6437
        %v6439 = vrot.slane %v604, 2
        %v6440 = vsel %vm1607, %v6437, %v6439
        %v6441 = vrot.slane %v605, 2
        %v6442 = vsel %vm1607, %v6439, %v6441
        %v6443 = vrot.slane %v606, 2
        %v6444 = vsel %vm1607, %v6441, %v6443
        %v6445 = vrot.slane %v607, 2
        %v6446 = vsel %vm1607, %v6443, %v6445
        %v6447 = vrot.slane %v608, 2
        %v6448 = vsel %vm1607, %v6445, %v6447
        %v6449 = vrot.slane %v609, 2
        %v6450 = vsel %vm1607, %v6447, %v6449
        %v6451 = vrot.slane %v610, 2
        %v6452 = vsel %vm1607, %v6449, %v6451
        %v6485 = vrot.slane %v579, 2
        %v6486 = vrot.slane %v580, 2
        %v6487 = vsel %vm1607, %v6485, %v6486
        %v6488 = vrot.slane %v581, 2
        %v6489 = vsel %vm1607, %v6486, %v6488
        %v6490 = vrot.slane %v582, 2
        %v6491 = vsel %vm1607, %v6488, %v6490
        %v6492 = vsel %vm1607, %v6490, %v6398
        %v6498 = vsel %vm1607, %v6451, %v6485
        %v6499 = vpack.c.bf16 %v6402, %v6400
        %v6500 = vpack.c.bf16 %v6406, %v6404
        %v6501 = vpack.c.bf16 %v6410, %v6408
        %v6502 = vpack.c.bf16 %v6414, %v6412
        %v6503 = vpack.c.bf16 %v6418, %v6416
        %v6504 = vpack.c.bf16 %v6422, %v6420
        %v6505 = vpack.c.bf16 %v6426, %v6424
        %v6506 = vpack.c.bf16 %v6430, %v6428
        %v6507 = vpack.c.bf16 %v6434, %v6432
        %v6508 = vpack.c.bf16 %v6438, %v6436
        %v6509 = vpack.c.bf16 %v6442, %v6440
        %v6510 = vpack.c.bf16 %v6446, %v6444
        %v6511 = vpack.c.bf16 %v6450, %v6448
        %v6512 = vpack.c.bf16 %v6498, %v6452
        %v6513 = vpack.c.bf16 %v6489, %v6487
        %v6514 = vpack.c.bf16 %v6492, %v6491
        %v6515 = vld [vmem:[#allocation15] sm:$0xf]
        %v6516 = vld [vmem:[#allocation15 + $0x4] sm:$0xf]
        %v6517 = vld [vmem:[#allocation15 + $0x8] sm:$0xf]
        %v6518 = vld [vmem:[#allocation15 + $0xc] sm:$0xf]
        %v6519 = vld [vmem:[#allocation15 + $0x10] sm:$0xf]
        %v6520 = vld [vmem:[#allocation15 + $0x14] sm:$0xf]
        %v6521 = vld [vmem:[#allocation15 + $0x18] sm:$0xf]
        %v6522 = vld [vmem:[#allocation15 + $0x1c] sm:$0xf]
        %v6523 = vld [vmem:[#allocation15 + $0x20] sm:$0xf]
        %v6524 = vld [vmem:[#allocation15 + $0x24] sm:$0xf]
        %v6525 = vld [vmem:[#allocation15 + $0x28] sm:$0xf]
        %v6526 = vld [vmem:[#allocation15 + $0x2c] sm:$0xf]
        %v6527 = vld [vmem:[#allocation15 + $0x30] sm:$0xf]
        %v6528 = vld [vmem:[#allocation15 + $0x34] sm:$0xf]
        %v6529 = vld [vmem:[#allocation15 + $0x38] sm:$0xf]
        %v6530 = vld [vmem:[#allocation15 + $0x3c] sm:$0xf]
        %v6531 = vld [vmem:[%s13] sm:$0x1]
        %v6533 = vlaneseq
        %v6534 = vshrl.u32 %v6533, 7
        %v6535 = vsub.s32 0, %v6534
        %v6536 = vrot.slane %v6531, %v6535
        %v6554 = vunpack.c.l.b16 %v6515
        %v6555 = vunpack.c.l.b16 %v6516
        %v6556 = vunpack.c.l.b16 %v6517
        %v6557 = vunpack.c.l.b16 %v6518
        %v6558 = vunpack.c.l.b16 %v6519
        %v6559 = vunpack.c.l.b16 %v6520
        %v6560 = vunpack.c.l.b16 %v6521
        %v6561 = vunpack.c.l.b16 %v6522
        %v6562 = vunpack.c.l.b16 %v6523
        %v6563 = vunpack.c.l.b16 %v6524
        %v6564 = vunpack.c.l.b16 %v6525
        %v6565 = vunpack.c.l.b16 %v6526
        %v6566 = vunpack.c.l.b16 %v6527
        %v6567 = vunpack.c.l.b16 %v6528
        %v6568 = vunpack.c.l.b16 %v6529
        %v6569 = vunpack.c.l.b16 %v6530
        %v6570 = vpack.c.b16 %v6555, %v6554
        %v6571 = vpack.c.b16 %v6557, %v6556
        %v6572 = vpack.c.b16 %v6559, %v6558
        %v6573 = vpack.c.b16 %v6561, %v6560
        %v6574 = vpack.c.b16 %v6563, %v6562
        %v6575 = vpack.c.b16 %v6565, %v6564
        %v6576 = vpack.c.b16 %v6567, %v6566
        %v6577 = vpack.c.b16 %v6569, %v6568
        %6586 = vmatprep.subr.bf16.mxu0 0
        %6587 = vmatpush1.bf16.msra.mxu0 %v6570
        %6588 = vmatprep.subr.bf16.mxu0 0
        %6589 = vmatpush1.bf16.msra.mxu0 %v6571
        %6590 = vmatprep.subr.bf16.mxu0 0
        %6591 = vmatpush1.bf16.msra.mxu0 %v6572
        %6592 = vmatprep.subr.bf16.mxu0 0
        %6593 = vmatpush1.bf16.msra.mxu0 %v6573
        %6594 = vmatprep.subr.bf16.mxu0 0
        %6595 = vmatpush1.bf16.msra.mxu0 %v6574
        %6596 = vmatprep.subr.bf16.mxu0 0
        %6597 = vmatpush1.bf16.msra.mxu0 %v6575
        %6598 = vmatprep.subr.bf16.mxu0 0
        %6599 = vmatpush1.bf16.msra.mxu0 %v6576
        %6600 = vmatprep.subr.bf16.mxu0 0
        %6601 = vmatpush1.bf16.msra.mxu0 %v6577
        %6602 = vmatprep.subr.bf16.mxu0 0
        %6603 = vmatpush1.bf16.msra.mxu0 0
        %6604 = vmatprep.subr.bf16.mxu0 0
        %6605 = vmatpush1.bf16.msra.mxu0 0
        %6606 = vmatprep.subr.bf16.mxu0 0
        %6607 = vmatpush1.bf16.msra.mxu0 0
        %6608 = vmatprep.subr.bf16.mxu0 0
        %6609 = vmatpush1.bf16.msra.mxu0 0
        %6610 = vmatprep.subr.bf16.mxu0 0
        %6611 = vmatpush1.bf16.msra.mxu0 0
        %6612 = vmatprep.subr.bf16.mxu0 0
        %6613 = vmatpush1.bf16.msra.mxu0 0
        %6614 = vmatprep.subr.bf16.mxu0 0
        %6615 = vmatpush1.bf16.msra.mxu0 0
        %6616 = vmatprep.subr.bf16.mxu0 0
        %6617 = vmatpush1.bf16.msra.mxu0 0
        %6618 = vmatprep.mubr.bf16.mxu0 0
        %6619 = vmatmul.mubr.bf16.gmra.mrb[0].mxu0 %v6499
        %v6620 = vpop.f32.mrb[0].mxu0
        %v6621 = vadd.f32 %v6536, %v6620
        %v6622 = vpop.f32.mrb[0].mxu0
        %v6623 = vpop.f32.mrb[0].mxu0
        %v6624 = vadd.f32 %v6536, %v6623
        %v6625 = vpop.f32.mrb[0].mxu0
        %6626 = vmatprep.mubr.bf16.mxu0 0
        %6627 = vmatmul.mubr.bf16.gmra.mrb[0].mxu0 %v6500
        %v6628 = vpop.f32.mrb[0].mxu0
        %v6629 = vadd.f32 %v6536, %v6628
        %v6630 = vpop.f32.mrb[0].mxu0
        %v6631 = vpop.f32.mrb[0].mxu0
        %v6632 = vadd.f32 %v6536, %v6631
        %v6633 = vpop.f32.mrb[0].mxu0
        %6634 = vmatprep.mubr.bf16.mxu0 0
        %6635 = vmatmul.mubr.bf16.gmra.mrb[0].mxu0 %v6501
        %v6636 = vpop.f32.mrb[0].mxu0
        %v6637 = vadd.f32 %v6536, %v6636
        %v6638 = vpop.f32.mrb[0].mxu0
        %v6639 = vpop.f32.mrb[0].mxu0
        %v6640 = vadd.f32 %v6536, %v6639
        %v6641 = vpop.f32.mrb[0].mxu0
        %6642 = vmatprep.mubr.bf16.mxu0 0
        %6643 = vmatmul.mubr.bf16.gmra.mrb[0].mxu0 %v6502
        %v6644 = vpop.f32.mrb[0].mxu0
        %v6645 = vadd.f32 %v6536, %v6644
        %v6646 = vpop.f32.mrb[0].mxu0
        %v6647 = vpop.f32.mrb[0].mxu0
        %v6648 = vadd.f32 %v6536, %v6647
        %v6649 = vpop.f32.mrb[0].mxu0
        %6650 = vmatprep.mubr.bf16.mxu0 0
        %6651 = vmatmul.mubr.bf16.gmra.mrb[0].mxu0 %v6503
        %v6652 = vpop.f32.mrb[0].mxu0
        %v6653 = vadd.f32 %v6536, %v6652
        %v6654 = vpop.f32.mrb[0].mxu0
        %v6655 = vpop.f32.mrb[0].mxu0
        %v6656 = vadd.f32 %v6536, %v6655
        %v6657 = vpop.f32.mrb[0].mxu0
        %6658 = vmatprep.mubr.bf16.mxu0 0
        %6659 = vmatmul.mubr.bf16.gmra.mrb[0].mxu0 %v6504
        %v6660 = vpop.f32.mrb[0].mxu0
        %v6661 = vadd.f32 %v6536, %v6660
        %v6662 = vpop.f32.mrb[0].mxu0
        %v6663 = vpop.f32.mrb[0].mxu0
        %v6664 = vadd.f32 %v6536, %v6663
        %v6665 = vpop.f32.mrb[0].mxu0
        %6666 = vmatprep.mubr.bf16.mxu0 0
        %6667 = vmatmul.mubr.bf16.gmra.mrb[0].mxu0 %v6505
        %v6668 = vpop.f32.mrb[0].mxu0
        %v6669 = vadd.f32 %v6536, %v6668
        %v6670 = vpop.f32.mrb[0].mxu0
        %v6671 = vpop.f32.mrb[0].mxu0
        %v6672 = vadd.f32 %v6536, %v6671
        %v6673 = vpop.f32.mrb[0].mxu0
        %6674 = vmatprep.mubr.bf16.mxu0 0
        %6675 = vmatmul.mubr.bf16.gmra.mrb[0].mxu0 %v6506
        %v6676 = vpop.f32.mrb[0].mxu0
        %v6677 = vadd.f32 %v6536, %v6676
        %v6678 = vpop.f32.mrb[0].mxu0
        %v6679 = vpop.f32.mrb[0].mxu0
        %v6680 = vadd.f32 %v6536, %v6679
        %v6681 = vpop.f32.mrb[0].mxu0
        %6682 = vmatprep.mubr.bf16.mxu0 0
        %6683 = vmatmul.mubr.bf16.gmra.mrb[0].mxu0 %v6507
        %v6684 = vpop.f32.mrb[0].mxu0
        %v6685 = vadd.f32 %v6536, %v6684
        %v6686 = vpop.f32.mrb[0].mxu0
        %v6687 = vpop.f32.mrb[0].mxu0
        %v6688 = vadd.f32 %v6536, %v6687
        %v6689 = vpop.f32.mrb[0].mxu0
        %6690 = vmatprep.mubr.bf16.mxu0 0
        %6691 = vmatmul.mubr.bf16.gmra.mrb[0].mxu0 %v6508
        %v6692 = vpop.f32.mrb[0].mxu0
        %v6693 = vadd.f32 %v6536, %v6692
        %v6694 = vpop.f32.mrb[0].mxu0
        %v6695 = vpop.f32.mrb[0].mxu0
        %v6696 = vadd.f32 %v6536, %v6695
        %v6697 = vpop.f32.mrb[0].mxu0
        %6698 = vmatprep.mubr.bf16.mxu0 0
        %6699 = vmatmul.mubr.bf16.gmra.mrb[0].mxu0 %v6509
        %v6700 = vpop.f32.mrb[0].mxu0
        %v6701 = vadd.f32 %v6536, %v6700
        %v6702 = vpop.f32.mrb[0].mxu0
        %v6703 = vpop.f32.mrb[0].mxu0
        %v6704 = vadd.f32 %v6536, %v6703
        %v6705 = vpop.f32.mrb[0].mxu0
        %6706 = vmatprep.mubr.bf16.mxu0 0
        %6707 = vmatmul.mubr.bf16.gmra.mrb[0].mxu0 %v6510
        %v6708 = vpop.f32.mrb[0].mxu0
        %v6709 = vadd.f32 %v6536, %v6708
        %v6710 = vpop.f32.mrb[0].mxu0
        %v6711 = vpop.f32.mrb[0].mxu0
        %v6712 = vadd.f32 %v6536, %v6711
        %v6713 = vpop.f32.mrb[0].mxu0
        %6714 = vmatprep.mubr.bf16.mxu0 0
        %6715 = vmatmul.mubr.bf16.gmra.mrb[0].mxu0 %v6511
        %v6716 = vpop.f32.mrb[0].mxu0
        %v6717 = vadd.f32 %v6536, %v6716
        %v6718 = vpop.f32.mrb[0].mxu0
        %v6719 = vpop.f32.mrb[0].mxu0
        %v6720 = vadd.f32 %v6536, %v6719
        %v6721 = vpop.f32.mrb[0].mxu0
        %6722 = vmatprep.mubr.bf16.mxu0 0
        %6723 = vmatmul.mubr.bf16.gmra.mrb[0].mxu0 %v6512
        %v6724 = vpop.f32.mrb[0].mxu0
        %v6725 = vadd.f32 %v6536, %v6724
        %v6726 = vpop.f32.mrb[0].mxu0
        %v6727 = vpop.f32.mrb[0].mxu0
        %v6728 = vadd.f32 %v6536, %v6727
        %v6729 = vpop.f32.mrb[0].mxu0
        %6730 = vmatprep.mubr.bf16.mxu0 0
        %6731 = vmatmul.mubr.bf16.gmra.mrb[0].mxu0 %v6513
        %v6732 = vpop.f32.mrb[0].mxu0
        %v6733 = vadd.f32 %v6536, %v6732
        %v6734 = vpop.f32.mrb[0].mxu0
        %v6735 = vpop.f32.mrb[0].mxu0
        %v6736 = vadd.f32 %v6536, %v6735
        %v6737 = vpop.f32.mrb[0].mxu0
        %6738 = vmatprep.mubr.bf16.mxu0 0
        %6739 = vmatmul.mubr.bf16.gmra.mrb[0].mxu0 %v6514
        %v6740 = vpop.f32.mrb[0].mxu0
        %v6741 = vadd.f32 %v6536, %v6740
        %v6742 = vpop.f32.mrb[0].mxu0
        %v6743 = vpop.f32.mrb[0].mxu0
        %v6744 = vadd.f32 %v6536, %v6743
        %v6745 = vpop.f32.mrb[0].mxu0
        %6746 = vdwg.mxu0
        %v6747 = vadd.f32 %v6244, %v6621
        %v6748 = vadd.f32 %v6247, %v6624
        %v6749 = vadd.f32 %v6252, %v6629
        %v6750 = vadd.f32 %v6255, %v6632
        %v6751 = vadd.f32 %v6260, %v6637
        %v6752 = vadd.f32 %v6263, %v6640
        %v6753 = vadd.f32 %v6268, %v6645
        %v6754 = vadd.f32 %v6271, %v6648
        %v6755 = vadd.f32 %v6276, %v6653
        %v6756 = vadd.f32 %v6279, %v6656
        %v6757 = vadd.f32 %v6284, %v6661
        %v6758 = vadd.f32 %v6287, %v6664
        %v6759 = vadd.f32 %v6292, %v6669
        %v6760 = vadd.f32 %v6295, %v6672
        %v6761 = vadd.f32 %v6300, %v6677
        %v6762 = vadd.f32 %v6303, %v6680
        %v6763 = vadd.f32 %v6308, %v6685
        %v6764 = vadd.f32 %v6311, %v6688
        %v6765 = vadd.f32 %v6316, %v6693
        %v6766 = vadd.f32 %v6319, %v6696
        %v6767 = vadd.f32 %v6324, %v6701
        %v6768 = vadd.f32 %v6327, %v6704
        %v6769 = vadd.f32 %v6332, %v6709
        %v6770 = vadd.f32 %v6335, %v6712
        %v6771 = vadd.f32 %v6340, %v6717
        %v6772 = vadd.f32 %v6343, %v6720
        %v6773 = vadd.f32 %v6348, %v6725
        %v6774 = vadd.f32 %v6351, %v6728
        %v6775 = vadd.f32 %v6356, %v6733
        %v6776 = vadd.f32 %v6359, %v6736
        %v6777 = vadd.f32 %v6364, %v6741
        %v6778 = vadd.f32 %v6367, %v6744
        %6779 = vst [vmem:[%s577] sm:$0xff] %v6747
        %6780 = vst [vmem:[%s577 + $0x8] sm:$0xff] %v6748
        %6781 = vst [vmem:[%s577 + $0x10] sm:$0xff] %v6749
        %6782 = vst [vmem:[%s577 + $0x18] sm:$0xff] %v6750
        %6783 = vst [vmem:[%s577 + $0x20] sm:$0xff] %v6751
        %6784 = vst [vmem:[%s577 + $0x28] sm:$0xff] %v6752
        %6785 = vst [vmem:[%s577 + $0x30] sm:$0xff] %v6753
        %6786 = vst [vmem:[%s577 + $0x38] sm:$0xff] %v6754
        %6787 = vst [vmem:[%s577 + $0x40] sm:$0xff] %v6755
        %6788 = vst [vmem:[%s577 + $0x48] sm:$0xff] %v6756
        %6789 = vst [vmem:[%s577 + $0x50] sm:$0xff] %v6757
        %6790 = vst [vmem:[%s577 + $0x58] sm:$0xff] %v6758
        %6791 = vst [vmem:[%s577 + $0x60] sm:$0xff] %v6759
        %6792 = vst [vmem:[%s577 + $0x68] sm:$0xff] %v6760
        %6793 = vst [vmem:[%s577 + $0x70] sm:$0xff] %v6761
        %6794 = vst [vmem:[%s577 + $0x78] sm:$0xff] %v6762
        %6795 = vst [vmem:[%s577 + $0x80] sm:$0xff] %v6763
        %6796 = vst [vmem:[%s577 + $0x88] sm:$0xff] %v6764
        %6797 = vst [vmem:[%s577 + $0x90] sm:$0xff] %v6765
        %6798 = vst [vmem:[%s577 + $0x98] sm:$0xff] %v6766
        %6799 = vst [vmem:[%s577 + $0xa0] sm:$0xff] %v6767
        %6800 = vst [vmem:[%s577 + $0xa8] sm:$0xff] %v6768
        %6801 = vst [vmem:[%s577 + $0xb0] sm:$0xff] %v6769
        %6802 = vst [vmem:[%s577 + $0xb8] sm:$0xff] %v6770
        %6803 = vst [vmem:[%s577 + $0xc0] sm:$0xff] %v6771
        %6804 = vst [vmem:[%s577 + $0xc8] sm:$0xff] %v6772
        %6805 = vst [vmem:[%s577 + $0xd0] sm:$0xff] %v6773
        %6806 = vst [vmem:[%s577 + $0xd8] sm:$0xff] %v6774
        %6807 = vst [vmem:[%s577 + $0xe0] sm:$0xff] %v6775
        %6808 = vst [vmem:[%s577 + $0xe8] sm:$0xff] %v6776
        %6809 = vst [vmem:[%s577 + $0xf0] sm:$0xff] %v6777
        %6810 = vst [vmem:[%s577 + $0xf8] sm:$0xff] %v6778
        %s6811 = sand.u32 %s342, 1
        %s6812 = scalar_lea.sflag [#allocation5], %s6811
        %s6813 = sand.u32 %s342, 1
        %s6814 = smul.addr %s6813, 256
        %s6815 = scalar_lea.vmem [#allocation17], %s6814
        // Predicated region
        $region109: #{tpu_custom_call.1} parent=75 // pred_check
          %p6816 = pneg %p352
        $region110: #{tpu_custom_call.1} parent=75 // pred_check_branch
          %6818 = sbr.rel (%p6816) target = $region112
        $region111: #{tpu_custom_call.1} parent=75 // pred_region
          %s6820 = ssub.s32 4096, 4096
          %6821 = vsyncadd %s6812, %s6820
          %s6822 = smul.addr %s35, 32
          %s6823 = smul.addr %s6822, 128
          %s6824 = scalar_lea.hbm %s14, %s6823
          %s6825 = sshll.u32 %s6815, 4
          %s6826 = int_to_ptr.vmem [resolvable:$true] %s6825
          %6831 = dma.vmem_to_hbm [thread:$0]  %s6826, 4096, %s6824, %s6812, 128, 128, 8
        $region112: #{tpu_custom_call.1} parent=75 // pred_fallthru
          _
      $region76: #{tpu_custom_call.1} parent=5 // pred_fallthru
        _
      %p6832 = scmp.le.s32.totalorder 2, %s30
      // Predicated region
      $region113: #{tpu_custom_call.1} parent=5 // pred_check
        %p6833 = pneg %p6832
      $region114: #{tpu_custom_call.1} parent=5 // pred_check_branch
        %6835 = sbr.rel (%p6833) target = $region116
      $region115: #{tpu_custom_call.1} parent=5 // pred_region
        %s6836 = ssub.s32 %s30, 2
        // Predicated region
        $region117: #{tpu_custom_call.1} parent=115 // pred_check
          %p6837 = pneg %p358
        $region118: #{tpu_custom_call.1} parent=115 // pred_check_branch
          %6839 = sbr.rel (%p6837) target = $region120
        $region119: #{tpu_custom_call.1} parent=115 // pred_region
          %s6840 = sand.u32 %s343, 1
          %s6841 = scalar_lea.sflag [#allocation5], %s6840
          %s6842 = sand.u32 %s343, 1
          %s6843 = smul.addr %s6842, 256
          %s6844 = scalar_lea.vmem [#allocation17], %s6843
          %6845 = dma.done %s6841, 4096
        $region120: #{tpu_custom_call.1} parent=115 // pred_fallthru
          _
      $region116: #{tpu_custom_call.1} parent=5 // pred_fallthru
        _
    $region6: #{tpu_custom_call.1} parent=1 // loop_footer
      %s34 = sadd.s32 1, %s30
    $region7: #{tpu_custom_call.1} parent=1 // loop_footer_branch
      %29 = sbr.rel target = $region3
    $region8: #{tpu_custom_call.1} parent=1 // loop_exit
      _
    %6846 = vsyncpa [#allocation4], 1
    %s6847 = scalar_lea.sflag [#allocation4], 1
    %6848 = vsyncpa %s6847, 1
    %6849 = vsyncpa [#allocation7], 1
    %6850 = vsyncpa [#allocation10], 1
    %6851 = vsyncpa [#allocation13], 1
    %6852 = vsyncpa [#allocation16], 1
    %6853 = vsyncpa [#allocation5], 1
    %s6854 = scalar_lea.sflag [#allocation5], 1
    %6855 = vsyncpa %s6854, 1

</llo_original>
